<compile_context>
chip_gen: v5e
topology: v5e:2x2
jax: 0.10.0
libtpu: 0.0.40
codegen_flags: <defaults>
</compile_context>

<pallas_src>
import math

import jax
import jax.numpy as jnp
from jax import lax
from jax.experimental import pallas as pl

# ----------------------------- problem sizes ----------------------------------------
B = 2          # batch
H = 8          # feature height
W = 8          # feature width
N = H * W      # tokens per batch element
C = 32         # in_dim
D = 32         # slot_dim
T = 8          # texture_dim
K = 4          # num_slots (1 background + K-1 foreground)
G = B * (K - 1)            # total foreground (batch, slot) pairs
BN = B * N
GN = G * N
ITERS = 4
HID = max(D, 128)          # hidden dim of to_res MLP (max(slot_dim, 128))
EPS = 1e-8                 # slot-attention eps
LN_EPS = 1e-5              # nn.LayerNorm default eps
SCALE = D ** -0.5

# ------------------------------- packed buffer layouts ------------------------------
MAIN_W = 32                # lane width of the "main" packed parameter buffer
WIDE_W = 128               # lane width of the "wide" packed parameter buffer
DATA_ROWS = BN + 16        # feat/tex rows + slot rows + position rows
DATA_W = C + T             # feat lanes | texture lanes

OUT_W = 128                # single lane-dense output slab, rows = B*K
ATTN_OFF = 0               # [0 , 64)   attention (N lanes)
SLOT_OFF = N               # [64, 96)   slots     (D lanes)
TEX_OFF = SLOT_OFF + D     # [96, 104)  slot texture (T lanes)
POS_OFF = TEX_OFF + T      # [104,106)  fg position (2 lanes, zero on bg rows)

_MAIN_SPECS = (            # (name, rows, cols) -- cols <= MAIN_W
    ("nf_g", 1, C), ("nf_b", 1, C),
    ("grid_wd", 2, C),                             # folded grid-embed weight W[0:2]-W[2:4]
    ("grid2", N, 2),                               # flattened coordinate grid
    ("ge_base", N, C),                             # precomputed grid embedding of the base grid
    ("mlp_fg_g", 1, C), ("mlp_fg_b", 1, C), ("mlp_fg_w", C, D), ("mlp_fg_bias", 1, D),
    ("mlp_bg_g", 1, C), ("mlp_bg_b", 1, C), ("mlp_bg_w", C, D), ("mlp_bg_bias", 1, D),
    ("toq_g8", B * K, D), ("toq_b8", B * K, D), ("toq_w2", 2 * D, D),
    ("res_g8", B * K, D), ("res_b8", B * K, D),
    ("res_w2s", 2 * HID, D), ("res_b2_8", B * K, D),
    ("tex_g2", 1, 2 * T), ("tex_b2", 1, 2 * T),
    ("tex_w_bd", 2 * T, 2 * T), ("tex_bias2", 1, 2 * T),
)
_WIDE_SPECS = (            # (name, rows, cols) -- cols <= WIDE_W
    ("w_kv4", C, 4 * C),                           # [k_fg | v_fg | k_bg | v_bg]
    ("gru_wih2", 2 * D, 3 * D), ("gru_whh2", 2 * D, 3 * D),
    ("gru_bih8", B * K, 3 * D), ("gru_bhh8", B * K, 3 * D),
    ("res_w1s", 2 * D, HID), ("res_b1_8", B * K, HID),
)


def _layout(specs):
    offs, off = {}, 0
    for name, rows, cols in specs:
        offs[name] = (off, rows, cols)
        off += ((rows + 7) // 8) * 8          # 8-sublane aligned blocks
    return offs, off


MAIN_OFF, MAIN_ROWS = _layout(_MAIN_SPECS)
WIDE_OFF, WIDE_ROWS = _layout(_WIDE_SPECS)


# --------------------------------- in-kernel helpers --------------------------------
def _ln(x, g, b):
    """nn.LayerNorm over the last dim; variance via E[x^2]-mu^2 (parallel reductions)."""
    mu = jnp.mean(x, axis=-1, keepdims=True)
    ex2 = jnp.mean(x * x, axis=-1, keepdims=True)
    var = jnp.maximum(ex2 - mu * mu, 0.0)
    return (x - mu) * lax.rsqrt(var + LN_EPS) * g + b


def _sigmoid(u):
    # exact: tanh goes to the EUP slot instead of burning VALU slots on a divide.
    return 0.5 * (jnp.tanh(0.5 * u) + 1.0)


# ------------------------------------- kernel ---------------------------------------
def slot_attention_kernel(data_ref, pmain_ref, pwide_ref, out_ref):
    f32 = jnp.float32

    # ---- unpack the two packed parameter buffers (static ref slices) ----
    p = {}
    for name, (off, rows, cols) in MAIN_OFF.items():
        p[name] = pmain_ref[off:off + rows, 0:cols]
    for name, (off, rows, cols) in WIDE_OFF.items():
        p[name] = pwide_ref[off:off + rows, 0:cols]

    # ---- unpack the single per-call data buffer ----
    feat = data_ref[0:BN, 0:C]                              # (BN, C)
    tex = data_ref[0:BN, C:C + T]                           # (BN, T)
    slot_all0 = data_ref[BN:BN + B * K, 0:D]                # (8, D) rows: fg g-order 0..5, bg 6..7
    fg_pos0 = data_ref[BN + B * K:BN + B * K + G, 0:2]      # (G, 2)

    # ---- hoisted constant selection / mask matrices (iota + compares only) ----
    def _iota(shape, dim):
        return lax.broadcasted_iota(jnp.int32, shape, dim)

    def _block_mask(rows, cols, blk):      # [r, c] = 1  iff  c // blk == r
        c = _iota((rows, cols), 1)
        lo = _iota((rows, cols), 0) * blk
        return jnp.logical_and(c >= lo, c < lo + blk).astype(f32)

    def _block_onehot(rows, cols, blk):    # [r, c] = 1  iff  r // blk == c
        r = _iota((rows, cols), 0)
        lo = _iota((rows, cols), 1) * blk
        return jnp.logical_and(r >= lo, r < lo + blk).astype(f32)

    eye_n = (_iota((N, N), 0) == _iota((N, N), 1)).astype(f32)
    mask_fg = _block_mask(G, GN, N)                                # (G, GN)
    mask_bg = _block_mask(B, BN, N)                                # (B, BN)
    mask_fg_tex = jnp.dot(_block_onehot(G, B, K - 1), mask_bg,
                          preferred_element_type=f32)              # (G, BN) batch block per fg pair
    fold_fg = jnp.concatenate([eye_n] * G, axis=0)                 # (GN, N)
    tile_fg = jnp.concatenate([eye_n] * G, axis=1)                 # (N, GN)
    fold_bg = jnp.concatenate([eye_n] * B, axis=0)                 # (BN, N)
    tile_bg = jnp.concatenate([eye_n] * B, axis=1)                 # (N, BN)
    onehot_g = _block_onehot(GN, G, N)                             # (GN, G)
    onehot2 = jnp.concatenate([onehot_g, onehot_g], axis=0)        # (2GN, G)

    m_fg = (_iota((B * K, 1), 0) < G).astype(f32)                  # (8, 1) fg-row mask
    m_bg = 1.0 - m_fg

    def bd2(x):
        # block-diagonal input trick: [x*m_fg | x*m_bg] so one matmul against vertically
        # stacked [W_fg; W_bg] applies the right per-row (fg vs bg) weights.
        return jnp.concatenate([x * m_fg, x * m_bg], axis=1)

    # ---- iteration-invariant feature work (hoisted) ----
    xf = _ln(feat, p["nf_g"], p["nf_b"])                                   # (BN, C)
    kv4 = jnp.dot(xf, p["w_kv4"], preferred_element_type=f32)              # (BN, 4C)
    k_base = kv4[:, 0:C]
    v_base = kv4[:, C:2 * C]
    kb_bg = kv4[:, 2 * C:3 * C]
    vb_bg = kv4[:, 3 * C:4 * C]

    ge = p["ge_base"]                                                      # (N, C)
    ge2 = jnp.concatenate([ge] * B, axis=0)                                # (BN, C)

    # background K/V (position independent, computed once)
    kv_bg_in = jnp.concatenate([kb_bg + ge2, vb_bg + ge2], axis=0)         # (2BN, C)
    kv_bg = jnp.dot(_ln(kv_bg_in, p["mlp_bg_g"], p["mlp_bg_b"]), p["mlp_bg_w"],
                    preferred_element_type=f32) + p["mlp_bg_bias"]         # (2BN, D)
    k_bg = kv_bg[0:BN]
    v_bg = kv_bg[BN:2 * BN]

    # stacked foreground K/V base, rows ordered (k/v, b, i, n)
    kge = [k_base[b * N:(b + 1) * N] + ge for b in range(B)]
    vge = [v_base[b * N:(b + 1) * N] + ge for b in range(B)]
    base_kv = jnp.concatenate([kge[b] for b in range(B) for _ in range(K - 1)]
                              + [vge[b] for b in range(B) for _ in range(K - 1)], axis=0)  # (2GN,C)

    # ---- one attention pass (shared by the fori_loop body and the peeled last iteration) ----
    def attention(slot_all, fg_pos):
        ln_s = _ln(slot_all, p["toq_g8"], p["toq_b8"])                     # fused fg/bg to_q LN
        q = jnp.dot(bd2(ln_s), p["toq_w2"], preferred_element_type=f32)    # (8, D)
        q_fg = q[0:G]
        q_bg = q[G:B * K]

        # per-slot K/V via grid-embed linearity + one-hot correction matmul
        pos_corr = jnp.dot(fg_pos, p["grid_wd"], preferred_element_type=f32)       # (G, C)
        kv_in = base_kv - jnp.dot(onehot2, pos_corr, preferred_element_type=f32)   # (2GN, C)
        kv_fg = jnp.dot(_ln(kv_in, p["mlp_fg_g"], p["mlp_fg_b"]), p["mlp_fg_w"],
                        preferred_element_type=f32) + p["mlp_fg_bias"]             # (2GN, D)
        k_fg = kv_fg[0:GN]
        v_fg = kv_fg[GN:2 * GN]

        # block-diagonal logits: one wide matmul, hoisted mask, constant fold matmul
        lf = lax.dot_general(q_fg, k_fg, (((1,), (1,)), ((), ())),
                             preferred_element_type=f32) * SCALE                   # (G, GN)
        lb = lax.dot_general(q_bg, k_bg, (((1,), (1,)), ((), ())),
                             preferred_element_type=f32) * SCALE                   # (B, BN)
        logits_fg = jnp.dot(lf * mask_fg, fold_fg, preferred_element_type=f32)     # (G, N)
        logits_bg = jnp.dot(lb * mask_bg, fold_bg, preferred_element_type=f32)     # (B, N)

        # softmax over the slot axis (per batch: 1 bg row + K-1 fg rows), exact division
        attn_fg_rows, attn_bg_rows, out_rows = [], [], []
        for b in range(B):
            lf_b = logits_fg[b * (K - 1):(b + 1) * (K - 1)]                # (K-1, N)
            lb_b = logits_bg[b:b + 1]                                      # (1, N)
            m = jnp.maximum(jnp.max(lf_b, axis=0, keepdims=True), lb_b)
            efg = jnp.exp(lf_b - m)
            ebg = jnp.exp(lb_b - m)
            den = jnp.sum(efg, axis=0, keepdims=True) + ebg
            afg = efg / den + EPS
            abg = ebg / den + EPS
            attn_fg_rows.append(afg)
            attn_bg_rows.append(abg)
            out_rows += [abg, afg]
        attn_fg = jnp.concatenate(attn_fg_rows, axis=0)                    # (G, N)
        attn_bg = jnp.concatenate(attn_bg_rows, axis=0)                    # (B, N)
        attn_bk = jnp.concatenate(out_rows, axis=0)                        # (B*K, N), output order

        w_fg = attn_fg / jnp.sum(attn_fg, axis=-1, keepdims=True)          # (G, N)
        w_bg = attn_bg / jnp.sum(attn_bg, axis=-1, keepdims=True)          # (B, N)
        fg_pos_new = jnp.dot(w_fg, p["grid2"], preferred_element_type=f32)  # (G, 2)
        return attn_bk, w_fg, w_bg, v_fg, fg_pos_new

    # ---- fused fg/bg slot update (block-diagonal V reduction + GRU + residual MLP) ----
    def update(slot_all, w_fg, w_bg, v_fg):
        w_fg_bd = jnp.dot(w_fg, tile_fg, preferred_element_type=f32) * mask_fg     # (G, GN)
        w_bg_bd = jnp.dot(w_bg, tile_bg, preferred_element_type=f32) * mask_bg     # (B, BN)
        upd_fg = jnp.dot(w_fg_bd, v_fg, preferred_element_type=f32)                # (G, D)
        upd_bg = jnp.dot(w_bg_bd, v_bg, preferred_element_type=f32)                # (B, D)
        upd = jnp.concatenate([upd_fg, upd_bg], axis=0)                            # (8, D)

        gx = jnp.dot(bd2(upd), p["gru_wih2"], preferred_element_type=f32) + p["gru_bih8"]
        gh = jnp.dot(bd2(slot_all), p["gru_whh2"], preferred_element_type=f32) + p["gru_bhh8"]
        r = _sigmoid(gx[:, 0:D] + gh[:, 0:D])
        z = _sigmoid(gx[:, D:2 * D] + gh[:, D:2 * D])
        g_new = jnp.tanh(gx[:, 2 * D:3 * D] + r * gh[:, 2 * D:3 * D])
        h = (1.0 - z) * g_new + z * slot_all

        y = _ln(h, p["res_g8"], p["res_b8"])
        h1 = jnp.maximum(jnp.dot(bd2(y), p["res_w1s"], preferred_element_type=f32)
                         + p["res_b1_8"], 0.0)                                      # (8, HID)
        res = jnp.dot(bd2(h1), p["res_w2s"], preferred_element_type=f32) + p["res_b2_8"]
        return h + res

    def iter_body(_, carry):
        slot_all, fg_pos = carry
        _, w_fg, w_bg, v_fg, fg_pos_new = attention(slot_all, fg_pos)
        return update(slot_all, w_fg, w_bg, v_fg), fg_pos_new

    slot_all, fg_pos = lax.fori_loop(0, ITERS - 1, iter_body, (slot_all0, fg_pos0))

    # ---- peeled final iteration: attention output + texture heads ----
    attn_bk, w_fg, w_bg, _, fg_pos = attention(slot_all, fg_pos)

    # texture heads: shared LayerNorm statistics, fused fg/bg affine + block-diag matmul
    mu_t = jnp.mean(tex, axis=-1, keepdims=True)
    var_t = jnp.maximum(jnp.mean(tex * tex, axis=-1, keepdims=True) - mu_t * mu_t, 0.0)
    tnorm = (tex - mu_t) * lax.rsqrt(var_t + LN_EPS)                               # (BN, T)
    t_in2 = jnp.concatenate([tnorm, tnorm], axis=1) * p["tex_g2"] + p["tex_b2"]    # (BN, 2T)
    t_both = jnp.dot(t_in2, p["tex_w_bd"], preferred_element_type=f32) + p["tex_bias2"]  # [t_fg|t_bg]

    w_fg_tex = jnp.dot(w_fg, tile_bg, preferred_element_type=f32) * mask_fg_tex    # (G, BN)
    w_bg_bd = jnp.dot(w_bg, tile_bg, preferred_element_type=f32) * mask_bg         # (B, BN)
    w_tex = jnp.concatenate([w_fg_tex, w_bg_bd], axis=0)                           # (8, BN)
    tex16 = jnp.dot(w_tex, t_both, preferred_element_type=f32)                     # (8, 2T)
    tex_g = jnp.where(m_fg > 0.5, tex16[:, 0:T], tex16[:, T:2 * T])                # (8, T) g-order

    # ---- single lane-dense output slab, one unmasked full-tile store ----
    pos_g = jnp.concatenate([fg_pos, jnp.zeros((B, 2), f32)], axis=0)              # (8, 2) g-order
    misc_g = jnp.concatenate([slot_all, tex_g, pos_g], axis=1)                     # (8, D+T+2)
    pieces = []
    for b in range(B):
        pieces.append(misc_g[G + b:G + b + 1])                       # bg row of batch b
        pieces.append(misc_g[b * (K - 1):(b + 1) * (K - 1)])         # fg rows of batch b
    misc_out = jnp.concatenate(pieces, axis=0)                       # (8, D+T+2), output row order
    pad = jnp.zeros((B * K, OUT_W - N - (D + T + 2)), f32)
    out_ref[...] = jnp.concatenate([attn_bk, misc_out, pad], axis=1)


# ------------------------------------ JAX glue ---------------------------------------
def build_grid(h, w):
    # TODO(synk): build_grid is not defined in the provided snippet; uORF-style (1,h,w,2)
    # grid with coordinates in [-1, 1] (x along W, y along H) is assumed.
    xs = jnp.linspace(-1.0, 1.0, w, dtype=jnp.float32)
    ys = jnp.linspace(-1.0, 1.0, h, dtype=jnp.float32)
    gy, gx = jnp.meshgrid(ys, xs, indexing="ij")
    return jnp.stack([gx, gy], axis=-1)[None]          # (1, h, w, 2)


def init_params(key):
    keys = jax.random.split(key, 64)
    it = iter(keys)

    def w(shape, scale=0.08):
        return (scale * jax.random.normal(next(it), shape)).astype(jnp.float32)

    ones = lambda s: jnp.ones(s, jnp.float32)
    zeros = lambda s: jnp.zeros(s, jnp.float32)

    p = {}
    p["nf_g"], p["nf_b"] = ones((1, C)), zeros((1, C))
    p["grid_w"], p["grid_b"] = w((4, C)), w((1, C))
    p["w_k_fg"], p["w_v_fg"] = w((C, C)), w((C, C))
    p["w_k_bg"], p["w_v_bg"] = w((C, C)), w((C, C))
    p["mlp_fg_g"], p["mlp_fg_b"] = ones((1, C)), zeros((1, C))
    p["mlp_fg_w"], p["mlp_fg_bias"] = w((C, D)), w((1, D))
    p["mlp_bg_g"], p["mlp_bg_b"] = ones((1, C)), zeros((1, C))
    p["mlp_bg_w"], p["mlp_bg_bias"] = w((C, D)), w((1, D))
    p["toq_g"], p["toq_b"], p["toq_w"] = ones((1, D)), zeros((1, D)), w((D, D))
    p["toqbg_g"], p["toqbg_b"], p["toqbg_w"] = ones((1, D)), zeros((1, D)), w((D, D))
    p["gru_wih"], p["gru_whh"] = w((D, 3 * D)), w((D, 3 * D))       # right-mul, gates (r,z,n)
    p["gru_bih"], p["gru_bhh"] = w((1, 3 * D)), w((1, 3 * D))
    p["grubg_wih"], p["grubg_whh"] = w((D, 3 * D)), w((D, 3 * D))
    p["grubg_bih"], p["grubg_bhh"] = w((1, 3 * D)), w((1, 3 * D))
    p["res_g"], p["res_b"] = ones((1, D)), zeros((1, D))
    p["res_w1"], p["res_b1"] = w((D, HID)), w((1, HID))
    p["res_w2"], p["res_b2"] = w((HID, D)), w((1, D))
    p["resbg_g"], p["resbg_b"] = ones((1, D)), zeros((1, D))
    p["resbg_w1"], p["resbg_b1"] = w((D, HID)), w((1, HID))
    p["resbg_w2"], p["resbg_b2"] = w((HID, D)), w((1, D))
    p["texfg_g"], p["texfg_b"] = ones((1, T)), zeros((1, T))
    p["texfg_w"], p["texfg_bias"] = w((T, T)), w((1, T))
    p["texbg_g"], p["texbg_b"] = ones((1, T)), zeros((1, T))
    p["texbg_w"], p["texbg_bias"] = w((T, T)), w((1, T))
    return p


def _stack_rows(fg_row, bg_row):
    """(1, X) fg row + (1, X) bg row -> per-slot-row (B*K, X) with fg rows 0..G-1, bg rows G..G+B-1."""
    cols = fg_row.shape[-1]
    return jnp.concatenate([jnp.broadcast_to(fg_row, (G, cols)),
                            jnp.broadcast_to(bg_row, (B, cols))], axis=0)


def pack_params(params):
    """Pack all parameters into two lane-friendly buffers (2 DMAs), with fg/bg weight stacks,
    the folded grid-embed weight and the precomputed base-grid embedding."""
    f32 = jnp.float32
    grid_wd = params["grid_w"][0:2, :] - params["grid_w"][2:4, :]      # cat([rel,-rel]) folded
    grid2 = build_grid(H, W).reshape(N, 2)
    zT = jnp.zeros((T, T), f32)
    src = {
        "nf_g": params["nf_g"], "nf_b": params["nf_b"],
        "grid_wd": grid_wd, "grid2": grid2,
        "ge_base": jnp.dot(grid2, grid_wd) + params["grid_b"],
        "w_kv4": jnp.concatenate([params["w_k_fg"], params["w_v_fg"],
                                  params["w_k_bg"], params["w_v_bg"]], axis=1),
        "mlp_fg_g": params["mlp_fg_g"], "mlp_fg_b": params["mlp_fg_b"],
        "mlp_fg_w": params["mlp_fg_w"], "mlp_fg_bias": params["mlp_fg_bias"],
        "mlp_bg_g": params["mlp_bg_g"], "mlp_bg_b": params["mlp_bg_b"],
        "mlp_bg_w": params["mlp_bg_w"], "mlp_bg_bias": params["mlp_bg_bias"],
        "toq_g8": _stack_rows(params["toq_g"], params["toqbg_g"]),
        "toq_b8": _stack_rows(params["toq_b"], params["toqbg_b"]),
        "toq_w2": jnp.concatenate([params["toq_w"], params["toqbg_w"]], axis=0),
        "gru_wih2": jnp.concatenate([params["gru_wih"], params["grubg_wih"]], axis=0),
        "gru_whh2": jnp.concatenate([params["gru_whh"], params["grubg_whh"]], axis=0),
        "gru_bih8": _stack_rows(params["gru_bih"], params["grubg_bih"]),
        "gru_bhh8": _stack_rows(params["gru_bhh"], params["grubg_bhh"]),
        "res_g8": _stack_rows(params["res_g"], params["resbg_g"]),
        "res_b8": _stack_rows(params["res_b"], params["resbg_b"]),
        "res_w1s": jnp.concatenate([params["res_w1"], params["resbg_w1"]], axis=0),
        "res_b1_8": _stack_rows(params["res_b1"], params["resbg_b1"]),
        "res_w2s": jnp.concatenate([params["res_w2"], params["resbg_w2"]], axis=0),
        "res_b2_8": _stack_rows(params["res_b2"], params["resbg_b2"]),
        "tex_g2": jnp.concatenate([params["texfg_g"], params["texbg_g"]], axis=1),
        "tex_b2": jnp.concatenate([params["texfg_b"], params["texbg_b"]], axis=1),
        "tex_w_bd": jnp.concatenate(
            [jnp.concatenate([params["texfg_w"], zT], axis=1),
             jnp.concatenate([zT, params["texbg_w"]], axis=1)], axis=0),
        "tex_bias2": jnp.concatenate([params["texfg_bias"], params["texbg_bias"]], axis=1),
    }
    pmain = jnp.zeros((MAIN_ROWS, MAIN_W), f32)
    for name, (off, rows, cols) in MAIN_OFF.items():
        pmain = pmain.at[off:off + rows, 0:cols].set(src[name].astype(f32))
    pwide = jnp.zeros((WIDE_ROWS, WIDE_W), f32)
    for name, (off, rows, cols) in WIDE_OFF.items():
        pwide = pwide.at[off:off + rows, 0:cols].set(src[name].astype(f32))
    return pmain, pwide


def pack_data(feat2, tex2, slot_all0, pos2):
    data = jnp.zeros((DATA_ROWS, DATA_W), jnp.float32)
    data = data.at[0:BN, 0:C].set(feat2)
    data = data.at[0:BN, C:C + T].set(tex2)
    data = data.at[BN:BN + B * K, 0:D].set(slot_all0)
    data = data.at[BN + B * K:BN + B * K + G, 0:2].set(pos2)
    return data


@jax.jit
def slot_attention_forward(feat, feat_texture, params, slot_fg0, slot_bg0, fg_pos0):
    assert feat.shape == (B, H, W, C) and feat_texture.shape == (B, H, W, T)
    feat2 = feat.reshape(B * N, C)
    tex2 = feat_texture.reshape(B * N, T)
    slot_all0 = jnp.concatenate([slot_fg0.reshape(G, D), slot_bg0.reshape(B, D)], axis=0)
    pos2 = fg_pos0.reshape(G, 2)
    data = pack_data(feat2, tex2, slot_all0, pos2)
    pmain, pwide = pack_params(params)

    out = pl.pallas_call(
        slot_attention_kernel,
        out_shape=jax.ShapeDtypeStruct((B * K, OUT_W), jnp.float32),
        cost_estimate=pl.CostEstimate(flops=16_000_000, transcendentals=12_000,
                                      bytes_accessed=260_000),
    )(data, pmain, pwide)

    out3 = out.reshape(B, K, OUT_W)
    attn = out3[:, :, ATTN_OFF:ATTN_OFF + N]
    slots = out3[:, :, SLOT_OFF:SLOT_OFF + D]
    slots_texture = out3[:, :, TEX_OFF:TEX_OFF + T]
    fg_position = out3[:, 1:, POS_OFF:POS_OFF + 2]
    return slots, attn, fg_position, slots_texture


# -------------------------------------- main -----------------------------------------
if __name__ == "__main__":
    key = jax.random.PRNGKey(0)
    (k_feat, k_tex, k_mu, k_sig, k_mubg, k_sigbg,
     k_pos, k_nfg, k_nbg, k_par) = jax.random.split(key, 10)

    feat = jax.random.normal(k_feat, (B, H, W, C), jnp.float32)
    feat_texture = jax.random.normal(k_tex, (B, H, W, T), jnp.float32)
    params = init_params(k_par)

    # slot initialization (mu + exp(logsigma) * noise).
    # TODO(synk): PyTorch RNG stream (torch.randn_like / init.xavier_uniform_) is not
    # bit-reproduced; deterministic JAX PRNG is used instead.
    xav = math.sqrt(3.0 / D)
    slots_mu = jax.random.normal(k_mu, (1, 1, D), jnp.float32)
    slots_logsigma = jax.random.uniform(k_sig, (1, 1, D), jnp.float32, -xav, xav)
    slots_mu_bg = jax.random.normal(k_mubg, (1, 1, D), jnp.float32)
    slots_logsigma_bg = jax.random.uniform(k_sigbg, (1, 1, D), jnp.float32, -xav, xav)
    fg_position_param = jax.random.uniform(k_pos, (1, K - 1, 2), jnp.float32, -1.0, 1.0)

    noise_fg = jax.random.normal(k_nfg, (B, K - 1, D), jnp.float32)
    noise_bg = jax.random.normal(k_nbg, (B, 1, D), jnp.float32)
    slot_fg0 = slots_mu + jnp.exp(slots_logsigma) * noise_fg        # (B, K-1, D)
    slot_bg0 = slots_mu_bg + jnp.exp(slots_logsigma_bg) * noise_bg  # (B, 1, D)
    fg_pos0 = jnp.broadcast_to(fg_position_param, (B, K - 1, 2))

    slots, attn, fg_pos_out, slots_tex = slot_attention_forward(
        feat, feat_texture, params, slot_fg0, slot_bg0, fg_pos0)
    jax.block_until_ready((slots, attn, fg_pos_out, slots_tex))

    assert slots.shape == (B, K, D)
    assert attn.shape == (B, K, N)
    assert fg_pos_out.shape == (B, K - 1, 2)
    assert slots_tex.shape == (B, K, T)
    finite = (jnp.all(jnp.isfinite(slots)) & jnp.all(jnp.isfinite(attn))
              & jnp.all(jnp.isfinite(fg_pos_out)) & jnp.all(jnp.isfinite(slots_tex)))
    assert bool(finite), "non-finite output"
    # softmax-over-slots sanity: sum over K == 1 + K*eps (exact division used in-kernel).
    assert bool(jnp.allclose(jnp.sum(attn, axis=1), 1.0 + K * EPS, atol=1e-5))
    assert bool(jnp.all(attn > 0.0))

    print("KERNEL_OK")
</pallas_src>

<mosaic_0001>
module attributes {stable_mosaic.version = 11 : i64} {
  func.func @slot_attention_kernel(%arg0: memref<144x40xf32, #tpu.memory_space<vmem>>, %arg1: memref<664x32xf32, #tpu.memory_space<vmem>>, %arg2: memref<248x128xf32, #tpu.memory_space<vmem>>, %arg3: memref<8x128xf32, #tpu.memory_space<vmem>>) attributes {dimension_semantics = [], scalar_prefetch = 0 : i64, scratch_operands = 0 : i64, tpu.core_type = #tpu.core_type<tc>} {
    %c0 = arith.constant 0 : index
    %c0_0 = arith.constant 0 : index
    %0 = vector.load %arg1[%c0, %c0_0] : memref<664x32xf32, #tpu.memory_space<vmem>>, vector<1x32xf32>
    %c8 = arith.constant 8 : index
    %c0_1 = arith.constant 0 : index
    %1 = vector.load %arg1[%c8, %c0_1] : memref<664x32xf32, #tpu.memory_space<vmem>>, vector<1x32xf32>
    %c16 = arith.constant 16 : index
    %c0_2 = arith.constant 0 : index
    %2 = vector.load %arg1[%c16, %c0_2] : memref<664x32xf32, #tpu.memory_space<vmem>>, vector<2x32xf32>
    %c24 = arith.constant 24 : index
    %c0_3 = arith.constant 0 : index
    %3 = vector.load %arg1[%c24, %c0_3] : memref<664x32xf32, #tpu.memory_space<vmem>>, vector<64x2xf32>
    %c88 = arith.constant 88 : index
    %c0_4 = arith.constant 0 : index
    %4 = vector.load %arg1[%c88, %c0_4] : memref<664x32xf32, #tpu.memory_space<vmem>>, vector<64x32xf32>
    %c152 = arith.constant 152 : index
    %c0_5 = arith.constant 0 : index
    %5 = vector.load %arg1[%c152, %c0_5] : memref<664x32xf32, #tpu.memory_space<vmem>>, vector<1x32xf32>
    %c160 = arith.constant 160 : index
    %c0_6 = arith.constant 0 : index
    %6 = vector.load %arg1[%c160, %c0_6] : memref<664x32xf32, #tpu.memory_space<vmem>>, vector<1x32xf32>
    %c168 = arith.constant 168 : index
    %c0_7 = arith.constant 0 : index
    %7 = vector.load %arg1[%c168, %c0_7] : memref<664x32xf32, #tpu.memory_space<vmem>>, vector<32x32xf32>
    %c200 = arith.constant 200 : index
    %c0_8 = arith.constant 0 : index
    %8 = vector.load %arg1[%c200, %c0_8] : memref<664x32xf32, #tpu.memory_space<vmem>>, vector<1x32xf32>
    %c208 = arith.constant 208 : index
    %c0_9 = arith.constant 0 : index
    %9 = vector.load %arg1[%c208, %c0_9] : memref<664x32xf32, #tpu.memory_space<vmem>>, vector<1x32xf32>
    %c216 = arith.constant 216 : index
    %c0_10 = arith.constant 0 : index
    %10 = vector.load %arg1[%c216, %c0_10] : memref<664x32xf32, #tpu.memory_space<vmem>>, vector<1x32xf32>
    %c224 = arith.constant 224 : index
    %c0_11 = arith.constant 0 : index
    %11 = vector.load %arg1[%c224, %c0_11] : memref<664x32xf32, #tpu.memory_space<vmem>>, vector<32x32xf32>
    %c256 = arith.constant 256 : index
    %c0_12 = arith.constant 0 : index
    %12 = vector.load %arg1[%c256, %c0_12] : memref<664x32xf32, #tpu.memory_space<vmem>>, vector<1x32xf32>
    %c264 = arith.constant 264 : index
    %c0_13 = arith.constant 0 : index
    %13 = vector.load %arg1[%c264, %c0_13] : memref<664x32xf32, #tpu.memory_space<vmem>>, vector<8x32xf32>
    %c272 = arith.constant 272 : index
    %c0_14 = arith.constant 0 : index
    %14 = vector.load %arg1[%c272, %c0_14] : memref<664x32xf32, #tpu.memory_space<vmem>>, vector<8x32xf32>
    %c280 = arith.constant 280 : index
    %c0_15 = arith.constant 0 : index
    %15 = vector.load %arg1[%c280, %c0_15] : memref<664x32xf32, #tpu.memory_space<vmem>>, vector<64x32xf32>
    %c344 = arith.constant 344 : index
    %c0_16 = arith.constant 0 : index
    %16 = vector.load %arg1[%c344, %c0_16] : memref<664x32xf32, #tpu.memory_space<vmem>>, vector<8x32xf32>
    %c352 = arith.constant 352 : index
    %c0_17 = arith.constant 0 : index
    %17 = vector.load %arg1[%c352, %c0_17] : memref<664x32xf32, #tpu.memory_space<vmem>>, vector<8x32xf32>
    %c360 = arith.constant 360 : index
    %c0_18 = arith.constant 0 : index
    %18 = vector.load %arg1[%c360, %c0_18] : memref<664x32xf32, #tpu.memory_space<vmem>>, vector<256x32xf32>
    %c616 = arith.constant 616 : index
    %c0_19 = arith.constant 0 : index
    %19 = vector.load %arg1[%c616, %c0_19] : memref<664x32xf32, #tpu.memory_space<vmem>>, vector<8x32xf32>
    %c624 = arith.constant 624 : index
    %c0_20 = arith.constant 0 : index
    %20 = vector.load %arg1[%c624, %c0_20] : memref<664x32xf32, #tpu.memory_space<vmem>>, vector<1x16xf32>
    %c632 = arith.constant 632 : index
    %c0_21 = arith.constant 0 : index
    %21 = vector.load %arg1[%c632, %c0_21] : memref<664x32xf32, #tpu.memory_space<vmem>>, vector<1x16xf32>
    %c640 = arith.constant 640 : index
    %c0_22 = arith.constant 0 : index
    %22 = vector.load %arg1[%c640, %c0_22] : memref<664x32xf32, #tpu.memory_space<vmem>>, vector<16x16xf32>
    %c656 = arith.constant 656 : index
    %c0_23 = arith.constant 0 : index
    %23 = vector.load %arg1[%c656, %c0_23] : memref<664x32xf32, #tpu.memory_space<vmem>>, vector<1x16xf32>
    %c0_24 = arith.constant 0 : index
    %c0_25 = arith.constant 0 : index
    %24 = vector.load %arg2[%c0_24, %c0_25] : memref<248x128xf32, #tpu.memory_space<vmem>>, vector<32x128xf32>
    %c32 = arith.constant 32 : index
    %c0_26 = arith.constant 0 : index
    %25 = vector.load %arg2[%c32, %c0_26] : memref<248x128xf32, #tpu.memory_space<vmem>>, vector<64x96xf32>
    %c96 = arith.constant 96 : index
    %c0_27 = arith.constant 0 : index
    %26 = vector.load %arg2[%c96, %c0_27] : memref<248x128xf32, #tpu.memory_space<vmem>>, vector<64x96xf32>
    %c160_28 = arith.constant 160 : index
    %c0_29 = arith.constant 0 : index
    %27 = vector.load %arg2[%c160_28, %c0_29] : memref<248x128xf32, #tpu.memory_space<vmem>>, vector<8x96xf32>
    %c168_30 = arith.constant 168 : index
    %c0_31 = arith.constant 0 : index
    %28 = vector.load %arg2[%c168_30, %c0_31] : memref<248x128xf32, #tpu.memory_space<vmem>>, vector<8x96xf32>
    %c176 = arith.constant 176 : index
    %c0_32 = arith.constant 0 : index
    %29 = vector.load %arg2[%c176, %c0_32] : memref<248x128xf32, #tpu.memory_space<vmem>>, vector<64x128xf32>
    %c240 = arith.constant 240 : index
    %c0_33 = arith.constant 0 : index
    %30 = vector.load %arg2[%c240, %c0_33] : memref<248x128xf32, #tpu.memory_space<vmem>>, vector<8x128xf32>
    %c0_34 = arith.constant 0 : index
    %c0_35 = arith.constant 0 : index
    %31 = vector.load %arg0[%c0_34, %c0_35] : memref<144x40xf32, #tpu.memory_space<vmem>>, vector<128x32xf32>
    %c0_36 = arith.constant 0 : index
    %c32_37 = arith.constant 32 : index
    %32 = vector.load %arg0[%c0_36, %c32_37] : memref<144x40xf32, #tpu.memory_space<vmem>>, vector<128x8xf32>
    %c128 = arith.constant 128 : index
    %c0_38 = arith.constant 0 : index
    %33 = vector.load %arg0[%c128, %c0_38] : memref<144x40xf32, #tpu.memory_space<vmem>>, vector<8x32xf32>
    %c136 = arith.constant 136 : index
    %c0_39 = arith.constant 0 : index
    %34 = vector.load %arg0[%c136, %c0_39] : memref<144x40xf32, #tpu.memory_space<vmem>>, vector<6x2xf32>
    %35 = tpu.iota {dimensions = array<i32: 0>} : vector<64x64xi32>
    %36 = tpu.iota {dimensions = array<i32: 1>} : vector<64x64xi32>
    %37 = arith.cmpi eq, %35, %36 : vector<64x64xi32>
    %38 = arith.extui %37 : vector<64x64xi1> to vector<64x64xi32>
    %39 = arith.sitofp %38 : vector<64x64xi32> to vector<64x64xf32>
    %40 = tpu.iota {dimensions = array<i32: 1>} : vector<6x384xi32>
    %41 = tpu.iota {dimensions = array<i32: 0>} : vector<6x384xi32>
    %c64_i32 = arith.constant 64 : i32
    %42 = vector.broadcast %c64_i32 : i32 to vector<6x384xi32>
    %43 = arith.muli %41, %42 : vector<6x384xi32>
    %44 = arith.cmpi sge, %40, %43 : vector<6x384xi32>
    %c64_i32_40 = arith.constant 64 : i32
    %45 = vector.broadcast %c64_i32_40 : i32 to vector<6x384xi32>
    %46 = arith.addi %43, %45 : vector<6x384xi32>
    %47 = arith.cmpi slt, %40, %46 : vector<6x384xi32>
    %48 = arith.andi %44, %47 : vector<6x384xi1>
    %49 = arith.extui %48 : vector<6x384xi1> to vector<6x384xi32>
    %50 = arith.sitofp %49 : vector<6x384xi32> to vector<6x384xf32>
    %51 = tpu.iota {dimensions = array<i32: 1>} : vector<2x128xi32>
    %52 = tpu.iota {dimensions = array<i32: 0>} : vector<2x128xi32>
    %c64_i32_41 = arith.constant 64 : i32
    %53 = vector.broadcast %c64_i32_41 : i32 to vector<2x128xi32>
    %54 = arith.muli %52, %53 : vector<2x128xi32>
    %55 = arith.cmpi sge, %51, %54 : vector<2x128xi32>
    %c64_i32_42 = arith.constant 64 : i32
    %56 = vector.broadcast %c64_i32_42 : i32 to vector<2x128xi32>
    %57 = arith.addi %54, %56 : vector<2x128xi32>
    %58 = arith.cmpi slt, %51, %57 : vector<2x128xi32>
    %59 = arith.andi %55, %58 : vector<2x128xi1>
    %60 = arith.extui %59 : vector<2x128xi1> to vector<2x128xi32>
    %61 = arith.sitofp %60 : vector<2x128xi32> to vector<2x128xf32>
    %62 = tpu.iota {dimensions = array<i32: 0>} : vector<6x2xi32>
    %63 = tpu.iota {dimensions = array<i32: 1>} : vector<6x2xi32>
    %c3_i32 = arith.constant 3 : i32
    %64 = vector.broadcast %c3_i32 : i32 to vector<6x2xi32>
    %65 = arith.muli %63, %64 : vector<6x2xi32>
    %66 = arith.cmpi sge, %62, %65 : vector<6x2xi32>
    %c3_i32_43 = arith.constant 3 : i32
    %67 = vector.broadcast %c3_i32_43 : i32 to vector<6x2xi32>
    %68 = arith.addi %65, %67 : vector<6x2xi32>
    %69 = arith.cmpi slt, %62, %68 : vector<6x2xi32>
    %70 = arith.andi %66, %69 : vector<6x2xi1>
    %71 = arith.extui %70 : vector<6x2xi1> to vector<6x2xi32>
    %72 = arith.sitofp %71 : vector<6x2xi32> to vector<6x2xf32>
    %cst = arith.constant dense<0.000000e+00> : vector<6x128xf32>
    %73 = tpu.matmul %72, %61, %cst {dimension_numbers = #tpu.dot_dimension_numbers<[1], [0], [0], [1], [0, 0, 1, 1], [], []>} : vector<6x2xf32>, vector<2x128xf32>, vector<6x128xf32> -> vector<6x128xf32>
    %74 = tpu.concatenate %39, %39, %39, %39, %39, %39 in 0 : vector<64x64xf32>, vector<64x64xf32>, vector<64x64xf32>, vector<64x64xf32>, vector<64x64xf32>, vector<64x64xf32> -> vector<384x64xf32>
    %75 = tpu.concatenate %39, %39, %39, %39, %39, %39 in 1 : vector<64x64xf32>, vector<64x64xf32>, vector<64x64xf32>, vector<64x64xf32>, vector<64x64xf32>, vector<64x64xf32> -> vector<64x384xf32>
    %76 = tpu.concatenate %39, %39 in 0 : vector<64x64xf32>, vector<64x64xf32> -> vector<128x64xf32>
    %77 = tpu.concatenate %39, %39 in 1 : vector<64x64xf32>, vector<64x64xf32> -> vector<64x128xf32>
    %78 = tpu.iota {dimensions = array<i32: 0>} : vector<384x6xi32>
    %79 = tpu.iota {dimensions = array<i32: 1>} : vector<384x6xi32>
    %c64_i32_44 = arith.constant 64 : i32
    %80 = vector.broadcast %c64_i32_44 : i32 to vector<384x6xi32>
    %81 = arith.muli %79, %80 : vector<384x6xi32>
    %82 = arith.cmpi sge, %78, %81 : vector<384x6xi32>
    %c64_i32_45 = arith.constant 64 : i32
    %83 = vector.broadcast %c64_i32_45 : i32 to vector<384x6xi32>
    %84 = arith.addi %81, %83 : vector<384x6xi32>
    %85 = arith.cmpi slt, %78, %84 : vector<384x6xi32>
    %86 = arith.andi %82, %85 : vector<384x6xi1>
    %87 = arith.extui %86 : vector<384x6xi1> to vector<384x6xi32>
    %88 = arith.sitofp %87 : vector<384x6xi32> to vector<384x6xf32>
    %89 = tpu.concatenate %88, %88 in 0 : vector<384x6xf32>, vector<384x6xf32> -> vector<768x6xf32>
    %90 = tpu.iota {dimensions = array<i32: 0>} : vector<8x1xi32>
    %c6_i32 = arith.constant 6 : i32
    %91 = vector.broadcast %c6_i32 : i32 to vector<8x1xi32>
    %92 = arith.cmpi slt, %90, %91 : vector<8x1xi32>
    %93 = arith.extui %92 : vector<8x1xi1> to vector<8x1xi32>
    %94 = arith.sitofp %93 : vector<8x1xi32> to vector<8x1xf32>
    %cst_46 = arith.constant 1.000000e+00 : f32
    %95 = vector.broadcast %cst_46 : f32 to vector<8x1xf32>
    %96 = arith.subf %95, %94 : vector<8x1xf32>
    %cst_47 = arith.constant dense<0.000000e+00> : vector<128xf32>
    %97 = vector.multi_reduction <add>, %31, %cst_47 [1] : vector<128x32xf32> to vector<128xf32>
    %98 = vector.shape_cast %97 : vector<128xf32> to vector<128x1xf32>
    %cst_48 = arith.constant 3.200000e+01 : f32
    %99 = vector.broadcast %cst_48 : f32 to vector<128x1xf32>
    %100 = arith.divf %98, %99 : vector<128x1xf32>
    %101 = arith.mulf %31, %31 : vector<128x32xf32>
    %cst_49 = arith.constant dense<0.000000e+00> : vector<128xf32>
    %102 = vector.multi_reduction <add>, %101, %cst_49 [1] : vector<128x32xf32> to vector<128xf32>
    %103 = vector.shape_cast %102 : vector<128xf32> to vector<128x1xf32>
    %cst_50 = arith.constant 3.200000e+01 : f32
    %104 = vector.broadcast %cst_50 : f32 to vector<128x1xf32>
    %105 = arith.divf %103, %104 : vector<128x1xf32>
    %106 = arith.mulf %100, %100 : vector<128x1xf32>
    %107 = arith.subf %105, %106 : vector<128x1xf32>
    %cst_51 = arith.constant 0.000000e+00 : f32
    %108 = vector.broadcast %cst_51 : f32 to vector<128x1xf32>
    %109 = arith.maximumf %107, %108 : vector<128x1xf32>
    %110 = vector.broadcast %100 : vector<128x1xf32> to vector<128x32xf32>
    %111 = arith.subf %31, %110 : vector<128x32xf32>
    %cst_52 = arith.constant 9.99999974E-6 : f32
    %112 = vector.broadcast %cst_52 : f32 to vector<128x1xf32>
    %113 = arith.addf %109, %112 : vector<128x1xf32>
    %114 = math.rsqrt %113 : vector<128x1xf32>
    %115 = vector.broadcast %114 : vector<128x1xf32> to vector<128x32xf32>
    %116 = arith.mulf %111, %115 : vector<128x32xf32>
    %117 = vector.broadcast %0 : vector<1x32xf32> to vector<128x32xf32>
    %118 = arith.mulf %116, %117 : vector<128x32xf32>
    %119 = vector.broadcast %1 : vector<1x32xf32> to vector<128x32xf32>
    %120 = arith.addf %118, %119 : vector<128x32xf32>
    %cst_53 = arith.constant dense<0.000000e+00> : vector<128x128xf32>
    %121 = tpu.matmul %120, %24, %cst_53 {dimension_numbers = #tpu.dot_dimension_numbers<[1], [0], [0], [1], [0, 0, 1, 1], [], []>} : vector<128x32xf32>, vector<32x128xf32>, vector<128x128xf32> -> vector<128x128xf32>
    %122 = vector.extract_strided_slice %121 {offsets = [0, 0], sizes = [128, 32], strides = [1, 1]} : vector<128x128xf32> to vector<128x32xf32>
    %123 = vector.extract_strided_slice %121 {offsets = [0, 32], sizes = [128, 32], strides = [1, 1]} : vector<128x128xf32> to vector<128x32xf32>
    %124 = vector.extract_strided_slice %121 {offsets = [0, 64], sizes = [128, 32], strides = [1, 1]} : vector<128x128xf32> to vector<128x32xf32>
    %125 = vector.extract_strided_slice %121 {offsets = [0, 96], sizes = [128, 32], strides = [1, 1]} : vector<128x128xf32> to vector<128x32xf32>
    %126 = tpu.concatenate %4, %4 in 0 : vector<64x32xf32>, vector<64x32xf32> -> vector<128x32xf32>
    %127 = arith.addf %124, %126 : vector<128x32xf32>
    %128 = arith.addf %125, %126 : vector<128x32xf32>
    %129 = tpu.concatenate %127, %128 in 0 : vector<128x32xf32>, vector<128x32xf32> -> vector<256x32xf32>
    %cst_54 = arith.constant dense<0.000000e+00> : vector<256xf32>
    %130 = vector.multi_reduction <add>, %129, %cst_54 [1] : vector<256x32xf32> to vector<256xf32>
    %131 = vector.shape_cast %130 : vector<256xf32> to vector<256x1xf32>
    %cst_55 = arith.constant 3.200000e+01 : f32
    %132 = vector.broadcast %cst_55 : f32 to vector<256x1xf32>
    %133 = arith.divf %131, %132 : vector<256x1xf32>
    %134 = arith.mulf %129, %129 : vector<256x32xf32>
    %cst_56 = arith.constant dense<0.000000e+00> : vector<256xf32>
    %135 = vector.multi_reduction <add>, %134, %cst_56 [1] : vector<256x32xf32> to vector<256xf32>
    %136 = vector.shape_cast %135 : vector<256xf32> to vector<256x1xf32>
    %cst_57 = arith.constant 3.200000e+01 : f32
    %137 = vector.broadcast %cst_57 : f32 to vector<256x1xf32>
    %138 = arith.divf %136, %137 : vector<256x1xf32>
    %139 = arith.mulf %133, %133 : vector<256x1xf32>
    %140 = arith.subf %138, %139 : vector<256x1xf32>
    %cst_58 = arith.constant 0.000000e+00 : f32
    %141 = vector.broadcast %cst_58 : f32 to vector<256x1xf32>
    %142 = arith.maximumf %140, %141 : vector<256x1xf32>
    %143 = vector.broadcast %133 : vector<256x1xf32> to vector<256x32xf32>
    %144 = arith.subf %129, %143 : vector<256x32xf32>
    %cst_59 = arith.constant 9.99999974E-6 : f32
    %145 = vector.broadcast %cst_59 : f32 to vector<256x1xf32>
    %146 = arith.addf %142, %145 : vector<256x1xf32>
    %147 = math.rsqrt %146 : vector<256x1xf32>
    %148 = vector.broadcast %147 : vector<256x1xf32> to vector<256x32xf32>
    %149 = arith.mulf %144, %148 : vector<256x32xf32>
    %150 = vector.broadcast %9 : vector<1x32xf32> to vector<256x32xf32>
    %151 = arith.mulf %149, %150 : vector<256x32xf32>
    %152 = vector.broadcast %10 : vector<1x32xf32> to vector<256x32xf32>
    %153 = arith.addf %151, %152 : vector<256x32xf32>
    %cst_60 = arith.constant dense<0.000000e+00> : vector<256x32xf32>
    %154 = tpu.matmul %153, %11, %cst_60 {dimension_numbers = #tpu.dot_dimension_numbers<[1], [0], [0], [1], [0, 0, 1, 1], [], []>} : vector<256x32xf32>, vector<32x32xf32>, vector<256x32xf32> -> vector<256x32xf32>
    %155 = vector.broadcast %12 : vector<1x32xf32> to vector<256x32xf32>
    %156 = arith.addf %154, %155 : vector<256x32xf32>
    %157 = vector.extract_strided_slice %156 {offsets = [0, 0], sizes = [128, 32], strides = [1, 1]} : vector<256x32xf32> to vector<128x32xf32>
    %158 = vector.extract_strided_slice %156 {offsets = [128, 0], sizes = [128, 32], strides = [1, 1]} : vector<256x32xf32> to vector<128x32xf32>
    %159 = vector.extract_strided_slice %122 {offsets = [0, 0], sizes = [64, 32], strides = [1, 1]} : vector<128x32xf32> to vector<64x32xf32>
    %160 = arith.addf %159, %4 : vector<64x32xf32>
    %161 = vector.extract_strided_slice %122 {offsets = [64, 0], sizes = [64, 32], strides = [1, 1]} : vector<128x32xf32> to vector<64x32xf32>
    %162 = arith.addf %161, %4 : vector<64x32xf32>
    %163 = vector.extract_strided_slice %123 {offsets = [0, 0], sizes = [64, 32], strides = [1, 1]} : vector<128x32xf32> to vector<64x32xf32>
    %164 = arith.addf %163, %4 : vector<64x32xf32>
    %165 = vector.extract_strided_slice %123 {offsets = [64, 0], sizes = [64, 32], strides = [1, 1]} : vector<128x32xf32> to vector<64x32xf32>
    %166 = arith.addf %165, %4 : vector<64x32xf32>
    %167 = tpu.concatenate %160, %160, %160, %162, %162, %162, %164, %164, %164, %166, %166, %166 in 0 : vector<64x32xf32>, vector<64x32xf32>, vector<64x32xf32>, vector<64x32xf32>, vector<64x32xf32>, vector<64x32xf32>, vector<64x32xf32>, vector<64x32xf32>, vector<64x32xf32>, vector<64x32xf32>, vector<64x32xf32>, vector<64x32xf32> -> vector<768x32xf32>
    %c0_i32 = arith.constant 0 : i32
    %c3_i32_61 = arith.constant 3 : i32
    %168 = arith.addi %c0_i32, %c3_i32_61 : i32
    %c1_i32 = arith.constant 1 : i32
    %169:2 = scf.for %arg4 = %c0_i32 to %168 step %c1_i32 iter_args(%arg5 = %33, %arg6 = %34) -> (vector<8x32xf32>, vector<6x2xf32>)  : i32 {
      %cst_110 = arith.constant dense<0.000000e+00> : vector<8xf32>
      %345 = vector.multi_reduction <add>, %arg5, %cst_110 [1] : vector<8x32xf32> to vector<8xf32>
      %346 = vector.shape_cast %345 : vector<8xf32> to vector<8x1xf32>
      %cst_111 = arith.constant 3.200000e+01 : f32
      %347 = vector.broadcast %cst_111 : f32 to vector<8x1xf32>
      %348 = arith.divf %346, %347 : vector<8x1xf32>
      %349 = arith.mulf %arg5, %arg5 : vector<8x32xf32>
      %cst_112 = arith.constant dense<0.000000e+00> : vector<8xf32>
      %350 = vector.multi_reduction <add>, %349, %cst_112 [1] : vector<8x32xf32> to vector<8xf32>
      %351 = vector.shape_cast %350 : vector<8xf32> to vector<8x1xf32>
      %cst_113 = arith.constant 3.200000e+01 : f32
      %352 = vector.broadcast %cst_113 : f32 to vector<8x1xf32>
      %353 = arith.divf %351, %352 : vector<8x1xf32>
      %354 = arith.mulf %348, %348 : vector<8x1xf32>
      %355 = arith.subf %353, %354 : vector<8x1xf32>
      %cst_114 = arith.constant 0.000000e+00 : f32
      %356 = vector.broadcast %cst_114 : f32 to vector<8x1xf32>
      %357 = arith.maximumf %355, %356 : vector<8x1xf32>
      %358 = vector.broadcast %348 : vector<8x1xf32> to vector<8x32xf32>
      %359 = arith.subf %arg5, %358 : vector<8x32xf32>
      %cst_115 = arith.constant 9.99999974E-6 : f32
      %360 = vector.broadcast %cst_115 : f32 to vector<8x1xf32>
      %361 = arith.addf %357, %360 : vector<8x1xf32>
      %362 = math.rsqrt %361 : vector<8x1xf32>
      %363 = vector.broadcast %362 : vector<8x1xf32> to vector<8x32xf32>
      %364 = arith.mulf %359, %363 : vector<8x32xf32>
      %365 = arith.mulf %364, %13 : vector<8x32xf32>
      %366 = arith.addf %365, %14 : vector<8x32xf32>
      %367 = vector.broadcast %94 : vector<8x1xf32> to vector<8x32xf32>
      %368 = arith.mulf %366, %367 : vector<8x32xf32>
      %369 = vector.broadcast %96 : vector<8x1xf32> to vector<8x32xf32>
      %370 = arith.mulf %366, %369 : vector<8x32xf32>
      %371 = tpu.concatenate %368, %370 in 1 : vector<8x32xf32>, vector<8x32xf32> -> vector<8x64xf32>
      %cst_116 = arith.constant dense<0.000000e+00> : vector<8x32xf32>
      %372 = tpu.matmul %371, %15, %cst_116 {dimension_numbers = #tpu.dot_dimension_numbers<[1], [0], [0], [1], [0, 0, 1, 1], [], []>} : vector<8x64xf32>, vector<64x32xf32>, vector<8x32xf32> -> vector<8x32xf32>
      %373 = vector.extract_strided_slice %372 {offsets = [0, 0], sizes = [6, 32], strides = [1, 1]} : vector<8x32xf32> to vector<6x32xf32>
      %374 = vector.extract_strided_slice %372 {offsets = [6, 0], sizes = [2, 32], strides = [1, 1]} : vector<8x32xf32> to vector<2x32xf32>
      %cst_117 = arith.constant dense<0.000000e+00> : vector<6x32xf32>
      %375 = tpu.matmul %arg6, %2, %cst_117 {dimension_numbers = #tpu.dot_dimension_numbers<[1], [0], [0], [1], [0, 0, 1, 1], [], []>} : vector<6x2xf32>, vector<2x32xf32>, vector<6x32xf32> -> vector<6x32xf32>
      %cst_118 = arith.constant dense<0.000000e+00> : vector<768x32xf32>
      %376 = tpu.matmul %89, %375, %cst_118 {dimension_numbers = #tpu.dot_dimension_numbers<[1], [0], [0], [1], [0, 0, 1, 1], [], []>} : vector<768x6xf32>, vector<6x32xf32>, vector<768x32xf32> -> vector<768x32xf32>
      %377 = arith.subf %167, %376 : vector<768x32xf32>
      %cst_119 = arith.constant dense<0.000000e+00> : vector<768xf32>
      %378 = vector.multi_reduction <add>, %377, %cst_119 [1] : vector<768x32xf32> to vector<768xf32>
      %379 = vector.shape_cast %378 : vector<768xf32> to vector<768x1xf32>
      %cst_120 = arith.constant 3.200000e+01 : f32
      %380 = vector.broadcast %cst_120 : f32 to vector<768x1xf32>
      %381 = arith.divf %379, %380 : vector<768x1xf32>
      %382 = arith.mulf %377, %377 : vector<768x32xf32>
      %cst_121 = arith.constant dense<0.000000e+00> : vector<768xf32>
      %383 = vector.multi_reduction <add>, %382, %cst_121 [1] : vector<768x32xf32> to vector<768xf32>
      %384 = vector.shape_cast %383 : vector<768xf32> to vector<768x1xf32>
      %cst_122 = arith.constant 3.200000e+01 : f32
      %385 = vector.broadcast %cst_122 : f32 to vector<768x1xf32>
      %386 = arith.divf %384, %385 : vector<768x1xf32>
      %387 = arith.mulf %381, %381 : vector<768x1xf32>
      %388 = arith.subf %386, %387 : vector<768x1xf32>
      %cst_123 = arith.constant 0.000000e+00 : f32
      %389 = vector.broadcast %cst_123 : f32 to vector<768x1xf32>
      %390 = arith.maximumf %388, %389 : vector<768x1xf32>
      %391 = vector.broadcast %381 : vector<768x1xf32> to vector<768x32xf32>
      %392 = arith.subf %377, %391 : vector<768x32xf32>
      %cst_124 = arith.constant 9.99999974E-6 : f32
      %393 = vector.broadcast %cst_124 : f32 to vector<768x1xf32>
      %394 = arith.addf %390, %393 : vector<768x1xf32>
      %395 = math.rsqrt %394 : vector<768x1xf32>
      %396 = vector.broadcast %395 : vector<768x1xf32> to vector<768x32xf32>
      %397 = arith.mulf %392, %396 : vector<768x32xf32>
      %398 = vector.broadcast %5 : vector<1x32xf32> to vector<768x32xf32>
      %399 = arith.mulf %397, %398 : vector<768x32xf32>
      %400 = vector.broadcast %6 : vector<1x32xf32> to vector<768x32xf32>
      %401 = arith.addf %399, %400 : vector<768x32xf32>
      %cst_125 = arith.constant dense<0.000000e+00> : vector<768x32xf32>
      %402 = tpu.matmul %401, %7, %cst_125 {dimension_numbers = #tpu.dot_dimension_numbers<[1], [0], [0], [1], [0, 0, 1, 1], [], []>} : vector<768x32xf32>, vector<32x32xf32>, vector<768x32xf32> -> vector<768x32xf32>
      %403 = vector.broadcast %8 : vector<1x32xf32> to vector<768x32xf32>
      %404 = arith.addf %402, %403 : vector<768x32xf32>
      %405 = vector.extract_strided_slice %404 {offsets = [0, 0], sizes = [384, 32], strides = [1, 1]} : vector<768x32xf32> to vector<384x32xf32>
      %406 = vector.extract_strided_slice %404 {offsets = [384, 0], sizes = [384, 32], strides = [1, 1]} : vector<768x32xf32> to vector<384x32xf32>
      %cst_126 = arith.constant dense<0.000000e+00> : vector<6x384xf32>
      %407 = tpu.matmul %373, %405, %cst_126 {dimension_numbers = #tpu.dot_dimension_numbers<[1], [1], [0], [0], [0, 0, 1, 0], [], []>} : vector<6x32xf32>, vector<384x32xf32>, vector<6x384xf32> -> vector<6x384xf32>
      %cst_127 = arith.constant 0.176776692 : f32
      %408 = vector.broadcast %cst_127 : f32 to vector<6x384xf32>
      %409 = arith.mulf %407, %408 : vector<6x384xf32>
      %cst_128 = arith.constant dense<0.000000e+00> : vector<2x128xf32>
      %410 = tpu.matmul %374, %157, %cst_128 {dimension_numbers = #tpu.dot_dimension_numbers<[1], [1], [0], [0], [0, 0, 1, 0], [], []>} : vector<2x32xf32>, vector<128x32xf32>, vector<2x128xf32> -> vector<2x128xf32>
      %cst_129 = arith.constant 0.176776692 : f32
      %411 = vector.broadcast %cst_129 : f32 to vector<2x128xf32>
      %412 = arith.mulf %410, %411 : vector<2x128xf32>
      %413 = arith.mulf %409, %50 : vector<6x384xf32>
      %cst_130 = arith.constant dense<0.000000e+00> : vector<6x64xf32>
      %414 = tpu.matmul %413, %74, %cst_130 {dimension_numbers = #tpu.dot_dimension_numbers<[1], [0], [0], [1], [0, 0, 1, 1], [], []>} : vector<6x384xf32>, vector<384x64xf32>, vector<6x64xf32> -> vector<6x64xf32>
      %415 = arith.mulf %412, %61 : vector<2x128xf32>
      %cst_131 = arith.constant dense<0.000000e+00> : vector<2x64xf32>
      %416 = tpu.matmul %415, %76, %cst_131 {dimension_numbers = #tpu.dot_dimension_numbers<[1], [0], [0], [1], [0, 0, 1, 1], [], []>} : vector<2x128xf32>, vector<128x64xf32>, vector<2x64xf32> -> vector<2x64xf32>
      %417 = vector.extract_strided_slice %414 {offsets = [0, 0], sizes = [3, 64], strides = [1, 1]} : vector<6x64xf32> to vector<3x64xf32>
      %418 = vector.extract_strided_slice %416 {offsets = [0, 0], sizes = [1, 64], strides = [1, 1]} : vector<2x64xf32> to vector<1x64xf32>
      %cst_132 = arith.constant dense<0xFF800000> : vector<64xf32>
      %419 = vector.multi_reduction <maximumf>, %417, %cst_132 [0] : vector<3x64xf32> to vector<64xf32>
      %420 = vector.shape_cast %419 : vector<64xf32> to vector<1x64xf32>
      %421 = arith.maximumf %420, %418 : vector<1x64xf32>
      %422 = vector.broadcast %421 : vector<1x64xf32> to vector<3x64xf32>
      %423 = arith.subf %417, %422 : vector<3x64xf32>
      %424 = math.exp %423 : vector<3x64xf32>
      %425 = arith.subf %418, %421 : vector<1x64xf32>
      %426 = math.exp %425 : vector<1x64xf32>
      %cst_133 = arith.constant dense<0.000000e+00> : vector<64xf32>
      %427 = vector.multi_reduction <add>, %424, %cst_133 [0] : vector<3x64xf32> to vector<64xf32>
      %428 = vector.shape_cast %427 : vector<64xf32> to vector<1x64xf32>
      %429 = arith.addf %428, %426 : vector<1x64xf32>
      %430 = vector.broadcast %429 : vector<1x64xf32> to vector<3x64xf32>
      %431 = arith.divf %424, %430 : vector<3x64xf32>
      %cst_134 = arith.constant 9.99999993E-9 : f32
      %432 = vector.broadcast %cst_134 : f32 to vector<3x64xf32>
      %433 = arith.addf %431, %432 : vector<3x64xf32>
      %434 = arith.divf %426, %429 : vector<1x64xf32>
      %cst_135 = arith.constant 9.99999993E-9 : f32
      %435 = vector.broadcast %cst_135 : f32 to vector<1x64xf32>
      %436 = arith.addf %434, %435 : vector<1x64xf32>
      %437 = vector.extract_strided_slice %414 {offsets = [3, 0], sizes = [3, 64], strides = [1, 1]} : vector<6x64xf32> to vector<3x64xf32>
      %438 = vector.extract_strided_slice %416 {offsets = [1, 0], sizes = [1, 64], strides = [1, 1]} : vector<2x64xf32> to vector<1x64xf32>
      %cst_136 = arith.constant dense<0xFF800000> : vector<64xf32>
      %439 = vector.multi_reduction <maximumf>, %437, %cst_136 [0] : vector<3x64xf32> to vector<64xf32>
      %440 = vector.shape_cast %439 : vector<64xf32> to vector<1x64xf32>
      %441 = arith.maximumf %440, %438 : vector<1x64xf32>
      %442 = vector.broadcast %441 : vector<1x64xf32> to vector<3x64xf32>
      %443 = arith.subf %437, %442 : vector<3x64xf32>
      %444 = math.exp %443 : vector<3x64xf32>
      %445 = arith.subf %438, %441 : vector<1x64xf32>
      %446 = math.exp %445 : vector<1x64xf32>
      %cst_137 = arith.constant dense<0.000000e+00> : vector<64xf32>
      %447 = vector.multi_reduction <add>, %444, %cst_137 [0] : vector<3x64xf32> to vector<64xf32>
      %448 = vector.shape_cast %447 : vector<64xf32> to vector<1x64xf32>
      %449 = arith.addf %448, %446 : vector<1x64xf32>
      %450 = vector.broadcast %449 : vector<1x64xf32> to vector<3x64xf32>
      %451 = arith.divf %444, %450 : vector<3x64xf32>
      %cst_138 = arith.constant 9.99999993E-9 : f32
      %452 = vector.broadcast %cst_138 : f32 to vector<3x64xf32>
      %453 = arith.addf %451, %452 : vector<3x64xf32>
      %454 = arith.divf %446, %449 : vector<1x64xf32>
      %cst_139 = arith.constant 9.99999993E-9 : f32
      %455 = vector.broadcast %cst_139 : f32 to vector<1x64xf32>
      %456 = arith.addf %454, %455 : vector<1x64xf32>
      %457 = tpu.concatenate %433, %453 in 0 : vector<3x64xf32>, vector<3x64xf32> -> vector<6x64xf32>
      %458 = tpu.concatenate %436, %456 in 0 : vector<1x64xf32>, vector<1x64xf32> -> vector<2x64xf32>
      %cst_140 = arith.constant dense<0.000000e+00> : vector<6xf32>
      %459 = vector.multi_reduction <add>, %457, %cst_140 [1] : vector<6x64xf32> to vector<6xf32>
      %460 = vector.shape_cast %459 : vector<6xf32> to vector<6x1xf32>
      %461 = vector.broadcast %460 : vector<6x1xf32> to vector<6x64xf32>
      %462 = arith.divf %457, %461 : vector<6x64xf32>
      %cst_141 = arith.constant dense<0.000000e+00> : vector<2xf32>
      %463 = vector.multi_reduction <add>, %458, %cst_141 [1] : vector<2x64xf32> to vector<2xf32>
      %464 = vector.shape_cast %463 : vector<2xf32> to vector<2x1xf32>
      %465 = vector.broadcast %464 : vector<2x1xf32> to vector<2x64xf32>
      %466 = arith.divf %458, %465 : vector<2x64xf32>
      %cst_142 = arith.constant dense<0.000000e+00> : vector<6x2xf32>
      %467 = tpu.matmul %462, %3, %cst_142 {dimension_numbers = #tpu.dot_dimension_numbers<[1], [0], [0], [1], [0, 0, 1, 1], [], []>} : vector<6x64xf32>, vector<64x2xf32>, vector<6x2xf32> -> vector<6x2xf32>
      %cst_143 = arith.constant dense<0.000000e+00> : vector<6x384xf32>
      %468 = tpu.matmul %462, %75, %cst_143 {dimension_numbers = #tpu.dot_dimension_numbers<[1], [0], [0], [1], [0, 0, 1, 1], [], []>} : vector<6x64xf32>, vector<64x384xf32>, vector<6x384xf32> -> vector<6x384xf32>
      %469 = arith.mulf %468, %50 : vector<6x384xf32>
      %cst_144 = arith.constant dense<0.000000e+00> : vector<2x128xf32>
      %470 = tpu.matmul %466, %77, %cst_144 {dimension_numbers = #tpu.dot_dimension_numbers<[1], [0], [0], [1], [0, 0, 1, 1], [], []>} : vector<2x64xf32>, vector<64x128xf32>, vector<2x128xf32> -> vector<2x128xf32>
      %471 = arith.mulf %470, %61 : vector<2x128xf32>
      %cst_145 = arith.constant dense<0.000000e+00> : vector<6x32xf32>
      %472 = tpu.matmul %469, %406, %cst_145 {dimension_numbers = #tpu.dot_dimension_numbers<[1], [0], [0], [1], [0, 0, 1, 1], [], []>} : vector<6x384xf32>, vector<384x32xf32>, vector<6x32xf32> -> vector<6x32xf32>
      %cst_146 = arith.constant dense<0.000000e+00> : vector<2x32xf32>
      %473 = tpu.matmul %471, %158, %cst_146 {dimension_numbers = #tpu.dot_dimension_numbers<[1], [0], [0], [1], [0, 0, 1, 1], [], []>} : vector<2x128xf32>, vector<128x32xf32>, vector<2x32xf32> -> vector<2x32xf32>
      %474 = tpu.concatenate %472, %473 in 0 : vector<6x32xf32>, vector<2x32xf32> -> vector<8x32xf32>
      %475 = vector.broadcast %94 : vector<8x1xf32> to vector<8x32xf32>
      %476 = arith.mulf %474, %475 : vector<8x32xf32>
      %477 = vector.broadcast %96 : vector<8x1xf32> to vector<8x32xf32>
      %478 = arith.mulf %474, %477 : vector<8x32xf32>
      %479 = tpu.concatenate %476, %478 in 1 : vector<8x32xf32>, vector<8x32xf32> -> vector<8x64xf32>
      %cst_147 = arith.constant dense<0.000000e+00> : vector<8x96xf32>
      %480 = tpu.matmul %479, %25, %cst_147 {dimension_numbers = #tpu.dot_dimension_numbers<[1], [0], [0], [1], [0, 0, 1, 1], [], []>} : vector<8x64xf32>, vector<64x96xf32>, vector<8x96xf32> -> vector<8x96xf32>
      %481 = arith.addf %480, %27 : vector<8x96xf32>
      %482 = vector.broadcast %94 : vector<8x1xf32> to vector<8x32xf32>
      %483 = arith.mulf %arg5, %482 : vector<8x32xf32>
      %484 = vector.broadcast %96 : vector<8x1xf32> to vector<8x32xf32>
      %485 = arith.mulf %arg5, %484 : vector<8x32xf32>
      %486 = tpu.concatenate %483, %485 in 1 : vector<8x32xf32>, vector<8x32xf32> -> vector<8x64xf32>
      %cst_148 = arith.constant dense<0.000000e+00> : vector<8x96xf32>
      %487 = tpu.matmul %486, %26, %cst_148 {dimension_numbers = #tpu.dot_dimension_numbers<[1], [0], [0], [1], [0, 0, 1, 1], [], []>} : vector<8x64xf32>, vector<64x96xf32>, vector<8x96xf32> -> vector<8x96xf32>
      %488 = arith.addf %487, %28 : vector<8x96xf32>
      %489 = vector.extract_strided_slice %481 {offsets = [0, 0], sizes = [8, 32], strides = [1, 1]} : vector<8x96xf32> to vector<8x32xf32>
      %490 = vector.extract_strided_slice %488 {offsets = [0, 0], sizes = [8, 32], strides = [1, 1]} : vector<8x96xf32> to vector<8x32xf32>
      %491 = arith.addf %489, %490 : vector<8x32xf32>
      %cst_149 = arith.constant 5.000000e-01 : f32
      %492 = vector.broadcast %cst_149 : f32 to vector<8x32xf32>
      %493 = arith.mulf %492, %491 : vector<8x32xf32>
      %494 = math.tanh %493 : vector<8x32xf32>
      %cst_150 = arith.constant 1.000000e+00 : f32
      %495 = vector.broadcast %cst_150 : f32 to vector<8x32xf32>
      %496 = arith.addf %494, %495 : vector<8x32xf32>
      %cst_151 = arith.constant 5.000000e-01 : f32
      %497 = vector.broadcast %cst_151 : f32 to vector<8x32xf32>
      %498 = arith.mulf %497, %496 : vector<8x32xf32>
      %499 = vector.extract_strided_slice %481 {offsets = [0, 32], sizes = [8, 32], strides = [1, 1]} : vector<8x96xf32> to vector<8x32xf32>
      %500 = vector.extract_strided_slice %488 {offsets = [0, 32], sizes = [8, 32], strides = [1, 1]} : vector<8x96xf32> to vector<8x32xf32>
      %501 = arith.addf %499, %500 : vector<8x32xf32>
      %cst_152 = arith.constant 5.000000e-01 : f32
      %502 = vector.broadcast %cst_152 : f32 to vector<8x32xf32>
      %503 = arith.mulf %502, %501 : vector<8x32xf32>
      %504 = math.tanh %503 : vector<8x32xf32>
      %cst_153 = arith.constant 1.000000e+00 : f32
      %505 = vector.broadcast %cst_153 : f32 to vector<8x32xf32>
      %506 = arith.addf %504, %505 : vector<8x32xf32>
      %cst_154 = arith.constant 5.000000e-01 : f32
      %507 = vector.broadcast %cst_154 : f32 to vector<8x32xf32>
      %508 = arith.mulf %507, %506 : vector<8x32xf32>
      %509 = vector.extract_strided_slice %481 {offsets = [0, 64], sizes = [8, 32], strides = [1, 1]} : vector<8x96xf32> to vector<8x32xf32>
      %510 = vector.extract_strided_slice %488 {offsets = [0, 64], sizes = [8, 32], strides = [1, 1]} : vector<8x96xf32> to vector<8x32xf32>
      %511 = arith.mulf %498, %510 : vector<8x32xf32>
      %512 = arith.addf %509, %511 : vector<8x32xf32>
      %513 = math.tanh %512 : vector<8x32xf32>
      %cst_155 = arith.constant 1.000000e+00 : f32
      %514 = vector.broadcast %cst_155 : f32 to vector<8x32xf32>
      %515 = arith.subf %514, %508 : vector<8x32xf32>
      %516 = arith.mulf %515, %513 : vector<8x32xf32>
      %517 = arith.mulf %508, %arg5 : vector<8x32xf32>
      %518 = arith.addf %516, %517 : vector<8x32xf32>
      %cst_156 = arith.constant dense<0.000000e+00> : vector<8xf32>
      %519 = vector.multi_reduction <add>, %518, %cst_156 [1] : vector<8x32xf32> to vector<8xf32>
      %520 = vector.shape_cast %519 : vector<8xf32> to vector<8x1xf32>
      %cst_157 = arith.constant 3.200000e+01 : f32
      %521 = vector.broadcast %cst_157 : f32 to vector<8x1xf32>
      %522 = arith.divf %520, %521 : vector<8x1xf32>
      %523 = arith.mulf %518, %518 : vector<8x32xf32>
      %cst_158 = arith.constant dense<0.000000e+00> : vector<8xf32>
      %524 = vector.multi_reduction <add>, %523, %cst_158 [1] : vector<8x32xf32> to vector<8xf32>
      %525 = vector.shape_cast %524 : vector<8xf32> to vector<8x1xf32>
      %cst_159 = arith.constant 3.200000e+01 : f32
      %526 = vector.broadcast %cst_159 : f32 to vector<8x1xf32>
      %527 = arith.divf %525, %526 : vector<8x1xf32>
      %528 = arith.mulf %522, %522 : vector<8x1xf32>
      %529 = arith.subf %527, %528 : vector<8x1xf32>
      %cst_160 = arith.constant 0.000000e+00 : f32
      %530 = vector.broadcast %cst_160 : f32 to vector<8x1xf32>
      %531 = arith.maximumf %529, %530 : vector<8x1xf32>
      %532 = vector.broadcast %522 : vector<8x1xf32> to vector<8x32xf32>
      %533 = arith.subf %518, %532 : vector<8x32xf32>
      %cst_161 = arith.constant 9.99999974E-6 : f32
      %534 = vector.broadcast %cst_161 : f32 to vector<8x1xf32>
      %535 = arith.addf %531, %534 : vector<8x1xf32>
      %536 = math.rsqrt %535 : vector<8x1xf32>
      %537 = vector.broadcast %536 : vector<8x1xf32> to vector<8x32xf32>
      %538 = arith.mulf %533, %537 : vector<8x32xf32>
      %539 = arith.mulf %538, %16 : vector<8x32xf32>
      %540 = arith.addf %539, %17 : vector<8x32xf32>
      %541 = vector.broadcast %94 : vector<8x1xf32> to vector<8x32xf32>
      %542 = arith.mulf %540, %541 : vector<8x32xf32>
      %543 = vector.broadcast %96 : vector<8x1xf32> to vector<8x32xf32>
      %544 = arith.mulf %540, %543 : vector<8x32xf32>
      %545 = tpu.concatenate %542, %544 in 1 : vector<8x32xf32>, vector<8x32xf32> -> vector<8x64xf32>
      %cst_162 = arith.constant dense<0.000000e+00> : vector<8x128xf32>
      %546 = tpu.matmul %545, %29, %cst_162 {dimension_numbers = #tpu.dot_dimension_numbers<[1], [0], [0], [1], [0, 0, 1, 1], [], []>} : vector<8x64xf32>, vector<64x128xf32>, vector<8x128xf32> -> vector<8x128xf32>
      %547 = arith.addf %546, %30 : vector<8x128xf32>
      %cst_163 = arith.constant 0.000000e+00 : f32
      %548 = vector.broadcast %cst_163 : f32 to vector<8x128xf32>
      %549 = arith.maximumf %547, %548 : vector<8x128xf32>
      %550 = vector.broadcast %94 : vector<8x1xf32> to vector<8x128xf32>
      %551 = arith.mulf %549, %550 : vector<8x128xf32>
      %552 = vector.broadcast %96 : vector<8x1xf32> to vector<8x128xf32>
      %553 = arith.mulf %549, %552 : vector<8x128xf32>
      %554 = tpu.concatenate %551, %553 in 1 : vector<8x128xf32>, vector<8x128xf32> -> vector<8x256xf32>
      %cst_164 = arith.constant dense<0.000000e+00> : vector<8x32xf32>
      %555 = tpu.matmul %554, %18, %cst_164 {dimension_numbers = #tpu.dot_dimension_numbers<[1], [0], [0], [1], [0, 0, 1, 1], [], []>} : vector<8x256xf32>, vector<256x32xf32>, vector<8x32xf32> -> vector<8x32xf32>
      %556 = arith.addf %555, %19 : vector<8x32xf32>
      %557 = arith.addf %518, %556 : vector<8x32xf32>
      scf.yield %557, %467 : vector<8x32xf32>, vector<6x2xf32>
    }
    %cst_62 = arith.constant dense<0.000000e+00> : vector<8xf32>
    %170 = vector.multi_reduction <add>, %169#0, %cst_62 [1] : vector<8x32xf32> to vector<8xf32>
    %171 = vector.shape_cast %170 : vector<8xf32> to vector<8x1xf32>
    %cst_63 = arith.constant 3.200000e+01 : f32
    %172 = vector.broadcast %cst_63 : f32 to vector<8x1xf32>
    %173 = arith.divf %171, %172 : vector<8x1xf32>
    %174 = arith.mulf %169#0, %169#0 : vector<8x32xf32>
    %cst_64 = arith.constant dense<0.000000e+00> : vector<8xf32>
    %175 = vector.multi_reduction <add>, %174, %cst_64 [1] : vector<8x32xf32> to vector<8xf32>
    %176 = vector.shape_cast %175 : vector<8xf32> to vector<8x1xf32>
    %cst_65 = arith.constant 3.200000e+01 : f32
    %177 = vector.broadcast %cst_65 : f32 to vector<8x1xf32>
    %178 = arith.divf %176, %177 : vector<8x1xf32>
    %179 = arith.mulf %173, %173 : vector<8x1xf32>
    %180 = arith.subf %178, %179 : vector<8x1xf32>
    %cst_66 = arith.constant 0.000000e+00 : f32
    %181 = vector.broadcast %cst_66 : f32 to vector<8x1xf32>
    %182 = arith.maximumf %180, %181 : vector<8x1xf32>
    %183 = vector.broadcast %173 : vector<8x1xf32> to vector<8x32xf32>
    %184 = arith.subf %169#0, %183 : vector<8x32xf32>
    %cst_67 = arith.constant 9.99999974E-6 : f32
    %185 = vector.broadcast %cst_67 : f32 to vector<8x1xf32>
    %186 = arith.addf %182, %185 : vector<8x1xf32>
    %187 = math.rsqrt %186 : vector<8x1xf32>
    %188 = vector.broadcast %187 : vector<8x1xf32> to vector<8x32xf32>
    %189 = arith.mulf %184, %188 : vector<8x32xf32>
    %190 = arith.mulf %189, %13 : vector<8x32xf32>
    %191 = arith.addf %190, %14 : vector<8x32xf32>
    %192 = vector.broadcast %94 : vector<8x1xf32> to vector<8x32xf32>
    %193 = arith.mulf %191, %192 : vector<8x32xf32>
    %194 = vector.broadcast %96 : vector<8x1xf32> to vector<8x32xf32>
    %195 = arith.mulf %191, %194 : vector<8x32xf32>
    %196 = tpu.concatenate %193, %195 in 1 : vector<8x32xf32>, vector<8x32xf32> -> vector<8x64xf32>
    %cst_68 = arith.constant dense<0.000000e+00> : vector<8x32xf32>
    %197 = tpu.matmul %196, %15, %cst_68 {dimension_numbers = #tpu.dot_dimension_numbers<[1], [0], [0], [1], [0, 0, 1, 1], [], []>} : vector<8x64xf32>, vector<64x32xf32>, vector<8x32xf32> -> vector<8x32xf32>
    %198 = vector.extract_strided_slice %197 {offsets = [0, 0], sizes = [6, 32], strides = [1, 1]} : vector<8x32xf32> to vector<6x32xf32>
    %199 = vector.extract_strided_slice %197 {offsets = [6, 0], sizes = [2, 32], strides = [1, 1]} : vector<8x32xf32> to vector<2x32xf32>
    %cst_69 = arith.constant dense<0.000000e+00> : vector<6x32xf32>
    %200 = tpu.matmul %169#1, %2, %cst_69 {dimension_numbers = #tpu.dot_dimension_numbers<[1], [0], [0], [1], [0, 0, 1, 1], [], []>} : vector<6x2xf32>, vector<2x32xf32>, vector<6x32xf32> -> vector<6x32xf32>
    %cst_70 = arith.constant dense<0.000000e+00> : vector<768x32xf32>
    %201 = tpu.matmul %89, %200, %cst_70 {dimension_numbers = #tpu.dot_dimension_numbers<[1], [0], [0], [1], [0, 0, 1, 1], [], []>} : vector<768x6xf32>, vector<6x32xf32>, vector<768x32xf32> -> vector<768x32xf32>
    %202 = arith.subf %167, %201 : vector<768x32xf32>
    %cst_71 = arith.constant dense<0.000000e+00> : vector<768xf32>
    %203 = vector.multi_reduction <add>, %202, %cst_71 [1] : vector<768x32xf32> to vector<768xf32>
    %204 = vector.shape_cast %203 : vector<768xf32> to vector<768x1xf32>
    %cst_72 = arith.constant 3.200000e+01 : f32
    %205 = vector.broadcast %cst_72 : f32 to vector<768x1xf32>
    %206 = arith.divf %204, %205 : vector<768x1xf32>
    %207 = arith.mulf %202, %202 : vector<768x32xf32>
    %cst_73 = arith.constant dense<0.000000e+00> : vector<768xf32>
    %208 = vector.multi_reduction <add>, %207, %cst_73 [1] : vector<768x32xf32> to vector<768xf32>
    %209 = vector.shape_cast %208 : vector<768xf32> to vector<768x1xf32>
    %cst_74 = arith.constant 3.200000e+01 : f32
    %210 = vector.broadcast %cst_74 : f32 to vector<768x1xf32>
    %211 = arith.divf %209, %210 : vector<768x1xf32>
    %212 = arith.mulf %206, %206 : vector<768x1xf32>
    %213 = arith.subf %211, %212 : vector<768x1xf32>
    %cst_75 = arith.constant 0.000000e+00 : f32
    %214 = vector.broadcast %cst_75 : f32 to vector<768x1xf32>
    %215 = arith.maximumf %213, %214 : vector<768x1xf32>
    %216 = vector.broadcast %206 : vector<768x1xf32> to vector<768x32xf32>
    %217 = arith.subf %202, %216 : vector<768x32xf32>
    %cst_76 = arith.constant 9.99999974E-6 : f32
    %218 = vector.broadcast %cst_76 : f32 to vector<768x1xf32>
    %219 = arith.addf %215, %218 : vector<768x1xf32>
    %220 = math.rsqrt %219 : vector<768x1xf32>
    %221 = vector.broadcast %220 : vector<768x1xf32> to vector<768x32xf32>
    %222 = arith.mulf %217, %221 : vector<768x32xf32>
    %223 = vector.broadcast %5 : vector<1x32xf32> to vector<768x32xf32>
    %224 = arith.mulf %222, %223 : vector<768x32xf32>
    %225 = vector.broadcast %6 : vector<1x32xf32> to vector<768x32xf32>
    %226 = arith.addf %224, %225 : vector<768x32xf32>
    %cst_77 = arith.constant dense<0.000000e+00> : vector<768x32xf32>
    %227 = tpu.matmul %226, %7, %cst_77 {dimension_numbers = #tpu.dot_dimension_numbers<[1], [0], [0], [1], [0, 0, 1, 1], [], []>} : vector<768x32xf32>, vector<32x32xf32>, vector<768x32xf32> -> vector<768x32xf32>
    %228 = vector.broadcast %8 : vector<1x32xf32> to vector<768x32xf32>
    %229 = arith.addf %227, %228 : vector<768x32xf32>
    %230 = vector.extract_strided_slice %229 {offsets = [0, 0], sizes = [384, 32], strides = [1, 1]} : vector<768x32xf32> to vector<384x32xf32>
    %cst_78 = arith.constant dense<0.000000e+00> : vector<6x384xf32>
    %231 = tpu.matmul %198, %230, %cst_78 {dimension_numbers = #tpu.dot_dimension_numbers<[1], [1], [0], [0], [0, 0, 1, 0], [], []>} : vector<6x32xf32>, vector<384x32xf32>, vector<6x384xf32> -> vector<6x384xf32>
    %cst_79 = arith.constant 0.176776692 : f32
    %232 = vector.broadcast %cst_79 : f32 to vector<6x384xf32>
    %233 = arith.mulf %231, %232 : vector<6x384xf32>
    %cst_80 = arith.constant dense<0.000000e+00> : vector<2x128xf32>
    %234 = tpu.matmul %199, %157, %cst_80 {dimension_numbers = #tpu.dot_dimension_numbers<[1], [1], [0], [0], [0, 0, 1, 0], [], []>} : vector<2x32xf32>, vector<128x32xf32>, vector<2x128xf32> -> vector<2x128xf32>
    %cst_81 = arith.constant 0.176776692 : f32
    %235 = vector.broadcast %cst_81 : f32 to vector<2x128xf32>
    %236 = arith.mulf %234, %235 : vector<2x128xf32>
    %237 = arith.mulf %233, %50 : vector<6x384xf32>
    %cst_82 = arith.constant dense<0.000000e+00> : vector<6x64xf32>
    %238 = tpu.matmul %237, %74, %cst_82 {dimension_numbers = #tpu.dot_dimension_numbers<[1], [0], [0], [1], [0, 0, 1, 1], [], []>} : vector<6x384xf32>, vector<384x64xf32>, vector<6x64xf32> -> vector<6x64xf32>
    %239 = arith.mulf %236, %61 : vector<2x128xf32>
    %cst_83 = arith.constant dense<0.000000e+00> : vector<2x64xf32>
    %240 = tpu.matmul %239, %76, %cst_83 {dimension_numbers = #tpu.dot_dimension_numbers<[1], [0], [0], [1], [0, 0, 1, 1], [], []>} : vector<2x128xf32>, vector<128x64xf32>, vector<2x64xf32> -> vector<2x64xf32>
    %241 = vector.extract_strided_slice %238 {offsets = [0, 0], sizes = [3, 64], strides = [1, 1]} : vector<6x64xf32> to vector<3x64xf32>
    %242 = vector.extract_strided_slice %240 {offsets = [0, 0], sizes = [1, 64], strides = [1, 1]} : vector<2x64xf32> to vector<1x64xf32>
    %cst_84 = arith.constant dense<0xFF800000> : vector<64xf32>
    %243 = vector.multi_reduction <maximumf>, %241, %cst_84 [0] : vector<3x64xf32> to vector<64xf32>
    %244 = vector.shape_cast %243 : vector<64xf32> to vector<1x64xf32>
    %245 = arith.maximumf %244, %242 : vector<1x64xf32>
    %246 = vector.broadcast %245 : vector<1x64xf32> to vector<3x64xf32>
    %247 = arith.subf %241, %246 : vector<3x64xf32>
    %248 = math.exp %247 : vector<3x64xf32>
    %249 = arith.subf %242, %245 : vector<1x64xf32>
    %250 = math.exp %249 : vector<1x64xf32>
    %cst_85 = arith.constant dense<0.000000e+00> : vector<64xf32>
    %251 = vector.multi_reduction <add>, %248, %cst_85 [0] : vector<3x64xf32> to vector<64xf32>
    %252 = vector.shape_cast %251 : vector<64xf32> to vector<1x64xf32>
    %253 = arith.addf %252, %250 : vector<1x64xf32>
    %254 = vector.broadcast %253 : vector<1x64xf32> to vector<3x64xf32>
    %255 = arith.divf %248, %254 : vector<3x64xf32>
    %cst_86 = arith.constant 9.99999993E-9 : f32
    %256 = vector.broadcast %cst_86 : f32 to vector<3x64xf32>
    %257 = arith.addf %255, %256 : vector<3x64xf32>
    %258 = arith.divf %250, %253 : vector<1x64xf32>
    %cst_87 = arith.constant 9.99999993E-9 : f32
    %259 = vector.broadcast %cst_87 : f32 to vector<1x64xf32>
    %260 = arith.addf %258, %259 : vector<1x64xf32>
    %261 = vector.extract_strided_slice %238 {offsets = [3, 0], sizes = [3, 64], strides = [1, 1]} : vector<6x64xf32> to vector<3x64xf32>
    %262 = vector.extract_strided_slice %240 {offsets = [1, 0], sizes = [1, 64], strides = [1, 1]} : vector<2x64xf32> to vector<1x64xf32>
    %cst_88 = arith.constant dense<0xFF800000> : vector<64xf32>
    %263 = vector.multi_reduction <maximumf>, %261, %cst_88 [0] : vector<3x64xf32> to vector<64xf32>
    %264 = vector.shape_cast %263 : vector<64xf32> to vector<1x64xf32>
    %265 = arith.maximumf %264, %262 : vector<1x64xf32>
    %266 = vector.broadcast %265 : vector<1x64xf32> to vector<3x64xf32>
    %267 = arith.subf %261, %266 : vector<3x64xf32>
    %268 = math.exp %267 : vector<3x64xf32>
    %269 = arith.subf %262, %265 : vector<1x64xf32>
    %270 = math.exp %269 : vector<1x64xf32>
    %cst_89 = arith.constant dense<0.000000e+00> : vector<64xf32>
    %271 = vector.multi_reduction <add>, %268, %cst_89 [0] : vector<3x64xf32> to vector<64xf32>
    %272 = vector.shape_cast %271 : vector<64xf32> to vector<1x64xf32>
    %273 = arith.addf %272, %270 : vector<1x64xf32>
    %274 = vector.broadcast %273 : vector<1x64xf32> to vector<3x64xf32>
    %275 = arith.divf %268, %274 : vector<3x64xf32>
    %cst_90 = arith.constant 9.99999993E-9 : f32
    %276 = vector.broadcast %cst_90 : f32 to vector<3x64xf32>
    %277 = arith.addf %275, %276 : vector<3x64xf32>
    %278 = arith.divf %270, %273 : vector<1x64xf32>
    %cst_91 = arith.constant 9.99999993E-9 : f32
    %279 = vector.broadcast %cst_91 : f32 to vector<1x64xf32>
    %280 = arith.addf %278, %279 : vector<1x64xf32>
    %281 = tpu.concatenate %257, %277 in 0 : vector<3x64xf32>, vector<3x64xf32> -> vector<6x64xf32>
    %282 = tpu.concatenate %260, %280 in 0 : vector<1x64xf32>, vector<1x64xf32> -> vector<2x64xf32>
    %283 = tpu.concatenate %260, %257, %280, %277 in 0 : vector<1x64xf32>, vector<3x64xf32>, vector<1x64xf32>, vector<3x64xf32> -> vector<8x64xf32>
    %cst_92 = arith.constant dense<0.000000e+00> : vector<6xf32>
    %284 = vector.multi_reduction <add>, %281, %cst_92 [1] : vector<6x64xf32> to vector<6xf32>
    %285 = vector.shape_cast %284 : vector<6xf32> to vector<6x1xf32>
    %286 = vector.broadcast %285 : vector<6x1xf32> to vector<6x64xf32>
    %287 = arith.divf %281, %286 : vector<6x64xf32>
    %cst_93 = arith.constant dense<0.000000e+00> : vector<2xf32>
    %288 = vector.multi_reduction <add>, %282, %cst_93 [1] : vector<2x64xf32> to vector<2xf32>
    %289 = vector.shape_cast %288 : vector<2xf32> to vector<2x1xf32>
    %290 = vector.broadcast %289 : vector<2x1xf32> to vector<2x64xf32>
    %291 = arith.divf %282, %290 : vector<2x64xf32>
    %cst_94 = arith.constant dense<0.000000e+00> : vector<6x2xf32>
    %292 = tpu.matmul %287, %3, %cst_94 {dimension_numbers = #tpu.dot_dimension_numbers<[1], [0], [0], [1], [0, 0, 1, 1], [], []>} : vector<6x64xf32>, vector<64x2xf32>, vector<6x2xf32> -> vector<6x2xf32>
    %cst_95 = arith.constant dense<0.000000e+00> : vector<128xf32>
    %293 = vector.multi_reduction <add>, %32, %cst_95 [1] : vector<128x8xf32> to vector<128xf32>
    %294 = vector.shape_cast %293 : vector<128xf32> to vector<128x1xf32>
    %cst_96 = arith.constant 8.000000e+00 : f32
    %295 = vector.broadcast %cst_96 : f32 to vector<128x1xf32>
    %296 = arith.divf %294, %295 : vector<128x1xf32>
    %297 = arith.mulf %32, %32 : vector<128x8xf32>
    %cst_97 = arith.constant dense<0.000000e+00> : vector<128xf32>
    %298 = vector.multi_reduction <add>, %297, %cst_97 [1] : vector<128x8xf32> to vector<128xf32>
    %299 = vector.shape_cast %298 : vector<128xf32> to vector<128x1xf32>
    %cst_98 = arith.constant 8.000000e+00 : f32
    %300 = vector.broadcast %cst_98 : f32 to vector<128x1xf32>
    %301 = arith.divf %299, %300 : vector<128x1xf32>
    %302 = arith.mulf %296, %296 : vector<128x1xf32>
    %303 = arith.subf %301, %302 : vector<128x1xf32>
    %cst_99 = arith.constant 0.000000e+00 : f32
    %304 = vector.broadcast %cst_99 : f32 to vector<128x1xf32>
    %305 = arith.maximumf %303, %304 : vector<128x1xf32>
    %306 = vector.broadcast %296 : vector<128x1xf32> to vector<128x8xf32>
    %307 = arith.subf %32, %306 : vector<128x8xf32>
    %cst_100 = arith.constant 9.99999974E-6 : f32
    %308 = vector.broadcast %cst_100 : f32 to vector<128x1xf32>
    %309 = arith.addf %305, %308 : vector<128x1xf32>
    %310 = math.rsqrt %309 : vector<128x1xf32>
    %311 = vector.broadcast %310 : vector<128x1xf32> to vector<128x8xf32>
    %312 = arith.mulf %307, %311 : vector<128x8xf32>
    %313 = tpu.concatenate %312, %312 in 1 : vector<128x8xf32>, vector<128x8xf32> -> vector<128x16xf32>
    %314 = vector.broadcast %20 : vector<1x16xf32> to vector<128x16xf32>
    %315 = arith.mulf %313, %314 : vector<128x16xf32>
    %316 = vector.broadcast %21 : vector<1x16xf32> to vector<128x16xf32>
    %317 = arith.addf %315, %316 : vector<128x16xf32>
    %cst_101 = arith.constant dense<0.000000e+00> : vector<128x16xf32>
    %318 = tpu.matmul %317, %22, %cst_101 {dimension_numbers = #tpu.dot_dimension_numbers<[1], [0], [0], [1], [0, 0, 1, 1], [], []>} : vector<128x16xf32>, vector<16x16xf32>, vector<128x16xf32> -> vector<128x16xf32>
    %319 = vector.broadcast %23 : vector<1x16xf32> to vector<128x16xf32>
    %320 = arith.addf %318, %319 : vector<128x16xf32>
    %cst_102 = arith.constant dense<0.000000e+00> : vector<6x128xf32>
    %321 = tpu.matmul %287, %77, %cst_102 {dimension_numbers = #tpu.dot_dimension_numbers<[1], [0], [0], [1], [0, 0, 1, 1], [], []>} : vector<6x64xf32>, vector<64x128xf32>, vector<6x128xf32> -> vector<6x128xf32>
    %322 = arith.mulf %321, %73 : vector<6x128xf32>
    %cst_103 = arith.constant dense<0.000000e+00> : vector<2x128xf32>
    %323 = tpu.matmul %291, %77, %cst_103 {dimension_numbers = #tpu.dot_dimension_numbers<[1], [0], [0], [1], [0, 0, 1, 1], [], []>} : vector<2x64xf32>, vector<64x128xf32>, vector<2x128xf32> -> vector<2x128xf32>
    %324 = arith.mulf %323, %61 : vector<2x128xf32>
    %325 = tpu.concatenate %322, %324 in 0 : vector<6x128xf32>, vector<2x128xf32> -> vector<8x128xf32>
    %cst_104 = arith.constant dense<0.000000e+00> : vector<8x16xf32>
    %326 = tpu.matmul %325, %320, %cst_104 {dimension_numbers = #tpu.dot_dimension_numbers<[1], [0], [0], [1], [0, 0, 1, 1], [], []>} : vector<8x128xf32>, vector<128x16xf32>, vector<8x16xf32> -> vector<8x16xf32>
    %cst_105 = arith.constant 5.000000e-01 : f32
    %327 = vector.broadcast %cst_105 : f32 to vector<8x1xf32>
    %328 = arith.cmpf ogt, %94, %327 : vector<8x1xf32>
    %329 = vector.extract_strided_slice %326 {offsets = [0, 0], sizes = [8, 8], strides = [1, 1]} : vector<8x16xf32> to vector<8x8xf32>
    %330 = vector.extract_strided_slice %326 {offsets = [0, 8], sizes = [8, 8], strides = [1, 1]} : vector<8x16xf32> to vector<8x8xf32>
    %331 = vector.shape_cast %328 : vector<8x1xi1> to vector<8x1xi1>
    %332 = vector.broadcast %331 : vector<8x1xi1> to vector<8x8xi1>
    %333 = arith.select %332, %329, %330 : vector<8x8xi1>, vector<8x8xf32>
    %cst_106 = arith.constant 0.000000e+00 : f32
    %334 = vector.broadcast %cst_106 : f32 to vector<2x2xf32>
    %335 = tpu.concatenate %292, %334 in 0 : vector<6x2xf32>, vector<2x2xf32> -> vector<8x2xf32>
    %336 = tpu.concatenate %169#0, %333, %335 in 1 : vector<8x32xf32>, vector<8x8xf32>, vector<8x2xf32> -> vector<8x42xf32>
    %337 = vector.extract_strided_slice %336 {offsets = [6, 0], sizes = [1, 42], strides = [1, 1]} : vector<8x42xf32> to vector<1x42xf32>
    %338 = vector.extract_strided_slice %336 {offsets = [0, 0], sizes = [3, 42], strides = [1, 1]} : vector<8x42xf32> to vector<3x42xf32>
    %339 = vector.extract_strided_slice %336 {offsets = [7, 0], sizes = [1, 42], strides = [1, 1]} : vector<8x42xf32> to vector<1x42xf32>
    %340 = vector.extract_strided_slice %336 {offsets = [3, 0], sizes = [3, 42], strides = [1, 1]} : vector<8x42xf32> to vector<3x42xf32>
    %341 = tpu.concatenate %337, %338, %339, %340 in 0 : vector<1x42xf32>, vector<3x42xf32>, vector<1x42xf32>, vector<3x42xf32> -> vector<8x42xf32>
    %cst_107 = arith.constant 0.000000e+00 : f32
    %342 = vector.broadcast %cst_107 : f32 to vector<8x22xf32>
    %343 = tpu.concatenate %283, %341, %342 in 1 : vector<8x64xf32>, vector<8x42xf32>, vector<8x22xf32> -> vector<8x128xf32>
    %c0_108 = arith.constant 0 : index
    %c0_109 = arith.constant 0 : index
    %344 = vector.load %arg3[%c0_108, %c0_109] : memref<8x128xf32, #tpu.memory_space<vmem>>, vector<8x128xf32>
    tpu.vector_store %arg3[%c0_108, %c0_109], %343 {strides = array<i32>} : memref<8x128xf32, #tpu.memory_space<vmem>>, vector<8x128xf32>,
    return
  }
}

</mosaic_0001>

<llo_original>
// kernel: slot_attention_forward.1
$region0: #{slot_attention_forward.1}
  #allocation0 [shape = 'u32[]', space=smem, size = 0x4, offset = 0x4, fixed_abs, tag = 'smem constant byte address 0x4 - core index']
  #allocation1 [shape = 'u32[72,128]{1,0:T(1,128)}', space=vmem, size = 0x9000, scoped, tag = 'internal scratch']
  %s0 = inlined_call_operand.vmem [shape: f32[144,40], index: 0, kind: input, shape index: {}]
  %s1 = inlined_call_operand.vmem [shape: f32[664,32], index: 1, kind: input, shape index: {}]
  %s2 = inlined_call_operand.vmem [shape: f32[248,128], index: 2, kind: input, shape index: {}]
  %s3 = inlined_call_operand.vmem [shape: f32[8,128], index: 3, kind: output, shape index: {}]
  %s4 = sld [smem:[#allocation0]]
  $region29: #{slot_attention_forward.1} parent=0
    _
  %s6 = ssub.s32 1, %s4
  %s7 = scalar_select 0, %s6, %s4
  // Predicated region
  $region2: #{slot_attention_forward.1} parent=0 // pred_check
    _
  $region3: #{slot_attention_forward.1} parent=0 // pred_check_branch
    %9 = sbr.rel (0) target = $region5
  $region4: #{slot_attention_forward.1} parent=0 // pred_region
    _
  $region5: #{slot_attention_forward.1} parent=0 // pred_fallthru
    _
  // Predicated region
  $region6: #{slot_attention_forward.1} parent=0 // pred_check
    _
  $region7: #{slot_attention_forward.1} parent=0 // pred_check_branch
    %11 = sbr.rel (0) target = $region9
  $region8: #{slot_attention_forward.1} parent=0 // pred_region
    _
  $region9: #{slot_attention_forward.1} parent=0 // pred_fallthru
    _
  // Predicated region
  $region10: #{slot_attention_forward.1} parent=0 // pred_check
    _
  $region11: #{slot_attention_forward.1} parent=0 // pred_check_branch
    %13 = sbr.rel (0) target = $region13
  $region12: #{slot_attention_forward.1} parent=0 // pred_region
    _
  $region13: #{slot_attention_forward.1} parent=0 // pred_fallthru
    _
  %v14 = vld [vmem:[%s1] sm:$0x1]
  %v15 = vld [vmem:[%s1 + $0x8] sm:$0x1]
  %v16 = vld [vmem:[%s1 + $0x10] sm:$0x3]
  %v17 = vld [vmem:[%s1 + $0x18] sm:$0xff]
  %v18 = vld [vmem:[%s1 + $0x20] sm:$0xff]
  %v19 = vld [vmem:[%s1 + $0x28] sm:$0xff]
  %v20 = vld [vmem:[%s1 + $0x30] sm:$0xff]
  %v21 = vld [vmem:[%s1 + $0x38] sm:$0xff]
  %v22 = vld [vmem:[%s1 + $0x40] sm:$0xff]
  %v23 = vld [vmem:[%s1 + $0x48] sm:$0xff]
  %v24 = vld [vmem:[%s1 + $0x50] sm:$0xff]
  %v25 = vld [vmem:[%s1 + $0x58] sm:$0xff]
  %v26 = vld [vmem:[%s1 + $0x60] sm:$0xff]
  %v27 = vld [vmem:[%s1 + $0x68] sm:$0xff]
  %v28 = vld [vmem:[%s1 + $0x70] sm:$0xff]
  %v29 = vld [vmem:[%s1 + $0x78] sm:$0xff]
  %v30 = vld [vmem:[%s1 + $0x80] sm:$0xff]
  %v31 = vld [vmem:[%s1 + $0x88] sm:$0xff]
  %v32 = vld [vmem:[%s1 + $0x90] sm:$0xff]
  %v33 = vld [vmem:[%s1 + $0x98] sm:$0x1]
  %v34 = vld [vmem:[%s1 + $0xa0] sm:$0x1]
  %v35 = vld [vmem:[%s1 + $0xa8] sm:$0xff]
  %v36 = vld [vmem:[%s1 + $0xb0] sm:$0xff]
  %v37 = vld [vmem:[%s1 + $0xb8] sm:$0xff]
  %v38 = vld [vmem:[%s1 + $0xc0] sm:$0xff]
  %v39 = vld [vmem:[%s1 + $0xc8] sm:$0x1]
  %v40 = vld [vmem:[%s1 + $0xd0] sm:$0x1]
  %v41 = vld [vmem:[%s1 + $0xd8] sm:$0x1]
  %v42 = vld [vmem:[%s1 + $0xe0] sm:$0xff]
  %v43 = vld [vmem:[%s1 + $0xe8] sm:$0xff]
  %v44 = vld [vmem:[%s1 + $0xf0] sm:$0xff]
  %v45 = vld [vmem:[%s1 + $0xf8] sm:$0xff]
  %v46 = vld [vmem:[%s1 + $0x100] sm:$0x1]
  %v47 = vld [vmem:[%s1 + $0x108] sm:$0xff]
  %v48 = vld [vmem:[%s1 + $0x110] sm:$0xff]
  %v49 = vld [vmem:[%s1 + $0x118] sm:$0xff]
  %v50 = vld [vmem:[%s1 + $0x120] sm:$0xff]
  %v51 = vld [vmem:[%s1 + $0x128] sm:$0xff]
  %v52 = vld [vmem:[%s1 + $0x130] sm:$0xff]
  %v53 = vld [vmem:[%s1 + $0x138] sm:$0xff]
  %v54 = vld [vmem:[%s1 + $0x140] sm:$0xff]
  %v55 = vld [vmem:[%s1 + $0x148] sm:$0xff]
  %v56 = vld [vmem:[%s1 + $0x150] sm:$0xff]
  %v57 = vld [vmem:[%s1 + $0x158] sm:$0xff]
  %v58 = vld [vmem:[%s1 + $0x160] sm:$0xff]
  %v59 = vld [vmem:[%s1 + $0x168] sm:$0xff]
  %v60 = vld [vmem:[%s1 + $0x170] sm:$0xff]
  %v61 = vld [vmem:[%s1 + $0x178] sm:$0xff]
  %v62 = vld [vmem:[%s1 + $0x180] sm:$0xff]
  %v63 = vld [vmem:[%s1 + $0x188] sm:$0xff]
  %v64 = vld [vmem:[%s1 + $0x190] sm:$0xff]
  %v65 = vld [vmem:[%s1 + $0x198] sm:$0xff]
  %v66 = vld [vmem:[%s1 + $0x1a0] sm:$0xff]
  %v67 = vld [vmem:[%s1 + $0x1a8] sm:$0xff]
  %v68 = vld [vmem:[%s1 + $0x1b0] sm:$0xff]
  %v69 = vld [vmem:[%s1 + $0x1b8] sm:$0xff]
  %v70 = vld [vmem:[%s1 + $0x1c0] sm:$0xff]
  %v71 = vld [vmem:[%s1 + $0x1c8] sm:$0xff]
  %v72 = vld [vmem:[%s1 + $0x1d0] sm:$0xff]
  %v73 = vld [vmem:[%s1 + $0x1d8] sm:$0xff]
  %v74 = vld [vmem:[%s1 + $0x1e0] sm:$0xff]
  %v75 = vld [vmem:[%s1 + $0x1e8] sm:$0xff]
  %v76 = vld [vmem:[%s1 + $0x1f0] sm:$0xff]
  %v77 = vld [vmem:[%s1 + $0x1f8] sm:$0xff]
  %v78 = vld [vmem:[%s1 + $0x200] sm:$0xff]
  %v79 = vld [vmem:[%s1 + $0x208] sm:$0xff]
  %v80 = vld [vmem:[%s1 + $0x210] sm:$0xff]
  %v81 = vld [vmem:[%s1 + $0x218] sm:$0xff]
  %v82 = vld [vmem:[%s1 + $0x220] sm:$0xff]
  %v83 = vld [vmem:[%s1 + $0x228] sm:$0xff]
  %v84 = vld [vmem:[%s1 + $0x230] sm:$0xff]
  %v85 = vld [vmem:[%s1 + $0x238] sm:$0xff]
  %v86 = vld [vmem:[%s1 + $0x240] sm:$0xff]
  %v87 = vld [vmem:[%s1 + $0x248] sm:$0xff]
  %v88 = vld [vmem:[%s1 + $0x250] sm:$0xff]
  %v89 = vld [vmem:[%s1 + $0x258] sm:$0xff]
  %v90 = vld [vmem:[%s1 + $0x260] sm:$0xff]
  %v91 = vld [vmem:[%s1 + $0x268] sm:$0xff]
  %v92 = vld [vmem:[%s1 + $0x270] sm:$0x1]
  %v93 = vld [vmem:[%s1 + $0x278] sm:$0x1]
  %v94 = vld [vmem:[%s1 + $0x280] sm:$0xff]
  %v95 = vld [vmem:[%s1 + $0x288] sm:$0xff]
  %v96 = vld [vmem:[%s1 + $0x290] sm:$0x1]
  %v97 = vld [vmem:[%s2] sm:$0xff]
  %v98 = vld [vmem:[%s2 + $0x8] sm:$0xff]
  %v99 = vld [vmem:[%s2 + $0x10] sm:$0xff]
  %v100 = vld [vmem:[%s2 + $0x18] sm:$0xff]
  %v101 = vld [vmem:[%s2 + $0x20] sm:$0xff]
  %v102 = vld [vmem:[%s2 + $0x28] sm:$0xff]
  %v103 = vld [vmem:[%s2 + $0x30] sm:$0xff]
  %v104 = vld [vmem:[%s2 + $0x38] sm:$0xff]
  %v105 = vld [vmem:[%s2 + $0x40] sm:$0xff]
  %v106 = vld [vmem:[%s2 + $0x48] sm:$0xff]
  %v107 = vld [vmem:[%s2 + $0x50] sm:$0xff]
  %v108 = vld [vmem:[%s2 + $0x58] sm:$0xff]
  %v109 = vld [vmem:[%s2 + $0x60] sm:$0xff]
  %v110 = vld [vmem:[%s2 + $0x68] sm:$0xff]
  %v111 = vld [vmem:[%s2 + $0x70] sm:$0xff]
  %v112 = vld [vmem:[%s2 + $0x78] sm:$0xff]
  %v113 = vld [vmem:[%s2 + $0x80] sm:$0xff]
  %v114 = vld [vmem:[%s2 + $0x88] sm:$0xff]
  %v115 = vld [vmem:[%s2 + $0x90] sm:$0xff]
  %v116 = vld [vmem:[%s2 + $0x98] sm:$0xff]
  %v117 = vld [vmem:[%s2 + $0xa0] sm:$0xff]
  %v118 = vld [vmem:[%s2 + $0xa8] sm:$0xff]
  %v119 = vld [vmem:[%s2 + $0xb0] sm:$0xff]
  %v120 = vld [vmem:[%s2 + $0xb8] sm:$0xff]
  %v121 = vld [vmem:[%s2 + $0xc0] sm:$0xff]
  %v122 = vld [vmem:[%s2 + $0xc8] sm:$0xff]
  %v123 = vld [vmem:[%s2 + $0xd0] sm:$0xff]
  %v124 = vld [vmem:[%s2 + $0xd8] sm:$0xff]
  %v125 = vld [vmem:[%s2 + $0xe0] sm:$0xff]
  %v126 = vld [vmem:[%s2 + $0xe8] sm:$0xff]
  %v127 = vld [vmem:[%s2 + $0xf0] sm:$0xff]
  %v128 = vld [vmem:[%s0] sm:$0xff]
  %v129 = vld [vmem:[%s0 + $0x8] sm:$0xff]
  %v130 = vld [vmem:[%s0 + $0x10] sm:$0xff]
  %v131 = vld [vmem:[%s0 + $0x18] sm:$0xff]
  %v132 = vld [vmem:[%s0 + $0x20] sm:$0xff]
  %v133 = vld [vmem:[%s0 + $0x28] sm:$0xff]
  %v134 = vld [vmem:[%s0 + $0x30] sm:$0xff]
  %v135 = vld [vmem:[%s0 + $0x38] sm:$0xff]
  %v136 = vld [vmem:[%s0 + $0x40] sm:$0xff]
  %v137 = vld [vmem:[%s0 + $0x48] sm:$0xff]
  %v138 = vld [vmem:[%s0 + $0x50] sm:$0xff]
  %v139 = vld [vmem:[%s0 + $0x58] sm:$0xff]
  %v140 = vld [vmem:[%s0 + $0x60] sm:$0xff]
  %v141 = vld [vmem:[%s0 + $0x68] sm:$0xff]
  %v142 = vld [vmem:[%s0 + $0x70] sm:$0xff]
  %v143 = vld [vmem:[%s0 + $0x78] sm:$0xff]
  %v144 = vld [vmem:[%s0 + $0x80] sm:$0xff]
  %v145 = vld [vmem:[%s0 + $0x88] sm:$0x3f]
  %v146 = vlaneseq
  %v147 = vshrl.u32 %v146, 7
  %v148 = vadd.s32 %v147, 8
  %v149 = vadd.s32 %v147, 16
  %v150 = vadd.s32 %v147, 24
  %v151 = vadd.s32 %v147, 32
  %v152 = vadd.s32 %v147, 40
  %v153 = vadd.s32 %v147, 48
  %v154 = vadd.s32 %v147, 56
  %v155 = vlaneseq
  %v156 = vand.u32 %v155, 127
  %vm157 = vcmp.eq.s32.totalorder %v147, %v156
  %vm158 = vcmp.eq.s32.totalorder %v148, %v156
  %vm159 = vcmp.eq.s32.totalorder %v149, %v156
  %vm160 = vcmp.eq.s32.totalorder %v150, %v156
  %vm161 = vcmp.eq.s32.totalorder %v151, %v156
  %vm162 = vcmp.eq.s32.totalorder %v152, %v156
  %vm163 = vcmp.eq.s32.totalorder %v153, %v156
  %vm164 = vcmp.eq.s32.totalorder %v154, %v156
  %v165 = vsel %vm157, 1, 0
  %v166 = vsel %vm158, 1, 0
  %v167 = vsel %vm159, 1, 0
  %v168 = vsel %vm160, 1, 0
  %v169 = vsel %vm161, 1, 0
  %v170 = vsel %vm162, 1, 0
  %v171 = vsel %vm163, 1, 0
  %v172 = vsel %vm164, 1, 0
  %v173 = vcvt.s32.f32 %v165
  %v174 = vcvt.s32.f32 %v166
  %v175 = vcvt.s32.f32 %v167
  %v176 = vcvt.s32.f32 %v168
  %v177 = vcvt.s32.f32 %v169
  %v178 = vcvt.s32.f32 %v170
  %v179 = vcvt.s32.f32 %v171
  %v180 = vcvt.s32.f32 %v172
  %v181 = vadd.s32 %v156, 128
  %v182 = vadd.s32 %v156, 256
  %v183 = vmul.u32 %v147, 64
  %vm184 = vcmp.ge.s32.totalorder %v156, %v183
  %vm185 = vcmp.ge.s32.totalorder %v181, %v183
  %vm186 = vcmp.ge.s32.totalorder %v182, %v183
  %v187 = vadd.s32 %v183, 64
  %vm188 = vcmp.lt.s32.totalorder %v156, %v187
  %vm189 = vcmp.lt.s32.totalorder %v181, %v187
  %vm190 = vcmp.lt.s32.totalorder %v182, %v187
  %vm191 = vmand %vm184, %vm188
  %vm192 = vmand %vm185, %vm189
  %vm193 = vmand %vm186, %vm190
  %v194 = vsel %vm191, 1, 0
  %v195 = vsel %vm192, 1, 0
  %v196 = vsel %vm193, 1, 0
  %v197 = vcvt.s32.f32 %v194
  %v198 = vcvt.s32.f32 %v195
  %v199 = vcvt.s32.f32 %v196
  %v200 = vmul.u32 %v156, 3
  %vm201 = vcmp.ge.s32.totalorder %v147, %v200
  %v202 = vadd.s32 %v200, 3
  %vm203 = vcmp.lt.s32.totalorder %v147, %v202
  %vm204 = vmand %vm201, %vm203
  %v205 = vsel %vm204, 1, 0
  %v206 = vcvt.s32.f32 %v205
  %vm207 = vcmask 15360
  %v209 = vsel %vm207, %v206, 0
  %vm211 = vcmask 1041408
  %v213 = vsel %vm211, %v197, 0
  %215 = vmatpush.msra.mxu0 0.0
  %216 = vmatpush.msra.mxu0 0.0
  %217 = vmatpush.msra.mxu0 0.0
  %218 = vmatpush.msra.mxu0 0.0
  %219 = vmatpush.msra.mxu0 0.0
  %220 = vmatpush.msra.mxu0 0.0
  %221 = vmatpush.msra.mxu0 0.0
  %222 = vmatpush.msra.mxu0 0.0
  %223 = vmatpush.msra.mxu0 0.0
  %224 = vmatpush.msra.mxu0 0.0
  %225 = vmatpush.msra.mxu0 0.0
  %226 = vmatpush.msra.mxu0 0.0
  %227 = vmatpush.msra.mxu0 0.0
  %228 = vmatpush.msra.mxu0 0.0
  %229 = vmatpush.msra.mxu0 0.0
  %230 = vmatpush.msra.mxu0 %v213
  %231 = vmatmul.f32.gmra.mxu0 %v209
  %v232 = vpop.f32.mrf.mxu0
  %v233 = vadd.f32 0.0, %v232
  %234 = vdwg.mxu0
  %243 = vrot.lane.b32.xlu0 %v173, 64
  %v244 = vpop.permute.xlu0 %243
  %245 = vrot.lane.b32.xlu0 %v174, 64
  %v246 = vpop.permute.xlu0 %245
  %247 = vrot.lane.b32.xlu0 %v175, 64
  %v248 = vpop.permute.xlu0 %247
  %249 = vrot.lane.b32.xlu0 %v176, 64
  %v250 = vpop.permute.xlu0 %249
  %251 = vrot.lane.b32.xlu0 %v177, 64
  %v252 = vpop.permute.xlu0 %251
  %253 = vrot.lane.b32.xlu0 %v178, 64
  %v254 = vpop.permute.xlu0 %253
  %255 = vrot.lane.b32.xlu0 %v179, 64
  %v256 = vpop.permute.xlu0 %255
  %257 = vrot.lane.b32.xlu0 %v180, 64
  %v258 = vpop.permute.xlu0 %257
  %vm267 = vcmask 523264
  %v268 = vsel %vm267, %v173, %v244
  %v269 = vsel %vm267, %v174, %v246
  %v270 = vsel %vm267, %v175, %v248
  %v271 = vsel %vm267, %v176, %v250
  %v272 = vsel %vm267, %v177, %v252
  %v273 = vsel %vm267, %v178, %v254
  %v274 = vsel %vm267, %v179, %v256
  %v275 = vsel %vm267, %v180, %v258
  %v276 = vadd.s32 %v147, 64
  %v277 = vadd.s32 %v147, 72
  %v278 = vadd.s32 %v147, 80
  %v279 = vadd.s32 %v147, 88
  %v280 = vadd.s32 %v147, 96
  %v281 = vadd.s32 %v147, 104
  %v282 = vadd.s32 %v147, 112
  %v283 = vadd.s32 %v147, 120
  %v284 = vadd.s32 %v147, 128
  %v285 = vadd.s32 %v147, 136
  %v286 = vadd.s32 %v147, 144
  %v287 = vadd.s32 %v147, 152
  %v288 = vadd.s32 %v147, 160
  %v289 = vadd.s32 %v147, 168
  %v290 = vadd.s32 %v147, 176
  %v291 = vadd.s32 %v147, 184
  %v292 = vadd.s32 %v147, 192
  %v293 = vadd.s32 %v147, 200
  %v294 = vadd.s32 %v147, 208
  %v295 = vadd.s32 %v147, 216
  %v296 = vadd.s32 %v147, 224
  %v297 = vadd.s32 %v147, 232
  %v298 = vadd.s32 %v147, 240
  %v299 = vadd.s32 %v147, 248
  %v300 = vadd.s32 %v147, 256
  %v301 = vadd.s32 %v147, 264
  %v302 = vadd.s32 %v147, 272
  %v303 = vadd.s32 %v147, 280
  %v304 = vadd.s32 %v147, 288
  %v305 = vadd.s32 %v147, 296
  %v306 = vadd.s32 %v147, 304
  %v307 = vadd.s32 %v147, 312
  %v308 = vadd.s32 %v147, 320
  %v309 = vadd.s32 %v147, 328
  %v310 = vadd.s32 %v147, 336
  %v311 = vadd.s32 %v147, 344
  %v312 = vadd.s32 %v147, 352
  %v313 = vadd.s32 %v147, 360
  %v314 = vadd.s32 %v147, 368
  %v315 = vadd.s32 %v147, 376
  %v316 = vmul.u32 %v156, 64
  %vm317 = vcmp.ge.s32.totalorder %v147, %v316
  %vm318 = vcmp.ge.s32.totalorder %v148, %v316
  %vm319 = vcmp.ge.s32.totalorder %v149, %v316
  %vm320 = vcmp.ge.s32.totalorder %v150, %v316
  %vm321 = vcmp.ge.s32.totalorder %v151, %v316
  %vm322 = vcmp.ge.s32.totalorder %v152, %v316
  %vm323 = vcmp.ge.s32.totalorder %v153, %v316
  %vm324 = vcmp.ge.s32.totalorder %v154, %v316
  %vm325 = vcmp.ge.s32.totalorder %v276, %v316
  %vm326 = vcmp.ge.s32.totalorder %v277, %v316
  %vm327 = vcmp.ge.s32.totalorder %v278, %v316
  %vm328 = vcmp.ge.s32.totalorder %v279, %v316
  %vm329 = vcmp.ge.s32.totalorder %v280, %v316
  %vm330 = vcmp.ge.s32.totalorder %v281, %v316
  %vm331 = vcmp.ge.s32.totalorder %v282, %v316
  %vm332 = vcmp.ge.s32.totalorder %v283, %v316
  %vm333 = vcmp.ge.s32.totalorder %v284, %v316
  %vm334 = vcmp.ge.s32.totalorder %v285, %v316
  %vm335 = vcmp.ge.s32.totalorder %v286, %v316
  %vm336 = vcmp.ge.s32.totalorder %v287, %v316
  %vm337 = vcmp.ge.s32.totalorder %v288, %v316
  %vm338 = vcmp.ge.s32.totalorder %v289, %v316
  %vm339 = vcmp.ge.s32.totalorder %v290, %v316
  %vm340 = vcmp.ge.s32.totalorder %v291, %v316
  %vm341 = vcmp.ge.s32.totalorder %v292, %v316
  %vm342 = vcmp.ge.s32.totalorder %v293, %v316
  %vm343 = vcmp.ge.s32.totalorder %v294, %v316
  %vm344 = vcmp.ge.s32.totalorder %v295, %v316
  %vm345 = vcmp.ge.s32.totalorder %v296, %v316
  %vm346 = vcmp.ge.s32.totalorder %v297, %v316
  %vm347 = vcmp.ge.s32.totalorder %v298, %v316
  %vm348 = vcmp.ge.s32.totalorder %v299, %v316
  %vm349 = vcmp.ge.s32.totalorder %v300, %v316
  %vm350 = vcmp.ge.s32.totalorder %v301, %v316
  %vm351 = vcmp.ge.s32.totalorder %v302, %v316
  %vm352 = vcmp.ge.s32.totalorder %v303, %v316
  %vm353 = vcmp.ge.s32.totalorder %v304, %v316
  %vm354 = vcmp.ge.s32.totalorder %v305, %v316
  %vm355 = vcmp.ge.s32.totalorder %v306, %v316
  %vm356 = vcmp.ge.s32.totalorder %v307, %v316
  %vm357 = vcmp.ge.s32.totalorder %v308, %v316
  %vm358 = vcmp.ge.s32.totalorder %v309, %v316
  %vm359 = vcmp.ge.s32.totalorder %v310, %v316
  %vm360 = vcmp.ge.s32.totalorder %v311, %v316
  %vm361 = vcmp.ge.s32.totalorder %v312, %v316
  %vm362 = vcmp.ge.s32.totalorder %v313, %v316
  %vm363 = vcmp.ge.s32.totalorder %v314, %v316
  %vm364 = vcmp.ge.s32.totalorder %v315, %v316
  %v365 = vadd.s32 %v316, 64
  %vm366 = vcmp.lt.s32.totalorder %v147, %v365
  %vm367 = vcmp.lt.s32.totalorder %v148, %v365
  %vm368 = vcmp.lt.s32.totalorder %v149, %v365
  %vm369 = vcmp.lt.s32.totalorder %v150, %v365
  %vm370 = vcmp.lt.s32.totalorder %v151, %v365
  %vm371 = vcmp.lt.s32.totalorder %v152, %v365
  %vm372 = vcmp.lt.s32.totalorder %v153, %v365
  %vm373 = vcmp.lt.s32.totalorder %v154, %v365
  %vm374 = vcmp.lt.s32.totalorder %v276, %v365
  %vm375 = vcmp.lt.s32.totalorder %v277, %v365
  %vm376 = vcmp.lt.s32.totalorder %v278, %v365
  %vm377 = vcmp.lt.s32.totalorder %v279, %v365
  %vm378 = vcmp.lt.s32.totalorder %v280, %v365
  %vm379 = vcmp.lt.s32.totalorder %v281, %v365
  %vm380 = vcmp.lt.s32.totalorder %v282, %v365
  %vm381 = vcmp.lt.s32.totalorder %v283, %v365
  %vm382 = vcmp.lt.s32.totalorder %v284, %v365
  %vm383 = vcmp.lt.s32.totalorder %v285, %v365
  %vm384 = vcmp.lt.s32.totalorder %v286, %v365
  %vm385 = vcmp.lt.s32.totalorder %v287, %v365
  %vm386 = vcmp.lt.s32.totalorder %v288, %v365
  %vm387 = vcmp.lt.s32.totalorder %v289, %v365
  %vm388 = vcmp.lt.s32.totalorder %v290, %v365
  %vm389 = vcmp.lt.s32.totalorder %v291, %v365
  %vm390 = vcmp.lt.s32.totalorder %v292, %v365
  %vm391 = vcmp.lt.s32.totalorder %v293, %v365
  %vm392 = vcmp.lt.s32.totalorder %v294, %v365
  %vm393 = vcmp.lt.s32.totalorder %v295, %v365
  %vm394 = vcmp.lt.s32.totalorder %v296, %v365
  %vm395 = vcmp.lt.s32.totalorder %v297, %v365
  %vm396 = vcmp.lt.s32.totalorder %v298, %v365
  %vm397 = vcmp.lt.s32.totalorder %v299, %v365
  %vm398 = vcmp.lt.s32.totalorder %v300, %v365
  %vm399 = vcmp.lt.s32.totalorder %v301, %v365
  %vm400 = vcmp.lt.s32.totalorder %v302, %v365
  %vm401 = vcmp.lt.s32.totalorder %v303, %v365
  %vm402 = vcmp.lt.s32.totalorder %v304, %v365
  %vm403 = vcmp.lt.s32.totalorder %v305, %v365
  %vm404 = vcmp.lt.s32.totalorder %v306, %v365
  %vm405 = vcmp.lt.s32.totalorder %v307, %v365
  %vm406 = vcmp.lt.s32.totalorder %v308, %v365
  %vm407 = vcmp.lt.s32.totalorder %v309, %v365
  %vm408 = vcmp.lt.s32.totalorder %v310, %v365
  %vm409 = vcmp.lt.s32.totalorder %v311, %v365
  %vm410 = vcmp.lt.s32.totalorder %v312, %v365
  %vm411 = vcmp.lt.s32.totalorder %v313, %v365
  %vm412 = vcmp.lt.s32.totalorder %v314, %v365
  %vm413 = vcmp.lt.s32.totalorder %v315, %v365
  %vm414 = vmand %vm317, %vm366
  %vm415 = vmand %vm318, %vm367
  %vm416 = vmand %vm319, %vm368
  %vm417 = vmand %vm320, %vm369
  %vm418 = vmand %vm321, %vm370
  %vm419 = vmand %vm322, %vm371
  %vm420 = vmand %vm323, %vm372
  %vm421 = vmand %vm324, %vm373
  %vm422 = vmand %vm325, %vm374
  %vm423 = vmand %vm326, %vm375
  %vm424 = vmand %vm327, %vm376
  %vm425 = vmand %vm328, %vm377
  %vm426 = vmand %vm329, %vm378
  %vm427 = vmand %vm330, %vm379
  %vm428 = vmand %vm331, %vm380
  %vm429 = vmand %vm332, %vm381
  %vm430 = vmand %vm333, %vm382
  %vm431 = vmand %vm334, %vm383
  %vm432 = vmand %vm335, %vm384
  %vm433 = vmand %vm336, %vm385
  %vm434 = vmand %vm337, %vm386
  %vm435 = vmand %vm338, %vm387
  %vm436 = vmand %vm339, %vm388
  %vm437 = vmand %vm340, %vm389
  %vm438 = vmand %vm341, %vm390
  %vm439 = vmand %vm342, %vm391
  %vm440 = vmand %vm343, %vm392
  %vm441 = vmand %vm344, %vm393
  %vm442 = vmand %vm345, %vm394
  %vm443 = vmand %vm346, %vm395
  %vm444 = vmand %vm347, %vm396
  %vm445 = vmand %vm348, %vm397
  %vm446 = vmand %vm349, %vm398
  %vm447 = vmand %vm350, %vm399
  %vm448 = vmand %vm351, %vm400
  %vm449 = vmand %vm352, %vm401
  %vm450 = vmand %vm353, %vm402
  %vm451 = vmand %vm354, %vm403
  %vm452 = vmand %vm355, %vm404
  %vm453 = vmand %vm356, %vm405
  %vm454 = vmand %vm357, %vm406
  %vm455 = vmand %vm358, %vm407
  %vm456 = vmand %vm359, %vm408
  %vm457 = vmand %vm360, %vm409
  %vm458 = vmand %vm361, %vm410
  %vm459 = vmand %vm362, %vm411
  %vm460 = vmand %vm363, %vm412
  %vm461 = vmand %vm364, %vm413
  %v462 = vsel %vm414, 1, 0
  %v463 = vsel %vm415, 1, 0
  %v464 = vsel %vm416, 1, 0
  %v465 = vsel %vm417, 1, 0
  %v466 = vsel %vm418, 1, 0
  %v467 = vsel %vm419, 1, 0
  %v468 = vsel %vm420, 1, 0
  %v469 = vsel %vm421, 1, 0
  %v470 = vsel %vm422, 1, 0
  %v471 = vsel %vm423, 1, 0
  %v472 = vsel %vm424, 1, 0
  %v473 = vsel %vm425, 1, 0
  %v474 = vsel %vm426, 1, 0
  %v475 = vsel %vm427, 1, 0
  %v476 = vsel %vm428, 1, 0
  %v477 = vsel %vm429, 1, 0
  %v478 = vsel %vm430, 1, 0
  %v479 = vsel %vm431, 1, 0
  %v480 = vsel %vm432, 1, 0
  %v481 = vsel %vm433, 1, 0
  %v482 = vsel %vm434, 1, 0
  %v483 = vsel %vm435, 1, 0
  %v484 = vsel %vm436, 1, 0
  %v485 = vsel %vm437, 1, 0
  %v486 = vsel %vm438, 1, 0
  %v487 = vsel %vm439, 1, 0
  %v488 = vsel %vm440, 1, 0
  %v489 = vsel %vm441, 1, 0
  %v490 = vsel %vm442, 1, 0
  %v491 = vsel %vm443, 1, 0
  %v492 = vsel %vm444, 1, 0
  %v493 = vsel %vm445, 1, 0
  %v494 = vsel %vm446, 1, 0
  %v495 = vsel %vm447, 1, 0
  %v496 = vsel %vm448, 1, 0
  %v497 = vsel %vm449, 1, 0
  %v498 = vsel %vm450, 1, 0
  %v499 = vsel %vm451, 1, 0
  %v500 = vsel %vm452, 1, 0
  %v501 = vsel %vm453, 1, 0
  %v502 = vsel %vm454, 1, 0
  %v503 = vsel %vm455, 1, 0
  %v504 = vsel %vm456, 1, 0
  %v505 = vsel %vm457, 1, 0
  %v506 = vsel %vm458, 1, 0
  %v507 = vsel %vm459, 1, 0
  %v508 = vsel %vm460, 1, 0
  %v509 = vsel %vm461, 1, 0
  %v510 = vcvt.s32.f32 %v462
  %v511 = vcvt.s32.f32 %v463
  %v512 = vcvt.s32.f32 %v464
  %v513 = vcvt.s32.f32 %v465
  %v514 = vcvt.s32.f32 %v466
  %v515 = vcvt.s32.f32 %v467
  %v516 = vcvt.s32.f32 %v468
  %v517 = vcvt.s32.f32 %v469
  %v518 = vcvt.s32.f32 %v470
  %v519 = vcvt.s32.f32 %v471
  %v520 = vcvt.s32.f32 %v472
  %v521 = vcvt.s32.f32 %v473
  %v522 = vcvt.s32.f32 %v474
  %v523 = vcvt.s32.f32 %v475
  %v524 = vcvt.s32.f32 %v476
  %v525 = vcvt.s32.f32 %v477
  %v526 = vcvt.s32.f32 %v478
  %v527 = vcvt.s32.f32 %v479
  %v528 = vcvt.s32.f32 %v480
  %v529 = vcvt.s32.f32 %v481
  %v530 = vcvt.s32.f32 %v482
  %v531 = vcvt.s32.f32 %v483
  %v532 = vcvt.s32.f32 %v484
  %v533 = vcvt.s32.f32 %v485
  %v534 = vcvt.s32.f32 %v486
  %v535 = vcvt.s32.f32 %v487
  %v536 = vcvt.s32.f32 %v488
  %v537 = vcvt.s32.f32 %v489
  %v538 = vcvt.s32.f32 %v490
  %v539 = vcvt.s32.f32 %v491
  %v540 = vcvt.s32.f32 %v492
  %v541 = vcvt.s32.f32 %v493
  %v542 = vcvt.s32.f32 %v494
  %v543 = vcvt.s32.f32 %v495
  %v544 = vcvt.s32.f32 %v496
  %v545 = vcvt.s32.f32 %v497
  %v546 = vcvt.s32.f32 %v498
  %v547 = vcvt.s32.f32 %v499
  %v548 = vcvt.s32.f32 %v500
  %v549 = vcvt.s32.f32 %v501
  %v550 = vcvt.s32.f32 %v502
  %v551 = vcvt.s32.f32 %v503
  %v552 = vcvt.s32.f32 %v504
  %v553 = vcvt.s32.f32 %v505
  %v554 = vcvt.s32.f32 %v506
  %v555 = vcvt.s32.f32 %v507
  %v556 = vcvt.s32.f32 %v508
  %v557 = vcvt.s32.f32 %v509
  %vm558 = vcmp.lt.s32.totalorder %v147, 6
  %v559 = vsel %vm558, 1, 0
  %v560 = vcvt.s32.f32 %v559
  %v561 = vsub.f32 1.0, %v560
  %vm562 = vcmask 261120
  %v563 = vsel %vm562, %v128, 0.0
  %564 = vadd.xlane.f32.xlu0 %v563
  %v565 = vpop.xlane.xlu0 %564
  %v566 = vsel %vm562, %v129, 0.0
  %567 = vadd.xlane.f32.xlu0 %v566
  %v568 = vpop.xlane.xlu0 %567
  %v569 = vsel %vm562, %v130, 0.0
  %570 = vadd.xlane.f32.xlu0 %v569
  %v571 = vpop.xlane.xlu0 %570
  %v572 = vsel %vm562, %v131, 0.0
  %573 = vadd.xlane.f32.xlu0 %v572
  %v574 = vpop.xlane.xlu0 %573
  %v575 = vsel %vm562, %v132, 0.0
  %576 = vadd.xlane.f32.xlu0 %v575
  %v577 = vpop.xlane.xlu0 %576
  %v578 = vsel %vm562, %v133, 0.0
  %579 = vadd.xlane.f32.xlu0 %v578
  %v580 = vpop.xlane.xlu0 %579
  %v581 = vsel %vm562, %v134, 0.0
  %582 = vadd.xlane.f32.xlu0 %v581
  %v583 = vpop.xlane.xlu0 %582
  %v584 = vsel %vm562, %v135, 0.0
  %585 = vadd.xlane.f32.xlu0 %v584
  %v586 = vpop.xlane.xlu0 %585
  %v587 = vsel %vm562, %v136, 0.0
  %588 = vadd.xlane.f32.xlu0 %v587
  %v589 = vpop.xlane.xlu0 %588
  %v590 = vsel %vm562, %v137, 0.0
  %591 = vadd.xlane.f32.xlu0 %v590
  %v592 = vpop.xlane.xlu0 %591
  %v593 = vsel %vm562, %v138, 0.0
  %594 = vadd.xlane.f32.xlu0 %v593
  %v595 = vpop.xlane.xlu0 %594
  %v596 = vsel %vm562, %v139, 0.0
  %597 = vadd.xlane.f32.xlu0 %v596
  %v598 = vpop.xlane.xlu0 %597
  %v599 = vsel %vm562, %v140, 0.0
  %600 = vadd.xlane.f32.xlu0 %v599
  %v601 = vpop.xlane.xlu0 %600
  %v602 = vsel %vm562, %v141, 0.0
  %603 = vadd.xlane.f32.xlu0 %v602
  %v604 = vpop.xlane.xlu0 %603
  %v605 = vsel %vm562, %v142, 0.0
  %606 = vadd.xlane.f32.xlu0 %v605
  %v607 = vpop.xlane.xlu0 %606
  %v608 = vsel %vm562, %v143, 0.0
  %609 = vadd.xlane.f32.xlu0 %v608
  %v610 = vpop.xlane.xlu0 %609
  %v611 = vrcp.pop 32.0
  %v612 = vmul.f32 32.0, %v611
  %v613 = vsub.f32 1.0, %v612
  %v614 = vmul.f32 %v611, %v613
  %v615 = vadd.f32 %v611, %v614
  %vm616 = vweird.f32 %v611
  %v617 = vsel %vm616, %v611, %v615
  %v618 = vmul.f32 %v565, %v617
  %v619 = vmul.f32 %v568, %v617
  %v620 = vmul.f32 %v571, %v617
  %v621 = vmul.f32 %v574, %v617
  %v622 = vmul.f32 %v577, %v617
  %v623 = vmul.f32 %v580, %v617
  %v624 = vmul.f32 %v583, %v617
  %v625 = vmul.f32 %v586, %v617
  %v626 = vmul.f32 %v589, %v617
  %v627 = vmul.f32 %v592, %v617
  %v628 = vmul.f32 %v595, %v617
  %v629 = vmul.f32 %v598, %v617
  %v630 = vmul.f32 %v601, %v617
  %v631 = vmul.f32 %v604, %v617
  %v632 = vmul.f32 %v607, %v617
  %v633 = vmul.f32 %v610, %v617
  %v634 = vmul.f32 %v128, %v128
  %v635 = vmul.f32 %v129, %v129
  %v636 = vmul.f32 %v130, %v130
  %v637 = vmul.f32 %v131, %v131
  %v638 = vmul.f32 %v132, %v132
  %v639 = vmul.f32 %v133, %v133
  %v640 = vmul.f32 %v134, %v134
  %v641 = vmul.f32 %v135, %v135
  %v642 = vmul.f32 %v136, %v136
  %v643 = vmul.f32 %v137, %v137
  %v644 = vmul.f32 %v138, %v138
  %v645 = vmul.f32 %v139, %v139
  %v646 = vmul.f32 %v140, %v140
  %v647 = vmul.f32 %v141, %v141
  %v648 = vmul.f32 %v142, %v142
  %v649 = vmul.f32 %v143, %v143
  %v650 = vsel %vm562, %v634, 0.0
  %651 = vadd.xlane.f32.xlu0 %v650
  %v652 = vpop.xlane.xlu0 %651
  %v653 = vsel %vm562, %v635, 0.0
  %654 = vadd.xlane.f32.xlu0 %v653
  %v655 = vpop.xlane.xlu0 %654
  %v656 = vsel %vm562, %v636, 0.0
  %657 = vadd.xlane.f32.xlu0 %v656
  %v658 = vpop.xlane.xlu0 %657
  %v659 = vsel %vm562, %v637, 0.0
  %660 = vadd.xlane.f32.xlu0 %v659
  %v661 = vpop.xlane.xlu0 %660
  %v662 = vsel %vm562, %v638, 0.0
  %663 = vadd.xlane.f32.xlu0 %v662
  %v664 = vpop.xlane.xlu0 %663
  %v665 = vsel %vm562, %v639, 0.0
  %666 = vadd.xlane.f32.xlu0 %v665
  %v667 = vpop.xlane.xlu0 %666
  %v668 = vsel %vm562, %v640, 0.0
  %669 = vadd.xlane.f32.xlu0 %v668
  %v670 = vpop.xlane.xlu0 %669
  %v671 = vsel %vm562, %v641, 0.0
  %672 = vadd.xlane.f32.xlu0 %v671
  %v673 = vpop.xlane.xlu0 %672
  %v674 = vsel %vm562, %v642, 0.0
  %675 = vadd.xlane.f32.xlu0 %v674
  %v676 = vpop.xlane.xlu0 %675
  %v677 = vsel %vm562, %v643, 0.0
  %678 = vadd.xlane.f32.xlu0 %v677
  %v679 = vpop.xlane.xlu0 %678
  %v680 = vsel %vm562, %v644, 0.0
  %681 = vadd.xlane.f32.xlu0 %v680
  %v682 = vpop.xlane.xlu0 %681
  %v683 = vsel %vm562, %v645, 0.0
  %684 = vadd.xlane.f32.xlu0 %v683
  %v685 = vpop.xlane.xlu0 %684
  %v686 = vsel %vm562, %v646, 0.0
  %687 = vadd.xlane.f32.xlu0 %v686
  %v688 = vpop.xlane.xlu0 %687
  %v689 = vsel %vm562, %v647, 0.0
  %690 = vadd.xlane.f32.xlu0 %v689
  %v691 = vpop.xlane.xlu0 %690
  %v692 = vsel %vm562, %v648, 0.0
  %693 = vadd.xlane.f32.xlu0 %v692
  %v694 = vpop.xlane.xlu0 %693
  %v695 = vsel %vm562, %v649, 0.0
  %696 = vadd.xlane.f32.xlu0 %v695
  %v697 = vpop.xlane.xlu0 %696
  %v698 = vmul.f32 %v652, %v617
  %v699 = vmul.f32 %v655, %v617
  %v700 = vmul.f32 %v658, %v617
  %v701 = vmul.f32 %v661, %v617
  %v702 = vmul.f32 %v664, %v617
  %v703 = vmul.f32 %v667, %v617
  %v704 = vmul.f32 %v670, %v617
  %v705 = vmul.f32 %v673, %v617
  %v706 = vmul.f32 %v676, %v617
  %v707 = vmul.f32 %v679, %v617
  %v708 = vmul.f32 %v682, %v617
  %v709 = vmul.f32 %v685, %v617
  %v710 = vmul.f32 %v688, %v617
  %v711 = vmul.f32 %v691, %v617
  %v712 = vmul.f32 %v694, %v617
  %v713 = vmul.f32 %v697, %v617
  %v714 = vmul.f32 %v618, %v618
  %v715 = vmul.f32 %v619, %v619
  %v716 = vmul.f32 %v620, %v620
  %v717 = vmul.f32 %v621, %v621
  %v718 = vmul.f32 %v622, %v622
  %v719 = vmul.f32 %v623, %v623
  %v720 = vmul.f32 %v624, %v624
  %v721 = vmul.f32 %v625, %v625
  %v722 = vmul.f32 %v626, %v626
  %v723 = vmul.f32 %v627, %v627
  %v724 = vmul.f32 %v628, %v628
  %v725 = vmul.f32 %v629, %v629
  %v726 = vmul.f32 %v630, %v630
  %v727 = vmul.f32 %v631, %v631
  %v728 = vmul.f32 %v632, %v632
  %v729 = vmul.f32 %v633, %v633
  %v730 = vsub.f32 %v698, %v714
  %v731 = vsub.f32 %v699, %v715
  %v732 = vsub.f32 %v700, %v716
  %v733 = vsub.f32 %v701, %v717
  %v734 = vsub.f32 %v702, %v718
  %v735 = vsub.f32 %v703, %v719
  %v736 = vsub.f32 %v704, %v720
  %v737 = vsub.f32 %v705, %v721
  %v738 = vsub.f32 %v706, %v722
  %v739 = vsub.f32 %v707, %v723
  %v740 = vsub.f32 %v708, %v724
  %v741 = vsub.f32 %v709, %v725
  %v742 = vsub.f32 %v710, %v726
  %v743 = vsub.f32 %v711, %v727
  %v744 = vsub.f32 %v712, %v728
  %v745 = vsub.f32 %v713, %v729
  %v746 = vmax.f32 %v730, 0.0
  %v747 = vmax.f32 %v731, 0.0
  %v748 = vmax.f32 %v732, 0.0
  %v749 = vmax.f32 %v733, 0.0
  %v750 = vmax.f32 %v734, 0.0
  %v751 = vmax.f32 %v735, 0.0
  %v752 = vmax.f32 %v736, 0.0
  %v753 = vmax.f32 %v737, 0.0
  %v754 = vmax.f32 %v738, 0.0
  %v755 = vmax.f32 %v739, 0.0
  %v756 = vmax.f32 %v740, 0.0
  %v757 = vmax.f32 %v741, 0.0
  %v758 = vmax.f32 %v742, 0.0
  %v759 = vmax.f32 %v743, 0.0
  %v760 = vmax.f32 %v744, 0.0
  %v761 = vmax.f32 %v745, 0.0
  %v762 = vsub.f32 %v128, %v618
  %v763 = vsub.f32 %v129, %v619
  %v764 = vsub.f32 %v130, %v620
  %v765 = vsub.f32 %v131, %v621
  %v766 = vsub.f32 %v132, %v622
  %v767 = vsub.f32 %v133, %v623
  %v768 = vsub.f32 %v134, %v624
  %v769 = vsub.f32 %v135, %v625
  %v770 = vsub.f32 %v136, %v626
  %v771 = vsub.f32 %v137, %v627
  %v772 = vsub.f32 %v138, %v628
  %v773 = vsub.f32 %v139, %v629
  %v774 = vsub.f32 %v140, %v630
  %v775 = vsub.f32 %v141, %v631
  %v776 = vsub.f32 %v142, %v632
  %v777 = vsub.f32 %v143, %v633
  %v778 = vadd.f32 %v746, 1e-05
  %v779 = vadd.f32 %v747, 1e-05
  %v780 = vadd.f32 %v748, 1e-05
  %v781 = vadd.f32 %v749, 1e-05
  %v782 = vadd.f32 %v750, 1e-05
  %v783 = vadd.f32 %v751, 1e-05
  %v784 = vadd.f32 %v752, 1e-05
  %v785 = vadd.f32 %v753, 1e-05
  %v786 = vadd.f32 %v754, 1e-05
  %v787 = vadd.f32 %v755, 1e-05
  %v788 = vadd.f32 %v756, 1e-05
  %v789 = vadd.f32 %v757, 1e-05
  %v790 = vadd.f32 %v758, 1e-05
  %v791 = vadd.f32 %v759, 1e-05
  %v792 = vadd.f32 %v760, 1e-05
  %v793 = vadd.f32 %v761, 1e-05
  %v794 = vrsqrt.pop %v778
  %v795 = vmul.f32 %v794, %v778
  %v796 = vmul.f32 %v795, %v794
  %v797 = vmul.f32 0.5, %v796
  %v798 = vsub.f32 1.5, %v797
  %v799 = vmul.f32 %v794, %v798
  %vm800 = vweird.f32 %v778
  %vm801 = vweird.f32 %v794
  %vm802 = vmor %vm800, %vm801
  %v803 = vsel %vm802, %v794, %v799
  %v804 = vrsqrt.pop %v779
  %v805 = vmul.f32 %v804, %v779
  %v806 = vmul.f32 %v805, %v804
  %v807 = vmul.f32 0.5, %v806
  %v808 = vsub.f32 1.5, %v807
  %v809 = vmul.f32 %v804, %v808
  %vm810 = vweird.f32 %v779
  %vm811 = vweird.f32 %v804
  %vm812 = vmor %vm810, %vm811
  %v813 = vsel %vm812, %v804, %v809
  %v814 = vrsqrt.pop %v780
  %v815 = vmul.f32 %v814, %v780
  %v816 = vmul.f32 %v815, %v814
  %v817 = vmul.f32 0.5, %v816
  %v818 = vsub.f32 1.5, %v817
  %v819 = vmul.f32 %v814, %v818
  %vm820 = vweird.f32 %v780
  %vm821 = vweird.f32 %v814
  %vm822 = vmor %vm820, %vm821
  %v823 = vsel %vm822, %v814, %v819
  %v824 = vrsqrt.pop %v781
  %v825 = vmul.f32 %v824, %v781
  %v826 = vmul.f32 %v825, %v824
  %v827 = vmul.f32 0.5, %v826
  %v828 = vsub.f32 1.5, %v827
  %v829 = vmul.f32 %v824, %v828
  %vm830 = vweird.f32 %v781
  %vm831 = vweird.f32 %v824
  %vm832 = vmor %vm830, %vm831
  %v833 = vsel %vm832, %v824, %v829
  %v834 = vrsqrt.pop %v782
  %v835 = vmul.f32 %v834, %v782
  %v836 = vmul.f32 %v835, %v834
  %v837 = vmul.f32 0.5, %v836
  %v838 = vsub.f32 1.5, %v837
  %v839 = vmul.f32 %v834, %v838
  %vm840 = vweird.f32 %v782
  %vm841 = vweird.f32 %v834
  %vm842 = vmor %vm840, %vm841
  %v843 = vsel %vm842, %v834, %v839
  %v844 = vrsqrt.pop %v783
  %v845 = vmul.f32 %v844, %v783
  %v846 = vmul.f32 %v845, %v844
  %v847 = vmul.f32 0.5, %v846
  %v848 = vsub.f32 1.5, %v847
  %v849 = vmul.f32 %v844, %v848
  %vm850 = vweird.f32 %v783
  %vm851 = vweird.f32 %v844
  %vm852 = vmor %vm850, %vm851
  %v853 = vsel %vm852, %v844, %v849
  %v854 = vrsqrt.pop %v784
  %v855 = vmul.f32 %v854, %v784
  %v856 = vmul.f32 %v855, %v854
  %v857 = vmul.f32 0.5, %v856
  %v858 = vsub.f32 1.5, %v857
  %v859 = vmul.f32 %v854, %v858
  %vm860 = vweird.f32 %v784
  %vm861 = vweird.f32 %v854
  %vm862 = vmor %vm860, %vm861
  %v863 = vsel %vm862, %v854, %v859
  %v864 = vrsqrt.pop %v785
  %v865 = vmul.f32 %v864, %v785
  %v866 = vmul.f32 %v865, %v864
  %v867 = vmul.f32 0.5, %v866
  %v868 = vsub.f32 1.5, %v867
  %v869 = vmul.f32 %v864, %v868
  %vm870 = vweird.f32 %v785
  %vm871 = vweird.f32 %v864
  %vm872 = vmor %vm870, %vm871
  %v873 = vsel %vm872, %v864, %v869
  %v874 = vrsqrt.pop %v786
  %v875 = vmul.f32 %v874, %v786
  %v876 = vmul.f32 %v875, %v874
  %v877 = vmul.f32 0.5, %v876
  %v878 = vsub.f32 1.5, %v877
  %v879 = vmul.f32 %v874, %v878
  %vm880 = vweird.f32 %v786
  %vm881 = vweird.f32 %v874
  %vm882 = vmor %vm880, %vm881
  %v883 = vsel %vm882, %v874, %v879
  %v884 = vrsqrt.pop %v787
  %v885 = vmul.f32 %v884, %v787
  %v886 = vmul.f32 %v885, %v884
  %v887 = vmul.f32 0.5, %v886
  %v888 = vsub.f32 1.5, %v887
  %v889 = vmul.f32 %v884, %v888
  %vm890 = vweird.f32 %v787
  %vm891 = vweird.f32 %v884
  %vm892 = vmor %vm890, %vm891
  %v893 = vsel %vm892, %v884, %v889
  %v894 = vrsqrt.pop %v788
  %v895 = vmul.f32 %v894, %v788
  %v896 = vmul.f32 %v895, %v894
  %v897 = vmul.f32 0.5, %v896
  %v898 = vsub.f32 1.5, %v897
  %v899 = vmul.f32 %v894, %v898
  %vm900 = vweird.f32 %v788
  %vm901 = vweird.f32 %v894
  %vm902 = vmor %vm900, %vm901
  %v903 = vsel %vm902, %v894, %v899
  %v904 = vrsqrt.pop %v789
  %v905 = vmul.f32 %v904, %v789
  %v906 = vmul.f32 %v905, %v904
  %v907 = vmul.f32 0.5, %v906
  %v908 = vsub.f32 1.5, %v907
  %v909 = vmul.f32 %v904, %v908
  %vm910 = vweird.f32 %v789
  %vm911 = vweird.f32 %v904
  %vm912 = vmor %vm910, %vm911
  %v913 = vsel %vm912, %v904, %v909
  %v914 = vrsqrt.pop %v790
  %v915 = vmul.f32 %v914, %v790
  %v916 = vmul.f32 %v915, %v914
  %v917 = vmul.f32 0.5, %v916
  %v918 = vsub.f32 1.5, %v917
  %v919 = vmul.f32 %v914, %v918
  %vm920 = vweird.f32 %v790
  %vm921 = vweird.f32 %v914
  %vm922 = vmor %vm920, %vm921
  %v923 = vsel %vm922, %v914, %v919
  %v924 = vrsqrt.pop %v791
  %v925 = vmul.f32 %v924, %v791
  %v926 = vmul.f32 %v925, %v924
  %v927 = vmul.f32 0.5, %v926
  %v928 = vsub.f32 1.5, %v927
  %v929 = vmul.f32 %v924, %v928
  %vm930 = vweird.f32 %v791
  %vm931 = vweird.f32 %v924
  %vm932 = vmor %vm930, %vm931
  %v933 = vsel %vm932, %v924, %v929
  %v934 = vrsqrt.pop %v792
  %v935 = vmul.f32 %v934, %v792
  %v936 = vmul.f32 %v935, %v934
  %v937 = vmul.f32 0.5, %v936
  %v938 = vsub.f32 1.5, %v937
  %v939 = vmul.f32 %v934, %v938
  %vm940 = vweird.f32 %v792
  %vm941 = vweird.f32 %v934
  %vm942 = vmor %vm940, %vm941
  %v943 = vsel %vm942, %v934, %v939
  %v944 = vrsqrt.pop %v793
  %v945 = vmul.f32 %v944, %v793
  %v946 = vmul.f32 %v945, %v944
  %v947 = vmul.f32 0.5, %v946
  %v948 = vsub.f32 1.5, %v947
  %v949 = vmul.f32 %v944, %v948
  %vm950 = vweird.f32 %v793
  %vm951 = vweird.f32 %v944
  %vm952 = vmor %vm950, %vm951
  %v953 = vsel %vm952, %v944, %v949
  %v954 = vmul.f32 %v762, %v803
  %v955 = vmul.f32 %v763, %v813
  %v956 = vmul.f32 %v764, %v823
  %v957 = vmul.f32 %v765, %v833
  %v958 = vmul.f32 %v766, %v843
  %v959 = vmul.f32 %v767, %v853
  %v960 = vmul.f32 %v768, %v863
  %v961 = vmul.f32 %v769, %v873
  %v962 = vmul.f32 %v770, %v883
  %v963 = vmul.f32 %v771, %v893
  %v964 = vmul.f32 %v772, %v903
  %v965 = vmul.f32 %v773, %v913
  %v966 = vmul.f32 %v774, %v923
  %v967 = vmul.f32 %v775, %v933
  %v968 = vmul.f32 %v776, %v943
  %v969 = vmul.f32 %v777, %v953
  %v970 = vperm.slane %v14, 0
  %v971 = vmul.f32 %v954, %v970
  %v972 = vmul.f32 %v955, %v970
  %v973 = vmul.f32 %v956, %v970
  %v974 = vmul.f32 %v957, %v970
  %v975 = vmul.f32 %v958, %v970
  %v976 = vmul.f32 %v959, %v970
  %v977 = vmul.f32 %v960, %v970
  %v978 = vmul.f32 %v961, %v970
  %v979 = vmul.f32 %v962, %v970
  %v980 = vmul.f32 %v963, %v970
  %v981 = vmul.f32 %v964, %v970
  %v982 = vmul.f32 %v965, %v970
  %v983 = vmul.f32 %v966, %v970
  %v984 = vmul.f32 %v967, %v970
  %v985 = vmul.f32 %v968, %v970
  %v986 = vmul.f32 %v969, %v970
  %v987 = vperm.slane %v15, 0
  %v988 = vadd.f32 %v971, %v987
  %v989 = vadd.f32 %v972, %v987
  %v990 = vadd.f32 %v973, %v987
  %v991 = vadd.f32 %v974, %v987
  %v992 = vadd.f32 %v975, %v987
  %v993 = vadd.f32 %v976, %v987
  %v994 = vadd.f32 %v977, %v987
  %v995 = vadd.f32 %v978, %v987
  %v996 = vadd.f32 %v979, %v987
  %v997 = vadd.f32 %v980, %v987
  %v998 = vadd.f32 %v981, %v987
  %v999 = vadd.f32 %v982, %v987
  %v1000 = vadd.f32 %v983, %v987
  %v1001 = vadd.f32 %v984, %v987
  %v1002 = vadd.f32 %v985, %v987
  %v1003 = vadd.f32 %v986, %v987
  %v1005 = vsel %vm562, %v988, 0
  %v1008 = vsel %vm562, %v989, 0
  %v1011 = vsel %vm562, %v990, 0
  %v1014 = vsel %vm562, %v991, 0
  %v1017 = vsel %vm562, %v992, 0
  %v1020 = vsel %vm562, %v993, 0
  %v1023 = vsel %vm562, %v994, 0
  %v1026 = vsel %vm562, %v995, 0
  %v1029 = vsel %vm562, %v996, 0
  %v1032 = vsel %vm562, %v997, 0
  %v1035 = vsel %vm562, %v998, 0
  %v1038 = vsel %vm562, %v999, 0
  %v1041 = vsel %vm562, %v1000, 0
  %v1044 = vsel %vm562, %v1001, 0
  %v1047 = vsel %vm562, %v1002, 0
  %v1050 = vsel %vm562, %v1003, 0
  %1052 = vmatpush.msra.mxu0 0.0
  %1053 = vmatpush.msra.mxu0 0.0
  %1054 = vmatpush.msra.mxu0 0.0
  %1055 = vmatpush.msra.mxu0 0.0
  %1056 = vmatpush.msra.mxu0 0.0
  %1057 = vmatpush.msra.mxu0 0.0
  %1058 = vmatpush.msra.mxu0 0.0
  %1059 = vmatpush.msra.mxu0 0.0
  %1060 = vmatpush.msra.mxu0 0.0
  %1061 = vmatpush.msra.mxu0 0.0
  %1062 = vmatpush.msra.mxu0 0.0
  %1063 = vmatpush.msra.mxu0 0.0
  %1064 = vmatpush.msra.mxu0 %v100
  %1065 = vmatpush.msra.mxu0 %v99
  %1066 = vmatpush.msra.mxu0 %v98
  %1067 = vmatpush.msra.mxu0 %v97
  %1068 = vmatmul.f32.gmra.mxu0 %v1005
  %v1069 = vpop.f32.mrf.mxu0
  %v1070 = vadd.f32 0.0, %v1069
  %1071 = vmatmul.f32.gmra.mxu0 %v1008
  %v1072 = vpop.f32.mrf.mxu0
  %v1073 = vadd.f32 0.0, %v1072
  %1074 = vmatmul.f32.gmra.mxu0 %v1011
  %v1075 = vpop.f32.mrf.mxu0
  %v1076 = vadd.f32 0.0, %v1075
  %1077 = vmatmul.f32.gmra.mxu0 %v1014
  %v1078 = vpop.f32.mrf.mxu0
  %v1079 = vadd.f32 0.0, %v1078
  %1080 = vmatmul.f32.gmra.mxu0 %v1017
  %v1081 = vpop.f32.mrf.mxu0
  %v1082 = vadd.f32 0.0, %v1081
  %1083 = vmatmul.f32.gmra.mxu0 %v1020
  %v1084 = vpop.f32.mrf.mxu0
  %v1085 = vadd.f32 0.0, %v1084
  %1086 = vmatmul.f32.gmra.mxu0 %v1023
  %v1087 = vpop.f32.mrf.mxu0
  %v1088 = vadd.f32 0.0, %v1087
  %1089 = vmatmul.f32.gmra.mxu0 %v1026
  %v1090 = vpop.f32.mrf.mxu0
  %v1091 = vadd.f32 0.0, %v1090
  %1092 = vmatmul.f32.gmra.mxu0 %v1029
  %v1093 = vpop.f32.mrf.mxu0
  %v1094 = vadd.f32 0.0, %v1093
  %1095 = vmatmul.f32.gmra.mxu0 %v1032
  %v1096 = vpop.f32.mrf.mxu0
  %v1097 = vadd.f32 0.0, %v1096
  %1098 = vmatmul.f32.gmra.mxu0 %v1035
  %v1099 = vpop.f32.mrf.mxu0
  %v1100 = vadd.f32 0.0, %v1099
  %1101 = vmatmul.f32.gmra.mxu0 %v1038
  %v1102 = vpop.f32.mrf.mxu0
  %v1103 = vadd.f32 0.0, %v1102
  %1104 = vmatmul.f32.gmra.mxu0 %v1041
  %v1105 = vpop.f32.mrf.mxu0
  %v1106 = vadd.f32 0.0, %v1105
  %1107 = vmatmul.f32.gmra.mxu0 %v1044
  %v1108 = vpop.f32.mrf.mxu0
  %v1109 = vadd.f32 0.0, %v1108
  %1110 = vmatmul.f32.gmra.mxu0 %v1047
  %v1111 = vpop.f32.mrf.mxu0
  %v1112 = vadd.f32 0.0, %v1111
  %1113 = vmatmul.f32.gmra.mxu0 %v1050
  %v1114 = vpop.f32.mrf.mxu0
  %v1115 = vadd.f32 0.0, %v1114
  %1116 = vdwg.mxu0
  %1125 = vrot.lane.b32.xlu0 %v25, 64
  %v1126 = vpop.permute.xlu0 %1125
  %1127 = vrot.lane.b32.xlu0 %v26, 64
  %v1128 = vpop.permute.xlu0 %1127
  %1129 = vrot.lane.b32.xlu0 %v27, 64
  %v1130 = vpop.permute.xlu0 %1129
  %1131 = vrot.lane.b32.xlu0 %v28, 64
  %v1132 = vpop.permute.xlu0 %1131
  %1133 = vrot.lane.b32.xlu0 %v29, 64
  %v1134 = vpop.permute.xlu0 %1133
  %1135 = vrot.lane.b32.xlu0 %v30, 64
  %v1136 = vpop.permute.xlu0 %1135
  %1137 = vrot.lane.b32.xlu0 %v31, 64
  %v1138 = vpop.permute.xlu0 %1137
  %1139 = vrot.lane.b32.xlu0 %v32, 64
  %v1140 = vpop.permute.xlu0 %1139
  %v1149 = vadd.f32 %v1070, %v1126
  %v1150 = vadd.f32 %v1073, %v1128
  %v1151 = vadd.f32 %v1076, %v1130
  %v1152 = vadd.f32 %v1079, %v1132
  %v1153 = vadd.f32 %v1082, %v1134
  %v1154 = vadd.f32 %v1085, %v1136
  %v1155 = vadd.f32 %v1088, %v1138
  %v1156 = vadd.f32 %v1091, %v1140
  %v1157 = vadd.f32 %v1094, %v1126
  %v1158 = vadd.f32 %v1097, %v1128
  %v1159 = vadd.f32 %v1100, %v1130
  %v1160 = vadd.f32 %v1103, %v1132
  %v1161 = vadd.f32 %v1106, %v1134
  %v1162 = vadd.f32 %v1109, %v1136
  %v1163 = vadd.f32 %v1112, %v1138
  %v1164 = vadd.f32 %v1115, %v1140
  %1165 = vrot.lane.b32.xlu0 %v25, 96
  %v1166 = vpop.permute.xlu0 %1165
  %1167 = vrot.lane.b32.xlu0 %v26, 96
  %v1168 = vpop.permute.xlu0 %1167
  %1169 = vrot.lane.b32.xlu0 %v27, 96
  %v1170 = vpop.permute.xlu0 %1169
  %1171 = vrot.lane.b32.xlu0 %v28, 96
  %v1172 = vpop.permute.xlu0 %1171
  %1173 = vrot.lane.b32.xlu0 %v29, 96
  %v1174 = vpop.permute.xlu0 %1173
  %1175 = vrot.lane.b32.xlu0 %v30, 96
  %v1176 = vpop.permute.xlu0 %1175
  %1177 = vrot.lane.b32.xlu0 %v31, 96
  %v1178 = vpop.permute.xlu0 %1177
  %1179 = vrot.lane.b32.xlu0 %v32, 96
  %v1180 = vpop.permute.xlu0 %1179
  %v1189 = vadd.f32 %v1070, %v1166
  %v1190 = vadd.f32 %v1073, %v1168
  %v1191 = vadd.f32 %v1076, %v1170
  %v1192 = vadd.f32 %v1079, %v1172
  %v1193 = vadd.f32 %v1082, %v1174
  %v1194 = vadd.f32 %v1085, %v1176
  %v1195 = vadd.f32 %v1088, %v1178
  %v1196 = vadd.f32 %v1091, %v1180
  %v1197 = vadd.f32 %v1094, %v1166
  %v1198 = vadd.f32 %v1097, %v1168
  %v1199 = vadd.f32 %v1100, %v1170
  %v1200 = vadd.f32 %v1103, %v1172
  %v1201 = vadd.f32 %v1106, %v1174
  %v1202 = vadd.f32 %v1109, %v1176
  %v1203 = vadd.f32 %v1112, %v1178
  %v1204 = vadd.f32 %v1115, %v1180
  %1221 = vrot.lane.b32.xlu0 %v1189, 96
  %v1222 = vpop.permute.xlu0 %1221
  %1223 = vrot.lane.b32.xlu0 %v1190, 96
  %v1224 = vpop.permute.xlu0 %1223
  %1225 = vrot.lane.b32.xlu0 %v1191, 96
  %v1226 = vpop.permute.xlu0 %1225
  %1227 = vrot.lane.b32.xlu0 %v1192, 96
  %v1228 = vpop.permute.xlu0 %1227
  %1229 = vrot.lane.b32.xlu0 %v1193, 96
  %v1230 = vpop.permute.xlu0 %1229
  %1231 = vrot.lane.b32.xlu0 %v1194, 96
  %v1232 = vpop.permute.xlu0 %1231
  %1233 = vrot.lane.b32.xlu0 %v1195, 96
  %v1234 = vpop.permute.xlu0 %1233
  %1235 = vrot.lane.b32.xlu0 %v1196, 96
  %v1236 = vpop.permute.xlu0 %1235
  %1237 = vrot.lane.b32.xlu0 %v1197, 96
  %v1238 = vpop.permute.xlu0 %1237
  %1239 = vrot.lane.b32.xlu0 %v1198, 96
  %v1240 = vpop.permute.xlu0 %1239
  %1241 = vrot.lane.b32.xlu0 %v1199, 96
  %v1242 = vpop.permute.xlu0 %1241
  %1243 = vrot.lane.b32.xlu0 %v1200, 96
  %v1244 = vpop.permute.xlu0 %1243
  %1245 = vrot.lane.b32.xlu0 %v1201, 96
  %v1246 = vpop.permute.xlu0 %1245
  %1247 = vrot.lane.b32.xlu0 %v1202, 96
  %v1248 = vpop.permute.xlu0 %1247
  %1249 = vrot.lane.b32.xlu0 %v1203, 96
  %v1250 = vpop.permute.xlu0 %1249
  %1251 = vrot.lane.b32.xlu0 %v1204, 96
  %v1252 = vpop.permute.xlu0 %1251
  %1285 = vrot.lane.b32.xlu0 %v1149, 64
  %v1286 = vpop.permute.xlu0 %1285
  %1287 = vrot.lane.b32.xlu0 %v1150, 64
  %v1288 = vpop.permute.xlu0 %1287
  %1289 = vrot.lane.b32.xlu0 %v1151, 64
  %v1290 = vpop.permute.xlu0 %1289
  %1291 = vrot.lane.b32.xlu0 %v1152, 64
  %v1292 = vpop.permute.xlu0 %1291
  %1293 = vrot.lane.b32.xlu0 %v1153, 64
  %v1294 = vpop.permute.xlu0 %1293
  %1295 = vrot.lane.b32.xlu0 %v1154, 64
  %v1296 = vpop.permute.xlu0 %1295
  %1297 = vrot.lane.b32.xlu0 %v1155, 64
  %v1298 = vpop.permute.xlu0 %1297
  %1299 = vrot.lane.b32.xlu0 %v1156, 64
  %v1300 = vpop.permute.xlu0 %1299
  %1301 = vrot.lane.b32.xlu0 %v1157, 64
  %v1302 = vpop.permute.xlu0 %1301
  %1303 = vrot.lane.b32.xlu0 %v1158, 64
  %v1304 = vpop.permute.xlu0 %1303
  %1305 = vrot.lane.b32.xlu0 %v1159, 64
  %v1306 = vpop.permute.xlu0 %1305
  %1307 = vrot.lane.b32.xlu0 %v1160, 64
  %v1308 = vpop.permute.xlu0 %1307
  %1309 = vrot.lane.b32.xlu0 %v1161, 64
  %v1310 = vpop.permute.xlu0 %1309
  %1311 = vrot.lane.b32.xlu0 %v1162, 64
  %v1312 = vpop.permute.xlu0 %1311
  %1313 = vrot.lane.b32.xlu0 %v1163, 64
  %v1314 = vpop.permute.xlu0 %1313
  %1315 = vrot.lane.b32.xlu0 %v1164, 64
  %v1316 = vpop.permute.xlu0 %1315
  %1317 = vrot.lane.b32.xlu0 %v1222, 64
  %v1318 = vpop.permute.xlu0 %1317
  %1319 = vrot.lane.b32.xlu0 %v1224, 64
  %v1320 = vpop.permute.xlu0 %1319
  %1321 = vrot.lane.b32.xlu0 %v1226, 64
  %v1322 = vpop.permute.xlu0 %1321
  %1323 = vrot.lane.b32.xlu0 %v1228, 64
  %v1324 = vpop.permute.xlu0 %1323
  %1325 = vrot.lane.b32.xlu0 %v1230, 64
  %v1326 = vpop.permute.xlu0 %1325
  %1327 = vrot.lane.b32.xlu0 %v1232, 64
  %v1328 = vpop.permute.xlu0 %1327
  %1329 = vrot.lane.b32.xlu0 %v1234, 64
  %v1330 = vpop.permute.xlu0 %1329
  %1331 = vrot.lane.b32.xlu0 %v1236, 64
  %v1332 = vpop.permute.xlu0 %1331
  %1333 = vrot.lane.b32.xlu0 %v1238, 64
  %v1334 = vpop.permute.xlu0 %1333
  %1335 = vrot.lane.b32.xlu0 %v1240, 64
  %v1336 = vpop.permute.xlu0 %1335
  %1337 = vrot.lane.b32.xlu0 %v1242, 64
  %v1338 = vpop.permute.xlu0 %1337
  %1339 = vrot.lane.b32.xlu0 %v1244, 64
  %v1340 = vpop.permute.xlu0 %1339
  %1341 = vrot.lane.b32.xlu0 %v1246, 64
  %v1342 = vpop.permute.xlu0 %1341
  %1343 = vrot.lane.b32.xlu0 %v1248, 64
  %v1344 = vpop.permute.xlu0 %1343
  %1345 = vrot.lane.b32.xlu0 %v1250, 64
  %v1346 = vpop.permute.xlu0 %1345
  %1347 = vrot.lane.b32.xlu0 %v1252, 64
  %v1348 = vpop.permute.xlu0 %1347
  %v1381 = vsel %vm562, %v1286, 0.0
  %1382 = vadd.xlane.f32.xlu0 %v1381
  %v1383 = vpop.xlane.xlu0 %1382
  %v1384 = vsel %vm562, %v1288, 0.0
  %1385 = vadd.xlane.f32.xlu0 %v1384
  %v1386 = vpop.xlane.xlu0 %1385
  %v1387 = vsel %vm562, %v1290, 0.0
  %1388 = vadd.xlane.f32.xlu0 %v1387
  %v1389 = vpop.xlane.xlu0 %1388
  %v1390 = vsel %vm562, %v1292, 0.0
  %1391 = vadd.xlane.f32.xlu0 %v1390
  %v1392 = vpop.xlane.xlu0 %1391
  %v1393 = vsel %vm562, %v1294, 0.0
  %1394 = vadd.xlane.f32.xlu0 %v1393
  %v1395 = vpop.xlane.xlu0 %1394
  %v1396 = vsel %vm562, %v1296, 0.0
  %1397 = vadd.xlane.f32.xlu0 %v1396
  %v1398 = vpop.xlane.xlu0 %1397
  %v1399 = vsel %vm562, %v1298, 0.0
  %1400 = vadd.xlane.f32.xlu0 %v1399
  %v1401 = vpop.xlane.xlu0 %1400
  %v1402 = vsel %vm562, %v1300, 0.0
  %1403 = vadd.xlane.f32.xlu0 %v1402
  %v1404 = vpop.xlane.xlu0 %1403
  %v1405 = vsel %vm562, %v1302, 0.0
  %1406 = vadd.xlane.f32.xlu0 %v1405
  %v1407 = vpop.xlane.xlu0 %1406
  %v1408 = vsel %vm562, %v1304, 0.0
  %1409 = vadd.xlane.f32.xlu0 %v1408
  %v1410 = vpop.xlane.xlu0 %1409
  %v1411 = vsel %vm562, %v1306, 0.0
  %1412 = vadd.xlane.f32.xlu0 %v1411
  %v1413 = vpop.xlane.xlu0 %1412
  %v1414 = vsel %vm562, %v1308, 0.0
  %1415 = vadd.xlane.f32.xlu0 %v1414
  %v1416 = vpop.xlane.xlu0 %1415
  %v1417 = vsel %vm562, %v1310, 0.0
  %1418 = vadd.xlane.f32.xlu0 %v1417
  %v1419 = vpop.xlane.xlu0 %1418
  %v1420 = vsel %vm562, %v1312, 0.0
  %1421 = vadd.xlane.f32.xlu0 %v1420
  %v1422 = vpop.xlane.xlu0 %1421
  %v1423 = vsel %vm562, %v1314, 0.0
  %1424 = vadd.xlane.f32.xlu0 %v1423
  %v1425 = vpop.xlane.xlu0 %1424
  %v1426 = vsel %vm562, %v1316, 0.0
  %1427 = vadd.xlane.f32.xlu0 %v1426
  %v1428 = vpop.xlane.xlu0 %1427
  %v1429 = vsel %vm562, %v1318, 0.0
  %1430 = vadd.xlane.f32.xlu0 %v1429
  %v1431 = vpop.xlane.xlu0 %1430
  %v1432 = vsel %vm562, %v1320, 0.0
  %1433 = vadd.xlane.f32.xlu0 %v1432
  %v1434 = vpop.xlane.xlu0 %1433
  %v1435 = vsel %vm562, %v1322, 0.0
  %1436 = vadd.xlane.f32.xlu0 %v1435
  %v1437 = vpop.xlane.xlu0 %1436
  %v1438 = vsel %vm562, %v1324, 0.0
  %1439 = vadd.xlane.f32.xlu0 %v1438
  %v1440 = vpop.xlane.xlu0 %1439
  %v1441 = vsel %vm562, %v1326, 0.0
  %1442 = vadd.xlane.f32.xlu0 %v1441
  %v1443 = vpop.xlane.xlu0 %1442
  %v1444 = vsel %vm562, %v1328, 0.0
  %1445 = vadd.xlane.f32.xlu0 %v1444
  %v1446 = vpop.xlane.xlu0 %1445
  %v1447 = vsel %vm562, %v1330, 0.0
  %1448 = vadd.xlane.f32.xlu0 %v1447
  %v1449 = vpop.xlane.xlu0 %1448
  %v1450 = vsel %vm562, %v1332, 0.0
  %1451 = vadd.xlane.f32.xlu0 %v1450
  %v1452 = vpop.xlane.xlu0 %1451
  %v1453 = vsel %vm562, %v1334, 0.0
  %1454 = vadd.xlane.f32.xlu0 %v1453
  %v1455 = vpop.xlane.xlu0 %1454
  %v1456 = vsel %vm562, %v1336, 0.0
  %1457 = vadd.xlane.f32.xlu0 %v1456
  %v1458 = vpop.xlane.xlu0 %1457
  %v1459 = vsel %vm562, %v1338, 0.0
  %1460 = vadd.xlane.f32.xlu0 %v1459
  %v1461 = vpop.xlane.xlu0 %1460
  %v1462 = vsel %vm562, %v1340, 0.0
  %1463 = vadd.xlane.f32.xlu0 %v1462
  %v1464 = vpop.xlane.xlu0 %1463
  %v1465 = vsel %vm562, %v1342, 0.0
  %1466 = vadd.xlane.f32.xlu0 %v1465
  %v1467 = vpop.xlane.xlu0 %1466
  %v1468 = vsel %vm562, %v1344, 0.0
  %1469 = vadd.xlane.f32.xlu0 %v1468
  %v1470 = vpop.xlane.xlu0 %1469
  %v1471 = vsel %vm562, %v1346, 0.0
  %1472 = vadd.xlane.f32.xlu0 %v1471
  %v1473 = vpop.xlane.xlu0 %1472
  %v1474 = vsel %vm562, %v1348, 0.0
  %1475 = vadd.xlane.f32.xlu0 %v1474
  %v1476 = vpop.xlane.xlu0 %1475
  %v1477 = vmul.f32 %v1383, %v617
  %v1478 = vmul.f32 %v1386, %v617
  %v1479 = vmul.f32 %v1389, %v617
  %v1480 = vmul.f32 %v1392, %v617
  %v1481 = vmul.f32 %v1395, %v617
  %v1482 = vmul.f32 %v1398, %v617
  %v1483 = vmul.f32 %v1401, %v617
  %v1484 = vmul.f32 %v1404, %v617
  %v1485 = vmul.f32 %v1407, %v617
  %v1486 = vmul.f32 %v1410, %v617
  %v1487 = vmul.f32 %v1413, %v617
  %v1488 = vmul.f32 %v1416, %v617
  %v1489 = vmul.f32 %v1419, %v617
  %v1490 = vmul.f32 %v1422, %v617
  %v1491 = vmul.f32 %v1425, %v617
  %v1492 = vmul.f32 %v1428, %v617
  %v1493 = vmul.f32 %v1431, %v617
  %v1494 = vmul.f32 %v1434, %v617
  %v1495 = vmul.f32 %v1437, %v617
  %v1496 = vmul.f32 %v1440, %v617
  %v1497 = vmul.f32 %v1443, %v617
  %v1498 = vmul.f32 %v1446, %v617
  %v1499 = vmul.f32 %v1449, %v617
  %v1500 = vmul.f32 %v1452, %v617
  %v1501 = vmul.f32 %v1455, %v617
  %v1502 = vmul.f32 %v1458, %v617
  %v1503 = vmul.f32 %v1461, %v617
  %v1504 = vmul.f32 %v1464, %v617
  %v1505 = vmul.f32 %v1467, %v617
  %v1506 = vmul.f32 %v1470, %v617
  %v1507 = vmul.f32 %v1473, %v617
  %v1508 = vmul.f32 %v1476, %v617
  %v1509 = vmul.f32 %v1149, %v1149
  %v1510 = vmul.f32 %v1150, %v1150
  %v1511 = vmul.f32 %v1151, %v1151
  %v1512 = vmul.f32 %v1152, %v1152
  %v1513 = vmul.f32 %v1153, %v1153
  %v1514 = vmul.f32 %v1154, %v1154
  %v1515 = vmul.f32 %v1155, %v1155
  %v1516 = vmul.f32 %v1156, %v1156
  %v1517 = vmul.f32 %v1157, %v1157
  %v1518 = vmul.f32 %v1158, %v1158
  %v1519 = vmul.f32 %v1159, %v1159
  %v1520 = vmul.f32 %v1160, %v1160
  %v1521 = vmul.f32 %v1161, %v1161
  %v1522 = vmul.f32 %v1162, %v1162
  %v1523 = vmul.f32 %v1163, %v1163
  %v1524 = vmul.f32 %v1164, %v1164
  %v1525 = vmul.f32 %v1222, %v1222
  %v1526 = vmul.f32 %v1224, %v1224
  %v1527 = vmul.f32 %v1226, %v1226
  %v1528 = vmul.f32 %v1228, %v1228
  %v1529 = vmul.f32 %v1230, %v1230
  %v1530 = vmul.f32 %v1232, %v1232
  %v1531 = vmul.f32 %v1234, %v1234
  %v1532 = vmul.f32 %v1236, %v1236
  %v1533 = vmul.f32 %v1238, %v1238
  %v1534 = vmul.f32 %v1240, %v1240
  %v1535 = vmul.f32 %v1242, %v1242
  %v1536 = vmul.f32 %v1244, %v1244
  %v1537 = vmul.f32 %v1246, %v1246
  %v1538 = vmul.f32 %v1248, %v1248
  %v1539 = vmul.f32 %v1250, %v1250
  %v1540 = vmul.f32 %v1252, %v1252
  %1573 = vrot.lane.b32.xlu0 %v1509, 64
  %v1574 = vpop.permute.xlu0 %1573
  %1575 = vrot.lane.b32.xlu0 %v1510, 64
  %v1576 = vpop.permute.xlu0 %1575
  %1577 = vrot.lane.b32.xlu0 %v1511, 64
  %v1578 = vpop.permute.xlu0 %1577
  %1579 = vrot.lane.b32.xlu0 %v1512, 64
  %v1580 = vpop.permute.xlu0 %1579
  %1581 = vrot.lane.b32.xlu0 %v1513, 64
  %v1582 = vpop.permute.xlu0 %1581
  %1583 = vrot.lane.b32.xlu0 %v1514, 64
  %v1584 = vpop.permute.xlu0 %1583
  %1585 = vrot.lane.b32.xlu0 %v1515, 64
  %v1586 = vpop.permute.xlu0 %1585
  %1587 = vrot.lane.b32.xlu0 %v1516, 64
  %v1588 = vpop.permute.xlu0 %1587
  %1589 = vrot.lane.b32.xlu0 %v1517, 64
  %v1590 = vpop.permute.xlu0 %1589
  %1591 = vrot.lane.b32.xlu0 %v1518, 64
  %v1592 = vpop.permute.xlu0 %1591
  %1593 = vrot.lane.b32.xlu0 %v1519, 64
  %v1594 = vpop.permute.xlu0 %1593
  %1595 = vrot.lane.b32.xlu0 %v1520, 64
  %v1596 = vpop.permute.xlu0 %1595
  %1597 = vrot.lane.b32.xlu0 %v1521, 64
  %v1598 = vpop.permute.xlu0 %1597
  %1599 = vrot.lane.b32.xlu0 %v1522, 64
  %v1600 = vpop.permute.xlu0 %1599
  %1601 = vrot.lane.b32.xlu0 %v1523, 64
  %v1602 = vpop.permute.xlu0 %1601
  %1603 = vrot.lane.b32.xlu0 %v1524, 64
  %v1604 = vpop.permute.xlu0 %1603
  %1605 = vrot.lane.b32.xlu0 %v1525, 64
  %v1606 = vpop.permute.xlu0 %1605
  %1607 = vrot.lane.b32.xlu0 %v1526, 64
  %v1608 = vpop.permute.xlu0 %1607
  %1609 = vrot.lane.b32.xlu0 %v1527, 64
  %v1610 = vpop.permute.xlu0 %1609
  %1611 = vrot.lane.b32.xlu0 %v1528, 64
  %v1612 = vpop.permute.xlu0 %1611
  %1613 = vrot.lane.b32.xlu0 %v1529, 64
  %v1614 = vpop.permute.xlu0 %1613
  %1615 = vrot.lane.b32.xlu0 %v1530, 64
  %v1616 = vpop.permute.xlu0 %1615
  %1617 = vrot.lane.b32.xlu0 %v1531, 64
  %v1618 = vpop.permute.xlu0 %1617
  %1619 = vrot.lane.b32.xlu0 %v1532, 64
  %v1620 = vpop.permute.xlu0 %1619
  %1621 = vrot.lane.b32.xlu0 %v1533, 64
  %v1622 = vpop.permute.xlu0 %1621
  %1623 = vrot.lane.b32.xlu0 %v1534, 64
  %v1624 = vpop.permute.xlu0 %1623
  %1625 = vrot.lane.b32.xlu0 %v1535, 64
  %v1626 = vpop.permute.xlu0 %1625
  %1627 = vrot.lane.b32.xlu0 %v1536, 64
  %v1628 = vpop.permute.xlu0 %1627
  %1629 = vrot.lane.b32.xlu0 %v1537, 64
  %v1630 = vpop.permute.xlu0 %1629
  %1631 = vrot.lane.b32.xlu0 %v1538, 64
  %v1632 = vpop.permute.xlu0 %1631
  %1633 = vrot.lane.b32.xlu0 %v1539, 64
  %v1634 = vpop.permute.xlu0 %1633
  %1635 = vrot.lane.b32.xlu0 %v1540, 64
  %v1636 = vpop.permute.xlu0 %1635
  %v1669 = vsel %vm562, %v1574, 0.0
  %1670 = vadd.xlane.f32.xlu0 %v1669
  %v1671 = vpop.xlane.xlu0 %1670
  %v1672 = vsel %vm562, %v1576, 0.0
  %1673 = vadd.xlane.f32.xlu0 %v1672
  %v1674 = vpop.xlane.xlu0 %1673
  %v1675 = vsel %vm562, %v1578, 0.0
  %1676 = vadd.xlane.f32.xlu0 %v1675
  %v1677 = vpop.xlane.xlu0 %1676
  %v1678 = vsel %vm562, %v1580, 0.0
  %1679 = vadd.xlane.f32.xlu0 %v1678
  %v1680 = vpop.xlane.xlu0 %1679
  %v1681 = vsel %vm562, %v1582, 0.0
  %1682 = vadd.xlane.f32.xlu0 %v1681
  %v1683 = vpop.xlane.xlu0 %1682
  %v1684 = vsel %vm562, %v1584, 0.0
  %1685 = vadd.xlane.f32.xlu0 %v1684
  %v1686 = vpop.xlane.xlu0 %1685
  %v1687 = vsel %vm562, %v1586, 0.0
  %1688 = vadd.xlane.f32.xlu0 %v1687
  %v1689 = vpop.xlane.xlu0 %1688
  %v1690 = vsel %vm562, %v1588, 0.0
  %1691 = vadd.xlane.f32.xlu0 %v1690
  %v1692 = vpop.xlane.xlu0 %1691
  %v1693 = vsel %vm562, %v1590, 0.0
  %1694 = vadd.xlane.f32.xlu0 %v1693
  %v1695 = vpop.xlane.xlu0 %1694
  %v1696 = vsel %vm562, %v1592, 0.0
  %1697 = vadd.xlane.f32.xlu0 %v1696
  %v1698 = vpop.xlane.xlu0 %1697
  %v1699 = vsel %vm562, %v1594, 0.0
  %1700 = vadd.xlane.f32.xlu0 %v1699
  %v1701 = vpop.xlane.xlu0 %1700
  %v1702 = vsel %vm562, %v1596, 0.0
  %1703 = vadd.xlane.f32.xlu0 %v1702
  %v1704 = vpop.xlane.xlu0 %1703
  %v1705 = vsel %vm562, %v1598, 0.0
  %1706 = vadd.xlane.f32.xlu0 %v1705
  %v1707 = vpop.xlane.xlu0 %1706
  %v1708 = vsel %vm562, %v1600, 0.0
  %1709 = vadd.xlane.f32.xlu0 %v1708
  %v1710 = vpop.xlane.xlu0 %1709
  %v1711 = vsel %vm562, %v1602, 0.0
  %1712 = vadd.xlane.f32.xlu0 %v1711
  %v1713 = vpop.xlane.xlu0 %1712
  %v1714 = vsel %vm562, %v1604, 0.0
  %1715 = vadd.xlane.f32.xlu0 %v1714
  %v1716 = vpop.xlane.xlu0 %1715
  %v1717 = vsel %vm562, %v1606, 0.0
  %1718 = vadd.xlane.f32.xlu0 %v1717
  %v1719 = vpop.xlane.xlu0 %1718
  %v1720 = vsel %vm562, %v1608, 0.0
  %1721 = vadd.xlane.f32.xlu0 %v1720
  %v1722 = vpop.xlane.xlu0 %1721
  %v1723 = vsel %vm562, %v1610, 0.0
  %1724 = vadd.xlane.f32.xlu0 %v1723
  %v1725 = vpop.xlane.xlu0 %1724
  %v1726 = vsel %vm562, %v1612, 0.0
  %1727 = vadd.xlane.f32.xlu0 %v1726
  %v1728 = vpop.xlane.xlu0 %1727
  %v1729 = vsel %vm562, %v1614, 0.0
  %1730 = vadd.xlane.f32.xlu0 %v1729
  %v1731 = vpop.xlane.xlu0 %1730
  %v1732 = vsel %vm562, %v1616, 0.0
  %1733 = vadd.xlane.f32.xlu0 %v1732
  %v1734 = vpop.xlane.xlu0 %1733
  %v1735 = vsel %vm562, %v1618, 0.0
  %1736 = vadd.xlane.f32.xlu0 %v1735
  %v1737 = vpop.xlane.xlu0 %1736
  %v1738 = vsel %vm562, %v1620, 0.0
  %1739 = vadd.xlane.f32.xlu0 %v1738
  %v1740 = vpop.xlane.xlu0 %1739
  %v1741 = vsel %vm562, %v1622, 0.0
  %1742 = vadd.xlane.f32.xlu0 %v1741
  %v1743 = vpop.xlane.xlu0 %1742
  %v1744 = vsel %vm562, %v1624, 0.0
  %1745 = vadd.xlane.f32.xlu0 %v1744
  %v1746 = vpop.xlane.xlu0 %1745
  %v1747 = vsel %vm562, %v1626, 0.0
  %1748 = vadd.xlane.f32.xlu0 %v1747
  %v1749 = vpop.xlane.xlu0 %1748
  %v1750 = vsel %vm562, %v1628, 0.0
  %1751 = vadd.xlane.f32.xlu0 %v1750
  %v1752 = vpop.xlane.xlu0 %1751
  %v1753 = vsel %vm562, %v1630, 0.0
  %1754 = vadd.xlane.f32.xlu0 %v1753
  %v1755 = vpop.xlane.xlu0 %1754
  %v1756 = vsel %vm562, %v1632, 0.0
  %1757 = vadd.xlane.f32.xlu0 %v1756
  %v1758 = vpop.xlane.xlu0 %1757
  %v1759 = vsel %vm562, %v1634, 0.0
  %1760 = vadd.xlane.f32.xlu0 %v1759
  %v1761 = vpop.xlane.xlu0 %1760
  %v1762 = vsel %vm562, %v1636, 0.0
  %1763 = vadd.xlane.f32.xlu0 %v1762
  %v1764 = vpop.xlane.xlu0 %1763
  %v1765 = vmul.f32 %v1671, %v617
  %v1766 = vmul.f32 %v1674, %v617
  %v1767 = vmul.f32 %v1677, %v617
  %v1768 = vmul.f32 %v1680, %v617
  %v1769 = vmul.f32 %v1683, %v617
  %v1770 = vmul.f32 %v1686, %v617
  %v1771 = vmul.f32 %v1689, %v617
  %v1772 = vmul.f32 %v1692, %v617
  %v1773 = vmul.f32 %v1695, %v617
  %v1774 = vmul.f32 %v1698, %v617
  %v1775 = vmul.f32 %v1701, %v617
  %v1776 = vmul.f32 %v1704, %v617
  %v1777 = vmul.f32 %v1707, %v617
  %v1778 = vmul.f32 %v1710, %v617
  %v1779 = vmul.f32 %v1713, %v617
  %v1780 = vmul.f32 %v1716, %v617
  %v1781 = vmul.f32 %v1719, %v617
  %v1782 = vmul.f32 %v1722, %v617
  %v1783 = vmul.f32 %v1725, %v617
  %v1784 = vmul.f32 %v1728, %v617
  %v1785 = vmul.f32 %v1731, %v617
  %v1786 = vmul.f32 %v1734, %v617
  %v1787 = vmul.f32 %v1737, %v617
  %v1788 = vmul.f32 %v1740, %v617
  %v1789 = vmul.f32 %v1743, %v617
  %v1790 = vmul.f32 %v1746, %v617
  %v1791 = vmul.f32 %v1749, %v617
  %v1792 = vmul.f32 %v1752, %v617
  %v1793 = vmul.f32 %v1755, %v617
  %v1794 = vmul.f32 %v1758, %v617
  %v1795 = vmul.f32 %v1761, %v617
  %v1796 = vmul.f32 %v1764, %v617
  %v1797 = vmul.f32 %v1477, %v1477
  %v1798 = vmul.f32 %v1478, %v1478
  %v1799 = vmul.f32 %v1479, %v1479
  %v1800 = vmul.f32 %v1480, %v1480
  %v1801 = vmul.f32 %v1481, %v1481
  %v1802 = vmul.f32 %v1482, %v1482
  %v1803 = vmul.f32 %v1483, %v1483
  %v1804 = vmul.f32 %v1484, %v1484
  %v1805 = vmul.f32 %v1485, %v1485
  %v1806 = vmul.f32 %v1486, %v1486
  %v1807 = vmul.f32 %v1487, %v1487
  %v1808 = vmul.f32 %v1488, %v1488
  %v1809 = vmul.f32 %v1489, %v1489
  %v1810 = vmul.f32 %v1490, %v1490
  %v1811 = vmul.f32 %v1491, %v1491
  %v1812 = vmul.f32 %v1492, %v1492
  %v1813 = vmul.f32 %v1493, %v1493
  %v1814 = vmul.f32 %v1494, %v1494
  %v1815 = vmul.f32 %v1495, %v1495
  %v1816 = vmul.f32 %v1496, %v1496
  %v1817 = vmul.f32 %v1497, %v1497
  %v1818 = vmul.f32 %v1498, %v1498
  %v1819 = vmul.f32 %v1499, %v1499
  %v1820 = vmul.f32 %v1500, %v1500
  %v1821 = vmul.f32 %v1501, %v1501
  %v1822 = vmul.f32 %v1502, %v1502
  %v1823 = vmul.f32 %v1503, %v1503
  %v1824 = vmul.f32 %v1504, %v1504
  %v1825 = vmul.f32 %v1505, %v1505
  %v1826 = vmul.f32 %v1506, %v1506
  %v1827 = vmul.f32 %v1507, %v1507
  %v1828 = vmul.f32 %v1508, %v1508
  %v1829 = vsub.f32 %v1765, %v1797
  %v1830 = vsub.f32 %v1766, %v1798
  %v1831 = vsub.f32 %v1767, %v1799
  %v1832 = vsub.f32 %v1768, %v1800
  %v1833 = vsub.f32 %v1769, %v1801
  %v1834 = vsub.f32 %v1770, %v1802
  %v1835 = vsub.f32 %v1771, %v1803
  %v1836 = vsub.f32 %v1772, %v1804
  %v1837 = vsub.f32 %v1773, %v1805
  %v1838 = vsub.f32 %v1774, %v1806
  %v1839 = vsub.f32 %v1775, %v1807
  %v1840 = vsub.f32 %v1776, %v1808
  %v1841 = vsub.f32 %v1777, %v1809
  %v1842 = vsub.f32 %v1778, %v1810
  %v1843 = vsub.f32 %v1779, %v1811
  %v1844 = vsub.f32 %v1780, %v1812
  %v1845 = vsub.f32 %v1781, %v1813
  %v1846 = vsub.f32 %v1782, %v1814
  %v1847 = vsub.f32 %v1783, %v1815
  %v1848 = vsub.f32 %v1784, %v1816
  %v1849 = vsub.f32 %v1785, %v1817
  %v1850 = vsub.f32 %v1786, %v1818
  %v1851 = vsub.f32 %v1787, %v1819
  %v1852 = vsub.f32 %v1788, %v1820
  %v1853 = vsub.f32 %v1789, %v1821
  %v1854 = vsub.f32 %v1790, %v1822
  %v1855 = vsub.f32 %v1791, %v1823
  %v1856 = vsub.f32 %v1792, %v1824
  %v1857 = vsub.f32 %v1793, %v1825
  %v1858 = vsub.f32 %v1794, %v1826
  %v1859 = vsub.f32 %v1795, %v1827
  %v1860 = vsub.f32 %v1796, %v1828
  %v1861 = vmax.f32 %v1829, 0.0
  %v1862 = vmax.f32 %v1830, 0.0
  %v1863 = vmax.f32 %v1831, 0.0
  %v1864 = vmax.f32 %v1832, 0.0
  %v1865 = vmax.f32 %v1833, 0.0
  %v1866 = vmax.f32 %v1834, 0.0
  %v1867 = vmax.f32 %v1835, 0.0
  %v1868 = vmax.f32 %v1836, 0.0
  %v1869 = vmax.f32 %v1837, 0.0
  %v1870 = vmax.f32 %v1838, 0.0
  %v1871 = vmax.f32 %v1839, 0.0
  %v1872 = vmax.f32 %v1840, 0.0
  %v1873 = vmax.f32 %v1841, 0.0
  %v1874 = vmax.f32 %v1842, 0.0
  %v1875 = vmax.f32 %v1843, 0.0
  %v1876 = vmax.f32 %v1844, 0.0
  %v1877 = vmax.f32 %v1845, 0.0
  %v1878 = vmax.f32 %v1846, 0.0
  %v1879 = vmax.f32 %v1847, 0.0
  %v1880 = vmax.f32 %v1848, 0.0
  %v1881 = vmax.f32 %v1849, 0.0
  %v1882 = vmax.f32 %v1850, 0.0
  %v1883 = vmax.f32 %v1851, 0.0
  %v1884 = vmax.f32 %v1852, 0.0
  %v1885 = vmax.f32 %v1853, 0.0
  %v1886 = vmax.f32 %v1854, 0.0
  %v1887 = vmax.f32 %v1855, 0.0
  %v1888 = vmax.f32 %v1856, 0.0
  %v1889 = vmax.f32 %v1857, 0.0
  %v1890 = vmax.f32 %v1858, 0.0
  %v1891 = vmax.f32 %v1859, 0.0
  %v1892 = vmax.f32 %v1860, 0.0
  %v1893 = vsub.f32 %v1149, %v1477
  %v1894 = vsub.f32 %v1150, %v1478
  %v1895 = vsub.f32 %v1151, %v1479
  %v1896 = vsub.f32 %v1152, %v1480
  %v1897 = vsub.f32 %v1153, %v1481
  %v1898 = vsub.f32 %v1154, %v1482
  %v1899 = vsub.f32 %v1155, %v1483
  %v1900 = vsub.f32 %v1156, %v1484
  %v1901 = vsub.f32 %v1157, %v1485
  %v1902 = vsub.f32 %v1158, %v1486
  %v1903 = vsub.f32 %v1159, %v1487
  %v1904 = vsub.f32 %v1160, %v1488
  %v1905 = vsub.f32 %v1161, %v1489
  %v1906 = vsub.f32 %v1162, %v1490
  %v1907 = vsub.f32 %v1163, %v1491
  %v1908 = vsub.f32 %v1164, %v1492
  %v1909 = vsub.f32 %v1222, %v1493
  %v1910 = vsub.f32 %v1224, %v1494
  %v1911 = vsub.f32 %v1226, %v1495
  %v1912 = vsub.f32 %v1228, %v1496
  %v1913 = vsub.f32 %v1230, %v1497
  %v1914 = vsub.f32 %v1232, %v1498
  %v1915 = vsub.f32 %v1234, %v1499
  %v1916 = vsub.f32 %v1236, %v1500
  %v1917 = vsub.f32 %v1238, %v1501
  %v1918 = vsub.f32 %v1240, %v1502
  %v1919 = vsub.f32 %v1242, %v1503
  %v1920 = vsub.f32 %v1244, %v1504
  %v1921 = vsub.f32 %v1246, %v1505
  %v1922 = vsub.f32 %v1248, %v1506
  %v1923 = vsub.f32 %v1250, %v1507
  %v1924 = vsub.f32 %v1252, %v1508
  %v1925 = vadd.f32 %v1861, 1e-05
  %v1926 = vadd.f32 %v1862, 1e-05
  %v1927 = vadd.f32 %v1863, 1e-05
  %v1928 = vadd.f32 %v1864, 1e-05
  %v1929 = vadd.f32 %v1865, 1e-05
  %v1930 = vadd.f32 %v1866, 1e-05
  %v1931 = vadd.f32 %v1867, 1e-05
  %v1932 = vadd.f32 %v1868, 1e-05
  %v1933 = vadd.f32 %v1869, 1e-05
  %v1934 = vadd.f32 %v1870, 1e-05
  %v1935 = vadd.f32 %v1871, 1e-05
  %v1936 = vadd.f32 %v1872, 1e-05
  %v1937 = vadd.f32 %v1873, 1e-05
  %v1938 = vadd.f32 %v1874, 1e-05
  %v1939 = vadd.f32 %v1875, 1e-05
  %v1940 = vadd.f32 %v1876, 1e-05
  %v1941 = vadd.f32 %v1877, 1e-05
  %v1942 = vadd.f32 %v1878, 1e-05
  %v1943 = vadd.f32 %v1879, 1e-05
  %v1944 = vadd.f32 %v1880, 1e-05
  %v1945 = vadd.f32 %v1881, 1e-05
  %v1946 = vadd.f32 %v1882, 1e-05
  %v1947 = vadd.f32 %v1883, 1e-05
  %v1948 = vadd.f32 %v1884, 1e-05
  %v1949 = vadd.f32 %v1885, 1e-05
  %v1950 = vadd.f32 %v1886, 1e-05
  %v1951 = vadd.f32 %v1887, 1e-05
  %v1952 = vadd.f32 %v1888, 1e-05
  %v1953 = vadd.f32 %v1889, 1e-05
  %v1954 = vadd.f32 %v1890, 1e-05
  %v1955 = vadd.f32 %v1891, 1e-05
  %v1956 = vadd.f32 %v1892, 1e-05
  %v1957 = vrsqrt.pop %v1925
  %v1958 = vmul.f32 %v1957, %v1925
  %v1959 = vmul.f32 %v1958, %v1957
  %v1960 = vmul.f32 0.5, %v1959
  %v1961 = vsub.f32 1.5, %v1960
  %v1962 = vmul.f32 %v1957, %v1961
  %vm1963 = vweird.f32 %v1925
  %vm1964 = vweird.f32 %v1957
  %vm1965 = vmor %vm1963, %vm1964
  %v1966 = vsel %vm1965, %v1957, %v1962
  %v1967 = vrsqrt.pop %v1926
  %v1968 = vmul.f32 %v1967, %v1926
  %v1969 = vmul.f32 %v1968, %v1967
  %v1970 = vmul.f32 0.5, %v1969
  %v1971 = vsub.f32 1.5, %v1970
  %v1972 = vmul.f32 %v1967, %v1971
  %vm1973 = vweird.f32 %v1926
  %vm1974 = vweird.f32 %v1967
  %vm1975 = vmor %vm1973, %vm1974
  %v1976 = vsel %vm1975, %v1967, %v1972
  %v1977 = vrsqrt.pop %v1927
  %v1978 = vmul.f32 %v1977, %v1927
  %v1979 = vmul.f32 %v1978, %v1977
  %v1980 = vmul.f32 0.5, %v1979
  %v1981 = vsub.f32 1.5, %v1980
  %v1982 = vmul.f32 %v1977, %v1981
  %vm1983 = vweird.f32 %v1927
  %vm1984 = vweird.f32 %v1977
  %vm1985 = vmor %vm1983, %vm1984
  %v1986 = vsel %vm1985, %v1977, %v1982
  %v1987 = vrsqrt.pop %v1928
  %v1988 = vmul.f32 %v1987, %v1928
  %v1989 = vmul.f32 %v1988, %v1987
  %v1990 = vmul.f32 0.5, %v1989
  %v1991 = vsub.f32 1.5, %v1990
  %v1992 = vmul.f32 %v1987, %v1991
  %vm1993 = vweird.f32 %v1928
  %vm1994 = vweird.f32 %v1987
  %vm1995 = vmor %vm1993, %vm1994
  %v1996 = vsel %vm1995, %v1987, %v1992
  %v1997 = vrsqrt.pop %v1929
  %v1998 = vmul.f32 %v1997, %v1929
  %v1999 = vmul.f32 %v1998, %v1997
  %v2000 = vmul.f32 0.5, %v1999
  %v2001 = vsub.f32 1.5, %v2000
  %v2002 = vmul.f32 %v1997, %v2001
  %vm2003 = vweird.f32 %v1929
  %vm2004 = vweird.f32 %v1997
  %vm2005 = vmor %vm2003, %vm2004
  %v2006 = vsel %vm2005, %v1997, %v2002
  %v2007 = vrsqrt.pop %v1930
  %v2008 = vmul.f32 %v2007, %v1930
  %v2009 = vmul.f32 %v2008, %v2007
  %v2010 = vmul.f32 0.5, %v2009
  %v2011 = vsub.f32 1.5, %v2010
  %v2012 = vmul.f32 %v2007, %v2011
  %vm2013 = vweird.f32 %v1930
  %vm2014 = vweird.f32 %v2007
  %vm2015 = vmor %vm2013, %vm2014
  %v2016 = vsel %vm2015, %v2007, %v2012
  %v2017 = vrsqrt.pop %v1931
  %v2018 = vmul.f32 %v2017, %v1931
  %v2019 = vmul.f32 %v2018, %v2017
  %v2020 = vmul.f32 0.5, %v2019
  %v2021 = vsub.f32 1.5, %v2020
  %v2022 = vmul.f32 %v2017, %v2021
  %vm2023 = vweird.f32 %v1931
  %vm2024 = vweird.f32 %v2017
  %vm2025 = vmor %vm2023, %vm2024
  %v2026 = vsel %vm2025, %v2017, %v2022
  %v2027 = vrsqrt.pop %v1932
  %v2028 = vmul.f32 %v2027, %v1932
  %v2029 = vmul.f32 %v2028, %v2027
  %v2030 = vmul.f32 0.5, %v2029
  %v2031 = vsub.f32 1.5, %v2030
  %v2032 = vmul.f32 %v2027, %v2031
  %vm2033 = vweird.f32 %v1932
  %vm2034 = vweird.f32 %v2027
  %vm2035 = vmor %vm2033, %vm2034
  %v2036 = vsel %vm2035, %v2027, %v2032
  %v2037 = vrsqrt.pop %v1933
  %v2038 = vmul.f32 %v2037, %v1933
  %v2039 = vmul.f32 %v2038, %v2037
  %v2040 = vmul.f32 0.5, %v2039
  %v2041 = vsub.f32 1.5, %v2040
  %v2042 = vmul.f32 %v2037, %v2041
  %vm2043 = vweird.f32 %v1933
  %vm2044 = vweird.f32 %v2037
  %vm2045 = vmor %vm2043, %vm2044
  %v2046 = vsel %vm2045, %v2037, %v2042
  %v2047 = vrsqrt.pop %v1934
  %v2048 = vmul.f32 %v2047, %v1934
  %v2049 = vmul.f32 %v2048, %v2047
  %v2050 = vmul.f32 0.5, %v2049
  %v2051 = vsub.f32 1.5, %v2050
  %v2052 = vmul.f32 %v2047, %v2051
  %vm2053 = vweird.f32 %v1934
  %vm2054 = vweird.f32 %v2047
  %vm2055 = vmor %vm2053, %vm2054
  %v2056 = vsel %vm2055, %v2047, %v2052
  %v2057 = vrsqrt.pop %v1935
  %v2058 = vmul.f32 %v2057, %v1935
  %v2059 = vmul.f32 %v2058, %v2057
  %v2060 = vmul.f32 0.5, %v2059
  %v2061 = vsub.f32 1.5, %v2060
  %v2062 = vmul.f32 %v2057, %v2061
  %vm2063 = vweird.f32 %v1935
  %vm2064 = vweird.f32 %v2057
  %vm2065 = vmor %vm2063, %vm2064
  %v2066 = vsel %vm2065, %v2057, %v2062
  %v2067 = vrsqrt.pop %v1936
  %v2068 = vmul.f32 %v2067, %v1936
  %v2069 = vmul.f32 %v2068, %v2067
  %v2070 = vmul.f32 0.5, %v2069
  %v2071 = vsub.f32 1.5, %v2070
  %v2072 = vmul.f32 %v2067, %v2071
  %vm2073 = vweird.f32 %v1936
  %vm2074 = vweird.f32 %v2067
  %vm2075 = vmor %vm2073, %vm2074
  %v2076 = vsel %vm2075, %v2067, %v2072
  %v2077 = vrsqrt.pop %v1937
  %v2078 = vmul.f32 %v2077, %v1937
  %v2079 = vmul.f32 %v2078, %v2077
  %v2080 = vmul.f32 0.5, %v2079
  %v2081 = vsub.f32 1.5, %v2080
  %v2082 = vmul.f32 %v2077, %v2081
  %vm2083 = vweird.f32 %v1937
  %vm2084 = vweird.f32 %v2077
  %vm2085 = vmor %vm2083, %vm2084
  %v2086 = vsel %vm2085, %v2077, %v2082
  %v2087 = vrsqrt.pop %v1938
  %v2088 = vmul.f32 %v2087, %v1938
  %v2089 = vmul.f32 %v2088, %v2087
  %v2090 = vmul.f32 0.5, %v2089
  %v2091 = vsub.f32 1.5, %v2090
  %v2092 = vmul.f32 %v2087, %v2091
  %vm2093 = vweird.f32 %v1938
  %vm2094 = vweird.f32 %v2087
  %vm2095 = vmor %vm2093, %vm2094
  %v2096 = vsel %vm2095, %v2087, %v2092
  %v2097 = vrsqrt.pop %v1939
  %v2098 = vmul.f32 %v2097, %v1939
  %v2099 = vmul.f32 %v2098, %v2097
  %v2100 = vmul.f32 0.5, %v2099
  %v2101 = vsub.f32 1.5, %v2100
  %v2102 = vmul.f32 %v2097, %v2101
  %vm2103 = vweird.f32 %v1939
  %vm2104 = vweird.f32 %v2097
  %vm2105 = vmor %vm2103, %vm2104
  %v2106 = vsel %vm2105, %v2097, %v2102
  %v2107 = vrsqrt.pop %v1940
  %v2108 = vmul.f32 %v2107, %v1940
  %v2109 = vmul.f32 %v2108, %v2107
  %v2110 = vmul.f32 0.5, %v2109
  %v2111 = vsub.f32 1.5, %v2110
  %v2112 = vmul.f32 %v2107, %v2111
  %vm2113 = vweird.f32 %v1940
  %vm2114 = vweird.f32 %v2107
  %vm2115 = vmor %vm2113, %vm2114
  %v2116 = vsel %vm2115, %v2107, %v2112
  %v2117 = vrsqrt.pop %v1941
  %v2118 = vmul.f32 %v2117, %v1941
  %v2119 = vmul.f32 %v2118, %v2117
  %v2120 = vmul.f32 0.5, %v2119
  %v2121 = vsub.f32 1.5, %v2120
  %v2122 = vmul.f32 %v2117, %v2121
  %vm2123 = vweird.f32 %v1941
  %vm2124 = vweird.f32 %v2117
  %vm2125 = vmor %vm2123, %vm2124
  %v2126 = vsel %vm2125, %v2117, %v2122
  %v2127 = vrsqrt.pop %v1942
  %v2128 = vmul.f32 %v2127, %v1942
  %v2129 = vmul.f32 %v2128, %v2127
  %v2130 = vmul.f32 0.5, %v2129
  %v2131 = vsub.f32 1.5, %v2130
  %v2132 = vmul.f32 %v2127, %v2131
  %vm2133 = vweird.f32 %v1942
  %vm2134 = vweird.f32 %v2127
  %vm2135 = vmor %vm2133, %vm2134
  %v2136 = vsel %vm2135, %v2127, %v2132
  %v2137 = vrsqrt.pop %v1943
  %v2138 = vmul.f32 %v2137, %v1943
  %v2139 = vmul.f32 %v2138, %v2137
  %v2140 = vmul.f32 0.5, %v2139
  %v2141 = vsub.f32 1.5, %v2140
  %v2142 = vmul.f32 %v2137, %v2141
  %vm2143 = vweird.f32 %v1943
  %vm2144 = vweird.f32 %v2137
  %vm2145 = vmor %vm2143, %vm2144
  %v2146 = vsel %vm2145, %v2137, %v2142
  %v2147 = vrsqrt.pop %v1944
  %v2148 = vmul.f32 %v2147, %v1944
  %v2149 = vmul.f32 %v2148, %v2147
  %v2150 = vmul.f32 0.5, %v2149
  %v2151 = vsub.f32 1.5, %v2150
  %v2152 = vmul.f32 %v2147, %v2151
  %vm2153 = vweird.f32 %v1944
  %vm2154 = vweird.f32 %v2147
  %vm2155 = vmor %vm2153, %vm2154
  %v2156 = vsel %vm2155, %v2147, %v2152
  %v2157 = vrsqrt.pop %v1945
  %v2158 = vmul.f32 %v2157, %v1945
  %v2159 = vmul.f32 %v2158, %v2157
  %v2160 = vmul.f32 0.5, %v2159
  %v2161 = vsub.f32 1.5, %v2160
  %v2162 = vmul.f32 %v2157, %v2161
  %vm2163 = vweird.f32 %v1945
  %vm2164 = vweird.f32 %v2157
  %vm2165 = vmor %vm2163, %vm2164
  %v2166 = vsel %vm2165, %v2157, %v2162
  %v2167 = vrsqrt.pop %v1946
  %v2168 = vmul.f32 %v2167, %v1946
  %v2169 = vmul.f32 %v2168, %v2167
  %v2170 = vmul.f32 0.5, %v2169
  %v2171 = vsub.f32 1.5, %v2170
  %v2172 = vmul.f32 %v2167, %v2171
  %vm2173 = vweird.f32 %v1946
  %vm2174 = vweird.f32 %v2167
  %vm2175 = vmor %vm2173, %vm2174
  %v2176 = vsel %vm2175, %v2167, %v2172
  %v2177 = vrsqrt.pop %v1947
  %v2178 = vmul.f32 %v2177, %v1947
  %v2179 = vmul.f32 %v2178, %v2177
  %v2180 = vmul.f32 0.5, %v2179
  %v2181 = vsub.f32 1.5, %v2180
  %v2182 = vmul.f32 %v2177, %v2181
  %vm2183 = vweird.f32 %v1947
  %vm2184 = vweird.f32 %v2177
  %vm2185 = vmor %vm2183, %vm2184
  %v2186 = vsel %vm2185, %v2177, %v2182
  %v2187 = vrsqrt.pop %v1948
  %v2188 = vmul.f32 %v2187, %v1948
  %v2189 = vmul.f32 %v2188, %v2187
  %v2190 = vmul.f32 0.5, %v2189
  %v2191 = vsub.f32 1.5, %v2190
  %v2192 = vmul.f32 %v2187, %v2191
  %vm2193 = vweird.f32 %v1948
  %vm2194 = vweird.f32 %v2187
  %vm2195 = vmor %vm2193, %vm2194
  %v2196 = vsel %vm2195, %v2187, %v2192
  %v2197 = vrsqrt.pop %v1949
  %v2198 = vmul.f32 %v2197, %v1949
  %v2199 = vmul.f32 %v2198, %v2197
  %v2200 = vmul.f32 0.5, %v2199
  %v2201 = vsub.f32 1.5, %v2200
  %v2202 = vmul.f32 %v2197, %v2201
  %vm2203 = vweird.f32 %v1949
  %vm2204 = vweird.f32 %v2197
  %vm2205 = vmor %vm2203, %vm2204
  %v2206 = vsel %vm2205, %v2197, %v2202
  %v2207 = vrsqrt.pop %v1950
  %v2208 = vmul.f32 %v2207, %v1950
  %v2209 = vmul.f32 %v2208, %v2207
  %v2210 = vmul.f32 0.5, %v2209
  %v2211 = vsub.f32 1.5, %v2210
  %v2212 = vmul.f32 %v2207, %v2211
  %vm2213 = vweird.f32 %v1950
  %vm2214 = vweird.f32 %v2207
  %vm2215 = vmor %vm2213, %vm2214
  %v2216 = vsel %vm2215, %v2207, %v2212
  %v2217 = vrsqrt.pop %v1951
  %v2218 = vmul.f32 %v2217, %v1951
  %v2219 = vmul.f32 %v2218, %v2217
  %v2220 = vmul.f32 0.5, %v2219
  %v2221 = vsub.f32 1.5, %v2220
  %v2222 = vmul.f32 %v2217, %v2221
  %vm2223 = vweird.f32 %v1951
  %vm2224 = vweird.f32 %v2217
  %vm2225 = vmor %vm2223, %vm2224
  %v2226 = vsel %vm2225, %v2217, %v2222
  %v2227 = vrsqrt.pop %v1952
  %v2228 = vmul.f32 %v2227, %v1952
  %v2229 = vmul.f32 %v2228, %v2227
  %v2230 = vmul.f32 0.5, %v2229
  %v2231 = vsub.f32 1.5, %v2230
  %v2232 = vmul.f32 %v2227, %v2231
  %vm2233 = vweird.f32 %v1952
  %vm2234 = vweird.f32 %v2227
  %vm2235 = vmor %vm2233, %vm2234
  %v2236 = vsel %vm2235, %v2227, %v2232
  %v2237 = vrsqrt.pop %v1953
  %v2238 = vmul.f32 %v2237, %v1953
  %v2239 = vmul.f32 %v2238, %v2237
  %v2240 = vmul.f32 0.5, %v2239
  %v2241 = vsub.f32 1.5, %v2240
  %v2242 = vmul.f32 %v2237, %v2241
  %vm2243 = vweird.f32 %v1953
  %vm2244 = vweird.f32 %v2237
  %vm2245 = vmor %vm2243, %vm2244
  %v2246 = vsel %vm2245, %v2237, %v2242
  %v2247 = vrsqrt.pop %v1954
  %v2248 = vmul.f32 %v2247, %v1954
  %v2249 = vmul.f32 %v2248, %v2247
  %v2250 = vmul.f32 0.5, %v2249
  %v2251 = vsub.f32 1.5, %v2250
  %v2252 = vmul.f32 %v2247, %v2251
  %vm2253 = vweird.f32 %v1954
  %vm2254 = vweird.f32 %v2247
  %vm2255 = vmor %vm2253, %vm2254
  %v2256 = vsel %vm2255, %v2247, %v2252
  %v2257 = vrsqrt.pop %v1955
  %v2258 = vmul.f32 %v2257, %v1955
  %v2259 = vmul.f32 %v2258, %v2257
  %v2260 = vmul.f32 0.5, %v2259
  %v2261 = vsub.f32 1.5, %v2260
  %v2262 = vmul.f32 %v2257, %v2261
  %vm2263 = vweird.f32 %v1955
  %vm2264 = vweird.f32 %v2257
  %vm2265 = vmor %vm2263, %vm2264
  %v2266 = vsel %vm2265, %v2257, %v2262
  %v2267 = vrsqrt.pop %v1956
  %v2268 = vmul.f32 %v2267, %v1956
  %v2269 = vmul.f32 %v2268, %v2267
  %v2270 = vmul.f32 0.5, %v2269
  %v2271 = vsub.f32 1.5, %v2270
  %v2272 = vmul.f32 %v2267, %v2271
  %vm2273 = vweird.f32 %v1956
  %vm2274 = vweird.f32 %v2267
  %vm2275 = vmor %vm2273, %vm2274
  %v2276 = vsel %vm2275, %v2267, %v2272
  %v2277 = vmul.f32 %v1893, %v1966
  %v2278 = vmul.f32 %v1894, %v1976
  %v2279 = vmul.f32 %v1895, %v1986
  %v2280 = vmul.f32 %v1896, %v1996
  %v2281 = vmul.f32 %v1897, %v2006
  %v2282 = vmul.f32 %v1898, %v2016
  %v2283 = vmul.f32 %v1899, %v2026
  %v2284 = vmul.f32 %v1900, %v2036
  %v2285 = vmul.f32 %v1901, %v2046
  %v2286 = vmul.f32 %v1902, %v2056
  %v2287 = vmul.f32 %v1903, %v2066
  %v2288 = vmul.f32 %v1904, %v2076
  %v2289 = vmul.f32 %v1905, %v2086
  %v2290 = vmul.f32 %v1906, %v2096
  %v2291 = vmul.f32 %v1907, %v2106
  %v2292 = vmul.f32 %v1908, %v2116
  %v2293 = vmul.f32 %v1909, %v2126
  %v2294 = vmul.f32 %v1910, %v2136
  %v2295 = vmul.f32 %v1911, %v2146
  %v2296 = vmul.f32 %v1912, %v2156
  %v2297 = vmul.f32 %v1913, %v2166
  %v2298 = vmul.f32 %v1914, %v2176
  %v2299 = vmul.f32 %v1915, %v2186
  %v2300 = vmul.f32 %v1916, %v2196
  %v2301 = vmul.f32 %v1917, %v2206
  %v2302 = vmul.f32 %v1918, %v2216
  %v2303 = vmul.f32 %v1919, %v2226
  %v2304 = vmul.f32 %v1920, %v2236
  %v2305 = vmul.f32 %v1921, %v2246
  %v2306 = vmul.f32 %v1922, %v2256
  %v2307 = vmul.f32 %v1923, %v2266
  %v2308 = vmul.f32 %v1924, %v2276
  %v2309 = vperm.slane %v40, 0
  %2311 = vrot.lane.b32.xlu0 %v2309, 64
  %v2312 = vpop.permute.xlu0 %2311
  %v2314 = vmul.f32 %v2277, %v2312
  %v2315 = vmul.f32 %v2278, %v2312
  %v2316 = vmul.f32 %v2279, %v2312
  %v2317 = vmul.f32 %v2280, %v2312
  %v2318 = vmul.f32 %v2281, %v2312
  %v2319 = vmul.f32 %v2282, %v2312
  %v2320 = vmul.f32 %v2283, %v2312
  %v2321 = vmul.f32 %v2284, %v2312
  %v2322 = vmul.f32 %v2285, %v2312
  %v2323 = vmul.f32 %v2286, %v2312
  %v2324 = vmul.f32 %v2287, %v2312
  %v2325 = vmul.f32 %v2288, %v2312
  %v2326 = vmul.f32 %v2289, %v2312
  %v2327 = vmul.f32 %v2290, %v2312
  %v2328 = vmul.f32 %v2291, %v2312
  %v2329 = vmul.f32 %v2292, %v2312
  %v2330 = vmul.f32 %v2293, %v2312
  %v2331 = vmul.f32 %v2294, %v2312
  %v2332 = vmul.f32 %v2295, %v2312
  %v2333 = vmul.f32 %v2296, %v2312
  %v2334 = vmul.f32 %v2297, %v2312
  %v2335 = vmul.f32 %v2298, %v2312
  %v2336 = vmul.f32 %v2299, %v2312
  %v2337 = vmul.f32 %v2300, %v2312
  %v2338 = vmul.f32 %v2301, %v2312
  %v2339 = vmul.f32 %v2302, %v2312
  %v2340 = vmul.f32 %v2303, %v2312
  %v2341 = vmul.f32 %v2304, %v2312
  %v2342 = vmul.f32 %v2305, %v2312
  %v2343 = vmul.f32 %v2306, %v2312
  %v2344 = vmul.f32 %v2307, %v2312
  %v2345 = vmul.f32 %v2308, %v2312
  %v2346 = vperm.slane %v41, 0
  %2348 = vrot.lane.b32.xlu0 %v2346, 64
  %v2349 = vpop.permute.xlu0 %2348
  %v2351 = vadd.f32 %v2314, %v2349
  %v2352 = vadd.f32 %v2315, %v2349
  %v2353 = vadd.f32 %v2316, %v2349
  %v2354 = vadd.f32 %v2317, %v2349
  %v2355 = vadd.f32 %v2318, %v2349
  %v2356 = vadd.f32 %v2319, %v2349
  %v2357 = vadd.f32 %v2320, %v2349
  %v2358 = vadd.f32 %v2321, %v2349
  %v2359 = vadd.f32 %v2322, %v2349
  %v2360 = vadd.f32 %v2323, %v2349
  %v2361 = vadd.f32 %v2324, %v2349
  %v2362 = vadd.f32 %v2325, %v2349
  %v2363 = vadd.f32 %v2326, %v2349
  %v2364 = vadd.f32 %v2327, %v2349
  %v2365 = vadd.f32 %v2328, %v2349
  %v2366 = vadd.f32 %v2329, %v2349
  %v2367 = vadd.f32 %v2330, %v2349
  %v2368 = vadd.f32 %v2331, %v2349
  %v2369 = vadd.f32 %v2332, %v2349
  %v2370 = vadd.f32 %v2333, %v2349
  %v2371 = vadd.f32 %v2334, %v2349
  %v2372 = vadd.f32 %v2335, %v2349
  %v2373 = vadd.f32 %v2336, %v2349
  %v2374 = vadd.f32 %v2337, %v2349
  %v2375 = vadd.f32 %v2338, %v2349
  %v2376 = vadd.f32 %v2339, %v2349
  %v2377 = vadd.f32 %v2340, %v2349
  %v2378 = vadd.f32 %v2341, %v2349
  %v2379 = vadd.f32 %v2342, %v2349
  %v2380 = vadd.f32 %v2343, %v2349
  %v2381 = vadd.f32 %v2344, %v2349
  %v2382 = vadd.f32 %v2345, %v2349
  %v2383 = vperm.slane %v46, 0
  %2416 = vrot.lane.b32.xlu0 %v2351, 64
  %v2417 = vpop.permute.xlu0 %2416
  %2418 = vrot.lane.b32.xlu0 %v2352, 64
  %v2419 = vpop.permute.xlu0 %2418
  %2420 = vrot.lane.b32.xlu0 %v2353, 64
  %v2421 = vpop.permute.xlu0 %2420
  %2422 = vrot.lane.b32.xlu0 %v2354, 64
  %v2423 = vpop.permute.xlu0 %2422
  %2424 = vrot.lane.b32.xlu0 %v2355, 64
  %v2425 = vpop.permute.xlu0 %2424
  %2426 = vrot.lane.b32.xlu0 %v2356, 64
  %v2427 = vpop.permute.xlu0 %2426
  %2428 = vrot.lane.b32.xlu0 %v2357, 64
  %v2429 = vpop.permute.xlu0 %2428
  %2430 = vrot.lane.b32.xlu0 %v2358, 64
  %v2431 = vpop.permute.xlu0 %2430
  %2432 = vrot.lane.b32.xlu0 %v2359, 64
  %v2433 = vpop.permute.xlu0 %2432
  %2434 = vrot.lane.b32.xlu0 %v2360, 64
  %v2435 = vpop.permute.xlu0 %2434
  %2436 = vrot.lane.b32.xlu0 %v2361, 64
  %v2437 = vpop.permute.xlu0 %2436
  %2438 = vrot.lane.b32.xlu0 %v2362, 64
  %v2439 = vpop.permute.xlu0 %2438
  %2440 = vrot.lane.b32.xlu0 %v2363, 64
  %v2441 = vpop.permute.xlu0 %2440
  %2442 = vrot.lane.b32.xlu0 %v2364, 64
  %v2443 = vpop.permute.xlu0 %2442
  %2444 = vrot.lane.b32.xlu0 %v2365, 64
  %v2445 = vpop.permute.xlu0 %2444
  %2446 = vrot.lane.b32.xlu0 %v2366, 64
  %v2447 = vpop.permute.xlu0 %2446
  %2448 = vrot.lane.b32.xlu0 %v2367, 64
  %v2449 = vpop.permute.xlu0 %2448
  %2450 = vrot.lane.b32.xlu0 %v2368, 64
  %v2451 = vpop.permute.xlu0 %2450
  %2452 = vrot.lane.b32.xlu0 %v2369, 64
  %v2453 = vpop.permute.xlu0 %2452
  %2454 = vrot.lane.b32.xlu0 %v2370, 64
  %v2455 = vpop.permute.xlu0 %2454
  %2456 = vrot.lane.b32.xlu0 %v2371, 64
  %v2457 = vpop.permute.xlu0 %2456
  %2458 = vrot.lane.b32.xlu0 %v2372, 64
  %v2459 = vpop.permute.xlu0 %2458
  %2460 = vrot.lane.b32.xlu0 %v2373, 64
  %v2461 = vpop.permute.xlu0 %2460
  %2462 = vrot.lane.b32.xlu0 %v2374, 64
  %v2463 = vpop.permute.xlu0 %2462
  %2464 = vrot.lane.b32.xlu0 %v2375, 64
  %v2465 = vpop.permute.xlu0 %2464
  %2466 = vrot.lane.b32.xlu0 %v2376, 64
  %v2467 = vpop.permute.xlu0 %2466
  %2468 = vrot.lane.b32.xlu0 %v2377, 64
  %v2469 = vpop.permute.xlu0 %2468
  %2470 = vrot.lane.b32.xlu0 %v2378, 64
  %v2471 = vpop.permute.xlu0 %2470
  %2472 = vrot.lane.b32.xlu0 %v2379, 64
  %v2473 = vpop.permute.xlu0 %2472
  %2474 = vrot.lane.b32.xlu0 %v2380, 64
  %v2475 = vpop.permute.xlu0 %2474
  %2476 = vrot.lane.b32.xlu0 %v2381, 64
  %v2477 = vpop.permute.xlu0 %2476
  %2478 = vrot.lane.b32.xlu0 %v2382, 64
  %v2479 = vpop.permute.xlu0 %2478
  %v2480 = vsel %vm562, %v2417, 0
  %v2482 = vsel %vm562, %v2419, 0
  %v2484 = vsel %vm562, %v2421, 0
  %v2486 = vsel %vm562, %v2423, 0
  %v2488 = vsel %vm562, %v2425, 0
  %v2490 = vsel %vm562, %v2427, 0
  %v2492 = vsel %vm562, %v2429, 0
  %v2494 = vsel %vm562, %v2431, 0
  %v2496 = vsel %vm562, %v2433, 0
  %v2498 = vsel %vm562, %v2435, 0
  %v2500 = vsel %vm562, %v2437, 0
  %v2502 = vsel %vm562, %v2439, 0
  %v2504 = vsel %vm562, %v2441, 0
  %v2506 = vsel %vm562, %v2443, 0
  %v2508 = vsel %vm562, %v2445, 0
  %v2510 = vsel %vm562, %v2447, 0
  %v2512 = vsel %vm562, %v2449, 0
  %v2514 = vsel %vm562, %v2451, 0
  %v2516 = vsel %vm562, %v2453, 0
  %v2518 = vsel %vm562, %v2455, 0
  %v2520 = vsel %vm562, %v2457, 0
  %v2522 = vsel %vm562, %v2459, 0
  %v2524 = vsel %vm562, %v2461, 0
  %v2526 = vsel %vm562, %v2463, 0
  %v2528 = vsel %vm562, %v2465, 0
  %v2530 = vsel %vm562, %v2467, 0
  %v2532 = vsel %vm562, %v2469, 0
  %v2534 = vsel %vm562, %v2471, 0
  %v2536 = vsel %vm562, %v2473, 0
  %v2538 = vsel %vm562, %v2475, 0
  %v2540 = vsel %vm562, %v2477, 0
  %v2542 = vsel %vm562, %v2479, 0
  %2544 = vmatpush.msra.mxu0 0.0
  %2545 = vmatpush.msra.mxu0 0.0
  %2546 = vmatpush.msra.mxu0 0.0
  %2547 = vmatpush.msra.mxu0 0.0
  %2548 = vmatpush.msra.mxu0 0.0
  %2549 = vmatpush.msra.mxu0 0.0
  %2550 = vmatpush.msra.mxu0 0.0
  %2551 = vmatpush.msra.mxu0 0.0
  %2552 = vmatpush.msra.mxu0 0.0
  %2553 = vmatpush.msra.mxu0 0.0
  %2554 = vmatpush.msra.mxu0 0.0
  %2555 = vmatpush.msra.mxu0 0.0
  %2556 = vmatpush.msra.mxu0 %v45
  %2557 = vmatpush.msra.mxu0 %v44
  %2558 = vmatpush.msra.mxu0 %v43
  %2559 = vmatpush.msra.mxu0 %v42
  %2560 = vmatmul.f32.gmra.mxu0 %v2480
  %v2561 = vpop.f32.mrf.mxu0
  %v2562 = vadd.f32 %v2383, %v2561
  %2563 = vmatmul.f32.gmra.mxu0 %v2482
  %v2564 = vpop.f32.mrf.mxu0
  %v2565 = vadd.f32 %v2383, %v2564
  %2566 = vmatmul.f32.gmra.mxu0 %v2484
  %v2567 = vpop.f32.mrf.mxu0
  %v2568 = vadd.f32 %v2383, %v2567
  %2569 = vmatmul.f32.gmra.mxu0 %v2486
  %v2570 = vpop.f32.mrf.mxu0
  %v2571 = vadd.f32 %v2383, %v2570
  %2572 = vmatmul.f32.gmra.mxu0 %v2488
  %v2573 = vpop.f32.mrf.mxu0
  %v2574 = vadd.f32 %v2383, %v2573
  %2575 = vmatmul.f32.gmra.mxu0 %v2490
  %v2576 = vpop.f32.mrf.mxu0
  %v2577 = vadd.f32 %v2383, %v2576
  %2578 = vmatmul.f32.gmra.mxu0 %v2492
  %v2579 = vpop.f32.mrf.mxu0
  %v2580 = vadd.f32 %v2383, %v2579
  %2581 = vmatmul.f32.gmra.mxu0 %v2494
  %v2582 = vpop.f32.mrf.mxu0
  %v2583 = vadd.f32 %v2383, %v2582
  %2584 = vmatmul.f32.gmra.mxu0 %v2496
  %v2585 = vpop.f32.mrf.mxu0
  %v2586 = vadd.f32 %v2383, %v2585
  %2587 = vmatmul.f32.gmra.mxu0 %v2498
  %v2588 = vpop.f32.mrf.mxu0
  %v2589 = vadd.f32 %v2383, %v2588
  %2590 = vmatmul.f32.gmra.mxu0 %v2500
  %v2591 = vpop.f32.mrf.mxu0
  %v2592 = vadd.f32 %v2383, %v2591
  %2593 = vmatmul.f32.gmra.mxu0 %v2502
  %v2594 = vpop.f32.mrf.mxu0
  %v2595 = vadd.f32 %v2383, %v2594
  %2596 = vmatmul.f32.gmra.mxu0 %v2504
  %v2597 = vpop.f32.mrf.mxu0
  %v2598 = vadd.f32 %v2383, %v2597
  %2599 = vmatmul.f32.gmra.mxu0 %v2506
  %v2600 = vpop.f32.mrf.mxu0
  %v2601 = vadd.f32 %v2383, %v2600
  %2602 = vmatmul.f32.gmra.mxu0 %v2508
  %v2603 = vpop.f32.mrf.mxu0
  %v2604 = vadd.f32 %v2383, %v2603
  %2605 = vmatmul.f32.gmra.mxu0 %v2510
  %v2606 = vpop.f32.mrf.mxu0
  %v2607 = vadd.f32 %v2383, %v2606
  %2608 = vmatmul.f32.gmra.mxu0 %v2512
  %v2609 = vpop.f32.mrf.mxu0
  %v2610 = vadd.f32 %v2383, %v2609
  %2611 = vmatmul.f32.gmra.mxu0 %v2514
  %v2612 = vpop.f32.mrf.mxu0
  %v2613 = vadd.f32 %v2383, %v2612
  %2614 = vmatmul.f32.gmra.mxu0 %v2516
  %v2615 = vpop.f32.mrf.mxu0
  %v2616 = vadd.f32 %v2383, %v2615
  %2617 = vmatmul.f32.gmra.mxu0 %v2518
  %v2618 = vpop.f32.mrf.mxu0
  %v2619 = vadd.f32 %v2383, %v2618
  %2620 = vmatmul.f32.gmra.mxu0 %v2520
  %v2621 = vpop.f32.mrf.mxu0
  %v2622 = vadd.f32 %v2383, %v2621
  %2623 = vmatmul.f32.gmra.mxu0 %v2522
  %v2624 = vpop.f32.mrf.mxu0
  %v2625 = vadd.f32 %v2383, %v2624
  %2626 = vmatmul.f32.gmra.mxu0 %v2524
  %v2627 = vpop.f32.mrf.mxu0
  %v2628 = vadd.f32 %v2383, %v2627
  %2629 = vmatmul.f32.gmra.mxu0 %v2526
  %v2630 = vpop.f32.mrf.mxu0
  %v2631 = vadd.f32 %v2383, %v2630
  %2632 = vmatmul.f32.gmra.mxu0 %v2528
  %v2633 = vpop.f32.mrf.mxu0
  %v2634 = vadd.f32 %v2383, %v2633
  %2635 = vmatmul.f32.gmra.mxu0 %v2530
  %v2636 = vpop.f32.mrf.mxu0
  %v2637 = vadd.f32 %v2383, %v2636
  %2638 = vmatmul.f32.gmra.mxu0 %v2532
  %v2639 = vpop.f32.mrf.mxu0
  %v2640 = vadd.f32 %v2383, %v2639
  %2641 = vmatmul.f32.gmra.mxu0 %v2534
  %v2642 = vpop.f32.mrf.mxu0
  %v2643 = vadd.f32 %v2383, %v2642
  %2644 = vmatmul.f32.gmra.mxu0 %v2536
  %v2645 = vpop.f32.mrf.mxu0
  %v2646 = vadd.f32 %v2383, %v2645
  %2647 = vmatmul.f32.gmra.mxu0 %v2538
  %v2648 = vpop.f32.mrf.mxu0
  %v2649 = vadd.f32 %v2383, %v2648
  %2650 = vmatmul.f32.gmra.mxu0 %v2540
  %v2651 = vpop.f32.mrf.mxu0
  %v2652 = vadd.f32 %v2383, %v2651
  %2653 = vmatmul.f32.gmra.mxu0 %v2542
  %v2654 = vpop.f32.mrf.mxu0
  %v2655 = vadd.f32 %v2383, %v2654
  %2656 = vdwg.mxu0
  %v2657 = vadd.f32 %v1070, %v25
  %v2658 = vadd.f32 %v1073, %v26
  %v2659 = vadd.f32 %v1076, %v27
  %v2660 = vadd.f32 %v1079, %v28
  %v2661 = vadd.f32 %v1082, %v29
  %v2662 = vadd.f32 %v1085, %v30
  %v2663 = vadd.f32 %v1088, %v31
  %v2664 = vadd.f32 %v1091, %v32
  %v2665 = vadd.f32 %v1094, %v25
  %v2666 = vadd.f32 %v1097, %v26
  %v2667 = vadd.f32 %v1100, %v27
  %v2668 = vadd.f32 %v1103, %v28
  %v2669 = vadd.f32 %v1106, %v29
  %v2670 = vadd.f32 %v1109, %v30
  %v2671 = vadd.f32 %v1112, %v31
  %v2672 = vadd.f32 %v1115, %v32
  %2673 = vrot.lane.b32.xlu0 %v25, 32
  %v2674 = vpop.permute.xlu0 %2673
  %2675 = vrot.lane.b32.xlu0 %v26, 32
  %v2676 = vpop.permute.xlu0 %2675
  %2677 = vrot.lane.b32.xlu0 %v27, 32
  %v2678 = vpop.permute.xlu0 %2677
  %2679 = vrot.lane.b32.xlu0 %v28, 32
  %v2680 = vpop.permute.xlu0 %2679
  %2681 = vrot.lane.b32.xlu0 %v29, 32
  %v2682 = vpop.permute.xlu0 %2681
  %2683 = vrot.lane.b32.xlu0 %v30, 32
  %v2684 = vpop.permute.xlu0 %2683
  %2685 = vrot.lane.b32.xlu0 %v31, 32
  %v2686 = vpop.permute.xlu0 %2685
  %2687 = vrot.lane.b32.xlu0 %v32, 32
  %v2688 = vpop.permute.xlu0 %2687
  %v2697 = vadd.f32 %v1070, %v2674
  %v2698 = vadd.f32 %v1073, %v2676
  %v2699 = vadd.f32 %v1076, %v2678
  %v2700 = vadd.f32 %v1079, %v2680
  %v2701 = vadd.f32 %v1082, %v2682
  %v2702 = vadd.f32 %v1085, %v2684
  %v2703 = vadd.f32 %v1088, %v2686
  %v2704 = vadd.f32 %v1091, %v2688
  %v2705 = vadd.f32 %v1094, %v2674
  %v2706 = vadd.f32 %v1097, %v2676
  %v2707 = vadd.f32 %v1100, %v2678
  %v2708 = vadd.f32 %v1103, %v2680
  %v2709 = vadd.f32 %v1106, %v2682
  %v2710 = vadd.f32 %v1109, %v2684
  %v2711 = vadd.f32 %v1112, %v2686
  %v2712 = vadd.f32 %v1115, %v2688
  %2721 = vrot.lane.b32.xlu0 %v2697, 96
  %v2722 = vpop.permute.xlu0 %2721
  %2723 = vrot.lane.b32.xlu0 %v2698, 96
  %v2724 = vpop.permute.xlu0 %2723
  %2725 = vrot.lane.b32.xlu0 %v2699, 96
  %v2726 = vpop.permute.xlu0 %2725
  %2727 = vrot.lane.b32.xlu0 %v2700, 96
  %v2728 = vpop.permute.xlu0 %2727
  %2729 = vrot.lane.b32.xlu0 %v2701, 96
  %v2730 = vpop.permute.xlu0 %2729
  %2731 = vrot.lane.b32.xlu0 %v2702, 96
  %v2732 = vpop.permute.xlu0 %2731
  %2733 = vrot.lane.b32.xlu0 %v2703, 96
  %v2734 = vpop.permute.xlu0 %2733
  %2735 = vrot.lane.b32.xlu0 %v2704, 96
  %v2736 = vpop.permute.xlu0 %2735
  %2753 = vrot.lane.b32.xlu0 %v2705, 96
  %v2754 = vpop.permute.xlu0 %2753
  %2755 = vrot.lane.b32.xlu0 %v2706, 96
  %v2756 = vpop.permute.xlu0 %2755
  %2757 = vrot.lane.b32.xlu0 %v2707, 96
  %v2758 = vpop.permute.xlu0 %2757
  %2759 = vrot.lane.b32.xlu0 %v2708, 96
  %v2760 = vpop.permute.xlu0 %2759
  %2761 = vrot.lane.b32.xlu0 %v2709, 96
  %v2762 = vpop.permute.xlu0 %2761
  %2763 = vrot.lane.b32.xlu0 %v2710, 96
  %v2764 = vpop.permute.xlu0 %2763
  %2765 = vrot.lane.b32.xlu0 %v2711, 96
  %v2766 = vpop.permute.xlu0 %2765
  %2767 = vrot.lane.b32.xlu0 %v2712, 96
  %v2768 = vpop.permute.xlu0 %2767
  loop: start=0, step=1, limit=3
  $region14: #{slot_attention_forward.1} parent=0 // loop_pre_header
    _
  $region15: #{slot_attention_forward.1} parent=0 // loop_header
    %s2778 = sphi 0, %s2782
    %p2779 = scmp.ge.s32.totalorder %s2778, 3
    %v2783 = vphi %v144, %v7496
    %v2784 = vphi %v145, %v7152
  $region16: #{slot_attention_forward.1} parent=0 // loop_header_branch
    %2781 = sbr.rel (%p2779) target = $region20
  $region17: #{slot_attention_forward.1} parent=0 // loop_body
    %v2785 = vsel %vm562, %v2783, 0.0
    %2786 = vadd.xlane.f32.xlu0 %v2785
    %v2787 = vpop.xlane.xlu0 %2786
    %v2788 = vmul.f32 %v2787, %v617
    %v2789 = vmul.f32 %v2783, %v2783
    %v2790 = vsel %vm562, %v2789, 0.0
    %2791 = vadd.xlane.f32.xlu0 %v2790
    %v2792 = vpop.xlane.xlu0 %2791
    %v2793 = vmul.f32 %v2792, %v617
    %v2794 = vmul.f32 %v2788, %v2788
    %v2795 = vsub.f32 %v2793, %v2794
    %v2796 = vmax.f32 %v2795, 0.0
    %v2797 = vsub.f32 %v2783, %v2788
    %v2798 = vadd.f32 %v2796, 1e-05
    %v2799 = vrsqrt.pop %v2798
    %v2800 = vmul.f32 %v2799, %v2798
    %v2801 = vmul.f32 %v2800, %v2799
    %v2802 = vmul.f32 0.5, %v2801
    %v2803 = vsub.f32 1.5, %v2802
    %v2804 = vmul.f32 %v2799, %v2803
    %vm2805 = vweird.f32 %v2798
    %vm2806 = vweird.f32 %v2799
    %vm2807 = vmor %vm2805, %vm2806
    %v2808 = vsel %vm2807, %v2799, %v2804
    %v2809 = vmul.f32 %v2797, %v2808
    %v2810 = vmul.f32 %v2809, %v47
    %v2811 = vadd.f32 %v2810, %v48
    %v2812 = vmul.f32 %v2811, %v560
    %v2813 = vmul.f32 %v2811, %v561
    %2815 = vrot.lane.b32.xlu0 %v2813, 32
    %v2816 = vpop.permute.xlu0 %2815
    %v2818 = vsel %vm562, %v2812, %v2816
    %v2820 = vsel %vm267, %v2818, 0
    %2822 = vmatpush.msra.mxu0 0.0
    %2823 = vmatpush.msra.mxu0 0.0
    %2824 = vmatpush.msra.mxu0 0.0
    %2825 = vmatpush.msra.mxu0 0.0
    %2826 = vmatpush.msra.mxu0 0.0
    %2827 = vmatpush.msra.mxu0 0.0
    %2828 = vmatpush.msra.mxu0 0.0
    %2829 = vmatpush.msra.mxu0 0.0
    %2830 = vmatpush.msra.mxu0 %v56
    %2831 = vmatpush.msra.mxu0 %v55
    %2832 = vmatpush.msra.mxu0 %v54
    %2833 = vmatpush.msra.mxu0 %v53
    %2834 = vmatpush.msra.mxu0 %v52
    %2835 = vmatpush.msra.mxu0 %v51
    %2836 = vmatpush.msra.mxu0 %v50
    %2837 = vmatpush.msra.mxu0 %v49
    %2838 = vmatmul.f32.gmra.mxu0 %v2820
    %v2839 = vpop.f32.mrf.mxu0
    %v2840 = vadd.f32 0.0, %v2839
    %2841 = vdwg.mxu0
    %v2843 = vsel %vm207, %v2784, 0
    %v2846 = vsel %vm211, %v16, 0
    %2848 = vmatpush.msra.mxu0 0.0
    %2849 = vmatpush.msra.mxu0 0.0
    %2850 = vmatpush.msra.mxu0 0.0
    %2851 = vmatpush.msra.mxu0 0.0
    %2852 = vmatpush.msra.mxu0 0.0
    %2853 = vmatpush.msra.mxu0 0.0
    %2854 = vmatpush.msra.mxu0 0.0
    %2855 = vmatpush.msra.mxu0 0.0
    %2856 = vmatpush.msra.mxu0 0.0
    %2857 = vmatpush.msra.mxu0 0.0
    %2858 = vmatpush.msra.mxu0 0.0
    %2859 = vmatpush.msra.mxu0 0.0
    %2860 = vmatpush.msra.mxu0 0.0
    %2861 = vmatpush.msra.mxu0 0.0
    %2862 = vmatpush.msra.mxu0 0.0
    %2863 = vmatpush.msra.mxu0 %v2846
    %2864 = vmatmul.f32.gmra.mxu0 %v2843
    %v2865 = vpop.f32.mrf.mxu0
    %v2866 = vadd.f32 0.0, %v2865
    %2867 = vdwg.mxu0
    %vm2868 = vcmask 48128
    %v2870 = vsel %vm2868, %v510, 0
    %v2873 = vsel %vm2868, %v511, 0
    %v2876 = vsel %vm2868, %v512, 0
    %v2879 = vsel %vm2868, %v513, 0
    %v2882 = vsel %vm2868, %v514, 0
    %v2885 = vsel %vm2868, %v515, 0
    %v2888 = vsel %vm2868, %v516, 0
    %v2891 = vsel %vm2868, %v517, 0
    %v2894 = vsel %vm2868, %v518, 0
    %v2897 = vsel %vm2868, %v519, 0
    %v2900 = vsel %vm2868, %v520, 0
    %v2903 = vsel %vm2868, %v521, 0
    %v2906 = vsel %vm2868, %v522, 0
    %v2909 = vsel %vm2868, %v523, 0
    %v2912 = vsel %vm2868, %v524, 0
    %v2915 = vsel %vm2868, %v525, 0
    %v2918 = vsel %vm2868, %v526, 0
    %v2921 = vsel %vm2868, %v527, 0
    %v2924 = vsel %vm2868, %v528, 0
    %v2927 = vsel %vm2868, %v529, 0
    %v2930 = vsel %vm2868, %v530, 0
    %v2933 = vsel %vm2868, %v531, 0
    %v2936 = vsel %vm2868, %v532, 0
    %v2939 = vsel %vm2868, %v533, 0
    %v2942 = vsel %vm2868, %v534, 0
    %v2945 = vsel %vm2868, %v535, 0
    %v2948 = vsel %vm2868, %v536, 0
    %v2951 = vsel %vm2868, %v537, 0
    %v2954 = vsel %vm2868, %v538, 0
    %v2957 = vsel %vm2868, %v539, 0
    %v2960 = vsel %vm2868, %v540, 0
    %v2963 = vsel %vm2868, %v541, 0
    %v2966 = vsel %vm2868, %v542, 0
    %v2969 = vsel %vm2868, %v543, 0
    %v2972 = vsel %vm2868, %v544, 0
    %v2975 = vsel %vm2868, %v545, 0
    %v2978 = vsel %vm2868, %v546, 0
    %v2981 = vsel %vm2868, %v547, 0
    %v2984 = vsel %vm2868, %v548, 0
    %v2987 = vsel %vm2868, %v549, 0
    %v2990 = vsel %vm2868, %v550, 0
    %v2993 = vsel %vm2868, %v551, 0
    %v2996 = vsel %vm2868, %v552, 0
    %v2999 = vsel %vm2868, %v553, 0
    %v3002 = vsel %vm2868, %v554, 0
    %v3005 = vsel %vm2868, %v555, 0
    %v3008 = vsel %vm2868, %v556, 0
    %v3011 = vsel %vm2868, %v557, 0
    %vm3013 = vcmask 1045504
    %v3015 = vsel %vm3013, %v2866, 0
    %3017 = vmatpush.msra.mxu0 0.0
    %3018 = vmatpush.msra.mxu0 0.0
    %3019 = vmatpush.msra.mxu0 0.0
    %3020 = vmatpush.msra.mxu0 0.0
    %3021 = vmatpush.msra.mxu0 0.0
    %3022 = vmatpush.msra.mxu0 0.0
    %3023 = vmatpush.msra.mxu0 0.0
    %3024 = vmatpush.msra.mxu0 0.0
    %3025 = vmatpush.msra.mxu0 0.0
    %3026 = vmatpush.msra.mxu0 0.0
    %3027 = vmatpush.msra.mxu0 0.0
    %3028 = vmatpush.msra.mxu0 0.0
    %3029 = vmatpush.msra.mxu0 0.0
    %3030 = vmatpush.msra.mxu0 0.0
    %3031 = vmatpush.msra.mxu0 0.0
    %3032 = vmatpush.msra.mxu0 %v3015
    %3033 = vmatmul.f32.gmra.mxu0 %v2870
    %v3034 = vpop.f32.mrf.mxu0
    %v3035 = vadd.f32 0.0, %v3034
    %3036 = vmatmul.f32.gmra.mxu0 %v2873
    %v3037 = vpop.f32.mrf.mxu0
    %v3038 = vadd.f32 0.0, %v3037
    %3039 = vmatmul.f32.gmra.mxu0 %v2876
    %v3040 = vpop.f32.mrf.mxu0
    %v3041 = vadd.f32 0.0, %v3040
    %3042 = vmatmul.f32.gmra.mxu0 %v2879
    %v3043 = vpop.f32.mrf.mxu0
    %v3044 = vadd.f32 0.0, %v3043
    %3045 = vmatmul.f32.gmra.mxu0 %v2882
    %v3046 = vpop.f32.mrf.mxu0
    %v3047 = vadd.f32 0.0, %v3046
    %3048 = vmatmul.f32.gmra.mxu0 %v2885
    %v3049 = vpop.f32.mrf.mxu0
    %v3050 = vadd.f32 0.0, %v3049
    %3051 = vmatmul.f32.gmra.mxu0 %v2888
    %v3052 = vpop.f32.mrf.mxu0
    %v3053 = vadd.f32 0.0, %v3052
    %3054 = vmatmul.f32.gmra.mxu0 %v2891
    %v3055 = vpop.f32.mrf.mxu0
    %v3056 = vadd.f32 0.0, %v3055
    %3057 = vmatmul.f32.gmra.mxu0 %v2894
    %v3058 = vpop.f32.mrf.mxu0
    %v3059 = vadd.f32 0.0, %v3058
    %3060 = vmatmul.f32.gmra.mxu0 %v2897
    %v3061 = vpop.f32.mrf.mxu0
    %v3062 = vadd.f32 0.0, %v3061
    %3063 = vmatmul.f32.gmra.mxu0 %v2900
    %v3064 = vpop.f32.mrf.mxu0
    %v3065 = vadd.f32 0.0, %v3064
    %3066 = vmatmul.f32.gmra.mxu0 %v2903
    %v3067 = vpop.f32.mrf.mxu0
    %v3068 = vadd.f32 0.0, %v3067
    %3069 = vmatmul.f32.gmra.mxu0 %v2906
    %v3070 = vpop.f32.mrf.mxu0
    %v3071 = vadd.f32 0.0, %v3070
    %3072 = vmatmul.f32.gmra.mxu0 %v2909
    %v3073 = vpop.f32.mrf.mxu0
    %v3074 = vadd.f32 0.0, %v3073
    %3075 = vmatmul.f32.gmra.mxu0 %v2912
    %v3076 = vpop.f32.mrf.mxu0
    %v3077 = vadd.f32 0.0, %v3076
    %3078 = vmatmul.f32.gmra.mxu0 %v2915
    %v3079 = vpop.f32.mrf.mxu0
    %v3080 = vadd.f32 0.0, %v3079
    %3081 = vmatmul.f32.gmra.mxu0 %v2918
    %v3082 = vpop.f32.mrf.mxu0
    %v3083 = vadd.f32 0.0, %v3082
    %3084 = vmatmul.f32.gmra.mxu0 %v2921
    %v3085 = vpop.f32.mrf.mxu0
    %v3086 = vadd.f32 0.0, %v3085
    %3087 = vmatmul.f32.gmra.mxu0 %v2924
    %v3088 = vpop.f32.mrf.mxu0
    %v3089 = vadd.f32 0.0, %v3088
    %3090 = vmatmul.f32.gmra.mxu0 %v2927
    %v3091 = vpop.f32.mrf.mxu0
    %v3092 = vadd.f32 0.0, %v3091
    %3093 = vmatmul.f32.gmra.mxu0 %v2930
    %v3094 = vpop.f32.mrf.mxu0
    %v3095 = vadd.f32 0.0, %v3094
    %3096 = vmatmul.f32.gmra.mxu0 %v2933
    %v3097 = vpop.f32.mrf.mxu0
    %v3098 = vadd.f32 0.0, %v3097
    %3099 = vmatmul.f32.gmra.mxu0 %v2936
    %v3100 = vpop.f32.mrf.mxu0
    %v3101 = vadd.f32 0.0, %v3100
    %3102 = vmatmul.f32.gmra.mxu0 %v2939
    %v3103 = vpop.f32.mrf.mxu0
    %v3104 = vadd.f32 0.0, %v3103
    %3105 = vmatmul.f32.gmra.mxu0 %v2942
    %v3106 = vpop.f32.mrf.mxu0
    %v3107 = vadd.f32 0.0, %v3106
    %3108 = vmatmul.f32.gmra.mxu0 %v2945
    %v3109 = vpop.f32.mrf.mxu0
    %v3110 = vadd.f32 0.0, %v3109
    %3111 = vmatmul.f32.gmra.mxu0 %v2948
    %v3112 = vpop.f32.mrf.mxu0
    %v3113 = vadd.f32 0.0, %v3112
    %3114 = vmatmul.f32.gmra.mxu0 %v2951
    %v3115 = vpop.f32.mrf.mxu0
    %v3116 = vadd.f32 0.0, %v3115
    %3117 = vmatmul.f32.gmra.mxu0 %v2954
    %v3118 = vpop.f32.mrf.mxu0
    %v3119 = vadd.f32 0.0, %v3118
    %3120 = vmatmul.f32.gmra.mxu0 %v2957
    %v3121 = vpop.f32.mrf.mxu0
    %v3122 = vadd.f32 0.0, %v3121
    %3123 = vmatmul.f32.gmra.mxu0 %v2960
    %v3124 = vpop.f32.mrf.mxu0
    %v3125 = vadd.f32 0.0, %v3124
    %3126 = vmatmul.f32.gmra.mxu0 %v2963
    %v3127 = vpop.f32.mrf.mxu0
    %v3128 = vadd.f32 0.0, %v3127
    %3129 = vmatmul.f32.gmra.mxu0 %v2966
    %v3130 = vpop.f32.mrf.mxu0
    %v3131 = vadd.f32 0.0, %v3130
    %3132 = vmatmul.f32.gmra.mxu0 %v2969
    %v3133 = vpop.f32.mrf.mxu0
    %v3134 = vadd.f32 0.0, %v3133
    %3135 = vmatmul.f32.gmra.mxu0 %v2972
    %v3136 = vpop.f32.mrf.mxu0
    %v3137 = vadd.f32 0.0, %v3136
    %3138 = vmatmul.f32.gmra.mxu0 %v2975
    %v3139 = vpop.f32.mrf.mxu0
    %v3140 = vadd.f32 0.0, %v3139
    %3141 = vmatmul.f32.gmra.mxu0 %v2978
    %v3142 = vpop.f32.mrf.mxu0
    %v3143 = vadd.f32 0.0, %v3142
    %3144 = vmatmul.f32.gmra.mxu0 %v2981
    %v3145 = vpop.f32.mrf.mxu0
    %v3146 = vadd.f32 0.0, %v3145
    %3147 = vmatmul.f32.gmra.mxu0 %v2984
    %v3148 = vpop.f32.mrf.mxu0
    %v3149 = vadd.f32 0.0, %v3148
    %3150 = vmatmul.f32.gmra.mxu0 %v2987
    %v3151 = vpop.f32.mrf.mxu0
    %v3152 = vadd.f32 0.0, %v3151
    %3153 = vmatmul.f32.gmra.mxu0 %v2990
    %v3154 = vpop.f32.mrf.mxu0
    %v3155 = vadd.f32 0.0, %v3154
    %3156 = vmatmul.f32.gmra.mxu0 %v2993
    %v3157 = vpop.f32.mrf.mxu0
    %v3158 = vadd.f32 0.0, %v3157
    %3159 = vmatmul.f32.gmra.mxu0 %v2996
    %v3160 = vpop.f32.mrf.mxu0
    %v3161 = vadd.f32 0.0, %v3160
    %3162 = vmatmul.f32.gmra.mxu0 %v2999
    %v3163 = vpop.f32.mrf.mxu0
    %v3164 = vadd.f32 0.0, %v3163
    %3165 = vmatmul.f32.gmra.mxu0 %v3002
    %v3166 = vpop.f32.mrf.mxu0
    %v3167 = vadd.f32 0.0, %v3166
    %3168 = vmatmul.f32.gmra.mxu0 %v3005
    %v3169 = vpop.f32.mrf.mxu0
    %v3170 = vadd.f32 0.0, %v3169
    %3171 = vmatmul.f32.gmra.mxu0 %v3008
    %v3172 = vpop.f32.mrf.mxu0
    %v3173 = vadd.f32 0.0, %v3172
    %3174 = vmatmul.f32.gmra.mxu0 %v3011
    %v3175 = vpop.f32.mrf.mxu0
    %v3176 = vadd.f32 0.0, %v3175
    %3177 = vmatmul.f32.gmra.mxu0 %v2870
    %v3178 = vpop.f32.mrf.mxu0
    %v3179 = vadd.f32 0.0, %v3178
    %3180 = vmatmul.f32.gmra.mxu0 %v2873
    %v3181 = vpop.f32.mrf.mxu0
    %v3182 = vadd.f32 0.0, %v3181
    %3183 = vmatmul.f32.gmra.mxu0 %v2876
    %v3184 = vpop.f32.mrf.mxu0
    %v3185 = vadd.f32 0.0, %v3184
    %3186 = vmatmul.f32.gmra.mxu0 %v2879
    %v3187 = vpop.f32.mrf.mxu0
    %v3188 = vadd.f32 0.0, %v3187
    %3189 = vmatmul.f32.gmra.mxu0 %v2882
    %v3190 = vpop.f32.mrf.mxu0
    %v3191 = vadd.f32 0.0, %v3190
    %3192 = vmatmul.f32.gmra.mxu0 %v2885
    %v3193 = vpop.f32.mrf.mxu0
    %v3194 = vadd.f32 0.0, %v3193
    %3195 = vmatmul.f32.gmra.mxu0 %v2888
    %v3196 = vpop.f32.mrf.mxu0
    %v3197 = vadd.f32 0.0, %v3196
    %3198 = vmatmul.f32.gmra.mxu0 %v2891
    %v3199 = vpop.f32.mrf.mxu0
    %v3200 = vadd.f32 0.0, %v3199
    %3201 = vmatmul.f32.gmra.mxu0 %v2894
    %v3202 = vpop.f32.mrf.mxu0
    %v3203 = vadd.f32 0.0, %v3202
    %3204 = vmatmul.f32.gmra.mxu0 %v2897
    %v3205 = vpop.f32.mrf.mxu0
    %v3206 = vadd.f32 0.0, %v3205
    %3207 = vmatmul.f32.gmra.mxu0 %v2900
    %v3208 = vpop.f32.mrf.mxu0
    %v3209 = vadd.f32 0.0, %v3208
    %3210 = vmatmul.f32.gmra.mxu0 %v2903
    %v3211 = vpop.f32.mrf.mxu0
    %v3212 = vadd.f32 0.0, %v3211
    %3213 = vmatmul.f32.gmra.mxu0 %v2906
    %v3214 = vpop.f32.mrf.mxu0
    %v3215 = vadd.f32 0.0, %v3214
    %3216 = vmatmul.f32.gmra.mxu0 %v2909
    %v3217 = vpop.f32.mrf.mxu0
    %v3218 = vadd.f32 0.0, %v3217
    %3219 = vmatmul.f32.gmra.mxu0 %v2912
    %v3220 = vpop.f32.mrf.mxu0
    %v3221 = vadd.f32 0.0, %v3220
    %3222 = vmatmul.f32.gmra.mxu0 %v2915
    %v3223 = vpop.f32.mrf.mxu0
    %v3224 = vadd.f32 0.0, %v3223
    %3225 = vmatmul.f32.gmra.mxu0 %v2918
    %v3226 = vpop.f32.mrf.mxu0
    %v3227 = vadd.f32 0.0, %v3226
    %3228 = vmatmul.f32.gmra.mxu0 %v2921
    %v3229 = vpop.f32.mrf.mxu0
    %v3230 = vadd.f32 0.0, %v3229
    %3231 = vmatmul.f32.gmra.mxu0 %v2924
    %v3232 = vpop.f32.mrf.mxu0
    %v3233 = vadd.f32 0.0, %v3232
    %3234 = vmatmul.f32.gmra.mxu0 %v2927
    %v3235 = vpop.f32.mrf.mxu0
    %v3236 = vadd.f32 0.0, %v3235
    %3237 = vmatmul.f32.gmra.mxu0 %v2930
    %v3238 = vpop.f32.mrf.mxu0
    %v3239 = vadd.f32 0.0, %v3238
    %3240 = vmatmul.f32.gmra.mxu0 %v2933
    %v3241 = vpop.f32.mrf.mxu0
    %v3242 = vadd.f32 0.0, %v3241
    %3243 = vmatmul.f32.gmra.mxu0 %v2936
    %v3244 = vpop.f32.mrf.mxu0
    %v3245 = vadd.f32 0.0, %v3244
    %3246 = vmatmul.f32.gmra.mxu0 %v2939
    %v3247 = vpop.f32.mrf.mxu0
    %v3248 = vadd.f32 0.0, %v3247
    %3249 = vmatmul.f32.gmra.mxu0 %v2942
    %v3250 = vpop.f32.mrf.mxu0
    %v3251 = vadd.f32 0.0, %v3250
    %3252 = vmatmul.f32.gmra.mxu0 %v2945
    %v3253 = vpop.f32.mrf.mxu0
    %v3254 = vadd.f32 0.0, %v3253
    %3255 = vmatmul.f32.gmra.mxu0 %v2948
    %v3256 = vpop.f32.mrf.mxu0
    %v3257 = vadd.f32 0.0, %v3256
    %3258 = vmatmul.f32.gmra.mxu0 %v2951
    %v3259 = vpop.f32.mrf.mxu0
    %v3260 = vadd.f32 0.0, %v3259
    %3261 = vmatmul.f32.gmra.mxu0 %v2954
    %v3262 = vpop.f32.mrf.mxu0
    %v3263 = vadd.f32 0.0, %v3262
    %3264 = vmatmul.f32.gmra.mxu0 %v2957
    %v3265 = vpop.f32.mrf.mxu0
    %v3266 = vadd.f32 0.0, %v3265
    %3267 = vmatmul.f32.gmra.mxu0 %v2960
    %v3268 = vpop.f32.mrf.mxu0
    %v3269 = vadd.f32 0.0, %v3268
    %3270 = vmatmul.f32.gmra.mxu0 %v2963
    %v3271 = vpop.f32.mrf.mxu0
    %v3272 = vadd.f32 0.0, %v3271
    %3273 = vmatmul.f32.gmra.mxu0 %v2966
    %v3274 = vpop.f32.mrf.mxu0
    %v3275 = vadd.f32 0.0, %v3274
    %3276 = vmatmul.f32.gmra.mxu0 %v2969
    %v3277 = vpop.f32.mrf.mxu0
    %v3278 = vadd.f32 0.0, %v3277
    %3279 = vmatmul.f32.gmra.mxu0 %v2972
    %v3280 = vpop.f32.mrf.mxu0
    %v3281 = vadd.f32 0.0, %v3280
    %3282 = vmatmul.f32.gmra.mxu0 %v2975
    %v3283 = vpop.f32.mrf.mxu0
    %v3284 = vadd.f32 0.0, %v3283
    %3285 = vmatmul.f32.gmra.mxu0 %v2978
    %v3286 = vpop.f32.mrf.mxu0
    %v3287 = vadd.f32 0.0, %v3286
    %3288 = vmatmul.f32.gmra.mxu0 %v2981
    %v3289 = vpop.f32.mrf.mxu0
    %v3290 = vadd.f32 0.0, %v3289
    %3291 = vmatmul.f32.gmra.mxu0 %v2984
    %v3292 = vpop.f32.mrf.mxu0
    %v3293 = vadd.f32 0.0, %v3292
    %3294 = vmatmul.f32.gmra.mxu0 %v2987
    %v3295 = vpop.f32.mrf.mxu0
    %v3296 = vadd.f32 0.0, %v3295
    %3297 = vmatmul.f32.gmra.mxu0 %v2990
    %v3298 = vpop.f32.mrf.mxu0
    %v3299 = vadd.f32 0.0, %v3298
    %3300 = vmatmul.f32.gmra.mxu0 %v2993
    %v3301 = vpop.f32.mrf.mxu0
    %v3302 = vadd.f32 0.0, %v3301
    %3303 = vmatmul.f32.gmra.mxu0 %v2996
    %v3304 = vpop.f32.mrf.mxu0
    %v3305 = vadd.f32 0.0, %v3304
    %3306 = vmatmul.f32.gmra.mxu0 %v2999
    %v3307 = vpop.f32.mrf.mxu0
    %v3308 = vadd.f32 0.0, %v3307
    %3309 = vmatmul.f32.gmra.mxu0 %v3002
    %v3310 = vpop.f32.mrf.mxu0
    %v3311 = vadd.f32 0.0, %v3310
    %3312 = vmatmul.f32.gmra.mxu0 %v3005
    %v3313 = vpop.f32.mrf.mxu0
    %v3314 = vadd.f32 0.0, %v3313
    %3315 = vmatmul.f32.gmra.mxu0 %v3008
    %v3316 = vpop.f32.mrf.mxu0
    %v3317 = vadd.f32 0.0, %v3316
    %3318 = vmatmul.f32.gmra.mxu0 %v3011
    %v3319 = vpop.f32.mrf.mxu0
    %v3320 = vadd.f32 0.0, %v3319
    %3321 = vdwg.mxu0
    %v3322 = vsub.f32 %v2657, %v3035
    %v3323 = vsub.f32 %v2658, %v3038
    %v3324 = vsub.f32 %v2659, %v3041
    %v3325 = vsub.f32 %v2660, %v3044
    %v3326 = vsub.f32 %v2661, %v3047
    %v3327 = vsub.f32 %v2662, %v3050
    %v3328 = vsub.f32 %v2663, %v3053
    %v3329 = vsub.f32 %v2664, %v3056
    %v3330 = vsub.f32 %v2657, %v3059
    %v3331 = vsub.f32 %v2658, %v3062
    %v3332 = vsub.f32 %v2659, %v3065
    %v3333 = vsub.f32 %v2660, %v3068
    %v3334 = vsub.f32 %v2661, %v3071
    %v3335 = vsub.f32 %v2662, %v3074
    %v3336 = vsub.f32 %v2663, %v3077
    %v3337 = vsub.f32 %v2664, %v3080
    %v3338 = vsub.f32 %v2657, %v3083
    %v3339 = vsub.f32 %v2658, %v3086
    %v3340 = vsub.f32 %v2659, %v3089
    %v3341 = vsub.f32 %v2660, %v3092
    %v3342 = vsub.f32 %v2661, %v3095
    %v3343 = vsub.f32 %v2662, %v3098
    %v3344 = vsub.f32 %v2663, %v3101
    %v3345 = vsub.f32 %v2664, %v3104
    %v3346 = vsub.f32 %v2665, %v3107
    %v3347 = vsub.f32 %v2666, %v3110
    %v3348 = vsub.f32 %v2667, %v3113
    %v3349 = vsub.f32 %v2668, %v3116
    %v3350 = vsub.f32 %v2669, %v3119
    %v3351 = vsub.f32 %v2670, %v3122
    %v3352 = vsub.f32 %v2671, %v3125
    %v3353 = vsub.f32 %v2672, %v3128
    %v3354 = vsub.f32 %v2665, %v3131
    %v3355 = vsub.f32 %v2666, %v3134
    %v3356 = vsub.f32 %v2667, %v3137
    %v3357 = vsub.f32 %v2668, %v3140
    %v3358 = vsub.f32 %v2669, %v3143
    %v3359 = vsub.f32 %v2670, %v3146
    %v3360 = vsub.f32 %v2671, %v3149
    %v3361 = vsub.f32 %v2672, %v3152
    %v3362 = vsub.f32 %v2665, %v3155
    %v3363 = vsub.f32 %v2666, %v3158
    %v3364 = vsub.f32 %v2667, %v3161
    %v3365 = vsub.f32 %v2668, %v3164
    %v3366 = vsub.f32 %v2669, %v3167
    %v3367 = vsub.f32 %v2670, %v3170
    %v3368 = vsub.f32 %v2671, %v3173
    %v3369 = vsub.f32 %v2672, %v3176
    %v3370 = vsub.f32 %v2722, %v3179
    %v3371 = vsub.f32 %v2724, %v3182
    %v3372 = vsub.f32 %v2726, %v3185
    %v3373 = vsub.f32 %v2728, %v3188
    %v3374 = vsub.f32 %v2730, %v3191
    %v3375 = vsub.f32 %v2732, %v3194
    %v3376 = vsub.f32 %v2734, %v3197
    %v3377 = vsub.f32 %v2736, %v3200
    %v3378 = vsub.f32 %v2722, %v3203
    %v3379 = vsub.f32 %v2724, %v3206
    %v3380 = vsub.f32 %v2726, %v3209
    %v3381 = vsub.f32 %v2728, %v3212
    %v3382 = vsub.f32 %v2730, %v3215
    %v3383 = vsub.f32 %v2732, %v3218
    %v3384 = vsub.f32 %v2734, %v3221
    %v3385 = vsub.f32 %v2736, %v3224
    %v3386 = vsub.f32 %v2722, %v3227
    %v3387 = vsub.f32 %v2724, %v3230
    %v3388 = vsub.f32 %v2726, %v3233
    %v3389 = vsub.f32 %v2728, %v3236
    %v3390 = vsub.f32 %v2730, %v3239
    %v3391 = vsub.f32 %v2732, %v3242
    %v3392 = vsub.f32 %v2734, %v3245
    %v3393 = vsub.f32 %v2736, %v3248
    %v3394 = vsub.f32 %v2754, %v3251
    %v3395 = vsub.f32 %v2756, %v3254
    %v3396 = vsub.f32 %v2758, %v3257
    %v3397 = vsub.f32 %v2760, %v3260
    %v3398 = vsub.f32 %v2762, %v3263
    %v3399 = vsub.f32 %v2764, %v3266
    %v3400 = vsub.f32 %v2766, %v3269
    %v3401 = vsub.f32 %v2768, %v3272
    %v3402 = vsub.f32 %v2754, %v3275
    %v3403 = vsub.f32 %v2756, %v3278
    %v3404 = vsub.f32 %v2758, %v3281
    %v3405 = vsub.f32 %v2760, %v3284
    %v3406 = vsub.f32 %v2762, %v3287
    %v3407 = vsub.f32 %v2764, %v3290
    %v3408 = vsub.f32 %v2766, %v3293
    %v3409 = vsub.f32 %v2768, %v3296
    %v3410 = vsub.f32 %v2754, %v3299
    %v3411 = vsub.f32 %v2756, %v3302
    %v3412 = vsub.f32 %v2758, %v3305
    %v3413 = vsub.f32 %v2760, %v3308
    %v3414 = vsub.f32 %v2762, %v3311
    %v3415 = vsub.f32 %v2764, %v3314
    %v3416 = vsub.f32 %v2766, %v3317
    %v3417 = vsub.f32 %v2768, %v3320
    %v3418 = vsel %vm562, %v3322, 0.0
    %3419 = vadd.xlane.f32.xlu0 %v3418
    %v3420 = vpop.xlane.xlu0 %3419
    %v3421 = vsel %vm562, %v3323, 0.0
    %3422 = vadd.xlane.f32.xlu0 %v3421
    %v3423 = vpop.xlane.xlu0 %3422
    %v3424 = vsel %vm562, %v3324, 0.0
    %3425 = vadd.xlane.f32.xlu0 %v3424
    %v3426 = vpop.xlane.xlu0 %3425
    %v3427 = vsel %vm562, %v3325, 0.0
    %3428 = vadd.xlane.f32.xlu0 %v3427
    %v3429 = vpop.xlane.xlu0 %3428
    %v3430 = vsel %vm562, %v3326, 0.0
    %3431 = vadd.xlane.f32.xlu0 %v3430
    %v3432 = vpop.xlane.xlu0 %3431
    %v3433 = vsel %vm562, %v3327, 0.0
    %3434 = vadd.xlane.f32.xlu0 %v3433
    %v3435 = vpop.xlane.xlu0 %3434
    %v3436 = vsel %vm562, %v3328, 0.0
    %3437 = vadd.xlane.f32.xlu0 %v3436
    %v3438 = vpop.xlane.xlu0 %3437
    %v3439 = vsel %vm562, %v3329, 0.0
    %3440 = vadd.xlane.f32.xlu0 %v3439
    %v3441 = vpop.xlane.xlu0 %3440
    %v3442 = vsel %vm562, %v3330, 0.0
    %3443 = vadd.xlane.f32.xlu0 %v3442
    %v3444 = vpop.xlane.xlu0 %3443
    %v3445 = vsel %vm562, %v3331, 0.0
    %3446 = vadd.xlane.f32.xlu0 %v3445
    %v3447 = vpop.xlane.xlu0 %3446
    %v3448 = vsel %vm562, %v3332, 0.0
    %3449 = vadd.xlane.f32.xlu0 %v3448
    %v3450 = vpop.xlane.xlu0 %3449
    %v3451 = vsel %vm562, %v3333, 0.0
    %3452 = vadd.xlane.f32.xlu0 %v3451
    %v3453 = vpop.xlane.xlu0 %3452
    %v3454 = vsel %vm562, %v3334, 0.0
    %3455 = vadd.xlane.f32.xlu0 %v3454
    %v3456 = vpop.xlane.xlu0 %3455
    %v3457 = vsel %vm562, %v3335, 0.0
    %3458 = vadd.xlane.f32.xlu0 %v3457
    %v3459 = vpop.xlane.xlu0 %3458
    %v3460 = vsel %vm562, %v3336, 0.0
    %3461 = vadd.xlane.f32.xlu0 %v3460
    %v3462 = vpop.xlane.xlu0 %3461
    %v3463 = vsel %vm562, %v3337, 0.0
    %3464 = vadd.xlane.f32.xlu0 %v3463
    %v3465 = vpop.xlane.xlu0 %3464
    %v3466 = vsel %vm562, %v3338, 0.0
    %3467 = vadd.xlane.f32.xlu0 %v3466
    %v3468 = vpop.xlane.xlu0 %3467
    %v3469 = vsel %vm562, %v3339, 0.0
    %3470 = vadd.xlane.f32.xlu0 %v3469
    %v3471 = vpop.xlane.xlu0 %3470
    %v3472 = vsel %vm562, %v3340, 0.0
    %3473 = vadd.xlane.f32.xlu0 %v3472
    %v3474 = vpop.xlane.xlu0 %3473
    %v3475 = vsel %vm562, %v3341, 0.0
    %3476 = vadd.xlane.f32.xlu0 %v3475
    %v3477 = vpop.xlane.xlu0 %3476
    %v3478 = vsel %vm562, %v3342, 0.0
    %3479 = vadd.xlane.f32.xlu0 %v3478
    %v3480 = vpop.xlane.xlu0 %3479
    %v3481 = vsel %vm562, %v3343, 0.0
    %3482 = vadd.xlane.f32.xlu0 %v3481
    %v3483 = vpop.xlane.xlu0 %3482
    %v3484 = vsel %vm562, %v3344, 0.0
    %3485 = vadd.xlane.f32.xlu0 %v3484
    %v3486 = vpop.xlane.xlu0 %3485
    %v3487 = vsel %vm562, %v3345, 0.0
    %3488 = vadd.xlane.f32.xlu0 %v3487
    %v3489 = vpop.xlane.xlu0 %3488
    %v3490 = vsel %vm562, %v3346, 0.0
    %3491 = vadd.xlane.f32.xlu0 %v3490
    %v3492 = vpop.xlane.xlu0 %3491
    %v3493 = vsel %vm562, %v3347, 0.0
    %3494 = vadd.xlane.f32.xlu0 %v3493
    %v3495 = vpop.xlane.xlu0 %3494
    %v3496 = vsel %vm562, %v3348, 0.0
    %3497 = vadd.xlane.f32.xlu0 %v3496
    %v3498 = vpop.xlane.xlu0 %3497
    %v3499 = vsel %vm562, %v3349, 0.0
    %3500 = vadd.xlane.f32.xlu0 %v3499
    %v3501 = vpop.xlane.xlu0 %3500
    %v3502 = vsel %vm562, %v3350, 0.0
    %3503 = vadd.xlane.f32.xlu0 %v3502
    %v3504 = vpop.xlane.xlu0 %3503
    %v3505 = vsel %vm562, %v3351, 0.0
    %3506 = vadd.xlane.f32.xlu0 %v3505
    %v3507 = vpop.xlane.xlu0 %3506
    %v3508 = vsel %vm562, %v3352, 0.0
    %3509 = vadd.xlane.f32.xlu0 %v3508
    %v3510 = vpop.xlane.xlu0 %3509
    %v3511 = vsel %vm562, %v3353, 0.0
    %3512 = vadd.xlane.f32.xlu0 %v3511
    %v3513 = vpop.xlane.xlu0 %3512
    %v3514 = vsel %vm562, %v3354, 0.0
    %3515 = vadd.xlane.f32.xlu0 %v3514
    %v3516 = vpop.xlane.xlu0 %3515
    %v3517 = vsel %vm562, %v3355, 0.0
    %3518 = vadd.xlane.f32.xlu0 %v3517
    %v3519 = vpop.xlane.xlu0 %3518
    %v3520 = vsel %vm562, %v3356, 0.0
    %3521 = vadd.xlane.f32.xlu0 %v3520
    %v3522 = vpop.xlane.xlu0 %3521
    %v3523 = vsel %vm562, %v3357, 0.0
    %3524 = vadd.xlane.f32.xlu0 %v3523
    %v3525 = vpop.xlane.xlu0 %3524
    %v3526 = vsel %vm562, %v3358, 0.0
    %3527 = vadd.xlane.f32.xlu0 %v3526
    %v3528 = vpop.xlane.xlu0 %3527
    %v3529 = vsel %vm562, %v3359, 0.0
    %3530 = vadd.xlane.f32.xlu0 %v3529
    %v3531 = vpop.xlane.xlu0 %3530
    %v3532 = vsel %vm562, %v3360, 0.0
    %3533 = vadd.xlane.f32.xlu0 %v3532
    %v3534 = vpop.xlane.xlu0 %3533
    %v3535 = vsel %vm562, %v3361, 0.0
    %3536 = vadd.xlane.f32.xlu0 %v3535
    %v3537 = vpop.xlane.xlu0 %3536
    %v3538 = vsel %vm562, %v3362, 0.0
    %3539 = vadd.xlane.f32.xlu0 %v3538
    %v3540 = vpop.xlane.xlu0 %3539
    %v3541 = vsel %vm562, %v3363, 0.0
    %3542 = vadd.xlane.f32.xlu0 %v3541
    %v3543 = vpop.xlane.xlu0 %3542
    %v3544 = vsel %vm562, %v3364, 0.0
    %3545 = vadd.xlane.f32.xlu0 %v3544
    %v3546 = vpop.xlane.xlu0 %3545
    %v3547 = vsel %vm562, %v3365, 0.0
    %3548 = vadd.xlane.f32.xlu0 %v3547
    %v3549 = vpop.xlane.xlu0 %3548
    %v3550 = vsel %vm562, %v3366, 0.0
    %3551 = vadd.xlane.f32.xlu0 %v3550
    %v3552 = vpop.xlane.xlu0 %3551
    %v3553 = vsel %vm562, %v3367, 0.0
    %3554 = vadd.xlane.f32.xlu0 %v3553
    %v3555 = vpop.xlane.xlu0 %3554
    %v3556 = vsel %vm562, %v3368, 0.0
    %3557 = vadd.xlane.f32.xlu0 %v3556
    %v3558 = vpop.xlane.xlu0 %3557
    %v3559 = vsel %vm562, %v3369, 0.0
    %3560 = vadd.xlane.f32.xlu0 %v3559
    %v3561 = vpop.xlane.xlu0 %3560
    %v3562 = vsel %vm562, %v3370, 0.0
    %3563 = vadd.xlane.f32.xlu0 %v3562
    %v3564 = vpop.xlane.xlu0 %3563
    %v3565 = vsel %vm562, %v3371, 0.0
    %3566 = vadd.xlane.f32.xlu0 %v3565
    %v3567 = vpop.xlane.xlu0 %3566
    %v3568 = vsel %vm562, %v3372, 0.0
    %3569 = vadd.xlane.f32.xlu0 %v3568
    %v3570 = vpop.xlane.xlu0 %3569
    %v3571 = vsel %vm562, %v3373, 0.0
    %3572 = vadd.xlane.f32.xlu0 %v3571
    %v3573 = vpop.xlane.xlu0 %3572
    %v3574 = vsel %vm562, %v3374, 0.0
    %3575 = vadd.xlane.f32.xlu0 %v3574
    %v3576 = vpop.xlane.xlu0 %3575
    %v3577 = vsel %vm562, %v3375, 0.0
    %3578 = vadd.xlane.f32.xlu0 %v3577
    %v3579 = vpop.xlane.xlu0 %3578
    %v3580 = vsel %vm562, %v3376, 0.0
    %3581 = vadd.xlane.f32.xlu0 %v3580
    %v3582 = vpop.xlane.xlu0 %3581
    %v3583 = vsel %vm562, %v3377, 0.0
    %3584 = vadd.xlane.f32.xlu0 %v3583
    %v3585 = vpop.xlane.xlu0 %3584
    %v3586 = vsel %vm562, %v3378, 0.0
    %3587 = vadd.xlane.f32.xlu0 %v3586
    %v3588 = vpop.xlane.xlu0 %3587
    %v3589 = vsel %vm562, %v3379, 0.0
    %3590 = vadd.xlane.f32.xlu0 %v3589
    %v3591 = vpop.xlane.xlu0 %3590
    %v3592 = vsel %vm562, %v3380, 0.0
    %3593 = vadd.xlane.f32.xlu0 %v3592
    %v3594 = vpop.xlane.xlu0 %3593
    %v3595 = vsel %vm562, %v3381, 0.0
    %3596 = vadd.xlane.f32.xlu0 %v3595
    %v3597 = vpop.xlane.xlu0 %3596
    %v3598 = vsel %vm562, %v3382, 0.0
    %3599 = vadd.xlane.f32.xlu0 %v3598
    %v3600 = vpop.xlane.xlu0 %3599
    %v3601 = vsel %vm562, %v3383, 0.0
    %3602 = vadd.xlane.f32.xlu0 %v3601
    %v3603 = vpop.xlane.xlu0 %3602
    %v3604 = vsel %vm562, %v3384, 0.0
    %3605 = vadd.xlane.f32.xlu0 %v3604
    %v3606 = vpop.xlane.xlu0 %3605
    %v3607 = vsel %vm562, %v3385, 0.0
    %3608 = vadd.xlane.f32.xlu0 %v3607
    %v3609 = vpop.xlane.xlu0 %3608
    %v3610 = vsel %vm562, %v3386, 0.0
    %3611 = vadd.xlane.f32.xlu0 %v3610
    %v3612 = vpop.xlane.xlu0 %3611
    %v3613 = vsel %vm562, %v3387, 0.0
    %3614 = vadd.xlane.f32.xlu0 %v3613
    %v3615 = vpop.xlane.xlu0 %3614
    %v3616 = vsel %vm562, %v3388, 0.0
    %3617 = vadd.xlane.f32.xlu0 %v3616
    %v3618 = vpop.xlane.xlu0 %3617
    %v3619 = vsel %vm562, %v3389, 0.0
    %3620 = vadd.xlane.f32.xlu0 %v3619
    %v3621 = vpop.xlane.xlu0 %3620
    %v3622 = vsel %vm562, %v3390, 0.0
    %3623 = vadd.xlane.f32.xlu0 %v3622
    %v3624 = vpop.xlane.xlu0 %3623
    %v3625 = vsel %vm562, %v3391, 0.0
    %3626 = vadd.xlane.f32.xlu0 %v3625
    %v3627 = vpop.xlane.xlu0 %3626
    %v3628 = vsel %vm562, %v3392, 0.0
    %3629 = vadd.xlane.f32.xlu0 %v3628
    %v3630 = vpop.xlane.xlu0 %3629
    %v3631 = vsel %vm562, %v3393, 0.0
    %3632 = vadd.xlane.f32.xlu0 %v3631
    %v3633 = vpop.xlane.xlu0 %3632
    %v3634 = vsel %vm562, %v3394, 0.0
    %3635 = vadd.xlane.f32.xlu0 %v3634
    %v3636 = vpop.xlane.xlu0 %3635
    %v3637 = vsel %vm562, %v3395, 0.0
    %3638 = vadd.xlane.f32.xlu0 %v3637
    %v3639 = vpop.xlane.xlu0 %3638
    %v3640 = vsel %vm562, %v3396, 0.0
    %3641 = vadd.xlane.f32.xlu0 %v3640
    %v3642 = vpop.xlane.xlu0 %3641
    %v3643 = vsel %vm562, %v3397, 0.0
    %3644 = vadd.xlane.f32.xlu0 %v3643
    %v3645 = vpop.xlane.xlu0 %3644
    %v3646 = vsel %vm562, %v3398, 0.0
    %3647 = vadd.xlane.f32.xlu0 %v3646
    %v3648 = vpop.xlane.xlu0 %3647
    %v3649 = vsel %vm562, %v3399, 0.0
    %3650 = vadd.xlane.f32.xlu0 %v3649
    %v3651 = vpop.xlane.xlu0 %3650
    %v3652 = vsel %vm562, %v3400, 0.0
    %3653 = vadd.xlane.f32.xlu0 %v3652
    %v3654 = vpop.xlane.xlu0 %3653
    %v3655 = vsel %vm562, %v3401, 0.0
    %3656 = vadd.xlane.f32.xlu0 %v3655
    %v3657 = vpop.xlane.xlu0 %3656
    %v3658 = vsel %vm562, %v3402, 0.0
    %3659 = vadd.xlane.f32.xlu0 %v3658
    %v3660 = vpop.xlane.xlu0 %3659
    %v3661 = vsel %vm562, %v3403, 0.0
    %3662 = vadd.xlane.f32.xlu0 %v3661
    %v3663 = vpop.xlane.xlu0 %3662
    %v3664 = vsel %vm562, %v3404, 0.0
    %3665 = vadd.xlane.f32.xlu0 %v3664
    %v3666 = vpop.xlane.xlu0 %3665
    %v3667 = vsel %vm562, %v3405, 0.0
    %3668 = vadd.xlane.f32.xlu0 %v3667
    %v3669 = vpop.xlane.xlu0 %3668
    %v3670 = vsel %vm562, %v3406, 0.0
    %3671 = vadd.xlane.f32.xlu0 %v3670
    %v3672 = vpop.xlane.xlu0 %3671
    %v3673 = vsel %vm562, %v3407, 0.0
    %3674 = vadd.xlane.f32.xlu0 %v3673
    %v3675 = vpop.xlane.xlu0 %3674
    %v3676 = vsel %vm562, %v3408, 0.0
    %3677 = vadd.xlane.f32.xlu0 %v3676
    %v3678 = vpop.xlane.xlu0 %3677
    %v3679 = vsel %vm562, %v3409, 0.0
    %3680 = vadd.xlane.f32.xlu0 %v3679
    %v3681 = vpop.xlane.xlu0 %3680
    %v3682 = vsel %vm562, %v3410, 0.0
    %3683 = vadd.xlane.f32.xlu0 %v3682
    %v3684 = vpop.xlane.xlu0 %3683
    %v3685 = vsel %vm562, %v3411, 0.0
    %3686 = vadd.xlane.f32.xlu0 %v3685
    %v3687 = vpop.xlane.xlu0 %3686
    %v3688 = vsel %vm562, %v3412, 0.0
    %3689 = vadd.xlane.f32.xlu0 %v3688
    %v3690 = vpop.xlane.xlu0 %3689
    %v3691 = vsel %vm562, %v3413, 0.0
    %3692 = vadd.xlane.f32.xlu0 %v3691
    %v3693 = vpop.xlane.xlu0 %3692
    %v3694 = vsel %vm562, %v3414, 0.0
    %3695 = vadd.xlane.f32.xlu0 %v3694
    %v3696 = vpop.xlane.xlu0 %3695
    %v3697 = vsel %vm562, %v3415, 0.0
    %3698 = vadd.xlane.f32.xlu0 %v3697
    %v3699 = vpop.xlane.xlu0 %3698
    %v3700 = vsel %vm562, %v3416, 0.0
    %3701 = vadd.xlane.f32.xlu0 %v3700
    %v3702 = vpop.xlane.xlu0 %3701
    %v3703 = vsel %vm562, %v3417, 0.0
    %3704 = vadd.xlane.f32.xlu0 %v3703
    %v3705 = vpop.xlane.xlu0 %3704
    %v3706 = vmul.f32 %v3420, %v617
    %v3707 = vmul.f32 %v3423, %v617
    %v3708 = vmul.f32 %v3426, %v617
    %v3709 = vmul.f32 %v3429, %v617
    %v3710 = vmul.f32 %v3432, %v617
    %v3711 = vmul.f32 %v3435, %v617
    %v3712 = vmul.f32 %v3438, %v617
    %v3713 = vmul.f32 %v3441, %v617
    %v3714 = vmul.f32 %v3444, %v617
    %v3715 = vmul.f32 %v3447, %v617
    %v3716 = vmul.f32 %v3450, %v617
    %v3717 = vmul.f32 %v3453, %v617
    %v3718 = vmul.f32 %v3456, %v617
    %v3719 = vmul.f32 %v3459, %v617
    %v3720 = vmul.f32 %v3462, %v617
    %v3721 = vmul.f32 %v3465, %v617
    %v3722 = vmul.f32 %v3468, %v617
    %v3723 = vmul.f32 %v3471, %v617
    %v3724 = vmul.f32 %v3474, %v617
    %v3725 = vmul.f32 %v3477, %v617
    %v3726 = vmul.f32 %v3480, %v617
    %v3727 = vmul.f32 %v3483, %v617
    %v3728 = vmul.f32 %v3486, %v617
    %v3729 = vmul.f32 %v3489, %v617
    %v3730 = vmul.f32 %v3492, %v617
    %v3731 = vmul.f32 %v3495, %v617
    %v3732 = vmul.f32 %v3498, %v617
    %v3733 = vmul.f32 %v3501, %v617
    %v3734 = vmul.f32 %v3504, %v617
    %v3735 = vmul.f32 %v3507, %v617
    %v3736 = vmul.f32 %v3510, %v617
    %v3737 = vmul.f32 %v3513, %v617
    %v3738 = vmul.f32 %v3516, %v617
    %v3739 = vmul.f32 %v3519, %v617
    %v3740 = vmul.f32 %v3522, %v617
    %v3741 = vmul.f32 %v3525, %v617
    %v3742 = vmul.f32 %v3528, %v617
    %v3743 = vmul.f32 %v3531, %v617
    %v3744 = vmul.f32 %v3534, %v617
    %v3745 = vmul.f32 %v3537, %v617
    %v3746 = vmul.f32 %v3540, %v617
    %v3747 = vmul.f32 %v3543, %v617
    %v3748 = vmul.f32 %v3546, %v617
    %v3749 = vmul.f32 %v3549, %v617
    %v3750 = vmul.f32 %v3552, %v617
    %v3751 = vmul.f32 %v3555, %v617
    %v3752 = vmul.f32 %v3558, %v617
    %v3753 = vmul.f32 %v3561, %v617
    %v3754 = vmul.f32 %v3564, %v617
    %v3755 = vmul.f32 %v3567, %v617
    %v3756 = vmul.f32 %v3570, %v617
    %v3757 = vmul.f32 %v3573, %v617
    %v3758 = vmul.f32 %v3576, %v617
    %v3759 = vmul.f32 %v3579, %v617
    %v3760 = vmul.f32 %v3582, %v617
    %v3761 = vmul.f32 %v3585, %v617
    %v3762 = vmul.f32 %v3588, %v617
    %v3763 = vmul.f32 %v3591, %v617
    %v3764 = vmul.f32 %v3594, %v617
    %v3765 = vmul.f32 %v3597, %v617
    %v3766 = vmul.f32 %v3600, %v617
    %v3767 = vmul.f32 %v3603, %v617
    %v3768 = vmul.f32 %v3606, %v617
    %v3769 = vmul.f32 %v3609, %v617
    %v3770 = vmul.f32 %v3612, %v617
    %v3771 = vmul.f32 %v3615, %v617
    %v3772 = vmul.f32 %v3618, %v617
    %v3773 = vmul.f32 %v3621, %v617
    %v3774 = vmul.f32 %v3624, %v617
    %v3775 = vmul.f32 %v3627, %v617
    %v3776 = vmul.f32 %v3630, %v617
    %v3777 = vmul.f32 %v3633, %v617
    %v3778 = vmul.f32 %v3636, %v617
    %v3779 = vmul.f32 %v3639, %v617
    %v3780 = vmul.f32 %v3642, %v617
    %v3781 = vmul.f32 %v3645, %v617
    %v3782 = vmul.f32 %v3648, %v617
    %v3783 = vmul.f32 %v3651, %v617
    %v3784 = vmul.f32 %v3654, %v617
    %v3785 = vmul.f32 %v3657, %v617
    %v3786 = vmul.f32 %v3660, %v617
    %v3787 = vmul.f32 %v3663, %v617
    %v3788 = vmul.f32 %v3666, %v617
    %v3789 = vmul.f32 %v3669, %v617
    %v3790 = vmul.f32 %v3672, %v617
    %v3791 = vmul.f32 %v3675, %v617
    %v3792 = vmul.f32 %v3678, %v617
    %v3793 = vmul.f32 %v3681, %v617
    %v3794 = vmul.f32 %v3684, %v617
    %v3795 = vmul.f32 %v3687, %v617
    %v3796 = vmul.f32 %v3690, %v617
    %v3797 = vmul.f32 %v3693, %v617
    %v3798 = vmul.f32 %v3696, %v617
    %v3799 = vmul.f32 %v3699, %v617
    %v3800 = vmul.f32 %v3702, %v617
    %v3801 = vmul.f32 %v3705, %v617
    %v3802 = vmul.f32 %v3322, %v3322
    %v3803 = vmul.f32 %v3323, %v3323
    %v3804 = vmul.f32 %v3324, %v3324
    %v3805 = vmul.f32 %v3325, %v3325
    %v3806 = vmul.f32 %v3326, %v3326
    %v3807 = vmul.f32 %v3327, %v3327
    %v3808 = vmul.f32 %v3328, %v3328
    %v3809 = vmul.f32 %v3329, %v3329
    %v3810 = vmul.f32 %v3330, %v3330
    %v3811 = vmul.f32 %v3331, %v3331
    %v3812 = vmul.f32 %v3332, %v3332
    %v3813 = vmul.f32 %v3333, %v3333
    %v3814 = vmul.f32 %v3334, %v3334
    %v3815 = vmul.f32 %v3335, %v3335
    %v3816 = vmul.f32 %v3336, %v3336
    %v3817 = vmul.f32 %v3337, %v3337
    %v3818 = vmul.f32 %v3338, %v3338
    %v3819 = vmul.f32 %v3339, %v3339
    %v3820 = vmul.f32 %v3340, %v3340
    %v3821 = vmul.f32 %v3341, %v3341
    %v3822 = vmul.f32 %v3342, %v3342
    %v3823 = vmul.f32 %v3343, %v3343
    %v3824 = vmul.f32 %v3344, %v3344
    %v3825 = vmul.f32 %v3345, %v3345
    %v3826 = vmul.f32 %v3346, %v3346
    %v3827 = vmul.f32 %v3347, %v3347
    %v3828 = vmul.f32 %v3348, %v3348
    %v3829 = vmul.f32 %v3349, %v3349
    %v3830 = vmul.f32 %v3350, %v3350
    %v3831 = vmul.f32 %v3351, %v3351
    %v3832 = vmul.f32 %v3352, %v3352
    %v3833 = vmul.f32 %v3353, %v3353
    %v3834 = vmul.f32 %v3354, %v3354
    %v3835 = vmul.f32 %v3355, %v3355
    %v3836 = vmul.f32 %v3356, %v3356
    %v3837 = vmul.f32 %v3357, %v3357
    %v3838 = vmul.f32 %v3358, %v3358
    %v3839 = vmul.f32 %v3359, %v3359
    %v3840 = vmul.f32 %v3360, %v3360
    %v3841 = vmul.f32 %v3361, %v3361
    %v3842 = vmul.f32 %v3362, %v3362
    %v3843 = vmul.f32 %v3363, %v3363
    %v3844 = vmul.f32 %v3364, %v3364
    %v3845 = vmul.f32 %v3365, %v3365
    %v3846 = vmul.f32 %v3366, %v3366
    %v3847 = vmul.f32 %v3367, %v3367
    %v3848 = vmul.f32 %v3368, %v3368
    %v3849 = vmul.f32 %v3369, %v3369
    %v3850 = vmul.f32 %v3370, %v3370
    %v3851 = vmul.f32 %v3371, %v3371
    %v3852 = vmul.f32 %v3372, %v3372
    %v3853 = vmul.f32 %v3373, %v3373
    %v3854 = vmul.f32 %v3374, %v3374
    %v3855 = vmul.f32 %v3375, %v3375
    %v3856 = vmul.f32 %v3376, %v3376
    %v3857 = vmul.f32 %v3377, %v3377
    %v3858 = vmul.f32 %v3378, %v3378
    %v3859 = vmul.f32 %v3379, %v3379
    %v3860 = vmul.f32 %v3380, %v3380
    %v3861 = vmul.f32 %v3381, %v3381
    %v3862 = vmul.f32 %v3382, %v3382
    %v3863 = vmul.f32 %v3383, %v3383
    %v3864 = vmul.f32 %v3384, %v3384
    %v3865 = vmul.f32 %v3385, %v3385
    %v3866 = vmul.f32 %v3386, %v3386
    %v3867 = vmul.f32 %v3387, %v3387
    %v3868 = vmul.f32 %v3388, %v3388
    %v3869 = vmul.f32 %v3389, %v3389
    %v3870 = vmul.f32 %v3390, %v3390
    %v3871 = vmul.f32 %v3391, %v3391
    %v3872 = vmul.f32 %v3392, %v3392
    %v3873 = vmul.f32 %v3393, %v3393
    %v3874 = vmul.f32 %v3394, %v3394
    %v3875 = vmul.f32 %v3395, %v3395
    %v3876 = vmul.f32 %v3396, %v3396
    %v3877 = vmul.f32 %v3397, %v3397
    %v3878 = vmul.f32 %v3398, %v3398
    %v3879 = vmul.f32 %v3399, %v3399
    %v3880 = vmul.f32 %v3400, %v3400
    %v3881 = vmul.f32 %v3401, %v3401
    %v3882 = vmul.f32 %v3402, %v3402
    %v3883 = vmul.f32 %v3403, %v3403
    %v3884 = vmul.f32 %v3404, %v3404
    %v3885 = vmul.f32 %v3405, %v3405
    %v3886 = vmul.f32 %v3406, %v3406
    %v3887 = vmul.f32 %v3407, %v3407
    %v3888 = vmul.f32 %v3408, %v3408
    %v3889 = vmul.f32 %v3409, %v3409
    %v3890 = vmul.f32 %v3410, %v3410
    %v3891 = vmul.f32 %v3411, %v3411
    %v3892 = vmul.f32 %v3412, %v3412
    %v3893 = vmul.f32 %v3413, %v3413
    %v3894 = vmul.f32 %v3414, %v3414
    %v3895 = vmul.f32 %v3415, %v3415
    %v3896 = vmul.f32 %v3416, %v3416
    %v3897 = vmul.f32 %v3417, %v3417
    %v3898 = vsel %vm562, %v3802, 0.0
    %3899 = vadd.xlane.f32.xlu0 %v3898
    %v3900 = vpop.xlane.xlu0 %3899
    %v3901 = vsel %vm562, %v3803, 0.0
    %3902 = vadd.xlane.f32.xlu0 %v3901
    %v3903 = vpop.xlane.xlu0 %3902
    %v3904 = vsel %vm562, %v3804, 0.0
    %3905 = vadd.xlane.f32.xlu0 %v3904
    %v3906 = vpop.xlane.xlu0 %3905
    %v3907 = vsel %vm562, %v3805, 0.0
    %3908 = vadd.xlane.f32.xlu0 %v3907
    %v3909 = vpop.xlane.xlu0 %3908
    %v3910 = vsel %vm562, %v3806, 0.0
    %3911 = vadd.xlane.f32.xlu0 %v3910
    %v3912 = vpop.xlane.xlu0 %3911
    %v3913 = vsel %vm562, %v3807, 0.0
    %3914 = vadd.xlane.f32.xlu0 %v3913
    %v3915 = vpop.xlane.xlu0 %3914
    %v3916 = vsel %vm562, %v3808, 0.0
    %3917 = vadd.xlane.f32.xlu0 %v3916
    %v3918 = vpop.xlane.xlu0 %3917
    %v3919 = vsel %vm562, %v3809, 0.0
    %3920 = vadd.xlane.f32.xlu0 %v3919
    %v3921 = vpop.xlane.xlu0 %3920
    %v3922 = vsel %vm562, %v3810, 0.0
    %3923 = vadd.xlane.f32.xlu0 %v3922
    %v3924 = vpop.xlane.xlu0 %3923
    %v3925 = vsel %vm562, %v3811, 0.0
    %3926 = vadd.xlane.f32.xlu0 %v3925
    %v3927 = vpop.xlane.xlu0 %3926
    %v3928 = vsel %vm562, %v3812, 0.0
    %3929 = vadd.xlane.f32.xlu0 %v3928
    %v3930 = vpop.xlane.xlu0 %3929
    %v3931 = vsel %vm562, %v3813, 0.0
    %3932 = vadd.xlane.f32.xlu0 %v3931
    %v3933 = vpop.xlane.xlu0 %3932
    %v3934 = vsel %vm562, %v3814, 0.0
    %3935 = vadd.xlane.f32.xlu0 %v3934
    %v3936 = vpop.xlane.xlu0 %3935
    %v3937 = vsel %vm562, %v3815, 0.0
    %3938 = vadd.xlane.f32.xlu0 %v3937
    %v3939 = vpop.xlane.xlu0 %3938
    %v3940 = vsel %vm562, %v3816, 0.0
    %3941 = vadd.xlane.f32.xlu0 %v3940
    %v3942 = vpop.xlane.xlu0 %3941
    %v3943 = vsel %vm562, %v3817, 0.0
    %3944 = vadd.xlane.f32.xlu0 %v3943
    %v3945 = vpop.xlane.xlu0 %3944
    %v3946 = vsel %vm562, %v3818, 0.0
    %3947 = vadd.xlane.f32.xlu0 %v3946
    %v3948 = vpop.xlane.xlu0 %3947
    %v3949 = vsel %vm562, %v3819, 0.0
    %3950 = vadd.xlane.f32.xlu0 %v3949
    %v3951 = vpop.xlane.xlu0 %3950
    %v3952 = vsel %vm562, %v3820, 0.0
    %3953 = vadd.xlane.f32.xlu0 %v3952
    %v3954 = vpop.xlane.xlu0 %3953
    %v3955 = vsel %vm562, %v3821, 0.0
    %3956 = vadd.xlane.f32.xlu0 %v3955
    %v3957 = vpop.xlane.xlu0 %3956
    %v3958 = vsel %vm562, %v3822, 0.0
    %3959 = vadd.xlane.f32.xlu0 %v3958
    %v3960 = vpop.xlane.xlu0 %3959
    %v3961 = vsel %vm562, %v3823, 0.0
    %3962 = vadd.xlane.f32.xlu0 %v3961
    %v3963 = vpop.xlane.xlu0 %3962
    %v3964 = vsel %vm562, %v3824, 0.0
    %3965 = vadd.xlane.f32.xlu0 %v3964
    %v3966 = vpop.xlane.xlu0 %3965
    %v3967 = vsel %vm562, %v3825, 0.0
    %3968 = vadd.xlane.f32.xlu0 %v3967
    %v3969 = vpop.xlane.xlu0 %3968
    %v3970 = vsel %vm562, %v3826, 0.0
    %3971 = vadd.xlane.f32.xlu0 %v3970
    %v3972 = vpop.xlane.xlu0 %3971
    %v3973 = vsel %vm562, %v3827, 0.0
    %3974 = vadd.xlane.f32.xlu0 %v3973
    %v3975 = vpop.xlane.xlu0 %3974
    %v3976 = vsel %vm562, %v3828, 0.0
    %3977 = vadd.xlane.f32.xlu0 %v3976
    %v3978 = vpop.xlane.xlu0 %3977
    %v3979 = vsel %vm562, %v3829, 0.0
    %3980 = vadd.xlane.f32.xlu0 %v3979
    %v3981 = vpop.xlane.xlu0 %3980
    %v3982 = vsel %vm562, %v3830, 0.0
    %3983 = vadd.xlane.f32.xlu0 %v3982
    %v3984 = vpop.xlane.xlu0 %3983
    %v3985 = vsel %vm562, %v3831, 0.0
    %3986 = vadd.xlane.f32.xlu0 %v3985
    %v3987 = vpop.xlane.xlu0 %3986
    %v3988 = vsel %vm562, %v3832, 0.0
    %3989 = vadd.xlane.f32.xlu0 %v3988
    %v3990 = vpop.xlane.xlu0 %3989
    %v3991 = vsel %vm562, %v3833, 0.0
    %3992 = vadd.xlane.f32.xlu0 %v3991
    %v3993 = vpop.xlane.xlu0 %3992
    %v3994 = vsel %vm562, %v3834, 0.0
    %3995 = vadd.xlane.f32.xlu0 %v3994
    %v3996 = vpop.xlane.xlu0 %3995
    %v3997 = vsel %vm562, %v3835, 0.0
    %3998 = vadd.xlane.f32.xlu0 %v3997
    %v3999 = vpop.xlane.xlu0 %3998
    %v4000 = vsel %vm562, %v3836, 0.0
    %4001 = vadd.xlane.f32.xlu0 %v4000
    %v4002 = vpop.xlane.xlu0 %4001
    %v4003 = vsel %vm562, %v3837, 0.0
    %4004 = vadd.xlane.f32.xlu0 %v4003
    %v4005 = vpop.xlane.xlu0 %4004
    %v4006 = vsel %vm562, %v3838, 0.0
    %4007 = vadd.xlane.f32.xlu0 %v4006
    %v4008 = vpop.xlane.xlu0 %4007
    %v4009 = vsel %vm562, %v3839, 0.0
    %4010 = vadd.xlane.f32.xlu0 %v4009
    %v4011 = vpop.xlane.xlu0 %4010
    %v4012 = vsel %vm562, %v3840, 0.0
    %4013 = vadd.xlane.f32.xlu0 %v4012
    %v4014 = vpop.xlane.xlu0 %4013
    %v4015 = vsel %vm562, %v3841, 0.0
    %4016 = vadd.xlane.f32.xlu0 %v4015
    %v4017 = vpop.xlane.xlu0 %4016
    %v4018 = vsel %vm562, %v3842, 0.0
    %4019 = vadd.xlane.f32.xlu0 %v4018
    %v4020 = vpop.xlane.xlu0 %4019
    %v4021 = vsel %vm562, %v3843, 0.0
    %4022 = vadd.xlane.f32.xlu0 %v4021
    %v4023 = vpop.xlane.xlu0 %4022
    %v4024 = vsel %vm562, %v3844, 0.0
    %4025 = vadd.xlane.f32.xlu0 %v4024
    %v4026 = vpop.xlane.xlu0 %4025
    %v4027 = vsel %vm562, %v3845, 0.0
    %4028 = vadd.xlane.f32.xlu0 %v4027
    %v4029 = vpop.xlane.xlu0 %4028
    %v4030 = vsel %vm562, %v3846, 0.0
    %4031 = vadd.xlane.f32.xlu0 %v4030
    %v4032 = vpop.xlane.xlu0 %4031
    %v4033 = vsel %vm562, %v3847, 0.0
    %4034 = vadd.xlane.f32.xlu0 %v4033
    %v4035 = vpop.xlane.xlu0 %4034
    %v4036 = vsel %vm562, %v3848, 0.0
    %4037 = vadd.xlane.f32.xlu0 %v4036
    %v4038 = vpop.xlane.xlu0 %4037
    %v4039 = vsel %vm562, %v3849, 0.0
    %4040 = vadd.xlane.f32.xlu0 %v4039
    %v4041 = vpop.xlane.xlu0 %4040
    %v4042 = vsel %vm562, %v3850, 0.0
    %4043 = vadd.xlane.f32.xlu0 %v4042
    %v4044 = vpop.xlane.xlu0 %4043
    %v4045 = vsel %vm562, %v3851, 0.0
    %4046 = vadd.xlane.f32.xlu0 %v4045
    %v4047 = vpop.xlane.xlu0 %4046
    %v4048 = vsel %vm562, %v3852, 0.0
    %4049 = vadd.xlane.f32.xlu0 %v4048
    %v4050 = vpop.xlane.xlu0 %4049
    %v4051 = vsel %vm562, %v3853, 0.0
    %4052 = vadd.xlane.f32.xlu0 %v4051
    %v4053 = vpop.xlane.xlu0 %4052
    %v4054 = vsel %vm562, %v3854, 0.0
    %4055 = vadd.xlane.f32.xlu0 %v4054
    %v4056 = vpop.xlane.xlu0 %4055
    %v4057 = vsel %vm562, %v3855, 0.0
    %4058 = vadd.xlane.f32.xlu0 %v4057
    %v4059 = vpop.xlane.xlu0 %4058
    %v4060 = vsel %vm562, %v3856, 0.0
    %4061 = vadd.xlane.f32.xlu0 %v4060
    %v4062 = vpop.xlane.xlu0 %4061
    %v4063 = vsel %vm562, %v3857, 0.0
    %4064 = vadd.xlane.f32.xlu0 %v4063
    %v4065 = vpop.xlane.xlu0 %4064
    %v4066 = vsel %vm562, %v3858, 0.0
    %4067 = vadd.xlane.f32.xlu0 %v4066
    %v4068 = vpop.xlane.xlu0 %4067
    %v4069 = vsel %vm562, %v3859, 0.0
    %4070 = vadd.xlane.f32.xlu0 %v4069
    %v4071 = vpop.xlane.xlu0 %4070
    %v4072 = vsel %vm562, %v3860, 0.0
    %4073 = vadd.xlane.f32.xlu0 %v4072
    %v4074 = vpop.xlane.xlu0 %4073
    %v4075 = vsel %vm562, %v3861, 0.0
    %4076 = vadd.xlane.f32.xlu0 %v4075
    %v4077 = vpop.xlane.xlu0 %4076
    %v4078 = vsel %vm562, %v3862, 0.0
    %4079 = vadd.xlane.f32.xlu0 %v4078
    %v4080 = vpop.xlane.xlu0 %4079
    %v4081 = vsel %vm562, %v3863, 0.0
    %4082 = vadd.xlane.f32.xlu0 %v4081
    %v4083 = vpop.xlane.xlu0 %4082
    %v4084 = vsel %vm562, %v3864, 0.0
    %4085 = vadd.xlane.f32.xlu0 %v4084
    %v4086 = vpop.xlane.xlu0 %4085
    %v4087 = vsel %vm562, %v3865, 0.0
    %4088 = vadd.xlane.f32.xlu0 %v4087
    %v4089 = vpop.xlane.xlu0 %4088
    %v4090 = vsel %vm562, %v3866, 0.0
    %4091 = vadd.xlane.f32.xlu0 %v4090
    %v4092 = vpop.xlane.xlu0 %4091
    %v4093 = vsel %vm562, %v3867, 0.0
    %4094 = vadd.xlane.f32.xlu0 %v4093
    %v4095 = vpop.xlane.xlu0 %4094
    %v4096 = vsel %vm562, %v3868, 0.0
    %4097 = vadd.xlane.f32.xlu0 %v4096
    %v4098 = vpop.xlane.xlu0 %4097
    %v4099 = vsel %vm562, %v3869, 0.0
    %4100 = vadd.xlane.f32.xlu0 %v4099
    %v4101 = vpop.xlane.xlu0 %4100
    %v4102 = vsel %vm562, %v3870, 0.0
    %4103 = vadd.xlane.f32.xlu0 %v4102
    %v4104 = vpop.xlane.xlu0 %4103
    %v4105 = vsel %vm562, %v3871, 0.0
    %4106 = vadd.xlane.f32.xlu0 %v4105
    %v4107 = vpop.xlane.xlu0 %4106
    %v4108 = vsel %vm562, %v3872, 0.0
    %4109 = vadd.xlane.f32.xlu0 %v4108
    %v4110 = vpop.xlane.xlu0 %4109
    %v4111 = vsel %vm562, %v3873, 0.0
    %4112 = vadd.xlane.f32.xlu0 %v4111
    %v4113 = vpop.xlane.xlu0 %4112
    %v4114 = vsel %vm562, %v3874, 0.0
    %4115 = vadd.xlane.f32.xlu0 %v4114
    %v4116 = vpop.xlane.xlu0 %4115
    %v4117 = vsel %vm562, %v3875, 0.0
    %4118 = vadd.xlane.f32.xlu0 %v4117
    %v4119 = vpop.xlane.xlu0 %4118
    %v4120 = vsel %vm562, %v3876, 0.0
    %4121 = vadd.xlane.f32.xlu0 %v4120
    %v4122 = vpop.xlane.xlu0 %4121
    %v4123 = vsel %vm562, %v3877, 0.0
    %4124 = vadd.xlane.f32.xlu0 %v4123
    %v4125 = vpop.xlane.xlu0 %4124
    %v4126 = vsel %vm562, %v3878, 0.0
    %4127 = vadd.xlane.f32.xlu0 %v4126
    %v4128 = vpop.xlane.xlu0 %4127
    %v4129 = vsel %vm562, %v3879, 0.0
    %4130 = vadd.xlane.f32.xlu0 %v4129
    %v4131 = vpop.xlane.xlu0 %4130
    %v4132 = vsel %vm562, %v3880, 0.0
    %4133 = vadd.xlane.f32.xlu0 %v4132
    %v4134 = vpop.xlane.xlu0 %4133
    %v4135 = vsel %vm562, %v3881, 0.0
    %4136 = vadd.xlane.f32.xlu0 %v4135
    %v4137 = vpop.xlane.xlu0 %4136
    %v4138 = vsel %vm562, %v3882, 0.0
    %4139 = vadd.xlane.f32.xlu0 %v4138
    %v4140 = vpop.xlane.xlu0 %4139
    %v4141 = vsel %vm562, %v3883, 0.0
    %4142 = vadd.xlane.f32.xlu0 %v4141
    %v4143 = vpop.xlane.xlu0 %4142
    %v4144 = vsel %vm562, %v3884, 0.0
    %4145 = vadd.xlane.f32.xlu0 %v4144
    %v4146 = vpop.xlane.xlu0 %4145
    %v4147 = vsel %vm562, %v3885, 0.0
    %4148 = vadd.xlane.f32.xlu0 %v4147
    %v4149 = vpop.xlane.xlu0 %4148
    %v4150 = vsel %vm562, %v3886, 0.0
    %4151 = vadd.xlane.f32.xlu0 %v4150
    %v4152 = vpop.xlane.xlu0 %4151
    %v4153 = vsel %vm562, %v3887, 0.0
    %4154 = vadd.xlane.f32.xlu0 %v4153
    %v4155 = vpop.xlane.xlu0 %4154
    %v4156 = vsel %vm562, %v3888, 0.0
    %4157 = vadd.xlane.f32.xlu0 %v4156
    %v4158 = vpop.xlane.xlu0 %4157
    %v4159 = vsel %vm562, %v3889, 0.0
    %4160 = vadd.xlane.f32.xlu0 %v4159
    %v4161 = vpop.xlane.xlu0 %4160
    %v4162 = vsel %vm562, %v3890, 0.0
    %4163 = vadd.xlane.f32.xlu0 %v4162
    %v4164 = vpop.xlane.xlu0 %4163
    %v4165 = vsel %vm562, %v3891, 0.0
    %4166 = vadd.xlane.f32.xlu0 %v4165
    %v4167 = vpop.xlane.xlu0 %4166
    %v4168 = vsel %vm562, %v3892, 0.0
    %4169 = vadd.xlane.f32.xlu0 %v4168
    %v4170 = vpop.xlane.xlu0 %4169
    %v4171 = vsel %vm562, %v3893, 0.0
    %4172 = vadd.xlane.f32.xlu0 %v4171
    %v4173 = vpop.xlane.xlu0 %4172
    %v4174 = vsel %vm562, %v3894, 0.0
    %4175 = vadd.xlane.f32.xlu0 %v4174
    %v4176 = vpop.xlane.xlu0 %4175
    %v4177 = vsel %vm562, %v3895, 0.0
    %4178 = vadd.xlane.f32.xlu0 %v4177
    %v4179 = vpop.xlane.xlu0 %4178
    %v4180 = vsel %vm562, %v3896, 0.0
    %4181 = vadd.xlane.f32.xlu0 %v4180
    %v4182 = vpop.xlane.xlu0 %4181
    %v4183 = vsel %vm562, %v3897, 0.0
    %4184 = vadd.xlane.f32.xlu0 %v4183
    %v4185 = vpop.xlane.xlu0 %4184
    %v4186 = vmul.f32 %v3900, %v617
    %v4187 = vmul.f32 %v3903, %v617
    %v4188 = vmul.f32 %v3906, %v617
    %v4189 = vmul.f32 %v3909, %v617
    %v4190 = vmul.f32 %v3912, %v617
    %v4191 = vmul.f32 %v3915, %v617
    %v4192 = vmul.f32 %v3918, %v617
    %v4193 = vmul.f32 %v3921, %v617
    %v4194 = vmul.f32 %v3924, %v617
    %v4195 = vmul.f32 %v3927, %v617
    %v4196 = vmul.f32 %v3930, %v617
    %v4197 = vmul.f32 %v3933, %v617
    %v4198 = vmul.f32 %v3936, %v617
    %v4199 = vmul.f32 %v3939, %v617
    %v4200 = vmul.f32 %v3942, %v617
    %v4201 = vmul.f32 %v3945, %v617
    %v4202 = vmul.f32 %v3948, %v617
    %v4203 = vmul.f32 %v3951, %v617
    %v4204 = vmul.f32 %v3954, %v617
    %v4205 = vmul.f32 %v3957, %v617
    %v4206 = vmul.f32 %v3960, %v617
    %v4207 = vmul.f32 %v3963, %v617
    %v4208 = vmul.f32 %v3966, %v617
    %v4209 = vmul.f32 %v3969, %v617
    %v4210 = vmul.f32 %v3972, %v617
    %v4211 = vmul.f32 %v3975, %v617
    %v4212 = vmul.f32 %v3978, %v617
    %v4213 = vmul.f32 %v3981, %v617
    %v4214 = vmul.f32 %v3984, %v617
    %v4215 = vmul.f32 %v3987, %v617
    %v4216 = vmul.f32 %v3990, %v617
    %v4217 = vmul.f32 %v3993, %v617
    %v4218 = vmul.f32 %v3996, %v617
    %v4219 = vmul.f32 %v3999, %v617
    %v4220 = vmul.f32 %v4002, %v617
    %v4221 = vmul.f32 %v4005, %v617
    %v4222 = vmul.f32 %v4008, %v617
    %v4223 = vmul.f32 %v4011, %v617
    %v4224 = vmul.f32 %v4014, %v617
    %v4225 = vmul.f32 %v4017, %v617
    %v4226 = vmul.f32 %v4020, %v617
    %v4227 = vmul.f32 %v4023, %v617
    %v4228 = vmul.f32 %v4026, %v617
    %v4229 = vmul.f32 %v4029, %v617
    %v4230 = vmul.f32 %v4032, %v617
    %v4231 = vmul.f32 %v4035, %v617
    %v4232 = vmul.f32 %v4038, %v617
    %v4233 = vmul.f32 %v4041, %v617
    %v4234 = vmul.f32 %v4044, %v617
    %v4235 = vmul.f32 %v4047, %v617
    %v4236 = vmul.f32 %v4050, %v617
    %v4237 = vmul.f32 %v4053, %v617
    %v4238 = vmul.f32 %v4056, %v617
    %v4239 = vmul.f32 %v4059, %v617
    %v4240 = vmul.f32 %v4062, %v617
    %v4241 = vmul.f32 %v4065, %v617
    %v4242 = vmul.f32 %v4068, %v617
    %v4243 = vmul.f32 %v4071, %v617
    %v4244 = vmul.f32 %v4074, %v617
    %v4245 = vmul.f32 %v4077, %v617
    %v4246 = vmul.f32 %v4080, %v617
    %v4247 = vmul.f32 %v4083, %v617
    %v4248 = vmul.f32 %v4086, %v617
    %v4249 = vmul.f32 %v4089, %v617
    %v4250 = vmul.f32 %v4092, %v617
    %v4251 = vmul.f32 %v4095, %v617
    %v4252 = vmul.f32 %v4098, %v617
    %v4253 = vmul.f32 %v4101, %v617
    %v4254 = vmul.f32 %v4104, %v617
    %v4255 = vmul.f32 %v4107, %v617
    %v4256 = vmul.f32 %v4110, %v617
    %v4257 = vmul.f32 %v4113, %v617
    %v4258 = vmul.f32 %v4116, %v617
    %v4259 = vmul.f32 %v4119, %v617
    %v4260 = vmul.f32 %v4122, %v617
    %v4261 = vmul.f32 %v4125, %v617
    %v4262 = vmul.f32 %v4128, %v617
    %v4263 = vmul.f32 %v4131, %v617
    %v4264 = vmul.f32 %v4134, %v617
    %v4265 = vmul.f32 %v4137, %v617
    %v4266 = vmul.f32 %v4140, %v617
    %v4267 = vmul.f32 %v4143, %v617
    %v4268 = vmul.f32 %v4146, %v617
    %v4269 = vmul.f32 %v4149, %v617
    %v4270 = vmul.f32 %v4152, %v617
    %v4271 = vmul.f32 %v4155, %v617
    %v4272 = vmul.f32 %v4158, %v617
    %v4273 = vmul.f32 %v4161, %v617
    %v4274 = vmul.f32 %v4164, %v617
    %v4275 = vmul.f32 %v4167, %v617
    %v4276 = vmul.f32 %v4170, %v617
    %v4277 = vmul.f32 %v4173, %v617
    %v4278 = vmul.f32 %v4176, %v617
    %v4279 = vmul.f32 %v4179, %v617
    %v4280 = vmul.f32 %v4182, %v617
    %v4281 = vmul.f32 %v4185, %v617
    %v4282 = vmul.f32 %v3706, %v3706
    %v4283 = vmul.f32 %v3707, %v3707
    %v4284 = vmul.f32 %v3708, %v3708
    %v4285 = vmul.f32 %v3709, %v3709
    %v4286 = vmul.f32 %v3710, %v3710
    %v4287 = vmul.f32 %v3711, %v3711
    %v4288 = vmul.f32 %v3712, %v3712
    %v4289 = vmul.f32 %v3713, %v3713
    %v4290 = vmul.f32 %v3714, %v3714
    %v4291 = vmul.f32 %v3715, %v3715
    %v4292 = vmul.f32 %v3716, %v3716
    %v4293 = vmul.f32 %v3717, %v3717
    %v4294 = vmul.f32 %v3718, %v3718
    %v4295 = vmul.f32 %v3719, %v3719
    %v4296 = vmul.f32 %v3720, %v3720
    %v4297 = vmul.f32 %v3721, %v3721
    %v4298 = vmul.f32 %v3722, %v3722
    %v4299 = vmul.f32 %v3723, %v3723
    %v4300 = vmul.f32 %v3724, %v3724
    %v4301 = vmul.f32 %v3725, %v3725
    %v4302 = vmul.f32 %v3726, %v3726
    %v4303 = vmul.f32 %v3727, %v3727
    %v4304 = vmul.f32 %v3728, %v3728
    %v4305 = vmul.f32 %v3729, %v3729
    %v4306 = vmul.f32 %v3730, %v3730
    %v4307 = vmul.f32 %v3731, %v3731
    %v4308 = vmul.f32 %v3732, %v3732
    %v4309 = vmul.f32 %v3733, %v3733
    %v4310 = vmul.f32 %v3734, %v3734
    %v4311 = vmul.f32 %v3735, %v3735
    %v4312 = vmul.f32 %v3736, %v3736
    %v4313 = vmul.f32 %v3737, %v3737
    %v4314 = vmul.f32 %v3738, %v3738
    %v4315 = vmul.f32 %v3739, %v3739
    %v4316 = vmul.f32 %v3740, %v3740
    %v4317 = vmul.f32 %v3741, %v3741
    %v4318 = vmul.f32 %v3742, %v3742
    %v4319 = vmul.f32 %v3743, %v3743
    %v4320 = vmul.f32 %v3744, %v3744
    %v4321 = vmul.f32 %v3745, %v3745
    %v4322 = vmul.f32 %v3746, %v3746
    %v4323 = vmul.f32 %v3747, %v3747
    %v4324 = vmul.f32 %v3748, %v3748
    %v4325 = vmul.f32 %v3749, %v3749
    %v4326 = vmul.f32 %v3750, %v3750
    %v4327 = vmul.f32 %v3751, %v3751
    %v4328 = vmul.f32 %v3752, %v3752
    %v4329 = vmul.f32 %v3753, %v3753
    %v4330 = vmul.f32 %v3754, %v3754
    %v4331 = vmul.f32 %v3755, %v3755
    %v4332 = vmul.f32 %v3756, %v3756
    %v4333 = vmul.f32 %v3757, %v3757
    %v4334 = vmul.f32 %v3758, %v3758
    %v4335 = vmul.f32 %v3759, %v3759
    %v4336 = vmul.f32 %v3760, %v3760
    %v4337 = vmul.f32 %v3761, %v3761
    %v4338 = vmul.f32 %v3762, %v3762
    %v4339 = vmul.f32 %v3763, %v3763
    %v4340 = vmul.f32 %v3764, %v3764
    %v4341 = vmul.f32 %v3765, %v3765
    %v4342 = vmul.f32 %v3766, %v3766
    %v4343 = vmul.f32 %v3767, %v3767
    %v4344 = vmul.f32 %v3768, %v3768
    %v4345 = vmul.f32 %v3769, %v3769
    %v4346 = vmul.f32 %v3770, %v3770
    %v4347 = vmul.f32 %v3771, %v3771
    %v4348 = vmul.f32 %v3772, %v3772
    %v4349 = vmul.f32 %v3773, %v3773
    %v4350 = vmul.f32 %v3774, %v3774
    %v4351 = vmul.f32 %v3775, %v3775
    %v4352 = vmul.f32 %v3776, %v3776
    %v4353 = vmul.f32 %v3777, %v3777
    %v4354 = vmul.f32 %v3778, %v3778
    %v4355 = vmul.f32 %v3779, %v3779
    %v4356 = vmul.f32 %v3780, %v3780
    %v4357 = vmul.f32 %v3781, %v3781
    %v4358 = vmul.f32 %v3782, %v3782
    %v4359 = vmul.f32 %v3783, %v3783
    %v4360 = vmul.f32 %v3784, %v3784
    %v4361 = vmul.f32 %v3785, %v3785
    %v4362 = vmul.f32 %v3786, %v3786
    %v4363 = vmul.f32 %v3787, %v3787
    %v4364 = vmul.f32 %v3788, %v3788
    %v4365 = vmul.f32 %v3789, %v3789
    %v4366 = vmul.f32 %v3790, %v3790
    %v4367 = vmul.f32 %v3791, %v3791
    %v4368 = vmul.f32 %v3792, %v3792
    %v4369 = vmul.f32 %v3793, %v3793
    %v4370 = vmul.f32 %v3794, %v3794
    %v4371 = vmul.f32 %v3795, %v3795
    %v4372 = vmul.f32 %v3796, %v3796
    %v4373 = vmul.f32 %v3797, %v3797
    %v4374 = vmul.f32 %v3798, %v3798
    %v4375 = vmul.f32 %v3799, %v3799
    %v4376 = vmul.f32 %v3800, %v3800
    %v4377 = vmul.f32 %v3801, %v3801
    %v4378 = vsub.f32 %v4186, %v4282
    %v4379 = vsub.f32 %v4187, %v4283
    %v4380 = vsub.f32 %v4188, %v4284
    %v4381 = vsub.f32 %v4189, %v4285
    %v4382 = vsub.f32 %v4190, %v4286
    %v4383 = vsub.f32 %v4191, %v4287
    %v4384 = vsub.f32 %v4192, %v4288
    %v4385 = vsub.f32 %v4193, %v4289
    %v4386 = vsub.f32 %v4194, %v4290
    %v4387 = vsub.f32 %v4195, %v4291
    %v4388 = vsub.f32 %v4196, %v4292
    %v4389 = vsub.f32 %v4197, %v4293
    %v4390 = vsub.f32 %v4198, %v4294
    %v4391 = vsub.f32 %v4199, %v4295
    %v4392 = vsub.f32 %v4200, %v4296
    %v4393 = vsub.f32 %v4201, %v4297
    %v4394 = vsub.f32 %v4202, %v4298
    %v4395 = vsub.f32 %v4203, %v4299
    %v4396 = vsub.f32 %v4204, %v4300
    %v4397 = vsub.f32 %v4205, %v4301
    %v4398 = vsub.f32 %v4206, %v4302
    %v4399 = vsub.f32 %v4207, %v4303
    %v4400 = vsub.f32 %v4208, %v4304
    %v4401 = vsub.f32 %v4209, %v4305
    %v4402 = vsub.f32 %v4210, %v4306
    %v4403 = vsub.f32 %v4211, %v4307
    %v4404 = vsub.f32 %v4212, %v4308
    %v4405 = vsub.f32 %v4213, %v4309
    %v4406 = vsub.f32 %v4214, %v4310
    %v4407 = vsub.f32 %v4215, %v4311
    %v4408 = vsub.f32 %v4216, %v4312
    %v4409 = vsub.f32 %v4217, %v4313
    %v4410 = vsub.f32 %v4218, %v4314
    %v4411 = vsub.f32 %v4219, %v4315
    %v4412 = vsub.f32 %v4220, %v4316
    %v4413 = vsub.f32 %v4221, %v4317
    %v4414 = vsub.f32 %v4222, %v4318
    %v4415 = vsub.f32 %v4223, %v4319
    %v4416 = vsub.f32 %v4224, %v4320
    %v4417 = vsub.f32 %v4225, %v4321
    %v4418 = vsub.f32 %v4226, %v4322
    %v4419 = vsub.f32 %v4227, %v4323
    %v4420 = vsub.f32 %v4228, %v4324
    %v4421 = vsub.f32 %v4229, %v4325
    %v4422 = vsub.f32 %v4230, %v4326
    %v4423 = vsub.f32 %v4231, %v4327
    %v4424 = vsub.f32 %v4232, %v4328
    %v4425 = vsub.f32 %v4233, %v4329
    %v4426 = vsub.f32 %v4234, %v4330
    %v4427 = vsub.f32 %v4235, %v4331
    %v4428 = vsub.f32 %v4236, %v4332
    %v4429 = vsub.f32 %v4237, %v4333
    %v4430 = vsub.f32 %v4238, %v4334
    %v4431 = vsub.f32 %v4239, %v4335
    %v4432 = vsub.f32 %v4240, %v4336
    %v4433 = vsub.f32 %v4241, %v4337
    %v4434 = vsub.f32 %v4242, %v4338
    %v4435 = vsub.f32 %v4243, %v4339
    %v4436 = vsub.f32 %v4244, %v4340
    %v4437 = vsub.f32 %v4245, %v4341
    %v4438 = vsub.f32 %v4246, %v4342
    %v4439 = vsub.f32 %v4247, %v4343
    %v4440 = vsub.f32 %v4248, %v4344
    %v4441 = vsub.f32 %v4249, %v4345
    %v4442 = vsub.f32 %v4250, %v4346
    %v4443 = vsub.f32 %v4251, %v4347
    %v4444 = vsub.f32 %v4252, %v4348
    %v4445 = vsub.f32 %v4253, %v4349
    %v4446 = vsub.f32 %v4254, %v4350
    %v4447 = vsub.f32 %v4255, %v4351
    %v4448 = vsub.f32 %v4256, %v4352
    %v4449 = vsub.f32 %v4257, %v4353
    %v4450 = vsub.f32 %v4258, %v4354
    %v4451 = vsub.f32 %v4259, %v4355
    %v4452 = vsub.f32 %v4260, %v4356
    %v4453 = vsub.f32 %v4261, %v4357
    %v4454 = vsub.f32 %v4262, %v4358
    %v4455 = vsub.f32 %v4263, %v4359
    %v4456 = vsub.f32 %v4264, %v4360
    %v4457 = vsub.f32 %v4265, %v4361
    %v4458 = vsub.f32 %v4266, %v4362
    %v4459 = vsub.f32 %v4267, %v4363
    %v4460 = vsub.f32 %v4268, %v4364
    %v4461 = vsub.f32 %v4269, %v4365
    %v4462 = vsub.f32 %v4270, %v4366
    %v4463 = vsub.f32 %v4271, %v4367
    %v4464 = vsub.f32 %v4272, %v4368
    %v4465 = vsub.f32 %v4273, %v4369
    %v4466 = vsub.f32 %v4274, %v4370
    %v4467 = vsub.f32 %v4275, %v4371
    %v4468 = vsub.f32 %v4276, %v4372
    %v4469 = vsub.f32 %v4277, %v4373
    %v4470 = vsub.f32 %v4278, %v4374
    %v4471 = vsub.f32 %v4279, %v4375
    %v4472 = vsub.f32 %v4280, %v4376
    %v4473 = vsub.f32 %v4281, %v4377
    %v4474 = vmax.f32 %v4378, 0.0
    %v4475 = vmax.f32 %v4379, 0.0
    %v4476 = vmax.f32 %v4380, 0.0
    %v4477 = vmax.f32 %v4381, 0.0
    %v4478 = vmax.f32 %v4382, 0.0
    %v4479 = vmax.f32 %v4383, 0.0
    %v4480 = vmax.f32 %v4384, 0.0
    %v4481 = vmax.f32 %v4385, 0.0
    %v4482 = vmax.f32 %v4386, 0.0
    %v4483 = vmax.f32 %v4387, 0.0
    %v4484 = vmax.f32 %v4388, 0.0
    %v4485 = vmax.f32 %v4389, 0.0
    %v4486 = vmax.f32 %v4390, 0.0
    %v4487 = vmax.f32 %v4391, 0.0
    %v4488 = vmax.f32 %v4392, 0.0
    %v4489 = vmax.f32 %v4393, 0.0
    %v4490 = vmax.f32 %v4394, 0.0
    %v4491 = vmax.f32 %v4395, 0.0
    %v4492 = vmax.f32 %v4396, 0.0
    %v4493 = vmax.f32 %v4397, 0.0
    %v4494 = vmax.f32 %v4398, 0.0
    %v4495 = vmax.f32 %v4399, 0.0
    %v4496 = vmax.f32 %v4400, 0.0
    %v4497 = vmax.f32 %v4401, 0.0
    %v4498 = vmax.f32 %v4402, 0.0
    %v4499 = vmax.f32 %v4403, 0.0
    %v4500 = vmax.f32 %v4404, 0.0
    %v4501 = vmax.f32 %v4405, 0.0
    %v4502 = vmax.f32 %v4406, 0.0
    %v4503 = vmax.f32 %v4407, 0.0
    %v4504 = vmax.f32 %v4408, 0.0
    %v4505 = vmax.f32 %v4409, 0.0
    %v4506 = vmax.f32 %v4410, 0.0
    %v4507 = vmax.f32 %v4411, 0.0
    %v4508 = vmax.f32 %v4412, 0.0
    %v4509 = vmax.f32 %v4413, 0.0
    %v4510 = vmax.f32 %v4414, 0.0
    %v4511 = vmax.f32 %v4415, 0.0
    %v4512 = vmax.f32 %v4416, 0.0
    %v4513 = vmax.f32 %v4417, 0.0
    %v4514 = vmax.f32 %v4418, 0.0
    %v4515 = vmax.f32 %v4419, 0.0
    %v4516 = vmax.f32 %v4420, 0.0
    %v4517 = vmax.f32 %v4421, 0.0
    %v4518 = vmax.f32 %v4422, 0.0
    %v4519 = vmax.f32 %v4423, 0.0
    %v4520 = vmax.f32 %v4424, 0.0
    %v4521 = vmax.f32 %v4425, 0.0
    %v4522 = vmax.f32 %v4426, 0.0
    %v4523 = vmax.f32 %v4427, 0.0
    %v4524 = vmax.f32 %v4428, 0.0
    %v4525 = vmax.f32 %v4429, 0.0
    %v4526 = vmax.f32 %v4430, 0.0
    %v4527 = vmax.f32 %v4431, 0.0
    %v4528 = vmax.f32 %v4432, 0.0
    %v4529 = vmax.f32 %v4433, 0.0
    %v4530 = vmax.f32 %v4434, 0.0
    %v4531 = vmax.f32 %v4435, 0.0
    %v4532 = vmax.f32 %v4436, 0.0
    %v4533 = vmax.f32 %v4437, 0.0
    %v4534 = vmax.f32 %v4438, 0.0
    %v4535 = vmax.f32 %v4439, 0.0
    %v4536 = vmax.f32 %v4440, 0.0
    %v4537 = vmax.f32 %v4441, 0.0
    %v4538 = vmax.f32 %v4442, 0.0
    %v4539 = vmax.f32 %v4443, 0.0
    %v4540 = vmax.f32 %v4444, 0.0
    %v4541 = vmax.f32 %v4445, 0.0
    %v4542 = vmax.f32 %v4446, 0.0
    %v4543 = vmax.f32 %v4447, 0.0
    %v4544 = vmax.f32 %v4448, 0.0
    %v4545 = vmax.f32 %v4449, 0.0
    %v4546 = vmax.f32 %v4450, 0.0
    %v4547 = vmax.f32 %v4451, 0.0
    %v4548 = vmax.f32 %v4452, 0.0
    %v4549 = vmax.f32 %v4453, 0.0
    %v4550 = vmax.f32 %v4454, 0.0
    %v4551 = vmax.f32 %v4455, 0.0
    %v4552 = vmax.f32 %v4456, 0.0
    %v4553 = vmax.f32 %v4457, 0.0
    %v4554 = vmax.f32 %v4458, 0.0
    %v4555 = vmax.f32 %v4459, 0.0
    %v4556 = vmax.f32 %v4460, 0.0
    %v4557 = vmax.f32 %v4461, 0.0
    %v4558 = vmax.f32 %v4462, 0.0
    %v4559 = vmax.f32 %v4463, 0.0
    %v4560 = vmax.f32 %v4464, 0.0
    %v4561 = vmax.f32 %v4465, 0.0
    %v4562 = vmax.f32 %v4466, 0.0
    %v4563 = vmax.f32 %v4467, 0.0
    %v4564 = vmax.f32 %v4468, 0.0
    %v4565 = vmax.f32 %v4469, 0.0
    %v4566 = vmax.f32 %v4470, 0.0
    %v4567 = vmax.f32 %v4471, 0.0
    %v4568 = vmax.f32 %v4472, 0.0
    %v4569 = vmax.f32 %v4473, 0.0
    %v4570 = vsub.f32 %v3322, %v3706
    %v4571 = vsub.f32 %v3323, %v3707
    %v4572 = vsub.f32 %v3324, %v3708
    %v4573 = vsub.f32 %v3325, %v3709
    %v4574 = vsub.f32 %v3326, %v3710
    %v4575 = vsub.f32 %v3327, %v3711
    %v4576 = vsub.f32 %v3328, %v3712
    %v4577 = vsub.f32 %v3329, %v3713
    %v4578 = vsub.f32 %v3330, %v3714
    %v4579 = vsub.f32 %v3331, %v3715
    %v4580 = vsub.f32 %v3332, %v3716
    %v4581 = vsub.f32 %v3333, %v3717
    %v4582 = vsub.f32 %v3334, %v3718
    %v4583 = vsub.f32 %v3335, %v3719
    %v4584 = vsub.f32 %v3336, %v3720
    %v4585 = vsub.f32 %v3337, %v3721
    %v4586 = vsub.f32 %v3338, %v3722
    %v4587 = vsub.f32 %v3339, %v3723
    %v4588 = vsub.f32 %v3340, %v3724
    %v4589 = vsub.f32 %v3341, %v3725
    %v4590 = vsub.f32 %v3342, %v3726
    %v4591 = vsub.f32 %v3343, %v3727
    %v4592 = vsub.f32 %v3344, %v3728
    %v4593 = vsub.f32 %v3345, %v3729
    %v4594 = vsub.f32 %v3346, %v3730
    %v4595 = vsub.f32 %v3347, %v3731
    %v4596 = vsub.f32 %v3348, %v3732
    %v4597 = vsub.f32 %v3349, %v3733
    %v4598 = vsub.f32 %v3350, %v3734
    %v4599 = vsub.f32 %v3351, %v3735
    %v4600 = vsub.f32 %v3352, %v3736
    %v4601 = vsub.f32 %v3353, %v3737
    %v4602 = vsub.f32 %v3354, %v3738
    %v4603 = vsub.f32 %v3355, %v3739
    %v4604 = vsub.f32 %v3356, %v3740
    %v4605 = vsub.f32 %v3357, %v3741
    %v4606 = vsub.f32 %v3358, %v3742
    %v4607 = vsub.f32 %v3359, %v3743
    %v4608 = vsub.f32 %v3360, %v3744
    %v4609 = vsub.f32 %v3361, %v3745
    %v4610 = vsub.f32 %v3362, %v3746
    %v4611 = vsub.f32 %v3363, %v3747
    %v4612 = vsub.f32 %v3364, %v3748
    %v4613 = vsub.f32 %v3365, %v3749
    %v4614 = vsub.f32 %v3366, %v3750
    %v4615 = vsub.f32 %v3367, %v3751
    %v4616 = vsub.f32 %v3368, %v3752
    %v4617 = vsub.f32 %v3369, %v3753
    %v4618 = vsub.f32 %v3370, %v3754
    %v4619 = vsub.f32 %v3371, %v3755
    %v4620 = vsub.f32 %v3372, %v3756
    %v4621 = vsub.f32 %v3373, %v3757
    %v4622 = vsub.f32 %v3374, %v3758
    %v4623 = vsub.f32 %v3375, %v3759
    %v4624 = vsub.f32 %v3376, %v3760
    %v4625 = vsub.f32 %v3377, %v3761
    %v4626 = vsub.f32 %v3378, %v3762
    %v4627 = vsub.f32 %v3379, %v3763
    %v4628 = vsub.f32 %v3380, %v3764
    %v4629 = vsub.f32 %v3381, %v3765
    %v4630 = vsub.f32 %v3382, %v3766
    %v4631 = vsub.f32 %v3383, %v3767
    %v4632 = vsub.f32 %v3384, %v3768
    %v4633 = vsub.f32 %v3385, %v3769
    %v4634 = vsub.f32 %v3386, %v3770
    %v4635 = vsub.f32 %v3387, %v3771
    %v4636 = vsub.f32 %v3388, %v3772
    %v4637 = vsub.f32 %v3389, %v3773
    %v4638 = vsub.f32 %v3390, %v3774
    %v4639 = vsub.f32 %v3391, %v3775
    %v4640 = vsub.f32 %v3392, %v3776
    %v4641 = vsub.f32 %v3393, %v3777
    %v4642 = vsub.f32 %v3394, %v3778
    %v4643 = vsub.f32 %v3395, %v3779
    %v4644 = vsub.f32 %v3396, %v3780
    %v4645 = vsub.f32 %v3397, %v3781
    %v4646 = vsub.f32 %v3398, %v3782
    %v4647 = vsub.f32 %v3399, %v3783
    %v4648 = vsub.f32 %v3400, %v3784
    %v4649 = vsub.f32 %v3401, %v3785
    %v4650 = vsub.f32 %v3402, %v3786
    %v4651 = vsub.f32 %v3403, %v3787
    %v4652 = vsub.f32 %v3404, %v3788
    %v4653 = vsub.f32 %v3405, %v3789
    %v4654 = vsub.f32 %v3406, %v3790
    %v4655 = vsub.f32 %v3407, %v3791
    %v4656 = vsub.f32 %v3408, %v3792
    %v4657 = vsub.f32 %v3409, %v3793
    %v4658 = vsub.f32 %v3410, %v3794
    %v4659 = vsub.f32 %v3411, %v3795
    %v4660 = vsub.f32 %v3412, %v3796
    %v4661 = vsub.f32 %v3413, %v3797
    %v4662 = vsub.f32 %v3414, %v3798
    %v4663 = vsub.f32 %v3415, %v3799
    %v4664 = vsub.f32 %v3416, %v3800
    %v4665 = vsub.f32 %v3417, %v3801
    %v4666 = vadd.f32 %v4474, 1e-05
    %v4667 = vadd.f32 %v4475, 1e-05
    %v4668 = vadd.f32 %v4476, 1e-05
    %v4669 = vadd.f32 %v4477, 1e-05
    %v4670 = vadd.f32 %v4478, 1e-05
    %v4671 = vadd.f32 %v4479, 1e-05
    %v4672 = vadd.f32 %v4480, 1e-05
    %v4673 = vadd.f32 %v4481, 1e-05
    %v4674 = vadd.f32 %v4482, 1e-05
    %v4675 = vadd.f32 %v4483, 1e-05
    %v4676 = vadd.f32 %v4484, 1e-05
    %v4677 = vadd.f32 %v4485, 1e-05
    %v4678 = vadd.f32 %v4486, 1e-05
    %v4679 = vadd.f32 %v4487, 1e-05
    %v4680 = vadd.f32 %v4488, 1e-05
    %v4681 = vadd.f32 %v4489, 1e-05
    %v4682 = vadd.f32 %v4490, 1e-05
    %v4683 = vadd.f32 %v4491, 1e-05
    %v4684 = vadd.f32 %v4492, 1e-05
    %v4685 = vadd.f32 %v4493, 1e-05
    %v4686 = vadd.f32 %v4494, 1e-05
    %v4687 = vadd.f32 %v4495, 1e-05
    %v4688 = vadd.f32 %v4496, 1e-05
    %v4689 = vadd.f32 %v4497, 1e-05
    %v4690 = vadd.f32 %v4498, 1e-05
    %v4691 = vadd.f32 %v4499, 1e-05
    %v4692 = vadd.f32 %v4500, 1e-05
    %v4693 = vadd.f32 %v4501, 1e-05
    %v4694 = vadd.f32 %v4502, 1e-05
    %v4695 = vadd.f32 %v4503, 1e-05
    %v4696 = vadd.f32 %v4504, 1e-05
    %v4697 = vadd.f32 %v4505, 1e-05
    %v4698 = vadd.f32 %v4506, 1e-05
    %v4699 = vadd.f32 %v4507, 1e-05
    %v4700 = vadd.f32 %v4508, 1e-05
    %v4701 = vadd.f32 %v4509, 1e-05
    %v4702 = vadd.f32 %v4510, 1e-05
    %v4703 = vadd.f32 %v4511, 1e-05
    %v4704 = vadd.f32 %v4512, 1e-05
    %v4705 = vadd.f32 %v4513, 1e-05
    %v4706 = vadd.f32 %v4514, 1e-05
    %v4707 = vadd.f32 %v4515, 1e-05
    %v4708 = vadd.f32 %v4516, 1e-05
    %v4709 = vadd.f32 %v4517, 1e-05
    %v4710 = vadd.f32 %v4518, 1e-05
    %v4711 = vadd.f32 %v4519, 1e-05
    %v4712 = vadd.f32 %v4520, 1e-05
    %v4713 = vadd.f32 %v4521, 1e-05
    %v4714 = vadd.f32 %v4522, 1e-05
    %v4715 = vadd.f32 %v4523, 1e-05
    %v4716 = vadd.f32 %v4524, 1e-05
    %v4717 = vadd.f32 %v4525, 1e-05
    %v4718 = vadd.f32 %v4526, 1e-05
    %v4719 = vadd.f32 %v4527, 1e-05
    %v4720 = vadd.f32 %v4528, 1e-05
    %v4721 = vadd.f32 %v4529, 1e-05
    %v4722 = vadd.f32 %v4530, 1e-05
    %v4723 = vadd.f32 %v4531, 1e-05
    %v4724 = vadd.f32 %v4532, 1e-05
    %v4725 = vadd.f32 %v4533, 1e-05
    %v4726 = vadd.f32 %v4534, 1e-05
    %v4727 = vadd.f32 %v4535, 1e-05
    %v4728 = vadd.f32 %v4536, 1e-05
    %v4729 = vadd.f32 %v4537, 1e-05
    %v4730 = vadd.f32 %v4538, 1e-05
    %v4731 = vadd.f32 %v4539, 1e-05
    %v4732 = vadd.f32 %v4540, 1e-05
    %v4733 = vadd.f32 %v4541, 1e-05
    %v4734 = vadd.f32 %v4542, 1e-05
    %v4735 = vadd.f32 %v4543, 1e-05
    %v4736 = vadd.f32 %v4544, 1e-05
    %v4737 = vadd.f32 %v4545, 1e-05
    %v4738 = vadd.f32 %v4546, 1e-05
    %v4739 = vadd.f32 %v4547, 1e-05
    %v4740 = vadd.f32 %v4548, 1e-05
    %v4741 = vadd.f32 %v4549, 1e-05
    %v4742 = vadd.f32 %v4550, 1e-05
    %v4743 = vadd.f32 %v4551, 1e-05
    %v4744 = vadd.f32 %v4552, 1e-05
    %v4745 = vadd.f32 %v4553, 1e-05
    %v4746 = vadd.f32 %v4554, 1e-05
    %v4747 = vadd.f32 %v4555, 1e-05
    %v4748 = vadd.f32 %v4556, 1e-05
    %v4749 = vadd.f32 %v4557, 1e-05
    %v4750 = vadd.f32 %v4558, 1e-05
    %v4751 = vadd.f32 %v4559, 1e-05
    %v4752 = vadd.f32 %v4560, 1e-05
    %v4753 = vadd.f32 %v4561, 1e-05
    %v4754 = vadd.f32 %v4562, 1e-05
    %v4755 = vadd.f32 %v4563, 1e-05
    %v4756 = vadd.f32 %v4564, 1e-05
    %v4757 = vadd.f32 %v4565, 1e-05
    %v4758 = vadd.f32 %v4566, 1e-05
    %v4759 = vadd.f32 %v4567, 1e-05
    %v4760 = vadd.f32 %v4568, 1e-05
    %v4761 = vadd.f32 %v4569, 1e-05
    %v4762 = vrsqrt.pop %v4666
    %v4763 = vmul.f32 %v4762, %v4666
    %v4764 = vmul.f32 %v4763, %v4762
    %v4765 = vmul.f32 0.5, %v4764
    %v4766 = vsub.f32 1.5, %v4765
    %v4767 = vmul.f32 %v4762, %v4766
    %vm4768 = vweird.f32 %v4666
    %vm4769 = vweird.f32 %v4762
    %vm4770 = vmor %vm4768, %vm4769
    %v4771 = vsel %vm4770, %v4762, %v4767
    %v4772 = vrsqrt.pop %v4667
    %v4773 = vmul.f32 %v4772, %v4667
    %v4774 = vmul.f32 %v4773, %v4772
    %v4775 = vmul.f32 0.5, %v4774
    %v4776 = vsub.f32 1.5, %v4775
    %v4777 = vmul.f32 %v4772, %v4776
    %vm4778 = vweird.f32 %v4667
    %vm4779 = vweird.f32 %v4772
    %vm4780 = vmor %vm4778, %vm4779
    %v4781 = vsel %vm4780, %v4772, %v4777
    %v4782 = vrsqrt.pop %v4668
    %v4783 = vmul.f32 %v4782, %v4668
    %v4784 = vmul.f32 %v4783, %v4782
    %v4785 = vmul.f32 0.5, %v4784
    %v4786 = vsub.f32 1.5, %v4785
    %v4787 = vmul.f32 %v4782, %v4786
    %vm4788 = vweird.f32 %v4668
    %vm4789 = vweird.f32 %v4782
    %vm4790 = vmor %vm4788, %vm4789
    %v4791 = vsel %vm4790, %v4782, %v4787
    %v4792 = vrsqrt.pop %v4669
    %v4793 = vmul.f32 %v4792, %v4669
    %v4794 = vmul.f32 %v4793, %v4792
    %v4795 = vmul.f32 0.5, %v4794
    %v4796 = vsub.f32 1.5, %v4795
    %v4797 = vmul.f32 %v4792, %v4796
    %vm4798 = vweird.f32 %v4669
    %vm4799 = vweird.f32 %v4792
    %vm4800 = vmor %vm4798, %vm4799
    %v4801 = vsel %vm4800, %v4792, %v4797
    %v4802 = vrsqrt.pop %v4670
    %v4803 = vmul.f32 %v4802, %v4670
    %v4804 = vmul.f32 %v4803, %v4802
    %v4805 = vmul.f32 0.5, %v4804
    %v4806 = vsub.f32 1.5, %v4805
    %v4807 = vmul.f32 %v4802, %v4806
    %vm4808 = vweird.f32 %v4670
    %vm4809 = vweird.f32 %v4802
    %vm4810 = vmor %vm4808, %vm4809
    %v4811 = vsel %vm4810, %v4802, %v4807
    %v4812 = vrsqrt.pop %v4671
    %v4813 = vmul.f32 %v4812, %v4671
    %v4814 = vmul.f32 %v4813, %v4812
    %v4815 = vmul.f32 0.5, %v4814
    %v4816 = vsub.f32 1.5, %v4815
    %v4817 = vmul.f32 %v4812, %v4816
    %vm4818 = vweird.f32 %v4671
    %vm4819 = vweird.f32 %v4812
    %vm4820 = vmor %vm4818, %vm4819
    %v4821 = vsel %vm4820, %v4812, %v4817
    %v4822 = vrsqrt.pop %v4672
    %v4823 = vmul.f32 %v4822, %v4672
    %v4824 = vmul.f32 %v4823, %v4822
    %v4825 = vmul.f32 0.5, %v4824
    %v4826 = vsub.f32 1.5, %v4825
    %v4827 = vmul.f32 %v4822, %v4826
    %vm4828 = vweird.f32 %v4672
    %vm4829 = vweird.f32 %v4822
    %vm4830 = vmor %vm4828, %vm4829
    %v4831 = vsel %vm4830, %v4822, %v4827
    %v4832 = vrsqrt.pop %v4673
    %v4833 = vmul.f32 %v4832, %v4673
    %v4834 = vmul.f32 %v4833, %v4832
    %v4835 = vmul.f32 0.5, %v4834
    %v4836 = vsub.f32 1.5, %v4835
    %v4837 = vmul.f32 %v4832, %v4836
    %vm4838 = vweird.f32 %v4673
    %vm4839 = vweird.f32 %v4832
    %vm4840 = vmor %vm4838, %vm4839
    %v4841 = vsel %vm4840, %v4832, %v4837
    %v4842 = vrsqrt.pop %v4674
    %v4843 = vmul.f32 %v4842, %v4674
    %v4844 = vmul.f32 %v4843, %v4842
    %v4845 = vmul.f32 0.5, %v4844
    %v4846 = vsub.f32 1.5, %v4845
    %v4847 = vmul.f32 %v4842, %v4846
    %vm4848 = vweird.f32 %v4674
    %vm4849 = vweird.f32 %v4842
    %vm4850 = vmor %vm4848, %vm4849
    %v4851 = vsel %vm4850, %v4842, %v4847
    %v4852 = vrsqrt.pop %v4675
    %v4853 = vmul.f32 %v4852, %v4675
    %v4854 = vmul.f32 %v4853, %v4852
    %v4855 = vmul.f32 0.5, %v4854
    %v4856 = vsub.f32 1.5, %v4855
    %v4857 = vmul.f32 %v4852, %v4856
    %vm4858 = vweird.f32 %v4675
    %vm4859 = vweird.f32 %v4852
    %vm4860 = vmor %vm4858, %vm4859
    %v4861 = vsel %vm4860, %v4852, %v4857
    %v4862 = vrsqrt.pop %v4676
    %v4863 = vmul.f32 %v4862, %v4676
    %v4864 = vmul.f32 %v4863, %v4862
    %v4865 = vmul.f32 0.5, %v4864
    %v4866 = vsub.f32 1.5, %v4865
    %v4867 = vmul.f32 %v4862, %v4866
    %vm4868 = vweird.f32 %v4676
    %vm4869 = vweird.f32 %v4862
    %vm4870 = vmor %vm4868, %vm4869
    %v4871 = vsel %vm4870, %v4862, %v4867
    %v4872 = vrsqrt.pop %v4677
    %v4873 = vmul.f32 %v4872, %v4677
    %v4874 = vmul.f32 %v4873, %v4872
    %v4875 = vmul.f32 0.5, %v4874
    %v4876 = vsub.f32 1.5, %v4875
    %v4877 = vmul.f32 %v4872, %v4876
    %vm4878 = vweird.f32 %v4677
    %vm4879 = vweird.f32 %v4872
    %vm4880 = vmor %vm4878, %vm4879
    %v4881 = vsel %vm4880, %v4872, %v4877
    %v4882 = vrsqrt.pop %v4678
    %v4883 = vmul.f32 %v4882, %v4678
    %v4884 = vmul.f32 %v4883, %v4882
    %v4885 = vmul.f32 0.5, %v4884
    %v4886 = vsub.f32 1.5, %v4885
    %v4887 = vmul.f32 %v4882, %v4886
    %vm4888 = vweird.f32 %v4678
    %vm4889 = vweird.f32 %v4882
    %vm4890 = vmor %vm4888, %vm4889
    %v4891 = vsel %vm4890, %v4882, %v4887
    %v4892 = vrsqrt.pop %v4679
    %v4893 = vmul.f32 %v4892, %v4679
    %v4894 = vmul.f32 %v4893, %v4892
    %v4895 = vmul.f32 0.5, %v4894
    %v4896 = vsub.f32 1.5, %v4895
    %v4897 = vmul.f32 %v4892, %v4896
    %vm4898 = vweird.f32 %v4679
    %vm4899 = vweird.f32 %v4892
    %vm4900 = vmor %vm4898, %vm4899
    %v4901 = vsel %vm4900, %v4892, %v4897
    %v4902 = vrsqrt.pop %v4680
    %v4903 = vmul.f32 %v4902, %v4680
    %v4904 = vmul.f32 %v4903, %v4902
    %v4905 = vmul.f32 0.5, %v4904
    %v4906 = vsub.f32 1.5, %v4905
    %v4907 = vmul.f32 %v4902, %v4906
    %vm4908 = vweird.f32 %v4680
    %vm4909 = vweird.f32 %v4902
    %vm4910 = vmor %vm4908, %vm4909
    %v4911 = vsel %vm4910, %v4902, %v4907
    %v4912 = vrsqrt.pop %v4681
    %v4913 = vmul.f32 %v4912, %v4681
    %v4914 = vmul.f32 %v4913, %v4912
    %v4915 = vmul.f32 0.5, %v4914
    %v4916 = vsub.f32 1.5, %v4915
    %v4917 = vmul.f32 %v4912, %v4916
    %vm4918 = vweird.f32 %v4681
    %vm4919 = vweird.f32 %v4912
    %vm4920 = vmor %vm4918, %vm4919
    %v4921 = vsel %vm4920, %v4912, %v4917
    %v4922 = vrsqrt.pop %v4682
    %v4923 = vmul.f32 %v4922, %v4682
    %v4924 = vmul.f32 %v4923, %v4922
    %v4925 = vmul.f32 0.5, %v4924
    %v4926 = vsub.f32 1.5, %v4925
    %v4927 = vmul.f32 %v4922, %v4926
    %vm4928 = vweird.f32 %v4682
    %vm4929 = vweird.f32 %v4922
    %vm4930 = vmor %vm4928, %vm4929
    %v4931 = vsel %vm4930, %v4922, %v4927
    %v4932 = vrsqrt.pop %v4683
    %v4933 = vmul.f32 %v4932, %v4683
    %v4934 = vmul.f32 %v4933, %v4932
    %v4935 = vmul.f32 0.5, %v4934
    %v4936 = vsub.f32 1.5, %v4935
    %v4937 = vmul.f32 %v4932, %v4936
    %vm4938 = vweird.f32 %v4683
    %vm4939 = vweird.f32 %v4932
    %vm4940 = vmor %vm4938, %vm4939
    %v4941 = vsel %vm4940, %v4932, %v4937
    %v4942 = vrsqrt.pop %v4684
    %v4943 = vmul.f32 %v4942, %v4684
    %v4944 = vmul.f32 %v4943, %v4942
    %v4945 = vmul.f32 0.5, %v4944
    %v4946 = vsub.f32 1.5, %v4945
    %v4947 = vmul.f32 %v4942, %v4946
    %vm4948 = vweird.f32 %v4684
    %vm4949 = vweird.f32 %v4942
    %vm4950 = vmor %vm4948, %vm4949
    %v4951 = vsel %vm4950, %v4942, %v4947
    %v4952 = vrsqrt.pop %v4685
    %v4953 = vmul.f32 %v4952, %v4685
    %v4954 = vmul.f32 %v4953, %v4952
    %v4955 = vmul.f32 0.5, %v4954
    %v4956 = vsub.f32 1.5, %v4955
    %v4957 = vmul.f32 %v4952, %v4956
    %vm4958 = vweird.f32 %v4685
    %vm4959 = vweird.f32 %v4952
    %vm4960 = vmor %vm4958, %vm4959
    %v4961 = vsel %vm4960, %v4952, %v4957
    %v4962 = vrsqrt.pop %v4686
    %v4963 = vmul.f32 %v4962, %v4686
    %v4964 = vmul.f32 %v4963, %v4962
    %v4965 = vmul.f32 0.5, %v4964
    %v4966 = vsub.f32 1.5, %v4965
    %v4967 = vmul.f32 %v4962, %v4966
    %vm4968 = vweird.f32 %v4686
    %vm4969 = vweird.f32 %v4962
    %vm4970 = vmor %vm4968, %vm4969
    %v4971 = vsel %vm4970, %v4962, %v4967
    %v4972 = vrsqrt.pop %v4687
    %v4973 = vmul.f32 %v4972, %v4687
    %v4974 = vmul.f32 %v4973, %v4972
    %v4975 = vmul.f32 0.5, %v4974
    %v4976 = vsub.f32 1.5, %v4975
    %v4977 = vmul.f32 %v4972, %v4976
    %vm4978 = vweird.f32 %v4687
    %vm4979 = vweird.f32 %v4972
    %vm4980 = vmor %vm4978, %vm4979
    %v4981 = vsel %vm4980, %v4972, %v4977
    %v4982 = vrsqrt.pop %v4688
    %v4983 = vmul.f32 %v4982, %v4688
    %v4984 = vmul.f32 %v4983, %v4982
    %v4985 = vmul.f32 0.5, %v4984
    %v4986 = vsub.f32 1.5, %v4985
    %v4987 = vmul.f32 %v4982, %v4986
    %vm4988 = vweird.f32 %v4688
    %vm4989 = vweird.f32 %v4982
    %vm4990 = vmor %vm4988, %vm4989
    %v4991 = vsel %vm4990, %v4982, %v4987
    %v4992 = vrsqrt.pop %v4689
    %v4993 = vmul.f32 %v4992, %v4689
    %v4994 = vmul.f32 %v4993, %v4992
    %v4995 = vmul.f32 0.5, %v4994
    %v4996 = vsub.f32 1.5, %v4995
    %v4997 = vmul.f32 %v4992, %v4996
    %vm4998 = vweird.f32 %v4689
    %vm4999 = vweird.f32 %v4992
    %vm5000 = vmor %vm4998, %vm4999
    %v5001 = vsel %vm5000, %v4992, %v4997
    %v5002 = vrsqrt.pop %v4690
    %v5003 = vmul.f32 %v5002, %v4690
    %v5004 = vmul.f32 %v5003, %v5002
    %v5005 = vmul.f32 0.5, %v5004
    %v5006 = vsub.f32 1.5, %v5005
    %v5007 = vmul.f32 %v5002, %v5006
    %vm5008 = vweird.f32 %v4690
    %vm5009 = vweird.f32 %v5002
    %vm5010 = vmor %vm5008, %vm5009
    %v5011 = vsel %vm5010, %v5002, %v5007
    %v5012 = vrsqrt.pop %v4691
    %v5013 = vmul.f32 %v5012, %v4691
    %v5014 = vmul.f32 %v5013, %v5012
    %v5015 = vmul.f32 0.5, %v5014
    %v5016 = vsub.f32 1.5, %v5015
    %v5017 = vmul.f32 %v5012, %v5016
    %vm5018 = vweird.f32 %v4691
    %vm5019 = vweird.f32 %v5012
    %vm5020 = vmor %vm5018, %vm5019
    %v5021 = vsel %vm5020, %v5012, %v5017
    %v5022 = vrsqrt.pop %v4692
    %v5023 = vmul.f32 %v5022, %v4692
    %v5024 = vmul.f32 %v5023, %v5022
    %v5025 = vmul.f32 0.5, %v5024
    %v5026 = vsub.f32 1.5, %v5025
    %v5027 = vmul.f32 %v5022, %v5026
    %vm5028 = vweird.f32 %v4692
    %vm5029 = vweird.f32 %v5022
    %vm5030 = vmor %vm5028, %vm5029
    %v5031 = vsel %vm5030, %v5022, %v5027
    %v5032 = vrsqrt.pop %v4693
    %v5033 = vmul.f32 %v5032, %v4693
    %v5034 = vmul.f32 %v5033, %v5032
    %v5035 = vmul.f32 0.5, %v5034
    %v5036 = vsub.f32 1.5, %v5035
    %v5037 = vmul.f32 %v5032, %v5036
    %vm5038 = vweird.f32 %v4693
    %vm5039 = vweird.f32 %v5032
    %vm5040 = vmor %vm5038, %vm5039
    %v5041 = vsel %vm5040, %v5032, %v5037
    %v5042 = vrsqrt.pop %v4694
    %v5043 = vmul.f32 %v5042, %v4694
    %v5044 = vmul.f32 %v5043, %v5042
    %v5045 = vmul.f32 0.5, %v5044
    %v5046 = vsub.f32 1.5, %v5045
    %v5047 = vmul.f32 %v5042, %v5046
    %vm5048 = vweird.f32 %v4694
    %vm5049 = vweird.f32 %v5042
    %vm5050 = vmor %vm5048, %vm5049
    %v5051 = vsel %vm5050, %v5042, %v5047
    %v5052 = vrsqrt.pop %v4695
    %v5053 = vmul.f32 %v5052, %v4695
    %v5054 = vmul.f32 %v5053, %v5052
    %v5055 = vmul.f32 0.5, %v5054
    %v5056 = vsub.f32 1.5, %v5055
    %v5057 = vmul.f32 %v5052, %v5056
    %vm5058 = vweird.f32 %v4695
    %vm5059 = vweird.f32 %v5052
    %vm5060 = vmor %vm5058, %vm5059
    %v5061 = vsel %vm5060, %v5052, %v5057
    %v5062 = vrsqrt.pop %v4696
    %v5063 = vmul.f32 %v5062, %v4696
    %v5064 = vmul.f32 %v5063, %v5062
    %v5065 = vmul.f32 0.5, %v5064
    %v5066 = vsub.f32 1.5, %v5065
    %v5067 = vmul.f32 %v5062, %v5066
    %vm5068 = vweird.f32 %v4696
    %vm5069 = vweird.f32 %v5062
    %vm5070 = vmor %vm5068, %vm5069
    %v5071 = vsel %vm5070, %v5062, %v5067
    %v5072 = vrsqrt.pop %v4697
    %v5073 = vmul.f32 %v5072, %v4697
    %v5074 = vmul.f32 %v5073, %v5072
    %v5075 = vmul.f32 0.5, %v5074
    %v5076 = vsub.f32 1.5, %v5075
    %v5077 = vmul.f32 %v5072, %v5076
    %vm5078 = vweird.f32 %v4697
    %vm5079 = vweird.f32 %v5072
    %vm5080 = vmor %vm5078, %vm5079
    %v5081 = vsel %vm5080, %v5072, %v5077
    %v5082 = vrsqrt.pop %v4698
    %v5083 = vmul.f32 %v5082, %v4698
    %v5084 = vmul.f32 %v5083, %v5082
    %v5085 = vmul.f32 0.5, %v5084
    %v5086 = vsub.f32 1.5, %v5085
    %v5087 = vmul.f32 %v5082, %v5086
    %vm5088 = vweird.f32 %v4698
    %vm5089 = vweird.f32 %v5082
    %vm5090 = vmor %vm5088, %vm5089
    %v5091 = vsel %vm5090, %v5082, %v5087
    %v5092 = vrsqrt.pop %v4699
    %v5093 = vmul.f32 %v5092, %v4699
    %v5094 = vmul.f32 %v5093, %v5092
    %v5095 = vmul.f32 0.5, %v5094
    %v5096 = vsub.f32 1.5, %v5095
    %v5097 = vmul.f32 %v5092, %v5096
    %vm5098 = vweird.f32 %v4699
    %vm5099 = vweird.f32 %v5092
    %vm5100 = vmor %vm5098, %vm5099
    %v5101 = vsel %vm5100, %v5092, %v5097
    %v5102 = vrsqrt.pop %v4700
    %v5103 = vmul.f32 %v5102, %v4700
    %v5104 = vmul.f32 %v5103, %v5102
    %v5105 = vmul.f32 0.5, %v5104
    %v5106 = vsub.f32 1.5, %v5105
    %v5107 = vmul.f32 %v5102, %v5106
    %vm5108 = vweird.f32 %v4700
    %vm5109 = vweird.f32 %v5102
    %vm5110 = vmor %vm5108, %vm5109
    %v5111 = vsel %vm5110, %v5102, %v5107
    %v5112 = vrsqrt.pop %v4701
    %v5113 = vmul.f32 %v5112, %v4701
    %v5114 = vmul.f32 %v5113, %v5112
    %v5115 = vmul.f32 0.5, %v5114
    %v5116 = vsub.f32 1.5, %v5115
    %v5117 = vmul.f32 %v5112, %v5116
    %vm5118 = vweird.f32 %v4701
    %vm5119 = vweird.f32 %v5112
    %vm5120 = vmor %vm5118, %vm5119
    %v5121 = vsel %vm5120, %v5112, %v5117
    %v5122 = vrsqrt.pop %v4702
    %v5123 = vmul.f32 %v5122, %v4702
    %v5124 = vmul.f32 %v5123, %v5122
    %v5125 = vmul.f32 0.5, %v5124
    %v5126 = vsub.f32 1.5, %v5125
    %v5127 = vmul.f32 %v5122, %v5126
    %vm5128 = vweird.f32 %v4702
    %vm5129 = vweird.f32 %v5122
    %vm5130 = vmor %vm5128, %vm5129
    %v5131 = vsel %vm5130, %v5122, %v5127
    %v5132 = vrsqrt.pop %v4703
    %v5133 = vmul.f32 %v5132, %v4703
    %v5134 = vmul.f32 %v5133, %v5132
    %v5135 = vmul.f32 0.5, %v5134
    %v5136 = vsub.f32 1.5, %v5135
    %v5137 = vmul.f32 %v5132, %v5136
    %vm5138 = vweird.f32 %v4703
    %vm5139 = vweird.f32 %v5132
    %vm5140 = vmor %vm5138, %vm5139
    %v5141 = vsel %vm5140, %v5132, %v5137
    %v5142 = vrsqrt.pop %v4704
    %v5143 = vmul.f32 %v5142, %v4704
    %v5144 = vmul.f32 %v5143, %v5142
    %v5145 = vmul.f32 0.5, %v5144
    %v5146 = vsub.f32 1.5, %v5145
    %v5147 = vmul.f32 %v5142, %v5146
    %vm5148 = vweird.f32 %v4704
    %vm5149 = vweird.f32 %v5142
    %vm5150 = vmor %vm5148, %vm5149
    %v5151 = vsel %vm5150, %v5142, %v5147
    %v5152 = vrsqrt.pop %v4705
    %v5153 = vmul.f32 %v5152, %v4705
    %v5154 = vmul.f32 %v5153, %v5152
    %v5155 = vmul.f32 0.5, %v5154
    %v5156 = vsub.f32 1.5, %v5155
    %v5157 = vmul.f32 %v5152, %v5156
    %vm5158 = vweird.f32 %v4705
    %vm5159 = vweird.f32 %v5152
    %vm5160 = vmor %vm5158, %vm5159
    %v5161 = vsel %vm5160, %v5152, %v5157
    %v5162 = vrsqrt.pop %v4706
    %v5163 = vmul.f32 %v5162, %v4706
    %v5164 = vmul.f32 %v5163, %v5162
    %v5165 = vmul.f32 0.5, %v5164
    %v5166 = vsub.f32 1.5, %v5165
    %v5167 = vmul.f32 %v5162, %v5166
    %vm5168 = vweird.f32 %v4706
    %vm5169 = vweird.f32 %v5162
    %vm5170 = vmor %vm5168, %vm5169
    %v5171 = vsel %vm5170, %v5162, %v5167
    %v5172 = vrsqrt.pop %v4707
    %v5173 = vmul.f32 %v5172, %v4707
    %v5174 = vmul.f32 %v5173, %v5172
    %v5175 = vmul.f32 0.5, %v5174
    %v5176 = vsub.f32 1.5, %v5175
    %v5177 = vmul.f32 %v5172, %v5176
    %vm5178 = vweird.f32 %v4707
    %vm5179 = vweird.f32 %v5172
    %vm5180 = vmor %vm5178, %vm5179
    %v5181 = vsel %vm5180, %v5172, %v5177
    %v5182 = vrsqrt.pop %v4708
    %v5183 = vmul.f32 %v5182, %v4708
    %v5184 = vmul.f32 %v5183, %v5182
    %v5185 = vmul.f32 0.5, %v5184
    %v5186 = vsub.f32 1.5, %v5185
    %v5187 = vmul.f32 %v5182, %v5186
    %vm5188 = vweird.f32 %v4708
    %vm5189 = vweird.f32 %v5182
    %vm5190 = vmor %vm5188, %vm5189
    %v5191 = vsel %vm5190, %v5182, %v5187
    %v5192 = vrsqrt.pop %v4709
    %v5193 = vmul.f32 %v5192, %v4709
    %v5194 = vmul.f32 %v5193, %v5192
    %v5195 = vmul.f32 0.5, %v5194
    %v5196 = vsub.f32 1.5, %v5195
    %v5197 = vmul.f32 %v5192, %v5196
    %vm5198 = vweird.f32 %v4709
    %vm5199 = vweird.f32 %v5192
    %vm5200 = vmor %vm5198, %vm5199
    %v5201 = vsel %vm5200, %v5192, %v5197
    %v5202 = vrsqrt.pop %v4710
    %v5203 = vmul.f32 %v5202, %v4710
    %v5204 = vmul.f32 %v5203, %v5202
    %v5205 = vmul.f32 0.5, %v5204
    %v5206 = vsub.f32 1.5, %v5205
    %v5207 = vmul.f32 %v5202, %v5206
    %vm5208 = vweird.f32 %v4710
    %vm5209 = vweird.f32 %v5202
    %vm5210 = vmor %vm5208, %vm5209
    %v5211 = vsel %vm5210, %v5202, %v5207
    %v5212 = vrsqrt.pop %v4711
    %v5213 = vmul.f32 %v5212, %v4711
    %v5214 = vmul.f32 %v5213, %v5212
    %v5215 = vmul.f32 0.5, %v5214
    %v5216 = vsub.f32 1.5, %v5215
    %v5217 = vmul.f32 %v5212, %v5216
    %vm5218 = vweird.f32 %v4711
    %vm5219 = vweird.f32 %v5212
    %vm5220 = vmor %vm5218, %vm5219
    %v5221 = vsel %vm5220, %v5212, %v5217
    %v5222 = vrsqrt.pop %v4712
    %v5223 = vmul.f32 %v5222, %v4712
    %v5224 = vmul.f32 %v5223, %v5222
    %v5225 = vmul.f32 0.5, %v5224
    %v5226 = vsub.f32 1.5, %v5225
    %v5227 = vmul.f32 %v5222, %v5226
    %vm5228 = vweird.f32 %v4712
    %vm5229 = vweird.f32 %v5222
    %vm5230 = vmor %vm5228, %vm5229
    %v5231 = vsel %vm5230, %v5222, %v5227
    %v5232 = vrsqrt.pop %v4713
    %v5233 = vmul.f32 %v5232, %v4713
    %v5234 = vmul.f32 %v5233, %v5232
    %v5235 = vmul.f32 0.5, %v5234
    %v5236 = vsub.f32 1.5, %v5235
    %v5237 = vmul.f32 %v5232, %v5236
    %vm5238 = vweird.f32 %v4713
    %vm5239 = vweird.f32 %v5232
    %vm5240 = vmor %vm5238, %vm5239
    %v5241 = vsel %vm5240, %v5232, %v5237
    %v5242 = vrsqrt.pop %v4714
    %v5243 = vmul.f32 %v5242, %v4714
    %v5244 = vmul.f32 %v5243, %v5242
    %v5245 = vmul.f32 0.5, %v5244
    %v5246 = vsub.f32 1.5, %v5245
    %v5247 = vmul.f32 %v5242, %v5246
    %vm5248 = vweird.f32 %v4714
    %vm5249 = vweird.f32 %v5242
    %vm5250 = vmor %vm5248, %vm5249
    %v5251 = vsel %vm5250, %v5242, %v5247
    %v5252 = vrsqrt.pop %v4715
    %v5253 = vmul.f32 %v5252, %v4715
    %v5254 = vmul.f32 %v5253, %v5252
    %v5255 = vmul.f32 0.5, %v5254
    %v5256 = vsub.f32 1.5, %v5255
    %v5257 = vmul.f32 %v5252, %v5256
    %vm5258 = vweird.f32 %v4715
    %vm5259 = vweird.f32 %v5252
    %vm5260 = vmor %vm5258, %vm5259
    %v5261 = vsel %vm5260, %v5252, %v5257
    %v5262 = vrsqrt.pop %v4716
    %v5263 = vmul.f32 %v5262, %v4716
    %v5264 = vmul.f32 %v5263, %v5262
    %v5265 = vmul.f32 0.5, %v5264
    %v5266 = vsub.f32 1.5, %v5265
    %v5267 = vmul.f32 %v5262, %v5266
    %vm5268 = vweird.f32 %v4716
    %vm5269 = vweird.f32 %v5262
    %vm5270 = vmor %vm5268, %vm5269
    %v5271 = vsel %vm5270, %v5262, %v5267
    %v5272 = vrsqrt.pop %v4717
    %v5273 = vmul.f32 %v5272, %v4717
    %v5274 = vmul.f32 %v5273, %v5272
    %v5275 = vmul.f32 0.5, %v5274
    %v5276 = vsub.f32 1.5, %v5275
    %v5277 = vmul.f32 %v5272, %v5276
    %vm5278 = vweird.f32 %v4717
    %vm5279 = vweird.f32 %v5272
    %vm5280 = vmor %vm5278, %vm5279
    %v5281 = vsel %vm5280, %v5272, %v5277
    %v5282 = vrsqrt.pop %v4718
    %v5283 = vmul.f32 %v5282, %v4718
    %v5284 = vmul.f32 %v5283, %v5282
    %v5285 = vmul.f32 0.5, %v5284
    %v5286 = vsub.f32 1.5, %v5285
    %v5287 = vmul.f32 %v5282, %v5286
    %vm5288 = vweird.f32 %v4718
    %vm5289 = vweird.f32 %v5282
    %vm5290 = vmor %vm5288, %vm5289
    %v5291 = vsel %vm5290, %v5282, %v5287
    %v5292 = vrsqrt.pop %v4719
    %v5293 = vmul.f32 %v5292, %v4719
    %v5294 = vmul.f32 %v5293, %v5292
    %v5295 = vmul.f32 0.5, %v5294
    %v5296 = vsub.f32 1.5, %v5295
    %v5297 = vmul.f32 %v5292, %v5296
    %vm5298 = vweird.f32 %v4719
    %vm5299 = vweird.f32 %v5292
    %vm5300 = vmor %vm5298, %vm5299
    %v5301 = vsel %vm5300, %v5292, %v5297
    %v5302 = vrsqrt.pop %v4720
    %v5303 = vmul.f32 %v5302, %v4720
    %v5304 = vmul.f32 %v5303, %v5302
    %v5305 = vmul.f32 0.5, %v5304
    %v5306 = vsub.f32 1.5, %v5305
    %v5307 = vmul.f32 %v5302, %v5306
    %vm5308 = vweird.f32 %v4720
    %vm5309 = vweird.f32 %v5302
    %vm5310 = vmor %vm5308, %vm5309
    %v5311 = vsel %vm5310, %v5302, %v5307
    %v5312 = vrsqrt.pop %v4721
    %v5313 = vmul.f32 %v5312, %v4721
    %v5314 = vmul.f32 %v5313, %v5312
    %v5315 = vmul.f32 0.5, %v5314
    %v5316 = vsub.f32 1.5, %v5315
    %v5317 = vmul.f32 %v5312, %v5316
    %vm5318 = vweird.f32 %v4721
    %vm5319 = vweird.f32 %v5312
    %vm5320 = vmor %vm5318, %vm5319
    %v5321 = vsel %vm5320, %v5312, %v5317
    %v5322 = vrsqrt.pop %v4722
    %v5323 = vmul.f32 %v5322, %v4722
    %v5324 = vmul.f32 %v5323, %v5322
    %v5325 = vmul.f32 0.5, %v5324
    %v5326 = vsub.f32 1.5, %v5325
    %v5327 = vmul.f32 %v5322, %v5326
    %vm5328 = vweird.f32 %v4722
    %vm5329 = vweird.f32 %v5322
    %vm5330 = vmor %vm5328, %vm5329
    %v5331 = vsel %vm5330, %v5322, %v5327
    %v5332 = vrsqrt.pop %v4723
    %v5333 = vmul.f32 %v5332, %v4723
    %v5334 = vmul.f32 %v5333, %v5332
    %v5335 = vmul.f32 0.5, %v5334
    %v5336 = vsub.f32 1.5, %v5335
    %v5337 = vmul.f32 %v5332, %v5336
    %vm5338 = vweird.f32 %v4723
    %vm5339 = vweird.f32 %v5332
    %vm5340 = vmor %vm5338, %vm5339
    %v5341 = vsel %vm5340, %v5332, %v5337
    %v5342 = vrsqrt.pop %v4724
    %v5343 = vmul.f32 %v5342, %v4724
    %v5344 = vmul.f32 %v5343, %v5342
    %v5345 = vmul.f32 0.5, %v5344
    %v5346 = vsub.f32 1.5, %v5345
    %v5347 = vmul.f32 %v5342, %v5346
    %vm5348 = vweird.f32 %v4724
    %vm5349 = vweird.f32 %v5342
    %vm5350 = vmor %vm5348, %vm5349
    %v5351 = vsel %vm5350, %v5342, %v5347
    %v5352 = vrsqrt.pop %v4725
    %v5353 = vmul.f32 %v5352, %v4725
    %v5354 = vmul.f32 %v5353, %v5352
    %v5355 = vmul.f32 0.5, %v5354
    %v5356 = vsub.f32 1.5, %v5355
    %v5357 = vmul.f32 %v5352, %v5356
    %vm5358 = vweird.f32 %v4725
    %vm5359 = vweird.f32 %v5352
    %vm5360 = vmor %vm5358, %vm5359
    %v5361 = vsel %vm5360, %v5352, %v5357
    %v5362 = vrsqrt.pop %v4726
    %v5363 = vmul.f32 %v5362, %v4726
    %v5364 = vmul.f32 %v5363, %v5362
    %v5365 = vmul.f32 0.5, %v5364
    %v5366 = vsub.f32 1.5, %v5365
    %v5367 = vmul.f32 %v5362, %v5366
    %vm5368 = vweird.f32 %v4726
    %vm5369 = vweird.f32 %v5362
    %vm5370 = vmor %vm5368, %vm5369
    %v5371 = vsel %vm5370, %v5362, %v5367
    %v5372 = vrsqrt.pop %v4727
    %v5373 = vmul.f32 %v5372, %v4727
    %v5374 = vmul.f32 %v5373, %v5372
    %v5375 = vmul.f32 0.5, %v5374
    %v5376 = vsub.f32 1.5, %v5375
    %v5377 = vmul.f32 %v5372, %v5376
    %vm5378 = vweird.f32 %v4727
    %vm5379 = vweird.f32 %v5372
    %vm5380 = vmor %vm5378, %vm5379
    %v5381 = vsel %vm5380, %v5372, %v5377
    %v5382 = vrsqrt.pop %v4728
    %v5383 = vmul.f32 %v5382, %v4728
    %v5384 = vmul.f32 %v5383, %v5382
    %v5385 = vmul.f32 0.5, %v5384
    %v5386 = vsub.f32 1.5, %v5385
    %v5387 = vmul.f32 %v5382, %v5386
    %vm5388 = vweird.f32 %v4728
    %vm5389 = vweird.f32 %v5382
    %vm5390 = vmor %vm5388, %vm5389
    %v5391 = vsel %vm5390, %v5382, %v5387
    %v5392 = vrsqrt.pop %v4729
    %v5393 = vmul.f32 %v5392, %v4729
    %v5394 = vmul.f32 %v5393, %v5392
    %v5395 = vmul.f32 0.5, %v5394
    %v5396 = vsub.f32 1.5, %v5395
    %v5397 = vmul.f32 %v5392, %v5396
    %vm5398 = vweird.f32 %v4729
    %vm5399 = vweird.f32 %v5392
    %vm5400 = vmor %vm5398, %vm5399
    %v5401 = vsel %vm5400, %v5392, %v5397
    %v5402 = vrsqrt.pop %v4730
    %v5403 = vmul.f32 %v5402, %v4730
    %v5404 = vmul.f32 %v5403, %v5402
    %v5405 = vmul.f32 0.5, %v5404
    %v5406 = vsub.f32 1.5, %v5405
    %v5407 = vmul.f32 %v5402, %v5406
    %vm5408 = vweird.f32 %v4730
    %vm5409 = vweird.f32 %v5402
    %vm5410 = vmor %vm5408, %vm5409
    %v5411 = vsel %vm5410, %v5402, %v5407
    %v5412 = vrsqrt.pop %v4731
    %v5413 = vmul.f32 %v5412, %v4731
    %v5414 = vmul.f32 %v5413, %v5412
    %v5415 = vmul.f32 0.5, %v5414
    %v5416 = vsub.f32 1.5, %v5415
    %v5417 = vmul.f32 %v5412, %v5416
    %vm5418 = vweird.f32 %v4731
    %vm5419 = vweird.f32 %v5412
    %vm5420 = vmor %vm5418, %vm5419
    %v5421 = vsel %vm5420, %v5412, %v5417
    %v5422 = vrsqrt.pop %v4732
    %v5423 = vmul.f32 %v5422, %v4732
    %v5424 = vmul.f32 %v5423, %v5422
    %v5425 = vmul.f32 0.5, %v5424
    %v5426 = vsub.f32 1.5, %v5425
    %v5427 = vmul.f32 %v5422, %v5426
    %vm5428 = vweird.f32 %v4732
    %vm5429 = vweird.f32 %v5422
    %vm5430 = vmor %vm5428, %vm5429
    %v5431 = vsel %vm5430, %v5422, %v5427
    %v5432 = vrsqrt.pop %v4733
    %v5433 = vmul.f32 %v5432, %v4733
    %v5434 = vmul.f32 %v5433, %v5432
    %v5435 = vmul.f32 0.5, %v5434
    %v5436 = vsub.f32 1.5, %v5435
    %v5437 = vmul.f32 %v5432, %v5436
    %vm5438 = vweird.f32 %v4733
    %vm5439 = vweird.f32 %v5432
    %vm5440 = vmor %vm5438, %vm5439
    %v5441 = vsel %vm5440, %v5432, %v5437
    %v5442 = vrsqrt.pop %v4734
    %v5443 = vmul.f32 %v5442, %v4734
    %v5444 = vmul.f32 %v5443, %v5442
    %v5445 = vmul.f32 0.5, %v5444
    %v5446 = vsub.f32 1.5, %v5445
    %v5447 = vmul.f32 %v5442, %v5446
    %vm5448 = vweird.f32 %v4734
    %vm5449 = vweird.f32 %v5442
    %vm5450 = vmor %vm5448, %vm5449
    %v5451 = vsel %vm5450, %v5442, %v5447
    %v5452 = vrsqrt.pop %v4735
    %v5453 = vmul.f32 %v5452, %v4735
    %v5454 = vmul.f32 %v5453, %v5452
    %v5455 = vmul.f32 0.5, %v5454
    %v5456 = vsub.f32 1.5, %v5455
    %v5457 = vmul.f32 %v5452, %v5456
    %vm5458 = vweird.f32 %v4735
    %vm5459 = vweird.f32 %v5452
    %vm5460 = vmor %vm5458, %vm5459
    %v5461 = vsel %vm5460, %v5452, %v5457
    %v5462 = vrsqrt.pop %v4736
    %v5463 = vmul.f32 %v5462, %v4736
    %v5464 = vmul.f32 %v5463, %v5462
    %v5465 = vmul.f32 0.5, %v5464
    %v5466 = vsub.f32 1.5, %v5465
    %v5467 = vmul.f32 %v5462, %v5466
    %vm5468 = vweird.f32 %v4736
    %vm5469 = vweird.f32 %v5462
    %vm5470 = vmor %vm5468, %vm5469
    %v5471 = vsel %vm5470, %v5462, %v5467
    %v5472 = vrsqrt.pop %v4737
    %v5473 = vmul.f32 %v5472, %v4737
    %v5474 = vmul.f32 %v5473, %v5472
    %v5475 = vmul.f32 0.5, %v5474
    %v5476 = vsub.f32 1.5, %v5475
    %v5477 = vmul.f32 %v5472, %v5476
    %vm5478 = vweird.f32 %v4737
    %vm5479 = vweird.f32 %v5472
    %vm5480 = vmor %vm5478, %vm5479
    %v5481 = vsel %vm5480, %v5472, %v5477
    %v5482 = vrsqrt.pop %v4738
    %v5483 = vmul.f32 %v5482, %v4738
    %v5484 = vmul.f32 %v5483, %v5482
    %v5485 = vmul.f32 0.5, %v5484
    %v5486 = vsub.f32 1.5, %v5485
    %v5487 = vmul.f32 %v5482, %v5486
    %vm5488 = vweird.f32 %v4738
    %vm5489 = vweird.f32 %v5482
    %vm5490 = vmor %vm5488, %vm5489
    %v5491 = vsel %vm5490, %v5482, %v5487
    %v5492 = vrsqrt.pop %v4739
    %v5493 = vmul.f32 %v5492, %v4739
    %v5494 = vmul.f32 %v5493, %v5492
    %v5495 = vmul.f32 0.5, %v5494
    %v5496 = vsub.f32 1.5, %v5495
    %v5497 = vmul.f32 %v5492, %v5496
    %vm5498 = vweird.f32 %v4739
    %vm5499 = vweird.f32 %v5492
    %vm5500 = vmor %vm5498, %vm5499
    %v5501 = vsel %vm5500, %v5492, %v5497
    %v5502 = vrsqrt.pop %v4740
    %v5503 = vmul.f32 %v5502, %v4740
    %v5504 = vmul.f32 %v5503, %v5502
    %v5505 = vmul.f32 0.5, %v5504
    %v5506 = vsub.f32 1.5, %v5505
    %v5507 = vmul.f32 %v5502, %v5506
    %vm5508 = vweird.f32 %v4740
    %vm5509 = vweird.f32 %v5502
    %vm5510 = vmor %vm5508, %vm5509
    %v5511 = vsel %vm5510, %v5502, %v5507
    %v5512 = vrsqrt.pop %v4741
    %v5513 = vmul.f32 %v5512, %v4741
    %v5514 = vmul.f32 %v5513, %v5512
    %v5515 = vmul.f32 0.5, %v5514
    %v5516 = vsub.f32 1.5, %v5515
    %v5517 = vmul.f32 %v5512, %v5516
    %vm5518 = vweird.f32 %v4741
    %vm5519 = vweird.f32 %v5512
    %vm5520 = vmor %vm5518, %vm5519
    %v5521 = vsel %vm5520, %v5512, %v5517
    %v5522 = vrsqrt.pop %v4742
    %v5523 = vmul.f32 %v5522, %v4742
    %v5524 = vmul.f32 %v5523, %v5522
    %v5525 = vmul.f32 0.5, %v5524
    %v5526 = vsub.f32 1.5, %v5525
    %v5527 = vmul.f32 %v5522, %v5526
    %vm5528 = vweird.f32 %v4742
    %vm5529 = vweird.f32 %v5522
    %vm5530 = vmor %vm5528, %vm5529
    %v5531 = vsel %vm5530, %v5522, %v5527
    %v5532 = vrsqrt.pop %v4743
    %v5533 = vmul.f32 %v5532, %v4743
    %v5534 = vmul.f32 %v5533, %v5532
    %v5535 = vmul.f32 0.5, %v5534
    %v5536 = vsub.f32 1.5, %v5535
    %v5537 = vmul.f32 %v5532, %v5536
    %vm5538 = vweird.f32 %v4743
    %vm5539 = vweird.f32 %v5532
    %vm5540 = vmor %vm5538, %vm5539
    %v5541 = vsel %vm5540, %v5532, %v5537
    %v5542 = vrsqrt.pop %v4744
    %v5543 = vmul.f32 %v5542, %v4744
    %v5544 = vmul.f32 %v5543, %v5542
    %v5545 = vmul.f32 0.5, %v5544
    %v5546 = vsub.f32 1.5, %v5545
    %v5547 = vmul.f32 %v5542, %v5546
    %vm5548 = vweird.f32 %v4744
    %vm5549 = vweird.f32 %v5542
    %vm5550 = vmor %vm5548, %vm5549
    %v5551 = vsel %vm5550, %v5542, %v5547
    %v5552 = vrsqrt.pop %v4745
    %v5553 = vmul.f32 %v5552, %v4745
    %v5554 = vmul.f32 %v5553, %v5552
    %v5555 = vmul.f32 0.5, %v5554
    %v5556 = vsub.f32 1.5, %v5555
    %v5557 = vmul.f32 %v5552, %v5556
    %vm5558 = vweird.f32 %v4745
    %vm5559 = vweird.f32 %v5552
    %vm5560 = vmor %vm5558, %vm5559
    %v5561 = vsel %vm5560, %v5552, %v5557
    %v5562 = vrsqrt.pop %v4746
    %v5563 = vmul.f32 %v5562, %v4746
    %v5564 = vmul.f32 %v5563, %v5562
    %v5565 = vmul.f32 0.5, %v5564
    %v5566 = vsub.f32 1.5, %v5565
    %v5567 = vmul.f32 %v5562, %v5566
    %vm5568 = vweird.f32 %v4746
    %vm5569 = vweird.f32 %v5562
    %vm5570 = vmor %vm5568, %vm5569
    %v5571 = vsel %vm5570, %v5562, %v5567
    %v5572 = vrsqrt.pop %v4747
    %v5573 = vmul.f32 %v5572, %v4747
    %v5574 = vmul.f32 %v5573, %v5572
    %v5575 = vmul.f32 0.5, %v5574
    %v5576 = vsub.f32 1.5, %v5575
    %v5577 = vmul.f32 %v5572, %v5576
    %vm5578 = vweird.f32 %v4747
    %vm5579 = vweird.f32 %v5572
    %vm5580 = vmor %vm5578, %vm5579
    %v5581 = vsel %vm5580, %v5572, %v5577
    %v5582 = vrsqrt.pop %v4748
    %v5583 = vmul.f32 %v5582, %v4748
    %v5584 = vmul.f32 %v5583, %v5582
    %v5585 = vmul.f32 0.5, %v5584
    %v5586 = vsub.f32 1.5, %v5585
    %v5587 = vmul.f32 %v5582, %v5586
    %vm5588 = vweird.f32 %v4748
    %vm5589 = vweird.f32 %v5582
    %vm5590 = vmor %vm5588, %vm5589
    %v5591 = vsel %vm5590, %v5582, %v5587
    %v5592 = vrsqrt.pop %v4749
    %v5593 = vmul.f32 %v5592, %v4749
    %v5594 = vmul.f32 %v5593, %v5592
    %v5595 = vmul.f32 0.5, %v5594
    %v5596 = vsub.f32 1.5, %v5595
    %v5597 = vmul.f32 %v5592, %v5596
    %vm5598 = vweird.f32 %v4749
    %vm5599 = vweird.f32 %v5592
    %vm5600 = vmor %vm5598, %vm5599
    %v5601 = vsel %vm5600, %v5592, %v5597
    %v5602 = vrsqrt.pop %v4750
    %v5603 = vmul.f32 %v5602, %v4750
    %v5604 = vmul.f32 %v5603, %v5602
    %v5605 = vmul.f32 0.5, %v5604
    %v5606 = vsub.f32 1.5, %v5605
    %v5607 = vmul.f32 %v5602, %v5606
    %vm5608 = vweird.f32 %v4750
    %vm5609 = vweird.f32 %v5602
    %vm5610 = vmor %vm5608, %vm5609
    %v5611 = vsel %vm5610, %v5602, %v5607
    %v5612 = vrsqrt.pop %v4751
    %v5613 = vmul.f32 %v5612, %v4751
    %v5614 = vmul.f32 %v5613, %v5612
    %v5615 = vmul.f32 0.5, %v5614
    %v5616 = vsub.f32 1.5, %v5615
    %v5617 = vmul.f32 %v5612, %v5616
    %vm5618 = vweird.f32 %v4751
    %vm5619 = vweird.f32 %v5612
    %vm5620 = vmor %vm5618, %vm5619
    %v5621 = vsel %vm5620, %v5612, %v5617
    %v5622 = vrsqrt.pop %v4752
    %v5623 = vmul.f32 %v5622, %v4752
    %v5624 = vmul.f32 %v5623, %v5622
    %v5625 = vmul.f32 0.5, %v5624
    %v5626 = vsub.f32 1.5, %v5625
    %v5627 = vmul.f32 %v5622, %v5626
    %vm5628 = vweird.f32 %v4752
    %vm5629 = vweird.f32 %v5622
    %vm5630 = vmor %vm5628, %vm5629
    %v5631 = vsel %vm5630, %v5622, %v5627
    %v5632 = vrsqrt.pop %v4753
    %v5633 = vmul.f32 %v5632, %v4753
    %v5634 = vmul.f32 %v5633, %v5632
    %v5635 = vmul.f32 0.5, %v5634
    %v5636 = vsub.f32 1.5, %v5635
    %v5637 = vmul.f32 %v5632, %v5636
    %vm5638 = vweird.f32 %v4753
    %vm5639 = vweird.f32 %v5632
    %vm5640 = vmor %vm5638, %vm5639
    %v5641 = vsel %vm5640, %v5632, %v5637
    %v5642 = vrsqrt.pop %v4754
    %v5643 = vmul.f32 %v5642, %v4754
    %v5644 = vmul.f32 %v5643, %v5642
    %v5645 = vmul.f32 0.5, %v5644
    %v5646 = vsub.f32 1.5, %v5645
    %v5647 = vmul.f32 %v5642, %v5646
    %vm5648 = vweird.f32 %v4754
    %vm5649 = vweird.f32 %v5642
    %vm5650 = vmor %vm5648, %vm5649
    %v5651 = vsel %vm5650, %v5642, %v5647
    %v5652 = vrsqrt.pop %v4755
    %v5653 = vmul.f32 %v5652, %v4755
    %v5654 = vmul.f32 %v5653, %v5652
    %v5655 = vmul.f32 0.5, %v5654
    %v5656 = vsub.f32 1.5, %v5655
    %v5657 = vmul.f32 %v5652, %v5656
    %vm5658 = vweird.f32 %v4755
    %vm5659 = vweird.f32 %v5652
    %vm5660 = vmor %vm5658, %vm5659
    %v5661 = vsel %vm5660, %v5652, %v5657
    %v5662 = vrsqrt.pop %v4756
    %v5663 = vmul.f32 %v5662, %v4756
    %v5664 = vmul.f32 %v5663, %v5662
    %v5665 = vmul.f32 0.5, %v5664
    %v5666 = vsub.f32 1.5, %v5665
    %v5667 = vmul.f32 %v5662, %v5666
    %vm5668 = vweird.f32 %v4756
    %vm5669 = vweird.f32 %v5662
    %vm5670 = vmor %vm5668, %vm5669
    %v5671 = vsel %vm5670, %v5662, %v5667
    %v5672 = vrsqrt.pop %v4757
    %v5673 = vmul.f32 %v5672, %v4757
    %v5674 = vmul.f32 %v5673, %v5672
    %v5675 = vmul.f32 0.5, %v5674
    %v5676 = vsub.f32 1.5, %v5675
    %v5677 = vmul.f32 %v5672, %v5676
    %vm5678 = vweird.f32 %v4757
    %vm5679 = vweird.f32 %v5672
    %vm5680 = vmor %vm5678, %vm5679
    %v5681 = vsel %vm5680, %v5672, %v5677
    %v5682 = vrsqrt.pop %v4758
    %v5683 = vmul.f32 %v5682, %v4758
    %v5684 = vmul.f32 %v5683, %v5682
    %v5685 = vmul.f32 0.5, %v5684
    %v5686 = vsub.f32 1.5, %v5685
    %v5687 = vmul.f32 %v5682, %v5686
    %vm5688 = vweird.f32 %v4758
    %vm5689 = vweird.f32 %v5682
    %vm5690 = vmor %vm5688, %vm5689
    %v5691 = vsel %vm5690, %v5682, %v5687
    %v5692 = vrsqrt.pop %v4759
    %v5693 = vmul.f32 %v5692, %v4759
    %v5694 = vmul.f32 %v5693, %v5692
    %v5695 = vmul.f32 0.5, %v5694
    %v5696 = vsub.f32 1.5, %v5695
    %v5697 = vmul.f32 %v5692, %v5696
    %vm5698 = vweird.f32 %v4759
    %vm5699 = vweird.f32 %v5692
    %vm5700 = vmor %vm5698, %vm5699
    %v5701 = vsel %vm5700, %v5692, %v5697
    %v5702 = vrsqrt.pop %v4760
    %v5703 = vmul.f32 %v5702, %v4760
    %v5704 = vmul.f32 %v5703, %v5702
    %v5705 = vmul.f32 0.5, %v5704
    %v5706 = vsub.f32 1.5, %v5705
    %v5707 = vmul.f32 %v5702, %v5706
    %vm5708 = vweird.f32 %v4760
    %vm5709 = vweird.f32 %v5702
    %vm5710 = vmor %vm5708, %vm5709
    %v5711 = vsel %vm5710, %v5702, %v5707
    %v5712 = vrsqrt.pop %v4761
    %v5713 = vmul.f32 %v5712, %v4761
    %v5714 = vmul.f32 %v5713, %v5712
    %v5715 = vmul.f32 0.5, %v5714
    %v5716 = vsub.f32 1.5, %v5715
    %v5717 = vmul.f32 %v5712, %v5716
    %vm5718 = vweird.f32 %v4761
    %vm5719 = vweird.f32 %v5712
    %vm5720 = vmor %vm5718, %vm5719
    %v5721 = vsel %vm5720, %v5712, %v5717
    %v5722 = vmul.f32 %v4570, %v4771
    %v5723 = vmul.f32 %v4571, %v4781
    %v5724 = vmul.f32 %v4572, %v4791
    %v5725 = vmul.f32 %v4573, %v4801
    %v5726 = vmul.f32 %v4574, %v4811
    %v5727 = vmul.f32 %v4575, %v4821
    %v5728 = vmul.f32 %v4576, %v4831
    %v5729 = vmul.f32 %v4577, %v4841
    %v5730 = vmul.f32 %v4578, %v4851
    %v5731 = vmul.f32 %v4579, %v4861
    %v5732 = vmul.f32 %v4580, %v4871
    %v5733 = vmul.f32 %v4581, %v4881
    %v5734 = vmul.f32 %v4582, %v4891
    %v5735 = vmul.f32 %v4583, %v4901
    %v5736 = vmul.f32 %v4584, %v4911
    %v5737 = vmul.f32 %v4585, %v4921
    %v5738 = vmul.f32 %v4586, %v4931
    %v5739 = vmul.f32 %v4587, %v4941
    %v5740 = vmul.f32 %v4588, %v4951
    %v5741 = vmul.f32 %v4589, %v4961
    %v5742 = vmul.f32 %v4590, %v4971
    %v5743 = vmul.f32 %v4591, %v4981
    %v5744 = vmul.f32 %v4592, %v4991
    %v5745 = vmul.f32 %v4593, %v5001
    %v5746 = vmul.f32 %v4594, %v5011
    %v5747 = vmul.f32 %v4595, %v5021
    %v5748 = vmul.f32 %v4596, %v5031
    %v5749 = vmul.f32 %v4597, %v5041
    %v5750 = vmul.f32 %v4598, %v5051
    %v5751 = vmul.f32 %v4599, %v5061
    %v5752 = vmul.f32 %v4600, %v5071
    %v5753 = vmul.f32 %v4601, %v5081
    %v5754 = vmul.f32 %v4602, %v5091
    %v5755 = vmul.f32 %v4603, %v5101
    %v5756 = vmul.f32 %v4604, %v5111
    %v5757 = vmul.f32 %v4605, %v5121
    %v5758 = vmul.f32 %v4606, %v5131
    %v5759 = vmul.f32 %v4607, %v5141
    %v5760 = vmul.f32 %v4608, %v5151
    %v5761 = vmul.f32 %v4609, %v5161
    %v5762 = vmul.f32 %v4610, %v5171
    %v5763 = vmul.f32 %v4611, %v5181
    %v5764 = vmul.f32 %v4612, %v5191
    %v5765 = vmul.f32 %v4613, %v5201
    %v5766 = vmul.f32 %v4614, %v5211
    %v5767 = vmul.f32 %v4615, %v5221
    %v5768 = vmul.f32 %v4616, %v5231
    %v5769 = vmul.f32 %v4617, %v5241
    %v5770 = vmul.f32 %v4618, %v5251
    %v5771 = vmul.f32 %v4619, %v5261
    %v5772 = vmul.f32 %v4620, %v5271
    %v5773 = vmul.f32 %v4621, %v5281
    %v5774 = vmul.f32 %v4622, %v5291
    %v5775 = vmul.f32 %v4623, %v5301
    %v5776 = vmul.f32 %v4624, %v5311
    %v5777 = vmul.f32 %v4625, %v5321
    %v5778 = vmul.f32 %v4626, %v5331
    %v5779 = vmul.f32 %v4627, %v5341
    %v5780 = vmul.f32 %v4628, %v5351
    %v5781 = vmul.f32 %v4629, %v5361
    %v5782 = vmul.f32 %v4630, %v5371
    %v5783 = vmul.f32 %v4631, %v5381
    %v5784 = vmul.f32 %v4632, %v5391
    %v5785 = vmul.f32 %v4633, %v5401
    %v5786 = vmul.f32 %v4634, %v5411
    %v5787 = vmul.f32 %v4635, %v5421
    %v5788 = vmul.f32 %v4636, %v5431
    %v5789 = vmul.f32 %v4637, %v5441
    %v5790 = vmul.f32 %v4638, %v5451
    %v5791 = vmul.f32 %v4639, %v5461
    %v5792 = vmul.f32 %v4640, %v5471
    %v5793 = vmul.f32 %v4641, %v5481
    %v5794 = vmul.f32 %v4642, %v5491
    %v5795 = vmul.f32 %v4643, %v5501
    %v5796 = vmul.f32 %v4644, %v5511
    %v5797 = vmul.f32 %v4645, %v5521
    %v5798 = vmul.f32 %v4646, %v5531
    %v5799 = vmul.f32 %v4647, %v5541
    %v5800 = vmul.f32 %v4648, %v5551
    %v5801 = vmul.f32 %v4649, %v5561
    %v5802 = vmul.f32 %v4650, %v5571
    %v5803 = vmul.f32 %v4651, %v5581
    %v5804 = vmul.f32 %v4652, %v5591
    %v5805 = vmul.f32 %v4653, %v5601
    %v5806 = vmul.f32 %v4654, %v5611
    %v5807 = vmul.f32 %v4655, %v5621
    %v5808 = vmul.f32 %v4656, %v5631
    %v5809 = vmul.f32 %v4657, %v5641
    %v5810 = vmul.f32 %v4658, %v5651
    %v5811 = vmul.f32 %v4659, %v5661
    %v5812 = vmul.f32 %v4660, %v5671
    %v5813 = vmul.f32 %v4661, %v5681
    %v5814 = vmul.f32 %v4662, %v5691
    %v5815 = vmul.f32 %v4663, %v5701
    %v5816 = vmul.f32 %v4664, %v5711
    %v5817 = vmul.f32 %v4665, %v5721
    %v5818 = vperm.slane %v33, 0
    %v5819 = vmul.f32 %v5722, %v5818
    %v5820 = vmul.f32 %v5723, %v5818
    %v5821 = vmul.f32 %v5724, %v5818
    %v5822 = vmul.f32 %v5725, %v5818
    %v5823 = vmul.f32 %v5726, %v5818
    %v5824 = vmul.f32 %v5727, %v5818
    %v5825 = vmul.f32 %v5728, %v5818
    %v5826 = vmul.f32 %v5729, %v5818
    %v5827 = vmul.f32 %v5730, %v5818
    %v5828 = vmul.f32 %v5731, %v5818
    %v5829 = vmul.f32 %v5732, %v5818
    %v5830 = vmul.f32 %v5733, %v5818
    %v5831 = vmul.f32 %v5734, %v5818
    %v5832 = vmul.f32 %v5735, %v5818
    %v5833 = vmul.f32 %v5736, %v5818
    %v5834 = vmul.f32 %v5737, %v5818
    %v5835 = vmul.f32 %v5738, %v5818
    %v5836 = vmul.f32 %v5739, %v5818
    %v5837 = vmul.f32 %v5740, %v5818
    %v5838 = vmul.f32 %v5741, %v5818
    %v5839 = vmul.f32 %v5742, %v5818
    %v5840 = vmul.f32 %v5743, %v5818
    %v5841 = vmul.f32 %v5744, %v5818
    %v5842 = vmul.f32 %v5745, %v5818
    %v5843 = vmul.f32 %v5746, %v5818
    %v5844 = vmul.f32 %v5747, %v5818
    %v5845 = vmul.f32 %v5748, %v5818
    %v5846 = vmul.f32 %v5749, %v5818
    %v5847 = vmul.f32 %v5750, %v5818
    %v5848 = vmul.f32 %v5751, %v5818
    %v5849 = vmul.f32 %v5752, %v5818
    %v5850 = vmul.f32 %v5753, %v5818
    %v5851 = vmul.f32 %v5754, %v5818
    %v5852 = vmul.f32 %v5755, %v5818
    %v5853 = vmul.f32 %v5756, %v5818
    %v5854 = vmul.f32 %v5757, %v5818
    %v5855 = vmul.f32 %v5758, %v5818
    %v5856 = vmul.f32 %v5759, %v5818
    %v5857 = vmul.f32 %v5760, %v5818
    %v5858 = vmul.f32 %v5761, %v5818
    %v5859 = vmul.f32 %v5762, %v5818
    %v5860 = vmul.f32 %v5763, %v5818
    %v5861 = vmul.f32 %v5764, %v5818
    %v5862 = vmul.f32 %v5765, %v5818
    %v5863 = vmul.f32 %v5766, %v5818
    %v5864 = vmul.f32 %v5767, %v5818
    %v5865 = vmul.f32 %v5768, %v5818
    %v5866 = vmul.f32 %v5769, %v5818
    %v5867 = vmul.f32 %v5770, %v5818
    %v5868 = vmul.f32 %v5771, %v5818
    %v5869 = vmul.f32 %v5772, %v5818
    %v5870 = vmul.f32 %v5773, %v5818
    %v5871 = vmul.f32 %v5774, %v5818
    %v5872 = vmul.f32 %v5775, %v5818
    %v5873 = vmul.f32 %v5776, %v5818
    %v5874 = vmul.f32 %v5777, %v5818
    %v5875 = vmul.f32 %v5778, %v5818
    %v5876 = vmul.f32 %v5779, %v5818
    %v5877 = vmul.f32 %v5780, %v5818
    %v5878 = vmul.f32 %v5781, %v5818
    %v5879 = vmul.f32 %v5782, %v5818
    %v5880 = vmul.f32 %v5783, %v5818
    %v5881 = vmul.f32 %v5784, %v5818
    %v5882 = vmul.f32 %v5785, %v5818
    %v5883 = vmul.f32 %v5786, %v5818
    %v5884 = vmul.f32 %v5787, %v5818
    %v5885 = vmul.f32 %v5788, %v5818
    %v5886 = vmul.f32 %v5789, %v5818
    %v5887 = vmul.f32 %v5790, %v5818
    %v5888 = vmul.f32 %v5791, %v5818
    %v5889 = vmul.f32 %v5792, %v5818
    %v5890 = vmul.f32 %v5793, %v5818
    %v5891 = vmul.f32 %v5794, %v5818
    %v5892 = vmul.f32 %v5795, %v5818
    %v5893 = vmul.f32 %v5796, %v5818
    %v5894 = vmul.f32 %v5797, %v5818
    %v5895 = vmul.f32 %v5798, %v5818
    %v5896 = vmul.f32 %v5799, %v5818
    %v5897 = vmul.f32 %v5800, %v5818
    %v5898 = vmul.f32 %v5801, %v5818
    %v5899 = vmul.f32 %v5802, %v5818
    %v5900 = vmul.f32 %v5803, %v5818
    %v5901 = vmul.f32 %v5804, %v5818
    %v5902 = vmul.f32 %v5805, %v5818
    %v5903 = vmul.f32 %v5806, %v5818
    %v5904 = vmul.f32 %v5807, %v5818
    %v5905 = vmul.f32 %v5808, %v5818
    %v5906 = vmul.f32 %v5809, %v5818
    %v5907 = vmul.f32 %v5810, %v5818
    %v5908 = vmul.f32 %v5811, %v5818
    %v5909 = vmul.f32 %v5812, %v5818
    %v5910 = vmul.f32 %v5813, %v5818
    %v5911 = vmul.f32 %v5814, %v5818
    %v5912 = vmul.f32 %v5815, %v5818
    %v5913 = vmul.f32 %v5816, %v5818
    %v5914 = vmul.f32 %v5817, %v5818
    %v5915 = vperm.slane %v34, 0
    %v5916 = vadd.f32 %v5819, %v5915
    %v5917 = vadd.f32 %v5820, %v5915
    %v5918 = vadd.f32 %v5821, %v5915
    %v5919 = vadd.f32 %v5822, %v5915
    %v5920 = vadd.f32 %v5823, %v5915
    %v5921 = vadd.f32 %v5824, %v5915
    %v5922 = vadd.f32 %v5825, %v5915
    %v5923 = vadd.f32 %v5826, %v5915
    %v5924 = vadd.f32 %v5827, %v5915
    %v5925 = vadd.f32 %v5828, %v5915
    %v5926 = vadd.f32 %v5829, %v5915
    %v5927 = vadd.f32 %v5830, %v5915
    %v5928 = vadd.f32 %v5831, %v5915
    %v5929 = vadd.f32 %v5832, %v5915
    %v5930 = vadd.f32 %v5833, %v5915
    %v5931 = vadd.f32 %v5834, %v5915
    %v5932 = vadd.f32 %v5835, %v5915
    %v5933 = vadd.f32 %v5836, %v5915
    %v5934 = vadd.f32 %v5837, %v5915
    %v5935 = vadd.f32 %v5838, %v5915
    %v5936 = vadd.f32 %v5839, %v5915
    %v5937 = vadd.f32 %v5840, %v5915
    %v5938 = vadd.f32 %v5841, %v5915
    %v5939 = vadd.f32 %v5842, %v5915
    %v5940 = vadd.f32 %v5843, %v5915
    %v5941 = vadd.f32 %v5844, %v5915
    %v5942 = vadd.f32 %v5845, %v5915
    %v5943 = vadd.f32 %v5846, %v5915
    %v5944 = vadd.f32 %v5847, %v5915
    %v5945 = vadd.f32 %v5848, %v5915
    %v5946 = vadd.f32 %v5849, %v5915
    %v5947 = vadd.f32 %v5850, %v5915
    %v5948 = vadd.f32 %v5851, %v5915
    %v5949 = vadd.f32 %v5852, %v5915
    %v5950 = vadd.f32 %v5853, %v5915
    %v5951 = vadd.f32 %v5854, %v5915
    %v5952 = vadd.f32 %v5855, %v5915
    %v5953 = vadd.f32 %v5856, %v5915
    %v5954 = vadd.f32 %v5857, %v5915
    %v5955 = vadd.f32 %v5858, %v5915
    %v5956 = vadd.f32 %v5859, %v5915
    %v5957 = vadd.f32 %v5860, %v5915
    %v5958 = vadd.f32 %v5861, %v5915
    %v5959 = vadd.f32 %v5862, %v5915
    %v5960 = vadd.f32 %v5863, %v5915
    %v5961 = vadd.f32 %v5864, %v5915
    %v5962 = vadd.f32 %v5865, %v5915
    %v5963 = vadd.f32 %v5866, %v5915
    %v5964 = vadd.f32 %v5867, %v5915
    %v5965 = vadd.f32 %v5868, %v5915
    %v5966 = vadd.f32 %v5869, %v5915
    %v5967 = vadd.f32 %v5870, %v5915
    %v5968 = vadd.f32 %v5871, %v5915
    %v5969 = vadd.f32 %v5872, %v5915
    %v5970 = vadd.f32 %v5873, %v5915
    %v5971 = vadd.f32 %v5874, %v5915
    %v5972 = vadd.f32 %v5875, %v5915
    %v5973 = vadd.f32 %v5876, %v5915
    %v5974 = vadd.f32 %v5877, %v5915
    %v5975 = vadd.f32 %v5878, %v5915
    %v5976 = vadd.f32 %v5879, %v5915
    %v5977 = vadd.f32 %v5880, %v5915
    %v5978 = vadd.f32 %v5881, %v5915
    %v5979 = vadd.f32 %v5882, %v5915
    %v5980 = vadd.f32 %v5883, %v5915
    %v5981 = vadd.f32 %v5884, %v5915
    %v5982 = vadd.f32 %v5885, %v5915
    %v5983 = vadd.f32 %v5886, %v5915
    %v5984 = vadd.f32 %v5887, %v5915
    %v5985 = vadd.f32 %v5888, %v5915
    %v5986 = vadd.f32 %v5889, %v5915
    %v5987 = vadd.f32 %v5890, %v5915
    %v5988 = vadd.f32 %v5891, %v5915
    %v5989 = vadd.f32 %v5892, %v5915
    %v5990 = vadd.f32 %v5893, %v5915
    %v5991 = vadd.f32 %v5894, %v5915
    %v5992 = vadd.f32 %v5895, %v5915
    %v5993 = vadd.f32 %v5896, %v5915
    %v5994 = vadd.f32 %v5897, %v5915
    %v5995 = vadd.f32 %v5898, %v5915
    %v5996 = vadd.f32 %v5899, %v5915
    %v5997 = vadd.f32 %v5900, %v5915
    %v5998 = vadd.f32 %v5901, %v5915
    %v5999 = vadd.f32 %v5902, %v5915
    %v6000 = vadd.f32 %v5903, %v5915
    %v6001 = vadd.f32 %v5904, %v5915
    %v6002 = vadd.f32 %v5905, %v5915
    %v6003 = vadd.f32 %v5906, %v5915
    %v6004 = vadd.f32 %v5907, %v5915
    %v6005 = vadd.f32 %v5908, %v5915
    %v6006 = vadd.f32 %v5909, %v5915
    %v6007 = vadd.f32 %v5910, %v5915
    %v6008 = vadd.f32 %v5911, %v5915
    %v6009 = vadd.f32 %v5912, %v5915
    %v6010 = vadd.f32 %v5913, %v5915
    %v6011 = vadd.f32 %v5914, %v5915
    %v6012 = vperm.slane %v39, 0
    %v6014 = vsel %vm562, %v5916, 0
    %v6017 = vsel %vm562, %v5917, 0
    %v6020 = vsel %vm562, %v5918, 0
    %v6023 = vsel %vm562, %v5919, 0
    %v6026 = vsel %vm562, %v5920, 0
    %v6029 = vsel %vm562, %v5921, 0
    %v6032 = vsel %vm562, %v5922, 0
    %v6035 = vsel %vm562, %v5923, 0
    %v6038 = vsel %vm562, %v5924, 0
    %v6041 = vsel %vm562, %v5925, 0
    %v6044 = vsel %vm562, %v5926, 0
    %v6047 = vsel %vm562, %v5927, 0
    %v6050 = vsel %vm562, %v5928, 0
    %v6053 = vsel %vm562, %v5929, 0
    %v6056 = vsel %vm562, %v5930, 0
    %v6059 = vsel %vm562, %v5931, 0
    %v6062 = vsel %vm562, %v5932, 0
    %v6065 = vsel %vm562, %v5933, 0
    %v6068 = vsel %vm562, %v5934, 0
    %v6071 = vsel %vm562, %v5935, 0
    %v6074 = vsel %vm562, %v5936, 0
    %v6077 = vsel %vm562, %v5937, 0
    %v6080 = vsel %vm562, %v5938, 0
    %v6083 = vsel %vm562, %v5939, 0
    %v6086 = vsel %vm562, %v5940, 0
    %v6089 = vsel %vm562, %v5941, 0
    %v6092 = vsel %vm562, %v5942, 0
    %v6095 = vsel %vm562, %v5943, 0
    %v6098 = vsel %vm562, %v5944, 0
    %v6101 = vsel %vm562, %v5945, 0
    %v6104 = vsel %vm562, %v5946, 0
    %v6107 = vsel %vm562, %v5947, 0
    %v6110 = vsel %vm562, %v5948, 0
    %v6113 = vsel %vm562, %v5949, 0
    %v6116 = vsel %vm562, %v5950, 0
    %v6119 = vsel %vm562, %v5951, 0
    %v6122 = vsel %vm562, %v5952, 0
    %v6125 = vsel %vm562, %v5953, 0
    %v6128 = vsel %vm562, %v5954, 0
    %v6131 = vsel %vm562, %v5955, 0
    %v6134 = vsel %vm562, %v5956, 0
    %v6137 = vsel %vm562, %v5957, 0
    %v6140 = vsel %vm562, %v5958, 0
    %v6143 = vsel %vm562, %v5959, 0
    %v6146 = vsel %vm562, %v5960, 0
    %v6149 = vsel %vm562, %v5961, 0
    %v6152 = vsel %vm562, %v5962, 0
    %v6155 = vsel %vm562, %v5963, 0
    %v6158 = vsel %vm562, %v5964, 0
    %v6161 = vsel %vm562, %v5965, 0
    %v6164 = vsel %vm562, %v5966, 0
    %v6167 = vsel %vm562, %v5967, 0
    %v6170 = vsel %vm562, %v5968, 0
    %v6173 = vsel %vm562, %v5969, 0
    %v6176 = vsel %vm562, %v5970, 0
    %v6179 = vsel %vm562, %v5971, 0
    %v6182 = vsel %vm562, %v5972, 0
    %v6185 = vsel %vm562, %v5973, 0
    %v6188 = vsel %vm562, %v5974, 0
    %v6191 = vsel %vm562, %v5975, 0
    %v6194 = vsel %vm562, %v5976, 0
    %v6197 = vsel %vm562, %v5977, 0
    %v6200 = vsel %vm562, %v5978, 0
    %v6203 = vsel %vm562, %v5979, 0
    %v6206 = vsel %vm562, %v5980, 0
    %v6209 = vsel %vm562, %v5981, 0
    %v6212 = vsel %vm562, %v5982, 0
    %v6215 = vsel %vm562, %v5983, 0
    %v6218 = vsel %vm562, %v5984, 0
    %v6221 = vsel %vm562, %v5985, 0
    %v6224 = vsel %vm562, %v5986, 0
    %v6227 = vsel %vm562, %v5987, 0
    %v6230 = vsel %vm562, %v5988, 0
    %v6233 = vsel %vm562, %v5989, 0
    %v6236 = vsel %vm562, %v5990, 0
    %v6239 = vsel %vm562, %v5991, 0
    %v6242 = vsel %vm562, %v5992, 0
    %v6245 = vsel %vm562, %v5993, 0
    %v6248 = vsel %vm562, %v5994, 0
    %v6251 = vsel %vm562, %v5995, 0
    %v6254 = vsel %vm562, %v5996, 0
    %v6257 = vsel %vm562, %v5997, 0
    %v6260 = vsel %vm562, %v5998, 0
    %v6263 = vsel %vm562, %v5999, 0
    %v6266 = vsel %vm562, %v6000, 0
    %v6269 = vsel %vm562, %v6001, 0
    %v6272 = vsel %vm562, %v6002, 0
    %v6275 = vsel %vm562, %v6003, 0
    %v6278 = vsel %vm562, %v6004, 0
    %v6281 = vsel %vm562, %v6005, 0
    %v6284 = vsel %vm562, %v6006, 0
    %v6287 = vsel %vm562, %v6007, 0
    %v6290 = vsel %vm562, %v6008, 0
    %v6293 = vsel %vm562, %v6009, 0
    %v6296 = vsel %vm562, %v6010, 0
    %v6299 = vsel %vm562, %v6011, 0
    %6301 = vmatpush.msra.mxu0 0.0
    %6302 = vmatpush.msra.mxu0 0.0
    %6303 = vmatpush.msra.mxu0 0.0
    %6304 = vmatpush.msra.mxu0 0.0
    %6305 = vmatpush.msra.mxu0 0.0
    %6306 = vmatpush.msra.mxu0 0.0
    %6307 = vmatpush.msra.mxu0 0.0
    %6308 = vmatpush.msra.mxu0 0.0
    %6309 = vmatpush.msra.mxu0 0.0
    %6310 = vmatpush.msra.mxu0 0.0
    %6311 = vmatpush.msra.mxu0 0.0
    %6312 = vmatpush.msra.mxu0 0.0
    %6313 = vmatpush.msra.mxu0 %v38
    %6314 = vmatpush.msra.mxu0 %v37
    %6315 = vmatpush.msra.mxu0 %v36
    %6316 = vmatpush.msra.mxu0 %v35
    %6317 = vmatmul.f32.gmra.mxu0 %v6014
    %v6318 = vpop.f32.mrf.mxu0
    %v6319 = vadd.f32 %v6012, %v6318
    %6320 = vmatmul.f32.gmra.mxu0 %v6017
    %v6321 = vpop.f32.mrf.mxu0
    %v6322 = vadd.f32 %v6012, %v6321
    %6323 = vmatmul.f32.gmra.mxu0 %v6020
    %v6324 = vpop.f32.mrf.mxu0
    %v6325 = vadd.f32 %v6012, %v6324
    %6326 = vmatmul.f32.gmra.mxu0 %v6023
    %v6327 = vpop.f32.mrf.mxu0
    %v6328 = vadd.f32 %v6012, %v6327
    %6329 = vmatmul.f32.gmra.mxu0 %v6026
    %v6330 = vpop.f32.mrf.mxu0
    %v6331 = vadd.f32 %v6012, %v6330
    %6332 = vmatmul.f32.gmra.mxu0 %v6029
    %v6333 = vpop.f32.mrf.mxu0
    %v6334 = vadd.f32 %v6012, %v6333
    %6335 = vmatmul.f32.gmra.mxu0 %v6032
    %v6336 = vpop.f32.mrf.mxu0
    %v6337 = vadd.f32 %v6012, %v6336
    %6338 = vmatmul.f32.gmra.mxu0 %v6035
    %v6339 = vpop.f32.mrf.mxu0
    %v6340 = vadd.f32 %v6012, %v6339
    %6341 = vmatmul.f32.gmra.mxu0 %v6038
    %v6342 = vpop.f32.mrf.mxu0
    %v6343 = vadd.f32 %v6012, %v6342
    %6344 = vmatmul.f32.gmra.mxu0 %v6041
    %v6345 = vpop.f32.mrf.mxu0
    %v6346 = vadd.f32 %v6012, %v6345
    %6347 = vmatmul.f32.gmra.mxu0 %v6044
    %v6348 = vpop.f32.mrf.mxu0
    %v6349 = vadd.f32 %v6012, %v6348
    %6350 = vmatmul.f32.gmra.mxu0 %v6047
    %v6351 = vpop.f32.mrf.mxu0
    %v6352 = vadd.f32 %v6012, %v6351
    %6353 = vmatmul.f32.gmra.mxu0 %v6050
    %v6354 = vpop.f32.mrf.mxu0
    %v6355 = vadd.f32 %v6012, %v6354
    %6356 = vmatmul.f32.gmra.mxu0 %v6053
    %v6357 = vpop.f32.mrf.mxu0
    %v6358 = vadd.f32 %v6012, %v6357
    %6359 = vmatmul.f32.gmra.mxu0 %v6056
    %v6360 = vpop.f32.mrf.mxu0
    %v6361 = vadd.f32 %v6012, %v6360
    %6362 = vmatmul.f32.gmra.mxu0 %v6059
    %v6363 = vpop.f32.mrf.mxu0
    %v6364 = vadd.f32 %v6012, %v6363
    %6365 = vmatmul.f32.gmra.mxu0 %v6062
    %v6366 = vpop.f32.mrf.mxu0
    %v6367 = vadd.f32 %v6012, %v6366
    %6368 = vmatmul.f32.gmra.mxu0 %v6065
    %v6369 = vpop.f32.mrf.mxu0
    %v6370 = vadd.f32 %v6012, %v6369
    %6371 = vmatmul.f32.gmra.mxu0 %v6068
    %v6372 = vpop.f32.mrf.mxu0
    %v6373 = vadd.f32 %v6012, %v6372
    %6374 = vmatmul.f32.gmra.mxu0 %v6071
    %v6375 = vpop.f32.mrf.mxu0
    %v6376 = vadd.f32 %v6012, %v6375
    %6377 = vmatmul.f32.gmra.mxu0 %v6074
    %v6378 = vpop.f32.mrf.mxu0
    %v6379 = vadd.f32 %v6012, %v6378
    %6380 = vmatmul.f32.gmra.mxu0 %v6077
    %v6381 = vpop.f32.mrf.mxu0
    %v6382 = vadd.f32 %v6012, %v6381
    %6383 = vmatmul.f32.gmra.mxu0 %v6080
    %v6384 = vpop.f32.mrf.mxu0
    %v6385 = vadd.f32 %v6012, %v6384
    %6386 = vmatmul.f32.gmra.mxu0 %v6083
    %v6387 = vpop.f32.mrf.mxu0
    %v6388 = vadd.f32 %v6012, %v6387
    %6389 = vmatmul.f32.gmra.mxu0 %v6086
    %v6390 = vpop.f32.mrf.mxu0
    %v6391 = vadd.f32 %v6012, %v6390
    %6392 = vmatmul.f32.gmra.mxu0 %v6089
    %v6393 = vpop.f32.mrf.mxu0
    %v6394 = vadd.f32 %v6012, %v6393
    %6395 = vmatmul.f32.gmra.mxu0 %v6092
    %v6396 = vpop.f32.mrf.mxu0
    %v6397 = vadd.f32 %v6012, %v6396
    %6398 = vmatmul.f32.gmra.mxu0 %v6095
    %v6399 = vpop.f32.mrf.mxu0
    %v6400 = vadd.f32 %v6012, %v6399
    %6401 = vmatmul.f32.gmra.mxu0 %v6098
    %v6402 = vpop.f32.mrf.mxu0
    %v6403 = vadd.f32 %v6012, %v6402
    %6404 = vmatmul.f32.gmra.mxu0 %v6101
    %v6405 = vpop.f32.mrf.mxu0
    %v6406 = vadd.f32 %v6012, %v6405
    %6407 = vmatmul.f32.gmra.mxu0 %v6104
    %v6408 = vpop.f32.mrf.mxu0
    %v6409 = vadd.f32 %v6012, %v6408
    %6410 = vmatmul.f32.gmra.mxu0 %v6107
    %v6411 = vpop.f32.mrf.mxu0
    %v6412 = vadd.f32 %v6012, %v6411
    %6413 = vmatmul.f32.gmra.mxu0 %v6110
    %v6414 = vpop.f32.mrf.mxu0
    %v6415 = vadd.f32 %v6012, %v6414
    %6416 = vmatmul.f32.gmra.mxu0 %v6113
    %v6417 = vpop.f32.mrf.mxu0
    %v6418 = vadd.f32 %v6012, %v6417
    %6419 = vmatmul.f32.gmra.mxu0 %v6116
    %v6420 = vpop.f32.mrf.mxu0
    %v6421 = vadd.f32 %v6012, %v6420
    %6422 = vmatmul.f32.gmra.mxu0 %v6119
    %v6423 = vpop.f32.mrf.mxu0
    %v6424 = vadd.f32 %v6012, %v6423
    %6425 = vmatmul.f32.gmra.mxu0 %v6122
    %v6426 = vpop.f32.mrf.mxu0
    %v6427 = vadd.f32 %v6012, %v6426
    %6428 = vmatmul.f32.gmra.mxu0 %v6125
    %v6429 = vpop.f32.mrf.mxu0
    %v6430 = vadd.f32 %v6012, %v6429
    %6431 = vmatmul.f32.gmra.mxu0 %v6128
    %v6432 = vpop.f32.mrf.mxu0
    %v6433 = vadd.f32 %v6012, %v6432
    %6434 = vmatmul.f32.gmra.mxu0 %v6131
    %v6435 = vpop.f32.mrf.mxu0
    %v6436 = vadd.f32 %v6012, %v6435
    %6437 = vmatmul.f32.gmra.mxu0 %v6134
    %v6438 = vpop.f32.mrf.mxu0
    %v6439 = vadd.f32 %v6012, %v6438
    %6440 = vmatmul.f32.gmra.mxu0 %v6137
    %v6441 = vpop.f32.mrf.mxu0
    %v6442 = vadd.f32 %v6012, %v6441
    %6443 = vmatmul.f32.gmra.mxu0 %v6140
    %v6444 = vpop.f32.mrf.mxu0
    %v6445 = vadd.f32 %v6012, %v6444
    %6446 = vmatmul.f32.gmra.mxu0 %v6143
    %v6447 = vpop.f32.mrf.mxu0
    %v6448 = vadd.f32 %v6012, %v6447
    %6449 = vmatmul.f32.gmra.mxu0 %v6146
    %v6450 = vpop.f32.mrf.mxu0
    %v6451 = vadd.f32 %v6012, %v6450
    %6452 = vmatmul.f32.gmra.mxu0 %v6149
    %v6453 = vpop.f32.mrf.mxu0
    %v6454 = vadd.f32 %v6012, %v6453
    %6455 = vmatmul.f32.gmra.mxu0 %v6152
    %v6456 = vpop.f32.mrf.mxu0
    %v6457 = vadd.f32 %v6012, %v6456
    %6458 = vmatmul.f32.gmra.mxu0 %v6155
    %v6459 = vpop.f32.mrf.mxu0
    %v6460 = vadd.f32 %v6012, %v6459
    %6461 = vmatmul.f32.gmra.mxu0 %v6158
    %v6462 = vpop.f32.mrf.mxu0
    %v6463 = vadd.f32 %v6012, %v6462
    %6464 = vmatmul.f32.gmra.mxu0 %v6161
    %v6465 = vpop.f32.mrf.mxu0
    %v6466 = vadd.f32 %v6012, %v6465
    %6467 = vmatmul.f32.gmra.mxu0 %v6164
    %v6468 = vpop.f32.mrf.mxu0
    %v6469 = vadd.f32 %v6012, %v6468
    %6470 = vmatmul.f32.gmra.mxu0 %v6167
    %v6471 = vpop.f32.mrf.mxu0
    %v6472 = vadd.f32 %v6012, %v6471
    %6473 = vmatmul.f32.gmra.mxu0 %v6170
    %v6474 = vpop.f32.mrf.mxu0
    %v6475 = vadd.f32 %v6012, %v6474
    %6476 = vmatmul.f32.gmra.mxu0 %v6173
    %v6477 = vpop.f32.mrf.mxu0
    %v6478 = vadd.f32 %v6012, %v6477
    %6479 = vmatmul.f32.gmra.mxu0 %v6176
    %v6480 = vpop.f32.mrf.mxu0
    %v6481 = vadd.f32 %v6012, %v6480
    %6482 = vmatmul.f32.gmra.mxu0 %v6179
    %v6483 = vpop.f32.mrf.mxu0
    %v6484 = vadd.f32 %v6012, %v6483
    %6485 = vmatmul.f32.gmra.mxu0 %v6182
    %v6486 = vpop.f32.mrf.mxu0
    %v6487 = vadd.f32 %v6012, %v6486
    %6488 = vmatmul.f32.gmra.mxu0 %v6185
    %v6489 = vpop.f32.mrf.mxu0
    %v6490 = vadd.f32 %v6012, %v6489
    %6491 = vmatmul.f32.gmra.mxu0 %v6188
    %v6492 = vpop.f32.mrf.mxu0
    %v6493 = vadd.f32 %v6012, %v6492
    %6494 = vmatmul.f32.gmra.mxu0 %v6191
    %v6495 = vpop.f32.mrf.mxu0
    %v6496 = vadd.f32 %v6012, %v6495
    %6497 = vmatmul.f32.gmra.mxu0 %v6194
    %v6498 = vpop.f32.mrf.mxu0
    %v6499 = vadd.f32 %v6012, %v6498
    %6500 = vmatmul.f32.gmra.mxu0 %v6197
    %v6501 = vpop.f32.mrf.mxu0
    %v6502 = vadd.f32 %v6012, %v6501
    %6503 = vmatmul.f32.gmra.mxu0 %v6200
    %v6504 = vpop.f32.mrf.mxu0
    %v6505 = vadd.f32 %v6012, %v6504
    %6506 = vmatmul.f32.gmra.mxu0 %v6203
    %v6507 = vpop.f32.mrf.mxu0
    %v6508 = vadd.f32 %v6012, %v6507
    %6509 = vmatmul.f32.gmra.mxu0 %v6206
    %v6510 = vpop.f32.mrf.mxu0
    %v6511 = vadd.f32 %v6012, %v6510
    %6512 = vmatmul.f32.gmra.mxu0 %v6209
    %v6513 = vpop.f32.mrf.mxu0
    %v6514 = vadd.f32 %v6012, %v6513
    %6515 = vmatmul.f32.gmra.mxu0 %v6212
    %v6516 = vpop.f32.mrf.mxu0
    %v6517 = vadd.f32 %v6012, %v6516
    %6518 = vmatmul.f32.gmra.mxu0 %v6215
    %v6519 = vpop.f32.mrf.mxu0
    %v6520 = vadd.f32 %v6012, %v6519
    %6521 = vmatmul.f32.gmra.mxu0 %v6218
    %v6522 = vpop.f32.mrf.mxu0
    %v6523 = vadd.f32 %v6012, %v6522
    %6524 = vmatmul.f32.gmra.mxu0 %v6221
    %v6525 = vpop.f32.mrf.mxu0
    %v6526 = vadd.f32 %v6012, %v6525
    %6527 = vmatmul.f32.gmra.mxu0 %v6224
    %v6528 = vpop.f32.mrf.mxu0
    %v6529 = vadd.f32 %v6012, %v6528
    %6530 = vmatmul.f32.gmra.mxu0 %v6227
    %v6531 = vpop.f32.mrf.mxu0
    %v6532 = vadd.f32 %v6012, %v6531
    %6533 = vmatmul.f32.gmra.mxu0 %v6230
    %v6534 = vpop.f32.mrf.mxu0
    %v6535 = vadd.f32 %v6012, %v6534
    %6536 = vmatmul.f32.gmra.mxu0 %v6233
    %v6537 = vpop.f32.mrf.mxu0
    %v6538 = vadd.f32 %v6012, %v6537
    %6539 = vmatmul.f32.gmra.mxu0 %v6236
    %v6540 = vpop.f32.mrf.mxu0
    %v6541 = vadd.f32 %v6012, %v6540
    %6542 = vmatmul.f32.gmra.mxu0 %v6239
    %v6543 = vpop.f32.mrf.mxu0
    %v6544 = vadd.f32 %v6012, %v6543
    %6545 = vmatmul.f32.gmra.mxu0 %v6242
    %v6546 = vpop.f32.mrf.mxu0
    %v6547 = vadd.f32 %v6012, %v6546
    %6548 = vmatmul.f32.gmra.mxu0 %v6245
    %v6549 = vpop.f32.mrf.mxu0
    %v6550 = vadd.f32 %v6012, %v6549
    %6551 = vmatmul.f32.gmra.mxu0 %v6248
    %v6552 = vpop.f32.mrf.mxu0
    %v6553 = vadd.f32 %v6012, %v6552
    %6554 = vmatmul.f32.gmra.mxu0 %v6251
    %v6555 = vpop.f32.mrf.mxu0
    %v6556 = vadd.f32 %v6012, %v6555
    %6557 = vmatmul.f32.gmra.mxu0 %v6254
    %v6558 = vpop.f32.mrf.mxu0
    %v6559 = vadd.f32 %v6012, %v6558
    %6560 = vmatmul.f32.gmra.mxu0 %v6257
    %v6561 = vpop.f32.mrf.mxu0
    %v6562 = vadd.f32 %v6012, %v6561
    %6563 = vmatmul.f32.gmra.mxu0 %v6260
    %v6564 = vpop.f32.mrf.mxu0
    %v6565 = vadd.f32 %v6012, %v6564
    %6566 = vmatmul.f32.gmra.mxu0 %v6263
    %v6567 = vpop.f32.mrf.mxu0
    %v6568 = vadd.f32 %v6012, %v6567
    %6569 = vmatmul.f32.gmra.mxu0 %v6266
    %v6570 = vpop.f32.mrf.mxu0
    %v6571 = vadd.f32 %v6012, %v6570
    %6572 = vmatmul.f32.gmra.mxu0 %v6269
    %v6573 = vpop.f32.mrf.mxu0
    %v6574 = vadd.f32 %v6012, %v6573
    %6575 = vmatmul.f32.gmra.mxu0 %v6272
    %v6576 = vpop.f32.mrf.mxu0
    %v6577 = vadd.f32 %v6012, %v6576
    %6578 = vmatmul.f32.gmra.mxu0 %v6275
    %v6579 = vpop.f32.mrf.mxu0
    %v6580 = vadd.f32 %v6012, %v6579
    %6581 = vmatmul.f32.gmra.mxu0 %v6278
    %v6582 = vpop.f32.mrf.mxu0
    %v6583 = vadd.f32 %v6012, %v6582
    %6584 = vmatmul.f32.gmra.mxu0 %v6281
    %v6585 = vpop.f32.mrf.mxu0
    %v6586 = vadd.f32 %v6012, %v6585
    %6587 = vmatmul.f32.gmra.mxu0 %v6284
    %v6588 = vpop.f32.mrf.mxu0
    %v6589 = vadd.f32 %v6012, %v6588
    %6590 = vmatmul.f32.gmra.mxu0 %v6287
    %v6591 = vpop.f32.mrf.mxu0
    %v6592 = vadd.f32 %v6012, %v6591
    %6593 = vmatmul.f32.gmra.mxu0 %v6290
    %v6594 = vpop.f32.mrf.mxu0
    %v6595 = vadd.f32 %v6012, %v6594
    %6596 = vmatmul.f32.gmra.mxu0 %v6293
    %v6597 = vpop.f32.mrf.mxu0
    %v6598 = vadd.f32 %v6012, %v6597
    %6599 = vmatmul.f32.gmra.mxu0 %v6296
    %v6600 = vpop.f32.mrf.mxu0
    %v6601 = vadd.f32 %v6012, %v6600
    %6602 = vmatmul.f32.gmra.mxu0 %v6299
    %v6603 = vpop.f32.mrf.mxu0
    %v6604 = vadd.f32 %v6012, %v6603
    %6605 = vdwg.mxu0
    %v6607 = vsel %vm562, %v2840, 0
    %v6610 = vsel %vm562, %v6319, 0
    %v6613 = vsel %vm562, %v6322, 0
    %v6616 = vsel %vm562, %v6325, 0
    %v6619 = vsel %vm562, %v6328, 0
    %v6622 = vsel %vm562, %v6331, 0
    %v6625 = vsel %vm562, %v6334, 0
    %v6628 = vsel %vm562, %v6337, 0
    %v6631 = vsel %vm562, %v6340, 0
    %v6634 = vsel %vm562, %v6343, 0
    %v6637 = vsel %vm562, %v6346, 0
    %v6640 = vsel %vm562, %v6349, 0
    %v6643 = vsel %vm562, %v6352, 0
    %v6646 = vsel %vm562, %v6355, 0
    %v6649 = vsel %vm562, %v6358, 0
    %v6652 = vsel %vm562, %v6361, 0
    %v6655 = vsel %vm562, %v6364, 0
    %v6658 = vsel %vm562, %v6367, 0
    %v6661 = vsel %vm562, %v6370, 0
    %v6664 = vsel %vm562, %v6373, 0
    %v6667 = vsel %vm562, %v6376, 0
    %v6670 = vsel %vm562, %v6379, 0
    %v6673 = vsel %vm562, %v6382, 0
    %v6676 = vsel %vm562, %v6385, 0
    %v6679 = vsel %vm562, %v6388, 0
    %v6682 = vsel %vm562, %v6391, 0
    %v6685 = vsel %vm562, %v6394, 0
    %v6688 = vsel %vm562, %v6397, 0
    %v6691 = vsel %vm562, %v6400, 0
    %v6694 = vsel %vm562, %v6403, 0
    %v6697 = vsel %vm562, %v6406, 0
    %v6700 = vsel %vm562, %v6409, 0
    %v6703 = vsel %vm562, %v6412, 0
    %v6706 = vsel %vm562, %v6415, 0
    %v6709 = vsel %vm562, %v6418, 0
    %v6712 = vsel %vm562, %v6421, 0
    %v6715 = vsel %vm562, %v6424, 0
    %v6718 = vsel %vm562, %v6427, 0
    %v6721 = vsel %vm562, %v6430, 0
    %v6724 = vsel %vm562, %v6433, 0
    %v6727 = vsel %vm562, %v6436, 0
    %v6730 = vsel %vm562, %v6439, 0
    %v6733 = vsel %vm562, %v6442, 0
    %v6736 = vsel %vm562, %v6445, 0
    %v6739 = vsel %vm562, %v6448, 0
    %v6742 = vsel %vm562, %v6451, 0
    %v6745 = vsel %vm562, %v6454, 0
    %v6748 = vsel %vm562, %v6457, 0
    %v6751 = vsel %vm562, %v6460, 0
    %6753 = vmatpush.xpose.msra.mxu0 %v6655
    %6754 = vmatpush.xpose.msra.mxu0 %v6652
    %6755 = vmatpush.xpose.msra.mxu0 %v6649
    %6756 = vmatpush.xpose.msra.mxu0 %v6646
    %6757 = vmatpush.xpose.msra.mxu0 %v6643
    %6758 = vmatpush.xpose.msra.mxu0 %v6640
    %6759 = vmatpush.xpose.msra.mxu0 %v6637
    %6760 = vmatpush.xpose.msra.mxu0 %v6634
    %6761 = vmatpush.xpose.msra.mxu0 %v6631
    %6762 = vmatpush.xpose.msra.mxu0 %v6628
    %6763 = vmatpush.xpose.msra.mxu0 %v6625
    %6764 = vmatpush.xpose.msra.mxu0 %v6622
    %6765 = vmatpush.xpose.msra.mxu0 %v6619
    %6766 = vmatpush.xpose.msra.mxu0 %v6616
    %6767 = vmatpush.xpose.msra.mxu0 %v6613
    %6768 = vmatpush.xpose.msra.mxu0 %v6610
    %6769 = vmatmul.f32.gmra.mxu0 %v6607
    %v6770 = vpop.f32.mrf.mxu0
    %v6771 = vadd.f32 0.0, %v6770
    %6772 = vdwg.mxu0
    %6773 = vmatpush.xpose.msra.mxu0 %v6703
    %6774 = vmatpush.xpose.msra.mxu0 %v6700
    %6775 = vmatpush.xpose.msra.mxu0 %v6697
    %6776 = vmatpush.xpose.msra.mxu0 %v6694
    %6777 = vmatpush.xpose.msra.mxu0 %v6691
    %6778 = vmatpush.xpose.msra.mxu0 %v6688
    %6779 = vmatpush.xpose.msra.mxu0 %v6685
    %6780 = vmatpush.xpose.msra.mxu0 %v6682
    %6781 = vmatpush.xpose.msra.mxu0 %v6679
    %6782 = vmatpush.xpose.msra.mxu0 %v6676
    %6783 = vmatpush.xpose.msra.mxu0 %v6673
    %6784 = vmatpush.xpose.msra.mxu0 %v6670
    %6785 = vmatpush.xpose.msra.mxu0 %v6667
    %6786 = vmatpush.xpose.msra.mxu0 %v6664
    %6787 = vmatpush.xpose.msra.mxu0 %v6661
    %6788 = vmatpush.xpose.msra.mxu0 %v6658
    %6789 = vmatmul.f32.gmra.mxu0 %v6607
    %v6790 = vpop.f32.mrf.mxu0
    %v6791 = vadd.f32 0.0, %v6790
    %6792 = vdwg.mxu0
    %6793 = vmatpush.xpose.msra.mxu0 %v6751
    %6794 = vmatpush.xpose.msra.mxu0 %v6748
    %6795 = vmatpush.xpose.msra.mxu0 %v6745
    %6796 = vmatpush.xpose.msra.mxu0 %v6742
    %6797 = vmatpush.xpose.msra.mxu0 %v6739
    %6798 = vmatpush.xpose.msra.mxu0 %v6736
    %6799 = vmatpush.xpose.msra.mxu0 %v6733
    %6800 = vmatpush.xpose.msra.mxu0 %v6730
    %6801 = vmatpush.xpose.msra.mxu0 %v6727
    %6802 = vmatpush.xpose.msra.mxu0 %v6724
    %6803 = vmatpush.xpose.msra.mxu0 %v6721
    %6804 = vmatpush.xpose.msra.mxu0 %v6718
    %6805 = vmatpush.xpose.msra.mxu0 %v6715
    %6806 = vmatpush.xpose.msra.mxu0 %v6712
    %6807 = vmatpush.xpose.msra.mxu0 %v6709
    %6808 = vmatpush.xpose.msra.mxu0 %v6706
    %6809 = vmatmul.f32.gmra.mxu0 %v6607
    %v6810 = vpop.f32.mrf.mxu0
    %v6811 = vadd.f32 0.0, %v6810
    %6812 = vdwg.mxu0
    %v6813 = vmul.f32 %v6771, 0.17677669
    %v6814 = vmul.f32 %v6791, 0.17677669
    %v6815 = vmul.f32 %v6811, 0.17677669
    %v6816 = vrot.slane %v2840, 6
    %v6817 = vsel %vm562, %v6816, 0
    %v6820 = vsel %vm562, %v2562, 0
    %v6823 = vsel %vm562, %v2565, 0
    %v6826 = vsel %vm562, %v2568, 0
    %v6829 = vsel %vm562, %v2571, 0
    %v6832 = vsel %vm562, %v2574, 0
    %v6835 = vsel %vm562, %v2577, 0
    %v6838 = vsel %vm562, %v2580, 0
    %v6841 = vsel %vm562, %v2583, 0
    %v6844 = vsel %vm562, %v2586, 0
    %v6847 = vsel %vm562, %v2589, 0
    %v6850 = vsel %vm562, %v2592, 0
    %v6853 = vsel %vm562, %v2595, 0
    %v6856 = vsel %vm562, %v2598, 0
    %v6859 = vsel %vm562, %v2601, 0
    %v6862 = vsel %vm562, %v2604, 0
    %v6865 = vsel %vm562, %v2607, 0
    %6867 = vmatpush.xpose.msra.mxu0 %v6865
    %6868 = vmatpush.xpose.msra.mxu0 %v6862
    %6869 = vmatpush.xpose.msra.mxu0 %v6859
    %6870 = vmatpush.xpose.msra.mxu0 %v6856
    %6871 = vmatpush.xpose.msra.mxu0 %v6853
    %6872 = vmatpush.xpose.msra.mxu0 %v6850
    %6873 = vmatpush.xpose.msra.mxu0 %v6847
    %6874 = vmatpush.xpose.msra.mxu0 %v6844
    %6875 = vmatpush.xpose.msra.mxu0 %v6841
    %6876 = vmatpush.xpose.msra.mxu0 %v6838
    %6877 = vmatpush.xpose.msra.mxu0 %v6835
    %6878 = vmatpush.xpose.msra.mxu0 %v6832
    %6879 = vmatpush.xpose.msra.mxu0 %v6829
    %6880 = vmatpush.xpose.msra.mxu0 %v6826
    %6881 = vmatpush.xpose.msra.mxu0 %v6823
    %6882 = vmatpush.xpose.msra.mxu0 %v6820
    %6883 = vmatmul.f32.gmra.mxu0 %v6817
    %v6884 = vpop.f32.mrf.mxu0
    %v6885 = vadd.f32 0.0, %v6884
    %6886 = vdwg.mxu0
    %v6887 = vmul.f32 %v6885, 0.17677669
    %v6888 = vmul.f32 %v6813, %v197
    %v6889 = vmul.f32 %v6814, %v198
    %v6890 = vmul.f32 %v6815, %v199
    %6891 = vmatpush.msra.mxu0 %v180
    %6892 = vmatpush.msra.mxu0 %v179
    %6893 = vmatpush.msra.mxu0 %v178
    %6894 = vmatpush.msra.mxu0 %v177
    %6895 = vmatpush.msra.mxu0 %v176
    %6896 = vmatpush.msra.mxu0 %v175
    %6897 = vmatpush.msra.mxu0 %v174
    %6898 = vmatpush.msra.mxu0 %v173
    %6899 = vmatpush.msra.mxu0 %v180
    %6900 = vmatpush.msra.mxu0 %v179
    %6901 = vmatpush.msra.mxu0 %v178
    %6902 = vmatpush.msra.mxu0 %v177
    %6903 = vmatpush.msra.mxu0 %v176
    %6904 = vmatpush.msra.mxu0 %v175
    %6905 = vmatpush.msra.mxu0 %v174
    %6906 = vmatpush.msra.mxu0 %v173
    %6907 = vmatmul.f32.gmra.mxu0 %v6888
    %v6908 = vpop.f32.mrf.mxu0
    %v6909 = vadd.f32 0.0, %v6908
    %6910 = vdwg.mxu0
    %6911 = vmatpush.msra.mxu0 %v180
    %6912 = vmatpush.msra.mxu0 %v179
    %6913 = vmatpush.msra.mxu0 %v178
    %6914 = vmatpush.msra.mxu0 %v177
    %6915 = vmatpush.msra.mxu0 %v176
    %6916 = vmatpush.msra.mxu0 %v175
    %6917 = vmatpush.msra.mxu0 %v174
    %6918 = vmatpush.msra.mxu0 %v173
    %6919 = vmatpush.msra.mxu0 %v180
    %6920 = vmatpush.msra.mxu0 %v179
    %6921 = vmatpush.msra.mxu0 %v178
    %6922 = vmatpush.msra.mxu0 %v177
    %6923 = vmatpush.msra.mxu0 %v176
    %6924 = vmatpush.msra.mxu0 %v175
    %6925 = vmatpush.msra.mxu0 %v174
    %6926 = vmatpush.msra.mxu0 %v173
    %6927 = vmatmul.f32.gmra.mxu0 %v6889
    %v6928 = vpop.f32.mrf.mxu0
    %v6929 = vadd.f32 %v6909, %v6928
    %6930 = vdwg.mxu0
    %6931 = vmatpush.msra.mxu0 %v180
    %6932 = vmatpush.msra.mxu0 %v179
    %6933 = vmatpush.msra.mxu0 %v178
    %6934 = vmatpush.msra.mxu0 %v177
    %6935 = vmatpush.msra.mxu0 %v176
    %6936 = vmatpush.msra.mxu0 %v175
    %6937 = vmatpush.msra.mxu0 %v174
    %6938 = vmatpush.msra.mxu0 %v173
    %6939 = vmatpush.msra.mxu0 %v180
    %6940 = vmatpush.msra.mxu0 %v179
    %6941 = vmatpush.msra.mxu0 %v178
    %6942 = vmatpush.msra.mxu0 %v177
    %6943 = vmatpush.msra.mxu0 %v176
    %6944 = vmatpush.msra.mxu0 %v175
    %6945 = vmatpush.msra.mxu0 %v174
    %6946 = vmatpush.msra.mxu0 %v173
    %6947 = vmatmul.f32.gmra.mxu0 %v6890
    %v6948 = vpop.f32.mrf.mxu0
    %v6949 = vadd.f32 %v6929, %v6948
    %6950 = vdwg.mxu0
    %v6951 = vmul.f32 %v6887, %v197
    %6952 = vmatpush.msra.mxu0 %v180
    %6953 = vmatpush.msra.mxu0 %v179
    %6954 = vmatpush.msra.mxu0 %v178
    %6955 = vmatpush.msra.mxu0 %v177
    %6956 = vmatpush.msra.mxu0 %v176
    %6957 = vmatpush.msra.mxu0 %v175
    %6958 = vmatpush.msra.mxu0 %v174
    %6959 = vmatpush.msra.mxu0 %v173
    %6960 = vmatpush.msra.mxu0 %v180
    %6961 = vmatpush.msra.mxu0 %v179
    %6962 = vmatpush.msra.mxu0 %v178
    %6963 = vmatpush.msra.mxu0 %v177
    %6964 = vmatpush.msra.mxu0 %v176
    %6965 = vmatpush.msra.mxu0 %v175
    %6966 = vmatpush.msra.mxu0 %v174
    %6967 = vmatpush.msra.mxu0 %v173
    %6968 = vmatmul.f32.gmra.mxu0 %v6951
    %v6969 = vpop.f32.mrf.mxu0
    %v6970 = vadd.f32 0.0, %v6969
    %6971 = vdwg.mxu0
    %vm6972 = vcmask 518144
    %v6973 = vsel %vm6972, %v6949, -inf
    %v6974 = vrot.slane %v6973, 4
    %v6975 = vmax.f32 %v6973, %v6974
    %v6976 = vrot.slane %v6975, 2
    %v6977 = vmax.f32 %v6975, %v6976
    %v6978 = vrot.slane %v6977, 1
    %v6979 = vmax.f32 %v6977, %v6978
    %v6980 = vmax.f32 %v6979, %v6970
    %v6981 = vperm.slane %v6980, 0
    %v6982 = vsub.f32 %v6949, %v6981
    %v6983 = vmul.f32 %v6982, 1.442695
    %v6984 = vpow.pop %v6983
    %v6985 = vsub.f32 %v6970, %v6980
    %v6986 = vmul.f32 %v6985, 1.442695
    %v6987 = vpow.pop %v6986
    %v6988 = vsel %vm6972, %v6984, 0.0
    %v6989 = vrot.slane %v6988, 4
    %v6990 = vadd.f32 %v6988, %v6989
    %v6991 = vrot.slane %v6990, 2
    %v6992 = vadd.f32 %v6990, %v6991
    %v6993 = vrot.slane %v6992, 1
    %v6994 = vadd.f32 %v6992, %v6993
    %v6995 = vadd.f32 %v6994, %v6987
    %v6996 = vperm.slane %v6995, 0
    %v6997 = vrcp.pop %v6996
    %v6998 = vmul.f32 %v6996, %v6997
    %v6999 = vsub.f32 1.0, %v6998
    %v7000 = vmul.f32 %v6997, %v6999
    %v7001 = vadd.f32 %v6997, %v7000
    %vm7002 = vweird.f32 %v6996
    %vm7003 = vweird.f32 %v6997
    %vm7004 = vmor %vm7002, %vm7003
    %v7005 = vsel %vm7004, %v6997, %v7001
    %v7006 = vand.u32 2147483647, %v6996
    %vm7007 = vcmp.eq.f32.partialorder %v7006, 8.507059e+37
    %v7008 = vand.u32 %v6996, 2147483648
    %v7009 = vor.u32 1.1754944e-38, %v7008
    %v7010 = vsel %vm7007, %v7009, %v7005
    %v7011 = vmul.f32 %v6984, %v7010
    %v7012 = vadd.f32 %v7011, 1e-08
    %v7013 = vrcp.pop %v6995
    %v7014 = vmul.f32 %v6995, %v7013
    %v7015 = vsub.f32 1.0, %v7014
    %v7016 = vmul.f32 %v7013, %v7015
    %v7017 = vadd.f32 %v7013, %v7016
    %vm7018 = vweird.f32 %v6995
    %vm7019 = vweird.f32 %v7013
    %vm7020 = vmor %vm7018, %vm7019
    %v7021 = vsel %vm7020, %v7013, %v7017
    %v7022 = vand.u32 2147483647, %v6995
    %vm7023 = vcmp.eq.f32.partialorder %v7022, 8.507059e+37
    %v7024 = vand.u32 %v6995, 2147483648
    %v7025 = vor.u32 1.1754944e-38, %v7024
    %v7026 = vsel %vm7023, %v7025, %v7021
    %v7027 = vmul.f32 %v6987, %v7026
    %v7028 = vadd.f32 %v7027, 1e-08
    %vm7029 = vcmask 521219
    %v7030 = vsel %vm7029, %v6949, -inf
    %v7031 = vrot.slane %v7030, 4
    %v7032 = vmax.f32 %v7030, %v7031
    %v7033 = vrot.slane %v7032, 2
    %v7034 = vmax.f32 %v7032, %v7033
    %v7035 = vrot.slane %v7034, 1
    %v7036 = vmax.f32 %v7034, %v7035
    %v7037 = vmax.f32 %v7036, %v6970
    %v7038 = vperm.slane %v7037, 1
    %v7039 = vsub.f32 %v6949, %v7038
    %v7040 = vmul.f32 %v7039, 1.442695
    %v7041 = vpow.pop %v7040
    %v7042 = vsub.f32 %v6970, %v7037
    %v7043 = vmul.f32 %v7042, 1.442695
    %v7044 = vpow.pop %v7043
    %v7046 = vrot.slane %v7041, 3
    %v7048 = vsel %vm6972, %v7046, 0.0
    %v7049 = vrot.slane %v7048, 4
    %v7050 = vadd.f32 %v7048, %v7049
    %v7051 = vrot.slane %v7050, 2
    %v7052 = vadd.f32 %v7050, %v7051
    %v7053 = vrot.slane %v7052, 1
    %v7054 = vadd.f32 %v7052, %v7053
    %v7055 = vadd.f32 %v7054, %v7044
    %v7056 = vperm.slane %v7055, 1
    %v7057 = vrcp.pop %v7056
    %v7058 = vmul.f32 %v7056, %v7057
    %v7059 = vsub.f32 1.0, %v7058
    %v7060 = vmul.f32 %v7057, %v7059
    %v7061 = vadd.f32 %v7057, %v7060
    %vm7062 = vweird.f32 %v7056
    %vm7063 = vweird.f32 %v7057
    %vm7064 = vmor %vm7062, %vm7063
    %v7065 = vsel %vm7064, %v7057, %v7061
    %v7066 = vand.u32 2147483647, %v7056
    %vm7067 = vcmp.eq.f32.partialorder %v7066, 8.507059e+37
    %v7068 = vand.u32 %v7056, 2147483648
    %v7069 = vor.u32 1.1754944e-38, %v7068
    %v7070 = vsel %vm7067, %v7069, %v7065
    %v7071 = vmul.f32 %v7041, %v7070
    %v7072 = vadd.f32 %v7071, 1e-08
    %v7073 = vrcp.pop %v7055
    %v7074 = vmul.f32 %v7055, %v7073
    %v7075 = vsub.f32 1.0, %v7074
    %v7076 = vmul.f32 %v7073, %v7075
    %v7077 = vadd.f32 %v7073, %v7076
    %vm7078 = vweird.f32 %v7055
    %vm7079 = vweird.f32 %v7073
    %vm7080 = vmor %vm7078, %vm7079
    %v7081 = vsel %vm7080, %v7073, %v7077
    %v7082 = vand.u32 2147483647, %v7055
    %vm7083 = vcmp.eq.f32.partialorder %v7082, 8.507059e+37
    %v7084 = vand.u32 %v7055, 2147483648
    %v7085 = vor.u32 1.1754944e-38, %v7084
    %v7086 = vsel %vm7083, %v7085, %v7081
    %v7087 = vmul.f32 %v7044, %v7086
    %v7088 = vadd.f32 %v7087, 1e-08
    %vm7089 = vcmask 1042432
    %v7090 = vsel %vm7089, %v7012, %v7072
    %vm7091 = vcmask 1040384
    %v7092 = vsel %vm7091, %v7028, %v7088
    %vm7093 = vcmask 521216
    %v7094 = vsel %vm7093, %v7090, 0.0
    %7095 = vadd.xlane.f32.xlu0 %v7094
    %v7096 = vpop.xlane.xlu0 %7095
    %v7097 = vrcp.pop %v7096
    %v7098 = vmul.f32 %v7096, %v7097
    %v7099 = vsub.f32 1.0, %v7098
    %v7100 = vmul.f32 %v7097, %v7099
    %v7101 = vadd.f32 %v7097, %v7100
    %vm7102 = vweird.f32 %v7096
    %vm7103 = vweird.f32 %v7097
    %vm7104 = vmor %vm7102, %vm7103
    %v7105 = vsel %vm7104, %v7097, %v7101
    %v7106 = vand.u32 2147483647, %v7096
    %vm7107 = vcmp.eq.f32.partialorder %v7106, 8.507059e+37
    %v7108 = vand.u32 %v7096, 2147483648
    %v7109 = vor.u32 1.1754944e-38, %v7108
    %v7110 = vsel %vm7107, %v7109, %v7105
    %v7111 = vmul.f32 %v7090, %v7110
    %vm7112 = vcmask 517120
    %v7113 = vsel %vm7112, %v7092, 0.0
    %7114 = vadd.xlane.f32.xlu0 %v7113
    %v7115 = vpop.xlane.xlu0 %7114
    %v7116 = vrcp.pop %v7115
    %v7117 = vmul.f32 %v7115, %v7116
    %v7118 = vsub.f32 1.0, %v7117
    %v7119 = vmul.f32 %v7116, %v7118
    %v7120 = vadd.f32 %v7116, %v7119
    %vm7121 = vweird.f32 %v7115
    %vm7122 = vweird.f32 %v7116
    %vm7123 = vmor %vm7121, %vm7122
    %v7124 = vsel %vm7123, %v7116, %v7120
    %v7125 = vand.u32 2147483647, %v7115
    %vm7126 = vcmp.eq.f32.partialorder %v7125, 8.507059e+37
    %v7127 = vand.u32 %v7115, 2147483648
    %v7128 = vor.u32 1.1754944e-38, %v7127
    %v7129 = vsel %vm7126, %v7128, %v7124
    %v7130 = vmul.f32 %v7092, %v7129
    %v7132 = vsel %vm267, %v7111, 0
    %7134 = vmatpush.msra.mxu0 0.0
    %7135 = vmatpush.msra.mxu0 0.0
    %7136 = vmatpush.msra.mxu0 0.0
    %7137 = vmatpush.msra.mxu0 0.0
    %7138 = vmatpush.msra.mxu0 0.0
    %7139 = vmatpush.msra.mxu0 0.0
    %7140 = vmatpush.msra.mxu0 0.0
    %7141 = vmatpush.msra.mxu0 0.0
    %7142 = vmatpush.msra.mxu0 %v24
    %7143 = vmatpush.msra.mxu0 %v23
    %7144 = vmatpush.msra.mxu0 %v22
    %7145 = vmatpush.msra.mxu0 %v21
    %7146 = vmatpush.msra.mxu0 %v20
    %7147 = vmatpush.msra.mxu0 %v19
    %7148 = vmatpush.msra.mxu0 %v18
    %7149 = vmatpush.msra.mxu0 %v17
    %7150 = vmatmul.f32.gmra.mxu0 %v7132
    %v7151 = vpop.f32.mrf.mxu0
    %v7152 = vadd.f32 0.0, %v7151
    %7153 = vdwg.mxu0
    %7154 = vmatpush.msra.mxu0 0.0
    %7155 = vmatpush.msra.mxu0 0.0
    %7156 = vmatpush.msra.mxu0 0.0
    %7157 = vmatpush.msra.mxu0 0.0
    %7158 = vmatpush.msra.mxu0 0.0
    %7159 = vmatpush.msra.mxu0 0.0
    %7160 = vmatpush.msra.mxu0 0.0
    %7161 = vmatpush.msra.mxu0 0.0
    %7162 = vmatpush.msra.mxu0 %v275
    %7163 = vmatpush.msra.mxu0 %v274
    %7164 = vmatpush.msra.mxu0 %v273
    %7165 = vmatpush.msra.mxu0 %v272
    %7166 = vmatpush.msra.mxu0 %v271
    %7167 = vmatpush.msra.mxu0 %v270
    %7168 = vmatpush.msra.mxu0 %v269
    %7169 = vmatpush.msra.mxu0 %v268
    %7170 = vmatmul.f32.gmra.mxu0 %v7132
    %v7171 = vpop.f32.mrf.mxu0
    %v7172 = vadd.f32 0.0, %v7171
    %7173 = vdwg.mxu0
    %v7174 = vmul.f32 %v7172, %v197
    %v7175 = vmul.f32 %v7172, %v198
    %v7176 = vmul.f32 %v7172, %v199
    %v7178 = vsel %vm267, %v7130, 0
    %7180 = vmatpush.msra.mxu0 0.0
    %7181 = vmatpush.msra.mxu0 0.0
    %7182 = vmatpush.msra.mxu0 0.0
    %7183 = vmatpush.msra.mxu0 0.0
    %7184 = vmatpush.msra.mxu0 0.0
    %7185 = vmatpush.msra.mxu0 0.0
    %7186 = vmatpush.msra.mxu0 0.0
    %7187 = vmatpush.msra.mxu0 0.0
    %7188 = vmatpush.msra.mxu0 %v275
    %7189 = vmatpush.msra.mxu0 %v274
    %7190 = vmatpush.msra.mxu0 %v273
    %7191 = vmatpush.msra.mxu0 %v272
    %7192 = vmatpush.msra.mxu0 %v271
    %7193 = vmatpush.msra.mxu0 %v270
    %7194 = vmatpush.msra.mxu0 %v269
    %7195 = vmatpush.msra.mxu0 %v268
    %7196 = vmatmul.f32.gmra.mxu0 %v7178
    %v7197 = vpop.f32.mrf.mxu0
    %v7198 = vadd.f32 0.0, %v7197
    %7199 = vdwg.mxu0
    %v7200 = vmul.f32 %v7198, %v197
    %7201 = vmatpush.msra.mxu0 %v6508
    %7202 = vmatpush.msra.mxu0 %v6505
    %7203 = vmatpush.msra.mxu0 %v6502
    %7204 = vmatpush.msra.mxu0 %v6499
    %7205 = vmatpush.msra.mxu0 %v6496
    %7206 = vmatpush.msra.mxu0 %v6493
    %7207 = vmatpush.msra.mxu0 %v6490
    %7208 = vmatpush.msra.mxu0 %v6487
    %7209 = vmatpush.msra.mxu0 %v6484
    %7210 = vmatpush.msra.mxu0 %v6481
    %7211 = vmatpush.msra.mxu0 %v6478
    %7212 = vmatpush.msra.mxu0 %v6475
    %7213 = vmatpush.msra.mxu0 %v6472
    %7214 = vmatpush.msra.mxu0 %v6469
    %7215 = vmatpush.msra.mxu0 %v6466
    %7216 = vmatpush.msra.mxu0 %v6463
    %7217 = vmatmul.f32.gmra.mxu0 %v7174
    %v7218 = vpop.f32.mrf.mxu0
    %v7219 = vadd.f32 0.0, %v7218
    %7220 = vdwg.mxu0
    %7221 = vmatpush.msra.mxu0 %v6556
    %7222 = vmatpush.msra.mxu0 %v6553
    %7223 = vmatpush.msra.mxu0 %v6550
    %7224 = vmatpush.msra.mxu0 %v6547
    %7225 = vmatpush.msra.mxu0 %v6544
    %7226 = vmatpush.msra.mxu0 %v6541
    %7227 = vmatpush.msra.mxu0 %v6538
    %7228 = vmatpush.msra.mxu0 %v6535
    %7229 = vmatpush.msra.mxu0 %v6532
    %7230 = vmatpush.msra.mxu0 %v6529
    %7231 = vmatpush.msra.mxu0 %v6526
    %7232 = vmatpush.msra.mxu0 %v6523
    %7233 = vmatpush.msra.mxu0 %v6520
    %7234 = vmatpush.msra.mxu0 %v6517
    %7235 = vmatpush.msra.mxu0 %v6514
    %7236 = vmatpush.msra.mxu0 %v6511
    %7237 = vmatmul.f32.gmra.mxu0 %v7175
    %v7238 = vpop.f32.mrf.mxu0
    %v7239 = vadd.f32 %v7219, %v7238
    %7240 = vdwg.mxu0
    %7241 = vmatpush.msra.mxu0 %v6604
    %7242 = vmatpush.msra.mxu0 %v6601
    %7243 = vmatpush.msra.mxu0 %v6598
    %7244 = vmatpush.msra.mxu0 %v6595
    %7245 = vmatpush.msra.mxu0 %v6592
    %7246 = vmatpush.msra.mxu0 %v6589
    %7247 = vmatpush.msra.mxu0 %v6586
    %7248 = vmatpush.msra.mxu0 %v6583
    %7249 = vmatpush.msra.mxu0 %v6580
    %7250 = vmatpush.msra.mxu0 %v6577
    %7251 = vmatpush.msra.mxu0 %v6574
    %7252 = vmatpush.msra.mxu0 %v6571
    %7253 = vmatpush.msra.mxu0 %v6568
    %7254 = vmatpush.msra.mxu0 %v6565
    %7255 = vmatpush.msra.mxu0 %v6562
    %7256 = vmatpush.msra.mxu0 %v6559
    %7257 = vmatmul.f32.gmra.mxu0 %v7176
    %v7258 = vpop.f32.mrf.mxu0
    %v7259 = vadd.f32 %v7239, %v7258
    %7260 = vdwg.mxu0
    %7261 = vmatpush.msra.mxu0 %v2655
    %7262 = vmatpush.msra.mxu0 %v2652
    %7263 = vmatpush.msra.mxu0 %v2649
    %7264 = vmatpush.msra.mxu0 %v2646
    %7265 = vmatpush.msra.mxu0 %v2643
    %7266 = vmatpush.msra.mxu0 %v2640
    %7267 = vmatpush.msra.mxu0 %v2637
    %7268 = vmatpush.msra.mxu0 %v2634
    %7269 = vmatpush.msra.mxu0 %v2631
    %7270 = vmatpush.msra.mxu0 %v2628
    %7271 = vmatpush.msra.mxu0 %v2625
    %7272 = vmatpush.msra.mxu0 %v2622
    %7273 = vmatpush.msra.mxu0 %v2619
    %7274 = vmatpush.msra.mxu0 %v2616
    %7275 = vmatpush.msra.mxu0 %v2613
    %7276 = vmatpush.msra.mxu0 %v2610
    %7277 = vmatmul.f32.gmra.mxu0 %v7200
    %v7278 = vpop.f32.mrf.mxu0
    %v7279 = vadd.f32 0.0, %v7278
    %7280 = vdwg.mxu0
    %v7282 = vrot.slane %v7279, 2
    %v7284 = vsel %vm3013, %v7259, %v7282
    %v7285 = vmul.f32 %v7284, %v560
    %v7286 = vmul.f32 %v7284, %v561
    %7288 = vrot.lane.b32.xlu0 %v7286, 32
    %v7289 = vpop.permute.xlu0 %7288
    %v7291 = vsel %vm562, %v7285, %v7289
    %v7293 = vsel %vm267, %v7291, 0
    %7295 = vmatpush.msra.mxu0 0.0
    %7296 = vmatpush.msra.mxu0 0.0
    %7297 = vmatpush.msra.mxu0 0.0
    %7298 = vmatpush.msra.mxu0 0.0
    %7299 = vmatpush.msra.mxu0 0.0
    %7300 = vmatpush.msra.mxu0 0.0
    %7301 = vmatpush.msra.mxu0 0.0
    %7302 = vmatpush.msra.mxu0 0.0
    %7303 = vmatpush.msra.mxu0 %v108
    %7304 = vmatpush.msra.mxu0 %v107
    %7305 = vmatpush.msra.mxu0 %v106
    %7306 = vmatpush.msra.mxu0 %v105
    %7307 = vmatpush.msra.mxu0 %v104
    %7308 = vmatpush.msra.mxu0 %v103
    %7309 = vmatpush.msra.mxu0 %v102
    %7310 = vmatpush.msra.mxu0 %v101
    %7311 = vmatmul.f32.gmra.mxu0 %v7293
    %v7312 = vpop.f32.mrf.mxu0
    %v7313 = vadd.f32 %v117, %v7312
    %7314 = vdwg.mxu0
    %v7315 = vmul.f32 %v2783, %v560
    %v7316 = vmul.f32 %v2783, %v561
    %7318 = vrot.lane.b32.xlu0 %v7316, 32
    %v7319 = vpop.permute.xlu0 %7318
    %v7321 = vsel %vm562, %v7315, %v7319
    %v7323 = vsel %vm267, %v7321, 0
    %7325 = vmatpush.msra.mxu0 0.0
    %7326 = vmatpush.msra.mxu0 0.0
    %7327 = vmatpush.msra.mxu0 0.0
    %7328 = vmatpush.msra.mxu0 0.0
    %7329 = vmatpush.msra.mxu0 0.0
    %7330 = vmatpush.msra.mxu0 0.0
    %7331 = vmatpush.msra.mxu0 0.0
    %7332 = vmatpush.msra.mxu0 0.0
    %7333 = vmatpush.msra.mxu0 %v116
    %7334 = vmatpush.msra.mxu0 %v115
    %7335 = vmatpush.msra.mxu0 %v114
    %7336 = vmatpush.msra.mxu0 %v113
    %7337 = vmatpush.msra.mxu0 %v112
    %7338 = vmatpush.msra.mxu0 %v111
    %7339 = vmatpush.msra.mxu0 %v110
    %7340 = vmatpush.msra.mxu0 %v109
    %7341 = vmatmul.f32.gmra.mxu0 %v7323
    %v7342 = vpop.f32.mrf.mxu0
    %v7343 = vadd.f32 %v118, %v7342
    %7344 = vdwg.mxu0
    %v7345 = vadd.f32 %v7313, %v7343
    %v7346 = vmul.f32 %v7345, 0.5
    %v7347 = vtanh.pop %v7346
    %v7348 = vadd.f32 %v7347, 1.0
    %v7349 = vmul.f32 %v7348, 0.5
    %7351 = vrot.lane.b32.xlu0 %v7343, 64
    %v7352 = vpop.permute.xlu0 %7351
    %v7354 = vmul.f32 %v7349, %v7352
    %7356 = vrot.lane.b32.xlu0 %v7354, 64
    %v7357 = vpop.permute.xlu0 %7356
    %v7359 = vadd.f32 %v7313, %v7357
    %v7360 = vtanh.pop %v7359
    %v7361 = vsub.f32 1.0, %v7349
    %7363 = vrot.lane.b32.xlu0 %v7360, 96
    %v7364 = vpop.permute.xlu0 %7363
    %v7366 = vmul.f32 %v7361, %v7364
    %7368 = vrot.lane.b32.xlu0 %v2783, 32
    %v7369 = vpop.permute.xlu0 %7368
    %v7371 = vmul.f32 %v7349, %v7369
    %v7372 = vadd.f32 %v7366, %v7371
    %7374 = vrot.lane.b32.xlu0 %v7372, 96
    %v7375 = vpop.permute.xlu0 %7374
    %v7377 = vsel %vm562, %v7375, 0.0
    %7378 = vadd.xlane.f32.xlu0 %v7377
    %v7379 = vpop.xlane.xlu0 %7378
    %v7380 = vmul.f32 %v7379, %v617
    %v7381 = vmul.f32 %v7372, %v7372
    %7383 = vrot.lane.b32.xlu0 %v7381, 96
    %v7384 = vpop.permute.xlu0 %7383
    %v7386 = vsel %vm562, %v7384, 0.0
    %7387 = vadd.xlane.f32.xlu0 %v7386
    %v7388 = vpop.xlane.xlu0 %7387
    %v7389 = vmul.f32 %v7388, %v617
    %v7390 = vmul.f32 %v7380, %v7380
    %v7391 = vsub.f32 %v7389, %v7390
    %v7392 = vmax.f32 %v7391, 0.0
    %v7393 = vsub.f32 %v7372, %v7380
    %v7394 = vadd.f32 %v7392, 1e-05
    %v7395 = vrsqrt.pop %v7394
    %v7396 = vmul.f32 %v7395, %v7394
    %v7397 = vmul.f32 %v7396, %v7395
    %v7398 = vmul.f32 0.5, %v7397
    %v7399 = vsub.f32 1.5, %v7398
    %v7400 = vmul.f32 %v7395, %v7399
    %vm7401 = vweird.f32 %v7394
    %vm7402 = vweird.f32 %v7395
    %vm7403 = vmor %vm7401, %vm7402
    %v7404 = vsel %vm7403, %v7395, %v7400
    %v7405 = vmul.f32 %v7393, %v7404
    %7407 = vrot.lane.b32.xlu0 %v57, 32
    %v7408 = vpop.permute.xlu0 %7407
    %v7410 = vmul.f32 %v7405, %v7408
    %7412 = vrot.lane.b32.xlu0 %v58, 32
    %v7413 = vpop.permute.xlu0 %7412
    %v7415 = vadd.f32 %v7410, %v7413
    %v7416 = vmul.f32 %v7415, %v560
    %v7417 = vmul.f32 %v7415, %v561
    %7419 = vrot.lane.b32.xlu0 %v7416, 96
    %v7420 = vpop.permute.xlu0 %7419
    %v7422 = vsel %vm562, %v7420, %v7417
    %v7424 = vsel %vm267, %v7422, 0
    %7426 = vmatpush.msra.mxu0 0.0
    %7427 = vmatpush.msra.mxu0 0.0
    %7428 = vmatpush.msra.mxu0 0.0
    %7429 = vmatpush.msra.mxu0 0.0
    %7430 = vmatpush.msra.mxu0 0.0
    %7431 = vmatpush.msra.mxu0 0.0
    %7432 = vmatpush.msra.mxu0 0.0
    %7433 = vmatpush.msra.mxu0 0.0
    %7434 = vmatpush.msra.mxu0 %v126
    %7435 = vmatpush.msra.mxu0 %v125
    %7436 = vmatpush.msra.mxu0 %v124
    %7437 = vmatpush.msra.mxu0 %v123
    %7438 = vmatpush.msra.mxu0 %v122
    %7439 = vmatpush.msra.mxu0 %v121
    %7440 = vmatpush.msra.mxu0 %v120
    %7441 = vmatpush.msra.mxu0 %v119
    %7442 = vmatmul.f32.gmra.mxu0 %v7424
    %v7443 = vpop.f32.mrf.mxu0
    %v7444 = vadd.f32 %v127, %v7443
    %7445 = vdwg.mxu0
    %v7446 = vmax.f32 %v7444, 0.0
    %v7447 = vmul.f32 %v7446, %v560
    %v7448 = vmul.f32 %v7446, %v561
    %7449 = vmatpush.msra.mxu0 %v74
    %7450 = vmatpush.msra.mxu0 %v73
    %7451 = vmatpush.msra.mxu0 %v72
    %7452 = vmatpush.msra.mxu0 %v71
    %7453 = vmatpush.msra.mxu0 %v70
    %7454 = vmatpush.msra.mxu0 %v69
    %7455 = vmatpush.msra.mxu0 %v68
    %7456 = vmatpush.msra.mxu0 %v67
    %7457 = vmatpush.msra.mxu0 %v66
    %7458 = vmatpush.msra.mxu0 %v65
    %7459 = vmatpush.msra.mxu0 %v64
    %7460 = vmatpush.msra.mxu0 %v63
    %7461 = vmatpush.msra.mxu0 %v62
    %7462 = vmatpush.msra.mxu0 %v61
    %7463 = vmatpush.msra.mxu0 %v60
    %7464 = vmatpush.msra.mxu0 %v59
    %7465 = vmatmul.f32.gmra.mxu0 %v7447
    %v7466 = vpop.f32.mrf.mxu0
    %v7467 = vadd.f32 %v91, %v7466
    %7468 = vdwg.mxu0
    %7469 = vmatpush.msra.mxu0 %v90
    %7470 = vmatpush.msra.mxu0 %v89
    %7471 = vmatpush.msra.mxu0 %v88
    %7472 = vmatpush.msra.mxu0 %v87
    %7473 = vmatpush.msra.mxu0 %v86
    %7474 = vmatpush.msra.mxu0 %v85
    %7475 = vmatpush.msra.mxu0 %v84
    %7476 = vmatpush.msra.mxu0 %v83
    %7477 = vmatpush.msra.mxu0 %v82
    %7478 = vmatpush.msra.mxu0 %v81
    %7479 = vmatpush.msra.mxu0 %v80
    %7480 = vmatpush.msra.mxu0 %v79
    %7481 = vmatpush.msra.mxu0 %v78
    %7482 = vmatpush.msra.mxu0 %v77
    %7483 = vmatpush.msra.mxu0 %v76
    %7484 = vmatpush.msra.mxu0 %v75
    %7485 = vmatmul.f32.gmra.mxu0 %v7448
    %v7486 = vpop.f32.mrf.mxu0
    %v7487 = vadd.f32 %v7467, %v7486
    %7488 = vdwg.mxu0
    %7490 = vrot.lane.b32.xlu0 %v7487, 32
    %v7491 = vpop.permute.xlu0 %7490
    %v7493 = vadd.f32 %v7372, %v7491
    %7495 = vrot.lane.b32.xlu0 %v7493, 96
    %v7496 = vpop.permute.xlu0 %7495
  $region18: #{slot_attention_forward.1} parent=0 // loop_footer
    %s2782 = sadd.s32 1, %s2778
  $region19: #{slot_attention_forward.1} parent=0 // loop_footer_branch
    %2777 = sbr.rel target = $region15
  $region20: #{slot_attention_forward.1} parent=0 // loop_exit
    _
  %v7498 = vsel %vm562, %v2783, 0.0
  %7499 = vadd.xlane.f32.xlu0 %v7498
  %v7500 = vpop.xlane.xlu0 %7499
  %v7501 = vmul.f32 %v7500, %v617
  %v7502 = vmul.f32 %v2783, %v2783
  %v7503 = vsel %vm562, %v7502, 0.0
  %7504 = vadd.xlane.f32.xlu0 %v7503
  %v7505 = vpop.xlane.xlu0 %7504
  %v7506 = vmul.f32 %v7505, %v617
  %v7507 = vmul.f32 %v7501, %v7501
  %v7508 = vsub.f32 %v7506, %v7507
  %v7509 = vmax.f32 %v7508, 0.0
  %v7510 = vsub.f32 %v2783, %v7501
  %v7511 = vadd.f32 %v7509, 1e-05
  %v7512 = vrsqrt.pop %v7511
  %v7513 = vmul.f32 %v7512, %v7511
  %v7514 = vmul.f32 %v7513, %v7512
  %v7515 = vmul.f32 0.5, %v7514
  %v7516 = vsub.f32 1.5, %v7515
  %v7517 = vmul.f32 %v7512, %v7516
  %vm7518 = vweird.f32 %v7511
  %vm7519 = vweird.f32 %v7512
  %vm7520 = vmor %vm7518, %vm7519
  %v7521 = vsel %vm7520, %v7512, %v7517
  %v7522 = vmul.f32 %v7510, %v7521
  %v7523 = vmul.f32 %v7522, %v47
  %v7524 = vadd.f32 %v7523, %v48
  %v7525 = vmul.f32 %v7524, %v560
  %v7526 = vmul.f32 %v7524, %v561
  %7528 = vrot.lane.b32.xlu0 %v7526, 32
  %v7529 = vpop.permute.xlu0 %7528
  %v7531 = vsel %vm562, %v7525, %v7529
  %v7533 = vsel %vm267, %v7531, 0
  %7535 = vmatpush.msra.mxu0 0.0
  %7536 = vmatpush.msra.mxu0 0.0
  %7537 = vmatpush.msra.mxu0 0.0
  %7538 = vmatpush.msra.mxu0 0.0
  %7539 = vmatpush.msra.mxu0 0.0
  %7540 = vmatpush.msra.mxu0 0.0
  %7541 = vmatpush.msra.mxu0 0.0
  %7542 = vmatpush.msra.mxu0 0.0
  %7543 = vmatpush.msra.mxu0 %v56
  %7544 = vmatpush.msra.mxu0 %v55
  %7545 = vmatpush.msra.mxu0 %v54
  %7546 = vmatpush.msra.mxu0 %v53
  %7547 = vmatpush.msra.mxu0 %v52
  %7548 = vmatpush.msra.mxu0 %v51
  %7549 = vmatpush.msra.mxu0 %v50
  %7550 = vmatpush.msra.mxu0 %v49
  %7551 = vmatmul.f32.gmra.mxu0 %v7533
  %v7552 = vpop.f32.mrf.mxu0
  %v7553 = vadd.f32 0.0, %v7552
  %7554 = vdwg.mxu0
  %v7556 = vsel %vm207, %v2784, 0
  %v7559 = vsel %vm211, %v16, 0
  %7561 = vmatpush.msra.mxu0 0.0
  %7562 = vmatpush.msra.mxu0 0.0
  %7563 = vmatpush.msra.mxu0 0.0
  %7564 = vmatpush.msra.mxu0 0.0
  %7565 = vmatpush.msra.mxu0 0.0
  %7566 = vmatpush.msra.mxu0 0.0
  %7567 = vmatpush.msra.mxu0 0.0
  %7568 = vmatpush.msra.mxu0 0.0
  %7569 = vmatpush.msra.mxu0 0.0
  %7570 = vmatpush.msra.mxu0 0.0
  %7571 = vmatpush.msra.mxu0 0.0
  %7572 = vmatpush.msra.mxu0 0.0
  %7573 = vmatpush.msra.mxu0 0.0
  %7574 = vmatpush.msra.mxu0 0.0
  %7575 = vmatpush.msra.mxu0 0.0
  %7576 = vmatpush.msra.mxu0 %v7559
  %7577 = vmatmul.f32.gmra.mxu0 %v7556
  %v7578 = vpop.f32.mrf.mxu0
  %v7579 = vadd.f32 0.0, %v7578
  %7580 = vdwg.mxu0
  %vm7581 = vcmask 48128
  %v7583 = vsel %vm7581, %v510, 0
  %v7586 = vsel %vm7581, %v511, 0
  %v7589 = vsel %vm7581, %v512, 0
  %v7592 = vsel %vm7581, %v513, 0
  %v7595 = vsel %vm7581, %v514, 0
  %v7598 = vsel %vm7581, %v515, 0
  %v7601 = vsel %vm7581, %v516, 0
  %v7604 = vsel %vm7581, %v517, 0
  %v7607 = vsel %vm7581, %v518, 0
  %v7610 = vsel %vm7581, %v519, 0
  %v7613 = vsel %vm7581, %v520, 0
  %v7616 = vsel %vm7581, %v521, 0
  %v7619 = vsel %vm7581, %v522, 0
  %v7622 = vsel %vm7581, %v523, 0
  %v7625 = vsel %vm7581, %v524, 0
  %v7628 = vsel %vm7581, %v525, 0
  %v7631 = vsel %vm7581, %v526, 0
  %v7634 = vsel %vm7581, %v527, 0
  %v7637 = vsel %vm7581, %v528, 0
  %v7640 = vsel %vm7581, %v529, 0
  %v7643 = vsel %vm7581, %v530, 0
  %v7646 = vsel %vm7581, %v531, 0
  %v7649 = vsel %vm7581, %v532, 0
  %v7652 = vsel %vm7581, %v533, 0
  %v7655 = vsel %vm7581, %v534, 0
  %v7658 = vsel %vm7581, %v535, 0
  %v7661 = vsel %vm7581, %v536, 0
  %v7664 = vsel %vm7581, %v537, 0
  %v7667 = vsel %vm7581, %v538, 0
  %v7670 = vsel %vm7581, %v539, 0
  %v7673 = vsel %vm7581, %v540, 0
  %v7676 = vsel %vm7581, %v541, 0
  %v7679 = vsel %vm7581, %v542, 0
  %v7682 = vsel %vm7581, %v543, 0
  %v7685 = vsel %vm7581, %v544, 0
  %v7688 = vsel %vm7581, %v545, 0
  %v7691 = vsel %vm7581, %v546, 0
  %v7694 = vsel %vm7581, %v547, 0
  %v7697 = vsel %vm7581, %v548, 0
  %v7700 = vsel %vm7581, %v549, 0
  %v7703 = vsel %vm7581, %v550, 0
  %v7706 = vsel %vm7581, %v551, 0
  %v7709 = vsel %vm7581, %v552, 0
  %v7712 = vsel %vm7581, %v553, 0
  %v7715 = vsel %vm7581, %v554, 0
  %v7718 = vsel %vm7581, %v555, 0
  %v7721 = vsel %vm7581, %v556, 0
  %v7724 = vsel %vm7581, %v557, 0
  %vm7726 = vcmask 1045504
  %v7728 = vsel %vm7726, %v7579, 0
  %7730 = vmatpush.msra.mxu0 0.0
  %7731 = vmatpush.msra.mxu0 0.0
  %7732 = vmatpush.msra.mxu0 0.0
  %7733 = vmatpush.msra.mxu0 0.0
  %7734 = vmatpush.msra.mxu0 0.0
  %7735 = vmatpush.msra.mxu0 0.0
  %7736 = vmatpush.msra.mxu0 0.0
  %7737 = vmatpush.msra.mxu0 0.0
  %7738 = vmatpush.msra.mxu0 0.0
  %7739 = vmatpush.msra.mxu0 0.0
  %7740 = vmatpush.msra.mxu0 0.0
  %7741 = vmatpush.msra.mxu0 0.0
  %7742 = vmatpush.msra.mxu0 0.0
  %7743 = vmatpush.msra.mxu0 0.0
  %7744 = vmatpush.msra.mxu0 0.0
  %7745 = vmatpush.msra.mxu0 %v7728
  %7746 = vmatmul.f32.gmra.mxu0 %v7583
  %v7747 = vpop.f32.mrf.mxu0
  %v7748 = vadd.f32 0.0, %v7747
  %7749 = vmatmul.f32.gmra.mxu0 %v7586
  %v7750 = vpop.f32.mrf.mxu0
  %v7751 = vadd.f32 0.0, %v7750
  %7752 = vmatmul.f32.gmra.mxu0 %v7589
  %v7753 = vpop.f32.mrf.mxu0
  %v7754 = vadd.f32 0.0, %v7753
  %7755 = vmatmul.f32.gmra.mxu0 %v7592
  %v7756 = vpop.f32.mrf.mxu0
  %v7757 = vadd.f32 0.0, %v7756
  %7758 = vmatmul.f32.gmra.mxu0 %v7595
  %v7759 = vpop.f32.mrf.mxu0
  %v7760 = vadd.f32 0.0, %v7759
  %7761 = vmatmul.f32.gmra.mxu0 %v7598
  %v7762 = vpop.f32.mrf.mxu0
  %v7763 = vadd.f32 0.0, %v7762
  %7764 = vmatmul.f32.gmra.mxu0 %v7601
  %v7765 = vpop.f32.mrf.mxu0
  %v7766 = vadd.f32 0.0, %v7765
  %7767 = vmatmul.f32.gmra.mxu0 %v7604
  %v7768 = vpop.f32.mrf.mxu0
  %v7769 = vadd.f32 0.0, %v7768
  %7770 = vmatmul.f32.gmra.mxu0 %v7607
  %v7771 = vpop.f32.mrf.mxu0
  %v7772 = vadd.f32 0.0, %v7771
  %7773 = vmatmul.f32.gmra.mxu0 %v7610
  %v7774 = vpop.f32.mrf.mxu0
  %v7775 = vadd.f32 0.0, %v7774
  %7776 = vmatmul.f32.gmra.mxu0 %v7613
  %v7777 = vpop.f32.mrf.mxu0
  %v7778 = vadd.f32 0.0, %v7777
  %7779 = vmatmul.f32.gmra.mxu0 %v7616
  %v7780 = vpop.f32.mrf.mxu0
  %v7781 = vadd.f32 0.0, %v7780
  %7782 = vmatmul.f32.gmra.mxu0 %v7619
  %v7783 = vpop.f32.mrf.mxu0
  %v7784 = vadd.f32 0.0, %v7783
  %7785 = vmatmul.f32.gmra.mxu0 %v7622
  %v7786 = vpop.f32.mrf.mxu0
  %v7787 = vadd.f32 0.0, %v7786
  %7788 = vmatmul.f32.gmra.mxu0 %v7625
  %v7789 = vpop.f32.mrf.mxu0
  %v7790 = vadd.f32 0.0, %v7789
  %7791 = vmatmul.f32.gmra.mxu0 %v7628
  %v7792 = vpop.f32.mrf.mxu0
  %v7793 = vadd.f32 0.0, %v7792
  %7794 = vmatmul.f32.gmra.mxu0 %v7631
  %v7795 = vpop.f32.mrf.mxu0
  %v7796 = vadd.f32 0.0, %v7795
  %7797 = vmatmul.f32.gmra.mxu0 %v7634
  %v7798 = vpop.f32.mrf.mxu0
  %v7799 = vadd.f32 0.0, %v7798
  %7800 = vmatmul.f32.gmra.mxu0 %v7637
  %v7801 = vpop.f32.mrf.mxu0
  %v7802 = vadd.f32 0.0, %v7801
  %7803 = vmatmul.f32.gmra.mxu0 %v7640
  %v7804 = vpop.f32.mrf.mxu0
  %v7805 = vadd.f32 0.0, %v7804
  %7806 = vmatmul.f32.gmra.mxu0 %v7643
  %v7807 = vpop.f32.mrf.mxu0
  %v7808 = vadd.f32 0.0, %v7807
  %7809 = vmatmul.f32.gmra.mxu0 %v7646
  %v7810 = vpop.f32.mrf.mxu0
  %v7811 = vadd.f32 0.0, %v7810
  %7812 = vmatmul.f32.gmra.mxu0 %v7649
  %v7813 = vpop.f32.mrf.mxu0
  %v7814 = vadd.f32 0.0, %v7813
  %7815 = vmatmul.f32.gmra.mxu0 %v7652
  %v7816 = vpop.f32.mrf.mxu0
  %v7817 = vadd.f32 0.0, %v7816
  %7818 = vmatmul.f32.gmra.mxu0 %v7655
  %v7819 = vpop.f32.mrf.mxu0
  %v7820 = vadd.f32 0.0, %v7819
  %7821 = vmatmul.f32.gmra.mxu0 %v7658
  %v7822 = vpop.f32.mrf.mxu0
  %v7823 = vadd.f32 0.0, %v7822
  %7824 = vmatmul.f32.gmra.mxu0 %v7661
  %v7825 = vpop.f32.mrf.mxu0
  %v7826 = vadd.f32 0.0, %v7825
  %7827 = vmatmul.f32.gmra.mxu0 %v7664
  %v7828 = vpop.f32.mrf.mxu0
  %v7829 = vadd.f32 0.0, %v7828
  %7830 = vmatmul.f32.gmra.mxu0 %v7667
  %v7831 = vpop.f32.mrf.mxu0
  %v7832 = vadd.f32 0.0, %v7831
  %7833 = vmatmul.f32.gmra.mxu0 %v7670
  %v7834 = vpop.f32.mrf.mxu0
  %v7835 = vadd.f32 0.0, %v7834
  %7836 = vmatmul.f32.gmra.mxu0 %v7673
  %v7837 = vpop.f32.mrf.mxu0
  %v7838 = vadd.f32 0.0, %v7837
  %7839 = vmatmul.f32.gmra.mxu0 %v7676
  %v7840 = vpop.f32.mrf.mxu0
  %v7841 = vadd.f32 0.0, %v7840
  %7842 = vmatmul.f32.gmra.mxu0 %v7679
  %v7843 = vpop.f32.mrf.mxu0
  %v7844 = vadd.f32 0.0, %v7843
  %7845 = vmatmul.f32.gmra.mxu0 %v7682
  %v7846 = vpop.f32.mrf.mxu0
  %v7847 = vadd.f32 0.0, %v7846
  %7848 = vmatmul.f32.gmra.mxu0 %v7685
  %v7849 = vpop.f32.mrf.mxu0
  %v7850 = vadd.f32 0.0, %v7849
  %7851 = vmatmul.f32.gmra.mxu0 %v7688
  %v7852 = vpop.f32.mrf.mxu0
  %v7853 = vadd.f32 0.0, %v7852
  %7854 = vmatmul.f32.gmra.mxu0 %v7691
  %v7855 = vpop.f32.mrf.mxu0
  %v7856 = vadd.f32 0.0, %v7855
  %7857 = vmatmul.f32.gmra.mxu0 %v7694
  %v7858 = vpop.f32.mrf.mxu0
  %v7859 = vadd.f32 0.0, %v7858
  %7860 = vmatmul.f32.gmra.mxu0 %v7697
  %v7861 = vpop.f32.mrf.mxu0
  %v7862 = vadd.f32 0.0, %v7861
  %7863 = vmatmul.f32.gmra.mxu0 %v7700
  %v7864 = vpop.f32.mrf.mxu0
  %v7865 = vadd.f32 0.0, %v7864
  %7866 = vmatmul.f32.gmra.mxu0 %v7703
  %v7867 = vpop.f32.mrf.mxu0
  %v7868 = vadd.f32 0.0, %v7867
  %7869 = vmatmul.f32.gmra.mxu0 %v7706
  %v7870 = vpop.f32.mrf.mxu0
  %v7871 = vadd.f32 0.0, %v7870
  %7872 = vmatmul.f32.gmra.mxu0 %v7709
  %v7873 = vpop.f32.mrf.mxu0
  %v7874 = vadd.f32 0.0, %v7873
  %7875 = vmatmul.f32.gmra.mxu0 %v7712
  %v7876 = vpop.f32.mrf.mxu0
  %v7877 = vadd.f32 0.0, %v7876
  %7878 = vmatmul.f32.gmra.mxu0 %v7715
  %v7879 = vpop.f32.mrf.mxu0
  %v7880 = vadd.f32 0.0, %v7879
  %7881 = vmatmul.f32.gmra.mxu0 %v7718
  %v7882 = vpop.f32.mrf.mxu0
  %v7883 = vadd.f32 0.0, %v7882
  %7884 = vmatmul.f32.gmra.mxu0 %v7721
  %v7885 = vpop.f32.mrf.mxu0
  %v7886 = vadd.f32 0.0, %v7885
  %7887 = vmatmul.f32.gmra.mxu0 %v7724
  %v7888 = vpop.f32.mrf.mxu0
  %v7889 = vadd.f32 0.0, %v7888
  %7890 = vmatmul.f32.gmra.mxu0 %v7583
  %v7891 = vpop.f32.mrf.mxu0
  %v7892 = vadd.f32 0.0, %v7891
  %7893 = vmatmul.f32.gmra.mxu0 %v7586
  %v7894 = vpop.f32.mrf.mxu0
  %v7895 = vadd.f32 0.0, %v7894
  %7896 = vmatmul.f32.gmra.mxu0 %v7589
  %v7897 = vpop.f32.mrf.mxu0
  %v7898 = vadd.f32 0.0, %v7897
  %7899 = vmatmul.f32.gmra.mxu0 %v7592
  %v7900 = vpop.f32.mrf.mxu0
  %v7901 = vadd.f32 0.0, %v7900
  %7902 = vmatmul.f32.gmra.mxu0 %v7595
  %v7903 = vpop.f32.mrf.mxu0
  %v7904 = vadd.f32 0.0, %v7903
  %7905 = vmatmul.f32.gmra.mxu0 %v7598
  %v7906 = vpop.f32.mrf.mxu0
  %v7907 = vadd.f32 0.0, %v7906
  %7908 = vmatmul.f32.gmra.mxu0 %v7601
  %v7909 = vpop.f32.mrf.mxu0
  %v7910 = vadd.f32 0.0, %v7909
  %7911 = vmatmul.f32.gmra.mxu0 %v7604
  %v7912 = vpop.f32.mrf.mxu0
  %v7913 = vadd.f32 0.0, %v7912
  %7914 = vmatmul.f32.gmra.mxu0 %v7607
  %v7915 = vpop.f32.mrf.mxu0
  %v7916 = vadd.f32 0.0, %v7915
  %7917 = vmatmul.f32.gmra.mxu0 %v7610
  %v7918 = vpop.f32.mrf.mxu0
  %v7919 = vadd.f32 0.0, %v7918
  %7920 = vmatmul.f32.gmra.mxu0 %v7613
  %v7921 = vpop.f32.mrf.mxu0
  %v7922 = vadd.f32 0.0, %v7921
  %7923 = vmatmul.f32.gmra.mxu0 %v7616
  %v7924 = vpop.f32.mrf.mxu0
  %v7925 = vadd.f32 0.0, %v7924
  %7926 = vmatmul.f32.gmra.mxu0 %v7619
  %v7927 = vpop.f32.mrf.mxu0
  %v7928 = vadd.f32 0.0, %v7927
  %7929 = vmatmul.f32.gmra.mxu0 %v7622
  %v7930 = vpop.f32.mrf.mxu0
  %v7931 = vadd.f32 0.0, %v7930
  %7932 = vmatmul.f32.gmra.mxu0 %v7625
  %v7933 = vpop.f32.mrf.mxu0
  %v7934 = vadd.f32 0.0, %v7933
  %7935 = vmatmul.f32.gmra.mxu0 %v7628
  %v7936 = vpop.f32.mrf.mxu0
  %v7937 = vadd.f32 0.0, %v7936
  %7938 = vmatmul.f32.gmra.mxu0 %v7631
  %v7939 = vpop.f32.mrf.mxu0
  %v7940 = vadd.f32 0.0, %v7939
  %7941 = vmatmul.f32.gmra.mxu0 %v7634
  %v7942 = vpop.f32.mrf.mxu0
  %v7943 = vadd.f32 0.0, %v7942
  %7944 = vmatmul.f32.gmra.mxu0 %v7637
  %v7945 = vpop.f32.mrf.mxu0
  %v7946 = vadd.f32 0.0, %v7945
  %7947 = vmatmul.f32.gmra.mxu0 %v7640
  %v7948 = vpop.f32.mrf.mxu0
  %v7949 = vadd.f32 0.0, %v7948
  %7950 = vmatmul.f32.gmra.mxu0 %v7643
  %v7951 = vpop.f32.mrf.mxu0
  %v7952 = vadd.f32 0.0, %v7951
  %7953 = vmatmul.f32.gmra.mxu0 %v7646
  %v7954 = vpop.f32.mrf.mxu0
  %v7955 = vadd.f32 0.0, %v7954
  %7956 = vmatmul.f32.gmra.mxu0 %v7649
  %v7957 = vpop.f32.mrf.mxu0
  %v7958 = vadd.f32 0.0, %v7957
  %7959 = vmatmul.f32.gmra.mxu0 %v7652
  %v7960 = vpop.f32.mrf.mxu0
  %v7961 = vadd.f32 0.0, %v7960
  %7962 = vmatmul.f32.gmra.mxu0 %v7655
  %v7963 = vpop.f32.mrf.mxu0
  %v7964 = vadd.f32 0.0, %v7963
  %7965 = vmatmul.f32.gmra.mxu0 %v7658
  %v7966 = vpop.f32.mrf.mxu0
  %v7967 = vadd.f32 0.0, %v7966
  %7968 = vmatmul.f32.gmra.mxu0 %v7661
  %v7969 = vpop.f32.mrf.mxu0
  %v7970 = vadd.f32 0.0, %v7969
  %7971 = vmatmul.f32.gmra.mxu0 %v7664
  %v7972 = vpop.f32.mrf.mxu0
  %v7973 = vadd.f32 0.0, %v7972
  %7974 = vmatmul.f32.gmra.mxu0 %v7667
  %v7975 = vpop.f32.mrf.mxu0
  %v7976 = vadd.f32 0.0, %v7975
  %7977 = vmatmul.f32.gmra.mxu0 %v7670
  %v7978 = vpop.f32.mrf.mxu0
  %v7979 = vadd.f32 0.0, %v7978
  %7980 = vmatmul.f32.gmra.mxu0 %v7673
  %v7981 = vpop.f32.mrf.mxu0
  %v7982 = vadd.f32 0.0, %v7981
  %7983 = vmatmul.f32.gmra.mxu0 %v7676
  %v7984 = vpop.f32.mrf.mxu0
  %v7985 = vadd.f32 0.0, %v7984
  %7986 = vmatmul.f32.gmra.mxu0 %v7679
  %v7987 = vpop.f32.mrf.mxu0
  %v7988 = vadd.f32 0.0, %v7987
  %7989 = vmatmul.f32.gmra.mxu0 %v7682
  %v7990 = vpop.f32.mrf.mxu0
  %v7991 = vadd.f32 0.0, %v7990
  %7992 = vmatmul.f32.gmra.mxu0 %v7685
  %v7993 = vpop.f32.mrf.mxu0
  %v7994 = vadd.f32 0.0, %v7993
  %7995 = vmatmul.f32.gmra.mxu0 %v7688
  %v7996 = vpop.f32.mrf.mxu0
  %v7997 = vadd.f32 0.0, %v7996
  %7998 = vmatmul.f32.gmra.mxu0 %v7691
  %v7999 = vpop.f32.mrf.mxu0
  %v8000 = vadd.f32 0.0, %v7999
  %8001 = vmatmul.f32.gmra.mxu0 %v7694
  %v8002 = vpop.f32.mrf.mxu0
  %v8003 = vadd.f32 0.0, %v8002
  %8004 = vmatmul.f32.gmra.mxu0 %v7697
  %v8005 = vpop.f32.mrf.mxu0
  %v8006 = vadd.f32 0.0, %v8005
  %8007 = vmatmul.f32.gmra.mxu0 %v7700
  %v8008 = vpop.f32.mrf.mxu0
  %v8009 = vadd.f32 0.0, %v8008
  %8010 = vmatmul.f32.gmra.mxu0 %v7703
  %v8011 = vpop.f32.mrf.mxu0
  %v8012 = vadd.f32 0.0, %v8011
  %8013 = vmatmul.f32.gmra.mxu0 %v7706
  %v8014 = vpop.f32.mrf.mxu0
  %v8015 = vadd.f32 0.0, %v8014
  %8016 = vmatmul.f32.gmra.mxu0 %v7709
  %v8017 = vpop.f32.mrf.mxu0
  %v8018 = vadd.f32 0.0, %v8017
  %8019 = vmatmul.f32.gmra.mxu0 %v7712
  %v8020 = vpop.f32.mrf.mxu0
  %v8021 = vadd.f32 0.0, %v8020
  %8022 = vmatmul.f32.gmra.mxu0 %v7715
  %v8023 = vpop.f32.mrf.mxu0
  %v8024 = vadd.f32 0.0, %v8023
  %8025 = vmatmul.f32.gmra.mxu0 %v7718
  %v8026 = vpop.f32.mrf.mxu0
  %v8027 = vadd.f32 0.0, %v8026
  %8028 = vmatmul.f32.gmra.mxu0 %v7721
  %v8029 = vpop.f32.mrf.mxu0
  %v8030 = vadd.f32 0.0, %v8029
  %8031 = vmatmul.f32.gmra.mxu0 %v7724
  %v8032 = vpop.f32.mrf.mxu0
  %v8033 = vadd.f32 0.0, %v8032
  %8034 = vdwg.mxu0
  %v8035 = vsub.f32 %v2657, %v7748
  %v8036 = vsub.f32 %v2658, %v7751
  %v8037 = vsub.f32 %v2659, %v7754
  %v8038 = vsub.f32 %v2660, %v7757
  %v8039 = vsub.f32 %v2661, %v7760
  %v8040 = vsub.f32 %v2662, %v7763
  %v8041 = vsub.f32 %v2663, %v7766
  %v8042 = vsub.f32 %v2664, %v7769
  %v8043 = vsub.f32 %v2657, %v7772
  %v8044 = vsub.f32 %v2658, %v7775
  %v8045 = vsub.f32 %v2659, %v7778
  %v8046 = vsub.f32 %v2660, %v7781
  %v8047 = vsub.f32 %v2661, %v7784
  %v8048 = vsub.f32 %v2662, %v7787
  %v8049 = vsub.f32 %v2663, %v7790
  %v8050 = vsub.f32 %v2664, %v7793
  %v8051 = vsub.f32 %v2657, %v7796
  %v8052 = vsub.f32 %v2658, %v7799
  %v8053 = vsub.f32 %v2659, %v7802
  %v8054 = vsub.f32 %v2660, %v7805
  %v8055 = vsub.f32 %v2661, %v7808
  %v8056 = vsub.f32 %v2662, %v7811
  %v8057 = vsub.f32 %v2663, %v7814
  %v8058 = vsub.f32 %v2664, %v7817
  %v8059 = vsub.f32 %v2665, %v7820
  %v8060 = vsub.f32 %v2666, %v7823
  %v8061 = vsub.f32 %v2667, %v7826
  %v8062 = vsub.f32 %v2668, %v7829
  %v8063 = vsub.f32 %v2669, %v7832
  %v8064 = vsub.f32 %v2670, %v7835
  %v8065 = vsub.f32 %v2671, %v7838
  %v8066 = vsub.f32 %v2672, %v7841
  %v8067 = vsub.f32 %v2665, %v7844
  %v8068 = vsub.f32 %v2666, %v7847
  %v8069 = vsub.f32 %v2667, %v7850
  %v8070 = vsub.f32 %v2668, %v7853
  %v8071 = vsub.f32 %v2669, %v7856
  %v8072 = vsub.f32 %v2670, %v7859
  %v8073 = vsub.f32 %v2671, %v7862
  %v8074 = vsub.f32 %v2672, %v7865
  %v8075 = vsub.f32 %v2665, %v7868
  %v8076 = vsub.f32 %v2666, %v7871
  %v8077 = vsub.f32 %v2667, %v7874
  %v8078 = vsub.f32 %v2668, %v7877
  %v8079 = vsub.f32 %v2669, %v7880
  %v8080 = vsub.f32 %v2670, %v7883
  %v8081 = vsub.f32 %v2671, %v7886
  %v8082 = vsub.f32 %v2672, %v7889
  %v8083 = vsub.f32 %v2722, %v7892
  %v8084 = vsub.f32 %v2724, %v7895
  %v8085 = vsub.f32 %v2726, %v7898
  %v8086 = vsub.f32 %v2728, %v7901
  %v8087 = vsub.f32 %v2730, %v7904
  %v8088 = vsub.f32 %v2732, %v7907
  %v8089 = vsub.f32 %v2734, %v7910
  %v8090 = vsub.f32 %v2736, %v7913
  %v8091 = vsub.f32 %v2722, %v7916
  %v8092 = vsub.f32 %v2724, %v7919
  %v8093 = vsub.f32 %v2726, %v7922
  %v8094 = vsub.f32 %v2728, %v7925
  %v8095 = vsub.f32 %v2730, %v7928
  %v8096 = vsub.f32 %v2732, %v7931
  %v8097 = vsub.f32 %v2734, %v7934
  %v8098 = vsub.f32 %v2736, %v7937
  %v8099 = vsub.f32 %v2722, %v7940
  %v8100 = vsub.f32 %v2724, %v7943
  %v8101 = vsub.f32 %v2726, %v7946
  %v8102 = vsub.f32 %v2728, %v7949
  %v8103 = vsub.f32 %v2730, %v7952
  %v8104 = vsub.f32 %v2732, %v7955
  %v8105 = vsub.f32 %v2734, %v7958
  %v8106 = vsub.f32 %v2736, %v7961
  %v8107 = vsub.f32 %v2754, %v7964
  %v8108 = vsub.f32 %v2756, %v7967
  %v8109 = vsub.f32 %v2758, %v7970
  %v8110 = vsub.f32 %v2760, %v7973
  %v8111 = vsub.f32 %v2762, %v7976
  %v8112 = vsub.f32 %v2764, %v7979
  %v8113 = vsub.f32 %v2766, %v7982
  %v8114 = vsub.f32 %v2768, %v7985
  %v8115 = vsub.f32 %v2754, %v7988
  %v8116 = vsub.f32 %v2756, %v7991
  %v8117 = vsub.f32 %v2758, %v7994
  %v8118 = vsub.f32 %v2760, %v7997
  %v8119 = vsub.f32 %v2762, %v8000
  %v8120 = vsub.f32 %v2764, %v8003
  %v8121 = vsub.f32 %v2766, %v8006
  %v8122 = vsub.f32 %v2768, %v8009
  %v8123 = vsub.f32 %v2754, %v8012
  %v8124 = vsub.f32 %v2756, %v8015
  %v8125 = vsub.f32 %v2758, %v8018
  %v8126 = vsub.f32 %v2760, %v8021
  %v8127 = vsub.f32 %v2762, %v8024
  %v8128 = vsub.f32 %v2764, %v8027
  %v8129 = vsub.f32 %v2766, %v8030
  %v8130 = vsub.f32 %v2768, %v8033
  %v8131 = vsel %vm562, %v8035, 0.0
  %8132 = vadd.xlane.f32.xlu0 %v8131
  %v8133 = vpop.xlane.xlu0 %8132
  %v8134 = vsel %vm562, %v8036, 0.0
  %8135 = vadd.xlane.f32.xlu0 %v8134
  %v8136 = vpop.xlane.xlu0 %8135
  %v8137 = vsel %vm562, %v8037, 0.0
  %8138 = vadd.xlane.f32.xlu0 %v8137
  %v8139 = vpop.xlane.xlu0 %8138
  %v8140 = vsel %vm562, %v8038, 0.0
  %8141 = vadd.xlane.f32.xlu0 %v8140
  %v8142 = vpop.xlane.xlu0 %8141
  %v8143 = vsel %vm562, %v8039, 0.0
  %8144 = vadd.xlane.f32.xlu0 %v8143
  %v8145 = vpop.xlane.xlu0 %8144
  %v8146 = vsel %vm562, %v8040, 0.0
  %8147 = vadd.xlane.f32.xlu0 %v8146
  %v8148 = vpop.xlane.xlu0 %8147
  %v8149 = vsel %vm562, %v8041, 0.0
  %8150 = vadd.xlane.f32.xlu0 %v8149
  %v8151 = vpop.xlane.xlu0 %8150
  %v8152 = vsel %vm562, %v8042, 0.0
  %8153 = vadd.xlane.f32.xlu0 %v8152
  %v8154 = vpop.xlane.xlu0 %8153
  %v8155 = vsel %vm562, %v8043, 0.0
  %8156 = vadd.xlane.f32.xlu0 %v8155
  %v8157 = vpop.xlane.xlu0 %8156
  %v8158 = vsel %vm562, %v8044, 0.0
  %8159 = vadd.xlane.f32.xlu0 %v8158
  %v8160 = vpop.xlane.xlu0 %8159
  %v8161 = vsel %vm562, %v8045, 0.0
  %8162 = vadd.xlane.f32.xlu0 %v8161
  %v8163 = vpop.xlane.xlu0 %8162
  %v8164 = vsel %vm562, %v8046, 0.0
  %8165 = vadd.xlane.f32.xlu0 %v8164
  %v8166 = vpop.xlane.xlu0 %8165
  %v8167 = vsel %vm562, %v8047, 0.0
  %8168 = vadd.xlane.f32.xlu0 %v8167
  %v8169 = vpop.xlane.xlu0 %8168
  %v8170 = vsel %vm562, %v8048, 0.0
  %8171 = vadd.xlane.f32.xlu0 %v8170
  %v8172 = vpop.xlane.xlu0 %8171
  %v8173 = vsel %vm562, %v8049, 0.0
  %8174 = vadd.xlane.f32.xlu0 %v8173
  %v8175 = vpop.xlane.xlu0 %8174
  %v8176 = vsel %vm562, %v8050, 0.0
  %8177 = vadd.xlane.f32.xlu0 %v8176
  %v8178 = vpop.xlane.xlu0 %8177
  %v8179 = vsel %vm562, %v8051, 0.0
  %8180 = vadd.xlane.f32.xlu0 %v8179
  %v8181 = vpop.xlane.xlu0 %8180
  %v8182 = vsel %vm562, %v8052, 0.0
  %8183 = vadd.xlane.f32.xlu0 %v8182
  %v8184 = vpop.xlane.xlu0 %8183
  %v8185 = vsel %vm562, %v8053, 0.0
  %8186 = vadd.xlane.f32.xlu0 %v8185
  %v8187 = vpop.xlane.xlu0 %8186
  %v8188 = vsel %vm562, %v8054, 0.0
  %8189 = vadd.xlane.f32.xlu0 %v8188
  %v8190 = vpop.xlane.xlu0 %8189
  %v8191 = vsel %vm562, %v8055, 0.0
  %8192 = vadd.xlane.f32.xlu0 %v8191
  %v8193 = vpop.xlane.xlu0 %8192
  %v8194 = vsel %vm562, %v8056, 0.0
  %8195 = vadd.xlane.f32.xlu0 %v8194
  %v8196 = vpop.xlane.xlu0 %8195
  %v8197 = vsel %vm562, %v8057, 0.0
  %8198 = vadd.xlane.f32.xlu0 %v8197
  %v8199 = vpop.xlane.xlu0 %8198
  %v8200 = vsel %vm562, %v8058, 0.0
  %8201 = vadd.xlane.f32.xlu0 %v8200
  %v8202 = vpop.xlane.xlu0 %8201
  %v8203 = vsel %vm562, %v8059, 0.0
  %8204 = vadd.xlane.f32.xlu0 %v8203
  %v8205 = vpop.xlane.xlu0 %8204
  %v8206 = vsel %vm562, %v8060, 0.0
  %8207 = vadd.xlane.f32.xlu0 %v8206
  %v8208 = vpop.xlane.xlu0 %8207
  %v8209 = vsel %vm562, %v8061, 0.0
  %8210 = vadd.xlane.f32.xlu0 %v8209
  %v8211 = vpop.xlane.xlu0 %8210
  %v8212 = vsel %vm562, %v8062, 0.0
  %8213 = vadd.xlane.f32.xlu0 %v8212
  %v8214 = vpop.xlane.xlu0 %8213
  %v8215 = vsel %vm562, %v8063, 0.0
  %8216 = vadd.xlane.f32.xlu0 %v8215
  %v8217 = vpop.xlane.xlu0 %8216
  %v8218 = vsel %vm562, %v8064, 0.0
  %8219 = vadd.xlane.f32.xlu0 %v8218
  %v8220 = vpop.xlane.xlu0 %8219
  %v8221 = vsel %vm562, %v8065, 0.0
  %8222 = vadd.xlane.f32.xlu0 %v8221
  %v8223 = vpop.xlane.xlu0 %8222
  %v8224 = vsel %vm562, %v8066, 0.0
  %8225 = vadd.xlane.f32.xlu0 %v8224
  %v8226 = vpop.xlane.xlu0 %8225
  %v8227 = vsel %vm562, %v8067, 0.0
  %8228 = vadd.xlane.f32.xlu0 %v8227
  %v8229 = vpop.xlane.xlu0 %8228
  %v8230 = vsel %vm562, %v8068, 0.0
  %8231 = vadd.xlane.f32.xlu0 %v8230
  %v8232 = vpop.xlane.xlu0 %8231
  %v8233 = vsel %vm562, %v8069, 0.0
  %8234 = vadd.xlane.f32.xlu0 %v8233
  %v8235 = vpop.xlane.xlu0 %8234
  %v8236 = vsel %vm562, %v8070, 0.0
  %8237 = vadd.xlane.f32.xlu0 %v8236
  %v8238 = vpop.xlane.xlu0 %8237
  %v8239 = vsel %vm562, %v8071, 0.0
  %8240 = vadd.xlane.f32.xlu0 %v8239
  %v8241 = vpop.xlane.xlu0 %8240
  %v8242 = vsel %vm562, %v8072, 0.0
  %8243 = vadd.xlane.f32.xlu0 %v8242
  %v8244 = vpop.xlane.xlu0 %8243
  %v8245 = vsel %vm562, %v8073, 0.0
  %8246 = vadd.xlane.f32.xlu0 %v8245
  %v8247 = vpop.xlane.xlu0 %8246
  %v8248 = vsel %vm562, %v8074, 0.0
  %8249 = vadd.xlane.f32.xlu0 %v8248
  %v8250 = vpop.xlane.xlu0 %8249
  %v8251 = vsel %vm562, %v8075, 0.0
  %8252 = vadd.xlane.f32.xlu0 %v8251
  %v8253 = vpop.xlane.xlu0 %8252
  %v8254 = vsel %vm562, %v8076, 0.0
  %8255 = vadd.xlane.f32.xlu0 %v8254
  %v8256 = vpop.xlane.xlu0 %8255
  %v8257 = vsel %vm562, %v8077, 0.0
  %8258 = vadd.xlane.f32.xlu0 %v8257
  %v8259 = vpop.xlane.xlu0 %8258
  %v8260 = vsel %vm562, %v8078, 0.0
  %8261 = vadd.xlane.f32.xlu0 %v8260
  %v8262 = vpop.xlane.xlu0 %8261
  %v8263 = vsel %vm562, %v8079, 0.0
  %8264 = vadd.xlane.f32.xlu0 %v8263
  %v8265 = vpop.xlane.xlu0 %8264
  %v8266 = vsel %vm562, %v8080, 0.0
  %8267 = vadd.xlane.f32.xlu0 %v8266
  %v8268 = vpop.xlane.xlu0 %8267
  %v8269 = vsel %vm562, %v8081, 0.0
  %8270 = vadd.xlane.f32.xlu0 %v8269
  %v8271 = vpop.xlane.xlu0 %8270
  %v8272 = vsel %vm562, %v8082, 0.0
  %8273 = vadd.xlane.f32.xlu0 %v8272
  %v8274 = vpop.xlane.xlu0 %8273
  %v8275 = vsel %vm562, %v8083, 0.0
  %8276 = vadd.xlane.f32.xlu0 %v8275
  %v8277 = vpop.xlane.xlu0 %8276
  %v8278 = vsel %vm562, %v8084, 0.0
  %8279 = vadd.xlane.f32.xlu0 %v8278
  %v8280 = vpop.xlane.xlu0 %8279
  %v8281 = vsel %vm562, %v8085, 0.0
  %8282 = vadd.xlane.f32.xlu0 %v8281
  %v8283 = vpop.xlane.xlu0 %8282
  %v8284 = vsel %vm562, %v8086, 0.0
  %8285 = vadd.xlane.f32.xlu0 %v8284
  %v8286 = vpop.xlane.xlu0 %8285
  %v8287 = vsel %vm562, %v8087, 0.0
  %8288 = vadd.xlane.f32.xlu0 %v8287
  %v8289 = vpop.xlane.xlu0 %8288
  %v8290 = vsel %vm562, %v8088, 0.0
  %8291 = vadd.xlane.f32.xlu0 %v8290
  %v8292 = vpop.xlane.xlu0 %8291
  %v8293 = vsel %vm562, %v8089, 0.0
  %8294 = vadd.xlane.f32.xlu0 %v8293
  %v8295 = vpop.xlane.xlu0 %8294
  %v8296 = vsel %vm562, %v8090, 0.0
  %8297 = vadd.xlane.f32.xlu0 %v8296
  %v8298 = vpop.xlane.xlu0 %8297
  %v8299 = vsel %vm562, %v8091, 0.0
  %8300 = vadd.xlane.f32.xlu0 %v8299
  %v8301 = vpop.xlane.xlu0 %8300
  %v8302 = vsel %vm562, %v8092, 0.0
  %8303 = vadd.xlane.f32.xlu0 %v8302
  %v8304 = vpop.xlane.xlu0 %8303
  %v8305 = vsel %vm562, %v8093, 0.0
  %8306 = vadd.xlane.f32.xlu0 %v8305
  %v8307 = vpop.xlane.xlu0 %8306
  %v8308 = vsel %vm562, %v8094, 0.0
  %8309 = vadd.xlane.f32.xlu0 %v8308
  %v8310 = vpop.xlane.xlu0 %8309
  %v8311 = vsel %vm562, %v8095, 0.0
  %8312 = vadd.xlane.f32.xlu0 %v8311
  %v8313 = vpop.xlane.xlu0 %8312
  %v8314 = vsel %vm562, %v8096, 0.0
  %8315 = vadd.xlane.f32.xlu0 %v8314
  %v8316 = vpop.xlane.xlu0 %8315
  %v8317 = vsel %vm562, %v8097, 0.0
  %8318 = vadd.xlane.f32.xlu0 %v8317
  %v8319 = vpop.xlane.xlu0 %8318
  %v8320 = vsel %vm562, %v8098, 0.0
  %8321 = vadd.xlane.f32.xlu0 %v8320
  %v8322 = vpop.xlane.xlu0 %8321
  %v8323 = vsel %vm562, %v8099, 0.0
  %8324 = vadd.xlane.f32.xlu0 %v8323
  %v8325 = vpop.xlane.xlu0 %8324
  %v8326 = vsel %vm562, %v8100, 0.0
  %8327 = vadd.xlane.f32.xlu0 %v8326
  %v8328 = vpop.xlane.xlu0 %8327
  %v8329 = vsel %vm562, %v8101, 0.0
  %8330 = vadd.xlane.f32.xlu0 %v8329
  %v8331 = vpop.xlane.xlu0 %8330
  %v8332 = vsel %vm562, %v8102, 0.0
  %8333 = vadd.xlane.f32.xlu0 %v8332
  %v8334 = vpop.xlane.xlu0 %8333
  %v8335 = vsel %vm562, %v8103, 0.0
  %8336 = vadd.xlane.f32.xlu0 %v8335
  %v8337 = vpop.xlane.xlu0 %8336
  %v8338 = vsel %vm562, %v8104, 0.0
  %8339 = vadd.xlane.f32.xlu0 %v8338
  %v8340 = vpop.xlane.xlu0 %8339
  %v8341 = vsel %vm562, %v8105, 0.0
  %8342 = vadd.xlane.f32.xlu0 %v8341
  %v8343 = vpop.xlane.xlu0 %8342
  %v8344 = vsel %vm562, %v8106, 0.0
  %8345 = vadd.xlane.f32.xlu0 %v8344
  %v8346 = vpop.xlane.xlu0 %8345
  %v8347 = vsel %vm562, %v8107, 0.0
  %8348 = vadd.xlane.f32.xlu0 %v8347
  %v8349 = vpop.xlane.xlu0 %8348
  %v8350 = vsel %vm562, %v8108, 0.0
  %8351 = vadd.xlane.f32.xlu0 %v8350
  %v8352 = vpop.xlane.xlu0 %8351
  %v8353 = vsel %vm562, %v8109, 0.0
  %8354 = vadd.xlane.f32.xlu0 %v8353
  %v8355 = vpop.xlane.xlu0 %8354
  %v8356 = vsel %vm562, %v8110, 0.0
  %8357 = vadd.xlane.f32.xlu0 %v8356
  %v8358 = vpop.xlane.xlu0 %8357
  %v8359 = vsel %vm562, %v8111, 0.0
  %8360 = vadd.xlane.f32.xlu0 %v8359
  %v8361 = vpop.xlane.xlu0 %8360
  %v8362 = vsel %vm562, %v8112, 0.0
  %8363 = vadd.xlane.f32.xlu0 %v8362
  %v8364 = vpop.xlane.xlu0 %8363
  %v8365 = vsel %vm562, %v8113, 0.0
  %8366 = vadd.xlane.f32.xlu0 %v8365
  %v8367 = vpop.xlane.xlu0 %8366
  %v8368 = vsel %vm562, %v8114, 0.0
  %8369 = vadd.xlane.f32.xlu0 %v8368
  %v8370 = vpop.xlane.xlu0 %8369
  %v8371 = vsel %vm562, %v8115, 0.0
  %8372 = vadd.xlane.f32.xlu0 %v8371
  %v8373 = vpop.xlane.xlu0 %8372
  %v8374 = vsel %vm562, %v8116, 0.0
  %8375 = vadd.xlane.f32.xlu0 %v8374
  %v8376 = vpop.xlane.xlu0 %8375
  %v8377 = vsel %vm562, %v8117, 0.0
  %8378 = vadd.xlane.f32.xlu0 %v8377
  %v8379 = vpop.xlane.xlu0 %8378
  %v8380 = vsel %vm562, %v8118, 0.0
  %8381 = vadd.xlane.f32.xlu0 %v8380
  %v8382 = vpop.xlane.xlu0 %8381
  %v8383 = vsel %vm562, %v8119, 0.0
  %8384 = vadd.xlane.f32.xlu0 %v8383
  %v8385 = vpop.xlane.xlu0 %8384
  %v8386 = vsel %vm562, %v8120, 0.0
  %8387 = vadd.xlane.f32.xlu0 %v8386
  %v8388 = vpop.xlane.xlu0 %8387
  %v8389 = vsel %vm562, %v8121, 0.0
  %8390 = vadd.xlane.f32.xlu0 %v8389
  %v8391 = vpop.xlane.xlu0 %8390
  %v8392 = vsel %vm562, %v8122, 0.0
  %8393 = vadd.xlane.f32.xlu0 %v8392
  %v8394 = vpop.xlane.xlu0 %8393
  %v8395 = vsel %vm562, %v8123, 0.0
  %8396 = vadd.xlane.f32.xlu0 %v8395
  %v8397 = vpop.xlane.xlu0 %8396
  %v8398 = vsel %vm562, %v8124, 0.0
  %8399 = vadd.xlane.f32.xlu0 %v8398
  %v8400 = vpop.xlane.xlu0 %8399
  %v8401 = vsel %vm562, %v8125, 0.0
  %8402 = vadd.xlane.f32.xlu0 %v8401
  %v8403 = vpop.xlane.xlu0 %8402
  %v8404 = vsel %vm562, %v8126, 0.0
  %8405 = vadd.xlane.f32.xlu0 %v8404
  %v8406 = vpop.xlane.xlu0 %8405
  %v8407 = vsel %vm562, %v8127, 0.0
  %8408 = vadd.xlane.f32.xlu0 %v8407
  %v8409 = vpop.xlane.xlu0 %8408
  %v8410 = vsel %vm562, %v8128, 0.0
  %8411 = vadd.xlane.f32.xlu0 %v8410
  %v8412 = vpop.xlane.xlu0 %8411
  %v8413 = vsel %vm562, %v8129, 0.0
  %8414 = vadd.xlane.f32.xlu0 %v8413
  %v8415 = vpop.xlane.xlu0 %8414
  %v8416 = vsel %vm562, %v8130, 0.0
  %8417 = vadd.xlane.f32.xlu0 %v8416
  %v8418 = vpop.xlane.xlu0 %8417
  %v8419 = vmul.f32 %v8133, %v617
  %v8420 = vmul.f32 %v8136, %v617
  %v8421 = vmul.f32 %v8139, %v617
  %v8422 = vmul.f32 %v8142, %v617
  %v8423 = vmul.f32 %v8145, %v617
  %v8424 = vmul.f32 %v8148, %v617
  %v8425 = vmul.f32 %v8151, %v617
  %v8426 = vmul.f32 %v8154, %v617
  %v8427 = vmul.f32 %v8157, %v617
  %v8428 = vmul.f32 %v8160, %v617
  %v8429 = vmul.f32 %v8163, %v617
  %v8430 = vmul.f32 %v8166, %v617
  %v8431 = vmul.f32 %v8169, %v617
  %v8432 = vmul.f32 %v8172, %v617
  %v8433 = vmul.f32 %v8175, %v617
  %v8434 = vmul.f32 %v8178, %v617
  %v8435 = vmul.f32 %v8181, %v617
  %v8436 = vmul.f32 %v8184, %v617
  %v8437 = vmul.f32 %v8187, %v617
  %v8438 = vmul.f32 %v8190, %v617
  %v8439 = vmul.f32 %v8193, %v617
  %v8440 = vmul.f32 %v8196, %v617
  %v8441 = vmul.f32 %v8199, %v617
  %v8442 = vmul.f32 %v8202, %v617
  %v8443 = vmul.f32 %v8205, %v617
  %v8444 = vmul.f32 %v8208, %v617
  %v8445 = vmul.f32 %v8211, %v617
  %v8446 = vmul.f32 %v8214, %v617
  %v8447 = vmul.f32 %v8217, %v617
  %v8448 = vmul.f32 %v8220, %v617
  %v8449 = vmul.f32 %v8223, %v617
  %v8450 = vmul.f32 %v8226, %v617
  %v8451 = vmul.f32 %v8229, %v617
  %v8452 = vmul.f32 %v8232, %v617
  %v8453 = vmul.f32 %v8235, %v617
  %v8454 = vmul.f32 %v8238, %v617
  %v8455 = vmul.f32 %v8241, %v617
  %v8456 = vmul.f32 %v8244, %v617
  %v8457 = vmul.f32 %v8247, %v617
  %v8458 = vmul.f32 %v8250, %v617
  %v8459 = vmul.f32 %v8253, %v617
  %v8460 = vmul.f32 %v8256, %v617
  %v8461 = vmul.f32 %v8259, %v617
  %v8462 = vmul.f32 %v8262, %v617
  %v8463 = vmul.f32 %v8265, %v617
  %v8464 = vmul.f32 %v8268, %v617
  %v8465 = vmul.f32 %v8271, %v617
  %v8466 = vmul.f32 %v8274, %v617
  %v8467 = vmul.f32 %v8277, %v617
  %v8468 = vmul.f32 %v8280, %v617
  %v8469 = vmul.f32 %v8283, %v617
  %v8470 = vmul.f32 %v8286, %v617
  %v8471 = vmul.f32 %v8289, %v617
  %v8472 = vmul.f32 %v8292, %v617
  %v8473 = vmul.f32 %v8295, %v617
  %v8474 = vmul.f32 %v8298, %v617
  %v8475 = vmul.f32 %v8301, %v617
  %v8476 = vmul.f32 %v8304, %v617
  %v8477 = vmul.f32 %v8307, %v617
  %v8478 = vmul.f32 %v8310, %v617
  %v8479 = vmul.f32 %v8313, %v617
  %v8480 = vmul.f32 %v8316, %v617
  %v8481 = vmul.f32 %v8319, %v617
  %v8482 = vmul.f32 %v8322, %v617
  %v8483 = vmul.f32 %v8325, %v617
  %v8484 = vmul.f32 %v8328, %v617
  %v8485 = vmul.f32 %v8331, %v617
  %v8486 = vmul.f32 %v8334, %v617
  %v8487 = vmul.f32 %v8337, %v617
  %v8488 = vmul.f32 %v8340, %v617
  %v8489 = vmul.f32 %v8343, %v617
  %v8490 = vmul.f32 %v8346, %v617
  %v8491 = vmul.f32 %v8349, %v617
  %v8492 = vmul.f32 %v8352, %v617
  %v8493 = vmul.f32 %v8355, %v617
  %v8494 = vmul.f32 %v8358, %v617
  %v8495 = vmul.f32 %v8361, %v617
  %v8496 = vmul.f32 %v8364, %v617
  %v8497 = vmul.f32 %v8367, %v617
  %v8498 = vmul.f32 %v8370, %v617
  %v8499 = vmul.f32 %v8373, %v617
  %v8500 = vmul.f32 %v8376, %v617
  %v8501 = vmul.f32 %v8379, %v617
  %v8502 = vmul.f32 %v8382, %v617
  %v8503 = vmul.f32 %v8385, %v617
  %v8504 = vmul.f32 %v8388, %v617
  %v8505 = vmul.f32 %v8391, %v617
  %v8506 = vmul.f32 %v8394, %v617
  %v8507 = vmul.f32 %v8397, %v617
  %v8508 = vmul.f32 %v8400, %v617
  %v8509 = vmul.f32 %v8403, %v617
  %v8510 = vmul.f32 %v8406, %v617
  %v8511 = vmul.f32 %v8409, %v617
  %v8512 = vmul.f32 %v8412, %v617
  %v8513 = vmul.f32 %v8415, %v617
  %v8514 = vmul.f32 %v8418, %v617
  %v8515 = vmul.f32 %v8035, %v8035
  %v8516 = vmul.f32 %v8036, %v8036
  %v8517 = vmul.f32 %v8037, %v8037
  %v8518 = vmul.f32 %v8038, %v8038
  %v8519 = vmul.f32 %v8039, %v8039
  %v8520 = vmul.f32 %v8040, %v8040
  %v8521 = vmul.f32 %v8041, %v8041
  %v8522 = vmul.f32 %v8042, %v8042
  %v8523 = vmul.f32 %v8043, %v8043
  %v8524 = vmul.f32 %v8044, %v8044
  %v8525 = vmul.f32 %v8045, %v8045
  %v8526 = vmul.f32 %v8046, %v8046
  %v8527 = vmul.f32 %v8047, %v8047
  %v8528 = vmul.f32 %v8048, %v8048
  %v8529 = vmul.f32 %v8049, %v8049
  %v8530 = vmul.f32 %v8050, %v8050
  %v8531 = vmul.f32 %v8051, %v8051
  %v8532 = vmul.f32 %v8052, %v8052
  %v8533 = vmul.f32 %v8053, %v8053
  %v8534 = vmul.f32 %v8054, %v8054
  %v8535 = vmul.f32 %v8055, %v8055
  %v8536 = vmul.f32 %v8056, %v8056
  %v8537 = vmul.f32 %v8057, %v8057
  %v8538 = vmul.f32 %v8058, %v8058
  %v8539 = vmul.f32 %v8059, %v8059
  %v8540 = vmul.f32 %v8060, %v8060
  %v8541 = vmul.f32 %v8061, %v8061
  %v8542 = vmul.f32 %v8062, %v8062
  %v8543 = vmul.f32 %v8063, %v8063
  %v8544 = vmul.f32 %v8064, %v8064
  %v8545 = vmul.f32 %v8065, %v8065
  %v8546 = vmul.f32 %v8066, %v8066
  %v8547 = vmul.f32 %v8067, %v8067
  %v8548 = vmul.f32 %v8068, %v8068
  %v8549 = vmul.f32 %v8069, %v8069
  %v8550 = vmul.f32 %v8070, %v8070
  %v8551 = vmul.f32 %v8071, %v8071
  %v8552 = vmul.f32 %v8072, %v8072
  %v8553 = vmul.f32 %v8073, %v8073
  %v8554 = vmul.f32 %v8074, %v8074
  %v8555 = vmul.f32 %v8075, %v8075
  %v8556 = vmul.f32 %v8076, %v8076
  %v8557 = vmul.f32 %v8077, %v8077
  %v8558 = vmul.f32 %v8078, %v8078
  %v8559 = vmul.f32 %v8079, %v8079
  %v8560 = vmul.f32 %v8080, %v8080
  %v8561 = vmul.f32 %v8081, %v8081
  %v8562 = vmul.f32 %v8082, %v8082
  %v8563 = vmul.f32 %v8083, %v8083
  %v8564 = vmul.f32 %v8084, %v8084
  %v8565 = vmul.f32 %v8085, %v8085
  %v8566 = vmul.f32 %v8086, %v8086
  %v8567 = vmul.f32 %v8087, %v8087
  %v8568 = vmul.f32 %v8088, %v8088
  %v8569 = vmul.f32 %v8089, %v8089
  %v8570 = vmul.f32 %v8090, %v8090
  %v8571 = vmul.f32 %v8091, %v8091
  %v8572 = vmul.f32 %v8092, %v8092
  %v8573 = vmul.f32 %v8093, %v8093
  %v8574 = vmul.f32 %v8094, %v8094
  %v8575 = vmul.f32 %v8095, %v8095
  %v8576 = vmul.f32 %v8096, %v8096
  %v8577 = vmul.f32 %v8097, %v8097
  %v8578 = vmul.f32 %v8098, %v8098
  %v8579 = vmul.f32 %v8099, %v8099
  %v8580 = vmul.f32 %v8100, %v8100
  %v8581 = vmul.f32 %v8101, %v8101
  %v8582 = vmul.f32 %v8102, %v8102
  %v8583 = vmul.f32 %v8103, %v8103
  %v8584 = vmul.f32 %v8104, %v8104
  %v8585 = vmul.f32 %v8105, %v8105
  %v8586 = vmul.f32 %v8106, %v8106
  %v8587 = vmul.f32 %v8107, %v8107
  %v8588 = vmul.f32 %v8108, %v8108
  %v8589 = vmul.f32 %v8109, %v8109
  %v8590 = vmul.f32 %v8110, %v8110
  %v8591 = vmul.f32 %v8111, %v8111
  %v8592 = vmul.f32 %v8112, %v8112
  %v8593 = vmul.f32 %v8113, %v8113
  %v8594 = vmul.f32 %v8114, %v8114
  %v8595 = vmul.f32 %v8115, %v8115
  %v8596 = vmul.f32 %v8116, %v8116
  %v8597 = vmul.f32 %v8117, %v8117
  %v8598 = vmul.f32 %v8118, %v8118
  %v8599 = vmul.f32 %v8119, %v8119
  %v8600 = vmul.f32 %v8120, %v8120
  %v8601 = vmul.f32 %v8121, %v8121
  %v8602 = vmul.f32 %v8122, %v8122
  %v8603 = vmul.f32 %v8123, %v8123
  %v8604 = vmul.f32 %v8124, %v8124
  %v8605 = vmul.f32 %v8125, %v8125
  %v8606 = vmul.f32 %v8126, %v8126
  %v8607 = vmul.f32 %v8127, %v8127
  %v8608 = vmul.f32 %v8128, %v8128
  %v8609 = vmul.f32 %v8129, %v8129
  %v8610 = vmul.f32 %v8130, %v8130
  %v8611 = vsel %vm562, %v8515, 0.0
  %8612 = vadd.xlane.f32.xlu0 %v8611
  %v8613 = vpop.xlane.xlu0 %8612
  %v8614 = vsel %vm562, %v8516, 0.0
  %8615 = vadd.xlane.f32.xlu0 %v8614
  %v8616 = vpop.xlane.xlu0 %8615
  %v8617 = vsel %vm562, %v8517, 0.0
  %8618 = vadd.xlane.f32.xlu0 %v8617
  %v8619 = vpop.xlane.xlu0 %8618
  %v8620 = vsel %vm562, %v8518, 0.0
  %8621 = vadd.xlane.f32.xlu0 %v8620
  %v8622 = vpop.xlane.xlu0 %8621
  %v8623 = vsel %vm562, %v8519, 0.0
  %8624 = vadd.xlane.f32.xlu0 %v8623
  %v8625 = vpop.xlane.xlu0 %8624
  %v8626 = vsel %vm562, %v8520, 0.0
  %8627 = vadd.xlane.f32.xlu0 %v8626
  %v8628 = vpop.xlane.xlu0 %8627
  %v8629 = vsel %vm562, %v8521, 0.0
  %8630 = vadd.xlane.f32.xlu0 %v8629
  %v8631 = vpop.xlane.xlu0 %8630
  %v8632 = vsel %vm562, %v8522, 0.0
  %8633 = vadd.xlane.f32.xlu0 %v8632
  %v8634 = vpop.xlane.xlu0 %8633
  %v8635 = vsel %vm562, %v8523, 0.0
  %8636 = vadd.xlane.f32.xlu0 %v8635
  %v8637 = vpop.xlane.xlu0 %8636
  %v8638 = vsel %vm562, %v8524, 0.0
  %8639 = vadd.xlane.f32.xlu0 %v8638
  %v8640 = vpop.xlane.xlu0 %8639
  %v8641 = vsel %vm562, %v8525, 0.0
  %8642 = vadd.xlane.f32.xlu0 %v8641
  %v8643 = vpop.xlane.xlu0 %8642
  %v8644 = vsel %vm562, %v8526, 0.0
  %8645 = vadd.xlane.f32.xlu0 %v8644
  %v8646 = vpop.xlane.xlu0 %8645
  %v8647 = vsel %vm562, %v8527, 0.0
  %8648 = vadd.xlane.f32.xlu0 %v8647
  %v8649 = vpop.xlane.xlu0 %8648
  %v8650 = vsel %vm562, %v8528, 0.0
  %8651 = vadd.xlane.f32.xlu0 %v8650
  %v8652 = vpop.xlane.xlu0 %8651
  %v8653 = vsel %vm562, %v8529, 0.0
  %8654 = vadd.xlane.f32.xlu0 %v8653
  %v8655 = vpop.xlane.xlu0 %8654
  %v8656 = vsel %vm562, %v8530, 0.0
  %8657 = vadd.xlane.f32.xlu0 %v8656
  %v8658 = vpop.xlane.xlu0 %8657
  %v8659 = vsel %vm562, %v8531, 0.0
  %8660 = vadd.xlane.f32.xlu0 %v8659
  %v8661 = vpop.xlane.xlu0 %8660
  %v8662 = vsel %vm562, %v8532, 0.0
  %8663 = vadd.xlane.f32.xlu0 %v8662
  %v8664 = vpop.xlane.xlu0 %8663
  %v8665 = vsel %vm562, %v8533, 0.0
  %8666 = vadd.xlane.f32.xlu0 %v8665
  %v8667 = vpop.xlane.xlu0 %8666
  %v8668 = vsel %vm562, %v8534, 0.0
  %8669 = vadd.xlane.f32.xlu0 %v8668
  %v8670 = vpop.xlane.xlu0 %8669
  %v8671 = vsel %vm562, %v8535, 0.0
  %8672 = vadd.xlane.f32.xlu0 %v8671
  %v8673 = vpop.xlane.xlu0 %8672
  %v8674 = vsel %vm562, %v8536, 0.0
  %8675 = vadd.xlane.f32.xlu0 %v8674
  %v8676 = vpop.xlane.xlu0 %8675
  %v8677 = vsel %vm562, %v8537, 0.0
  %8678 = vadd.xlane.f32.xlu0 %v8677
  %v8679 = vpop.xlane.xlu0 %8678
  %v8680 = vsel %vm562, %v8538, 0.0
  %8681 = vadd.xlane.f32.xlu0 %v8680
  %v8682 = vpop.xlane.xlu0 %8681
  %v8683 = vsel %vm562, %v8539, 0.0
  %8684 = vadd.xlane.f32.xlu0 %v8683
  %v8685 = vpop.xlane.xlu0 %8684
  %v8686 = vsel %vm562, %v8540, 0.0
  %8687 = vadd.xlane.f32.xlu0 %v8686
  %v8688 = vpop.xlane.xlu0 %8687
  %v8689 = vsel %vm562, %v8541, 0.0
  %8690 = vadd.xlane.f32.xlu0 %v8689
  %v8691 = vpop.xlane.xlu0 %8690
  %v8692 = vsel %vm562, %v8542, 0.0
  %8693 = vadd.xlane.f32.xlu0 %v8692
  %v8694 = vpop.xlane.xlu0 %8693
  %v8695 = vsel %vm562, %v8543, 0.0
  %8696 = vadd.xlane.f32.xlu0 %v8695
  %v8697 = vpop.xlane.xlu0 %8696
  %v8698 = vsel %vm562, %v8544, 0.0
  %8699 = vadd.xlane.f32.xlu0 %v8698
  %v8700 = vpop.xlane.xlu0 %8699
  %v8701 = vsel %vm562, %v8545, 0.0
  %8702 = vadd.xlane.f32.xlu0 %v8701
  %v8703 = vpop.xlane.xlu0 %8702
  %v8704 = vsel %vm562, %v8546, 0.0
  %8705 = vadd.xlane.f32.xlu0 %v8704
  %v8706 = vpop.xlane.xlu0 %8705
  %v8707 = vsel %vm562, %v8547, 0.0
  %8708 = vadd.xlane.f32.xlu0 %v8707
  %v8709 = vpop.xlane.xlu0 %8708
  %v8710 = vsel %vm562, %v8548, 0.0
  %8711 = vadd.xlane.f32.xlu0 %v8710
  %v8712 = vpop.xlane.xlu0 %8711
  %v8713 = vsel %vm562, %v8549, 0.0
  %8714 = vadd.xlane.f32.xlu0 %v8713
  %v8715 = vpop.xlane.xlu0 %8714
  %v8716 = vsel %vm562, %v8550, 0.0
  %8717 = vadd.xlane.f32.xlu0 %v8716
  %v8718 = vpop.xlane.xlu0 %8717
  %v8719 = vsel %vm562, %v8551, 0.0
  %8720 = vadd.xlane.f32.xlu0 %v8719
  %v8721 = vpop.xlane.xlu0 %8720
  %v8722 = vsel %vm562, %v8552, 0.0
  %8723 = vadd.xlane.f32.xlu0 %v8722
  %v8724 = vpop.xlane.xlu0 %8723
  %v8725 = vsel %vm562, %v8553, 0.0
  %8726 = vadd.xlane.f32.xlu0 %v8725
  %v8727 = vpop.xlane.xlu0 %8726
  %v8728 = vsel %vm562, %v8554, 0.0
  %8729 = vadd.xlane.f32.xlu0 %v8728
  %v8730 = vpop.xlane.xlu0 %8729
  %v8731 = vsel %vm562, %v8555, 0.0
  %8732 = vadd.xlane.f32.xlu0 %v8731
  %v8733 = vpop.xlane.xlu0 %8732
  %v8734 = vsel %vm562, %v8556, 0.0
  %8735 = vadd.xlane.f32.xlu0 %v8734
  %v8736 = vpop.xlane.xlu0 %8735
  %v8737 = vsel %vm562, %v8557, 0.0
  %8738 = vadd.xlane.f32.xlu0 %v8737
  %v8739 = vpop.xlane.xlu0 %8738
  %v8740 = vsel %vm562, %v8558, 0.0
  %8741 = vadd.xlane.f32.xlu0 %v8740
  %v8742 = vpop.xlane.xlu0 %8741
  %v8743 = vsel %vm562, %v8559, 0.0
  %8744 = vadd.xlane.f32.xlu0 %v8743
  %v8745 = vpop.xlane.xlu0 %8744
  %v8746 = vsel %vm562, %v8560, 0.0
  %8747 = vadd.xlane.f32.xlu0 %v8746
  %v8748 = vpop.xlane.xlu0 %8747
  %v8749 = vsel %vm562, %v8561, 0.0
  %8750 = vadd.xlane.f32.xlu0 %v8749
  %v8751 = vpop.xlane.xlu0 %8750
  %v8752 = vsel %vm562, %v8562, 0.0
  %8753 = vadd.xlane.f32.xlu0 %v8752
  %v8754 = vpop.xlane.xlu0 %8753
  %v8755 = vsel %vm562, %v8563, 0.0
  %8756 = vadd.xlane.f32.xlu0 %v8755
  %v8757 = vpop.xlane.xlu0 %8756
  %v8758 = vsel %vm562, %v8564, 0.0
  %8759 = vadd.xlane.f32.xlu0 %v8758
  %v8760 = vpop.xlane.xlu0 %8759
  %v8761 = vsel %vm562, %v8565, 0.0
  %8762 = vadd.xlane.f32.xlu0 %v8761
  %v8763 = vpop.xlane.xlu0 %8762
  %v8764 = vsel %vm562, %v8566, 0.0
  %8765 = vadd.xlane.f32.xlu0 %v8764
  %v8766 = vpop.xlane.xlu0 %8765
  %v8767 = vsel %vm562, %v8567, 0.0
  %8768 = vadd.xlane.f32.xlu0 %v8767
  %v8769 = vpop.xlane.xlu0 %8768
  %v8770 = vsel %vm562, %v8568, 0.0
  %8771 = vadd.xlane.f32.xlu0 %v8770
  %v8772 = vpop.xlane.xlu0 %8771
  %v8773 = vsel %vm562, %v8569, 0.0
  %8774 = vadd.xlane.f32.xlu0 %v8773
  %v8775 = vpop.xlane.xlu0 %8774
  %v8776 = vsel %vm562, %v8570, 0.0
  %8777 = vadd.xlane.f32.xlu0 %v8776
  %v8778 = vpop.xlane.xlu0 %8777
  %v8779 = vsel %vm562, %v8571, 0.0
  %8780 = vadd.xlane.f32.xlu0 %v8779
  %v8781 = vpop.xlane.xlu0 %8780
  %v8782 = vsel %vm562, %v8572, 0.0
  %8783 = vadd.xlane.f32.xlu0 %v8782
  %v8784 = vpop.xlane.xlu0 %8783
  %v8785 = vsel %vm562, %v8573, 0.0
  %8786 = vadd.xlane.f32.xlu0 %v8785
  %v8787 = vpop.xlane.xlu0 %8786
  %v8788 = vsel %vm562, %v8574, 0.0
  %8789 = vadd.xlane.f32.xlu0 %v8788
  %v8790 = vpop.xlane.xlu0 %8789
  %v8791 = vsel %vm562, %v8575, 0.0
  %8792 = vadd.xlane.f32.xlu0 %v8791
  %v8793 = vpop.xlane.xlu0 %8792
  %v8794 = vsel %vm562, %v8576, 0.0
  %8795 = vadd.xlane.f32.xlu0 %v8794
  %v8796 = vpop.xlane.xlu0 %8795
  %v8797 = vsel %vm562, %v8577, 0.0
  %8798 = vadd.xlane.f32.xlu0 %v8797
  %v8799 = vpop.xlane.xlu0 %8798
  %v8800 = vsel %vm562, %v8578, 0.0
  %8801 = vadd.xlane.f32.xlu0 %v8800
  %v8802 = vpop.xlane.xlu0 %8801
  %v8803 = vsel %vm562, %v8579, 0.0
  %8804 = vadd.xlane.f32.xlu0 %v8803
  %v8805 = vpop.xlane.xlu0 %8804
  %v8806 = vsel %vm562, %v8580, 0.0
  %8807 = vadd.xlane.f32.xlu0 %v8806
  %v8808 = vpop.xlane.xlu0 %8807
  %v8809 = vsel %vm562, %v8581, 0.0
  %8810 = vadd.xlane.f32.xlu0 %v8809
  %v8811 = vpop.xlane.xlu0 %8810
  %v8812 = vsel %vm562, %v8582, 0.0
  %8813 = vadd.xlane.f32.xlu0 %v8812
  %v8814 = vpop.xlane.xlu0 %8813
  %v8815 = vsel %vm562, %v8583, 0.0
  %8816 = vadd.xlane.f32.xlu0 %v8815
  %v8817 = vpop.xlane.xlu0 %8816
  %v8818 = vsel %vm562, %v8584, 0.0
  %8819 = vadd.xlane.f32.xlu0 %v8818
  %v8820 = vpop.xlane.xlu0 %8819
  %v8821 = vsel %vm562, %v8585, 0.0
  %8822 = vadd.xlane.f32.xlu0 %v8821
  %v8823 = vpop.xlane.xlu0 %8822
  %v8824 = vsel %vm562, %v8586, 0.0
  %8825 = vadd.xlane.f32.xlu0 %v8824
  %v8826 = vpop.xlane.xlu0 %8825
  %v8827 = vsel %vm562, %v8587, 0.0
  %8828 = vadd.xlane.f32.xlu0 %v8827
  %v8829 = vpop.xlane.xlu0 %8828
  %v8830 = vsel %vm562, %v8588, 0.0
  %8831 = vadd.xlane.f32.xlu0 %v8830
  %v8832 = vpop.xlane.xlu0 %8831
  %v8833 = vsel %vm562, %v8589, 0.0
  %8834 = vadd.xlane.f32.xlu0 %v8833
  %v8835 = vpop.xlane.xlu0 %8834
  %v8836 = vsel %vm562, %v8590, 0.0
  %8837 = vadd.xlane.f32.xlu0 %v8836
  %v8838 = vpop.xlane.xlu0 %8837
  %v8839 = vsel %vm562, %v8591, 0.0
  %8840 = vadd.xlane.f32.xlu0 %v8839
  %v8841 = vpop.xlane.xlu0 %8840
  %v8842 = vsel %vm562, %v8592, 0.0
  %8843 = vadd.xlane.f32.xlu0 %v8842
  %v8844 = vpop.xlane.xlu0 %8843
  %v8845 = vsel %vm562, %v8593, 0.0
  %8846 = vadd.xlane.f32.xlu0 %v8845
  %v8847 = vpop.xlane.xlu0 %8846
  %v8848 = vsel %vm562, %v8594, 0.0
  %8849 = vadd.xlane.f32.xlu0 %v8848
  %v8850 = vpop.xlane.xlu0 %8849
  %v8851 = vsel %vm562, %v8595, 0.0
  %8852 = vadd.xlane.f32.xlu0 %v8851
  %v8853 = vpop.xlane.xlu0 %8852
  %v8854 = vsel %vm562, %v8596, 0.0
  %8855 = vadd.xlane.f32.xlu0 %v8854
  %v8856 = vpop.xlane.xlu0 %8855
  %v8857 = vsel %vm562, %v8597, 0.0
  %8858 = vadd.xlane.f32.xlu0 %v8857
  %v8859 = vpop.xlane.xlu0 %8858
  %v8860 = vsel %vm562, %v8598, 0.0
  %8861 = vadd.xlane.f32.xlu0 %v8860
  %v8862 = vpop.xlane.xlu0 %8861
  %v8863 = vsel %vm562, %v8599, 0.0
  %8864 = vadd.xlane.f32.xlu0 %v8863
  %v8865 = vpop.xlane.xlu0 %8864
  %v8866 = vsel %vm562, %v8600, 0.0
  %8867 = vadd.xlane.f32.xlu0 %v8866
  %v8868 = vpop.xlane.xlu0 %8867
  %v8869 = vsel %vm562, %v8601, 0.0
  %8870 = vadd.xlane.f32.xlu0 %v8869
  %v8871 = vpop.xlane.xlu0 %8870
  %v8872 = vsel %vm562, %v8602, 0.0
  %8873 = vadd.xlane.f32.xlu0 %v8872
  %v8874 = vpop.xlane.xlu0 %8873
  %v8875 = vsel %vm562, %v8603, 0.0
  %8876 = vadd.xlane.f32.xlu0 %v8875
  %v8877 = vpop.xlane.xlu0 %8876
  %v8878 = vsel %vm562, %v8604, 0.0
  %8879 = vadd.xlane.f32.xlu0 %v8878
  %v8880 = vpop.xlane.xlu0 %8879
  %v8881 = vsel %vm562, %v8605, 0.0
  %8882 = vadd.xlane.f32.xlu0 %v8881
  %v8883 = vpop.xlane.xlu0 %8882
  %v8884 = vsel %vm562, %v8606, 0.0
  %8885 = vadd.xlane.f32.xlu0 %v8884
  %v8886 = vpop.xlane.xlu0 %8885
  %v8887 = vsel %vm562, %v8607, 0.0
  %8888 = vadd.xlane.f32.xlu0 %v8887
  %v8889 = vpop.xlane.xlu0 %8888
  %v8890 = vsel %vm562, %v8608, 0.0
  %8891 = vadd.xlane.f32.xlu0 %v8890
  %v8892 = vpop.xlane.xlu0 %8891
  %v8893 = vsel %vm562, %v8609, 0.0
  %8894 = vadd.xlane.f32.xlu0 %v8893
  %v8895 = vpop.xlane.xlu0 %8894
  %v8896 = vsel %vm562, %v8610, 0.0
  %8897 = vadd.xlane.f32.xlu0 %v8896
  %v8898 = vpop.xlane.xlu0 %8897
  %v8899 = vmul.f32 %v8613, %v617
  %v8900 = vmul.f32 %v8616, %v617
  %v8901 = vmul.f32 %v8619, %v617
  %v8902 = vmul.f32 %v8622, %v617
  %v8903 = vmul.f32 %v8625, %v617
  %v8904 = vmul.f32 %v8628, %v617
  %v8905 = vmul.f32 %v8631, %v617
  %v8906 = vmul.f32 %v8634, %v617
  %v8907 = vmul.f32 %v8637, %v617
  %v8908 = vmul.f32 %v8640, %v617
  %v8909 = vmul.f32 %v8643, %v617
  %v8910 = vmul.f32 %v8646, %v617
  %v8911 = vmul.f32 %v8649, %v617
  %v8912 = vmul.f32 %v8652, %v617
  %v8913 = vmul.f32 %v8655, %v617
  %v8914 = vmul.f32 %v8658, %v617
  %v8915 = vmul.f32 %v8661, %v617
  %v8916 = vmul.f32 %v8664, %v617
  %v8917 = vmul.f32 %v8667, %v617
  %v8918 = vmul.f32 %v8670, %v617
  %v8919 = vmul.f32 %v8673, %v617
  %v8920 = vmul.f32 %v8676, %v617
  %v8921 = vmul.f32 %v8679, %v617
  %v8922 = vmul.f32 %v8682, %v617
  %v8923 = vmul.f32 %v8685, %v617
  %v8924 = vmul.f32 %v8688, %v617
  %v8925 = vmul.f32 %v8691, %v617
  %v8926 = vmul.f32 %v8694, %v617
  %v8927 = vmul.f32 %v8697, %v617
  %v8928 = vmul.f32 %v8700, %v617
  %v8929 = vmul.f32 %v8703, %v617
  %v8930 = vmul.f32 %v8706, %v617
  %v8931 = vmul.f32 %v8709, %v617
  %v8932 = vmul.f32 %v8712, %v617
  %v8933 = vmul.f32 %v8715, %v617
  %v8934 = vmul.f32 %v8718, %v617
  %v8935 = vmul.f32 %v8721, %v617
  %v8936 = vmul.f32 %v8724, %v617
  %v8937 = vmul.f32 %v8727, %v617
  %v8938 = vmul.f32 %v8730, %v617
  %v8939 = vmul.f32 %v8733, %v617
  %v8940 = vmul.f32 %v8736, %v617
  %v8941 = vmul.f32 %v8739, %v617
  %v8942 = vmul.f32 %v8742, %v617
  %v8943 = vmul.f32 %v8745, %v617
  %v8944 = vmul.f32 %v8748, %v617
  %v8945 = vmul.f32 %v8751, %v617
  %v8946 = vmul.f32 %v8754, %v617
  %v8947 = vmul.f32 %v8757, %v617
  %v8948 = vmul.f32 %v8760, %v617
  %v8949 = vmul.f32 %v8763, %v617
  %v8950 = vmul.f32 %v8766, %v617
  %v8951 = vmul.f32 %v8769, %v617
  %v8952 = vmul.f32 %v8772, %v617
  %v8953 = vmul.f32 %v8775, %v617
  %v8954 = vmul.f32 %v8778, %v617
  %v8955 = vmul.f32 %v8781, %v617
  %v8956 = vmul.f32 %v8784, %v617
  %v8957 = vmul.f32 %v8787, %v617
  %v8958 = vmul.f32 %v8790, %v617
  %v8959 = vmul.f32 %v8793, %v617
  %v8960 = vmul.f32 %v8796, %v617
  %v8961 = vmul.f32 %v8799, %v617
  %v8962 = vmul.f32 %v8802, %v617
  %v8963 = vmul.f32 %v8805, %v617
  %v8964 = vmul.f32 %v8808, %v617
  %v8965 = vmul.f32 %v8811, %v617
  %v8966 = vmul.f32 %v8814, %v617
  %v8967 = vmul.f32 %v8817, %v617
  %v8968 = vmul.f32 %v8820, %v617
  %v8969 = vmul.f32 %v8823, %v617
  %v8970 = vmul.f32 %v8826, %v617
  %v8971 = vmul.f32 %v8829, %v617
  %v8972 = vmul.f32 %v8832, %v617
  %v8973 = vmul.f32 %v8835, %v617
  %v8974 = vmul.f32 %v8838, %v617
  %v8975 = vmul.f32 %v8841, %v617
  %v8976 = vmul.f32 %v8844, %v617
  %v8977 = vmul.f32 %v8847, %v617
  %v8978 = vmul.f32 %v8850, %v617
  %v8979 = vmul.f32 %v8853, %v617
  %v8980 = vmul.f32 %v8856, %v617
  %v8981 = vmul.f32 %v8859, %v617
  %v8982 = vmul.f32 %v8862, %v617
  %v8983 = vmul.f32 %v8865, %v617
  %v8984 = vmul.f32 %v8868, %v617
  %v8985 = vmul.f32 %v8871, %v617
  %v8986 = vmul.f32 %v8874, %v617
  %v8987 = vmul.f32 %v8877, %v617
  %v8988 = vmul.f32 %v8880, %v617
  %v8989 = vmul.f32 %v8883, %v617
  %v8990 = vmul.f32 %v8886, %v617
  %v8991 = vmul.f32 %v8889, %v617
  %v8992 = vmul.f32 %v8892, %v617
  %v8993 = vmul.f32 %v8895, %v617
  %v8994 = vmul.f32 %v8898, %v617
  %v8995 = vmul.f32 %v8419, %v8419
  %v8996 = vmul.f32 %v8420, %v8420
  %v8997 = vmul.f32 %v8421, %v8421
  %v8998 = vmul.f32 %v8422, %v8422
  %v8999 = vmul.f32 %v8423, %v8423
  %v9000 = vmul.f32 %v8424, %v8424
  %v9001 = vmul.f32 %v8425, %v8425
  %v9002 = vmul.f32 %v8426, %v8426
  %v9003 = vmul.f32 %v8427, %v8427
  %v9004 = vmul.f32 %v8428, %v8428
  %v9005 = vmul.f32 %v8429, %v8429
  %v9006 = vmul.f32 %v8430, %v8430
  %v9007 = vmul.f32 %v8431, %v8431
  %v9008 = vmul.f32 %v8432, %v8432
  %v9009 = vmul.f32 %v8433, %v8433
  %v9010 = vmul.f32 %v8434, %v8434
  %v9011 = vmul.f32 %v8435, %v8435
  %v9012 = vmul.f32 %v8436, %v8436
  %v9013 = vmul.f32 %v8437, %v8437
  %v9014 = vmul.f32 %v8438, %v8438
  %v9015 = vmul.f32 %v8439, %v8439
  %v9016 = vmul.f32 %v8440, %v8440
  %v9017 = vmul.f32 %v8441, %v8441
  %v9018 = vmul.f32 %v8442, %v8442
  %v9019 = vmul.f32 %v8443, %v8443
  %v9020 = vmul.f32 %v8444, %v8444
  %v9021 = vmul.f32 %v8445, %v8445
  %v9022 = vmul.f32 %v8446, %v8446
  %v9023 = vmul.f32 %v8447, %v8447
  %v9024 = vmul.f32 %v8448, %v8448
  %v9025 = vmul.f32 %v8449, %v8449
  %v9026 = vmul.f32 %v8450, %v8450
  %v9027 = vmul.f32 %v8451, %v8451
  %v9028 = vmul.f32 %v8452, %v8452
  %v9029 = vmul.f32 %v8453, %v8453
  %v9030 = vmul.f32 %v8454, %v8454
  %v9031 = vmul.f32 %v8455, %v8455
  %v9032 = vmul.f32 %v8456, %v8456
  %v9033 = vmul.f32 %v8457, %v8457
  %v9034 = vmul.f32 %v8458, %v8458
  %v9035 = vmul.f32 %v8459, %v8459
  %v9036 = vmul.f32 %v8460, %v8460
  %v9037 = vmul.f32 %v8461, %v8461
  %v9038 = vmul.f32 %v8462, %v8462
  %v9039 = vmul.f32 %v8463, %v8463
  %v9040 = vmul.f32 %v8464, %v8464
  %v9041 = vmul.f32 %v8465, %v8465
  %v9042 = vmul.f32 %v8466, %v8466
  %v9043 = vmul.f32 %v8467, %v8467
  %v9044 = vmul.f32 %v8468, %v8468
  %v9045 = vmul.f32 %v8469, %v8469
  %v9046 = vmul.f32 %v8470, %v8470
  %v9047 = vmul.f32 %v8471, %v8471
  %v9048 = vmul.f32 %v8472, %v8472
  %v9049 = vmul.f32 %v8473, %v8473
  %v9050 = vmul.f32 %v8474, %v8474
  %v9051 = vmul.f32 %v8475, %v8475
  %v9052 = vmul.f32 %v8476, %v8476
  %v9053 = vmul.f32 %v8477, %v8477
  %v9054 = vmul.f32 %v8478, %v8478
  %v9055 = vmul.f32 %v8479, %v8479
  %v9056 = vmul.f32 %v8480, %v8480
  %v9057 = vmul.f32 %v8481, %v8481
  %v9058 = vmul.f32 %v8482, %v8482
  %v9059 = vmul.f32 %v8483, %v8483
  %v9060 = vmul.f32 %v8484, %v8484
  %v9061 = vmul.f32 %v8485, %v8485
  %v9062 = vmul.f32 %v8486, %v8486
  %v9063 = vmul.f32 %v8487, %v8487
  %v9064 = vmul.f32 %v8488, %v8488
  %v9065 = vmul.f32 %v8489, %v8489
  %v9066 = vmul.f32 %v8490, %v8490
  %v9067 = vmul.f32 %v8491, %v8491
  %v9068 = vmul.f32 %v8492, %v8492
  %v9069 = vmul.f32 %v8493, %v8493
  %v9070 = vmul.f32 %v8494, %v8494
  %v9071 = vmul.f32 %v8495, %v8495
  %v9072 = vmul.f32 %v8496, %v8496
  %v9073 = vmul.f32 %v8497, %v8497
  %v9074 = vmul.f32 %v8498, %v8498
  %v9075 = vmul.f32 %v8499, %v8499
  %v9076 = vmul.f32 %v8500, %v8500
  %v9077 = vmul.f32 %v8501, %v8501
  %v9078 = vmul.f32 %v8502, %v8502
  %v9079 = vmul.f32 %v8503, %v8503
  %v9080 = vmul.f32 %v8504, %v8504
  %v9081 = vmul.f32 %v8505, %v8505
  %v9082 = vmul.f32 %v8506, %v8506
  %v9083 = vmul.f32 %v8507, %v8507
  %v9084 = vmul.f32 %v8508, %v8508
  %v9085 = vmul.f32 %v8509, %v8509
  %v9086 = vmul.f32 %v8510, %v8510
  %v9087 = vmul.f32 %v8511, %v8511
  %v9088 = vmul.f32 %v8512, %v8512
  %v9089 = vmul.f32 %v8513, %v8513
  %v9090 = vmul.f32 %v8514, %v8514
  %v9091 = vsub.f32 %v8899, %v8995
  %v9092 = vsub.f32 %v8900, %v8996
  %v9093 = vsub.f32 %v8901, %v8997
  %v9094 = vsub.f32 %v8902, %v8998
  %v9095 = vsub.f32 %v8903, %v8999
  %v9096 = vsub.f32 %v8904, %v9000
  %v9097 = vsub.f32 %v8905, %v9001
  %v9098 = vsub.f32 %v8906, %v9002
  %v9099 = vsub.f32 %v8907, %v9003
  %v9100 = vsub.f32 %v8908, %v9004
  %v9101 = vsub.f32 %v8909, %v9005
  %v9102 = vsub.f32 %v8910, %v9006
  %v9103 = vsub.f32 %v8911, %v9007
  %v9104 = vsub.f32 %v8912, %v9008
  %v9105 = vsub.f32 %v8913, %v9009
  %v9106 = vsub.f32 %v8914, %v9010
  %v9107 = vsub.f32 %v8915, %v9011
  %v9108 = vsub.f32 %v8916, %v9012
  %v9109 = vsub.f32 %v8917, %v9013
  %v9110 = vsub.f32 %v8918, %v9014
  %v9111 = vsub.f32 %v8919, %v9015
  %v9112 = vsub.f32 %v8920, %v9016
  %v9113 = vsub.f32 %v8921, %v9017
  %v9114 = vsub.f32 %v8922, %v9018
  %v9115 = vsub.f32 %v8923, %v9019
  %v9116 = vsub.f32 %v8924, %v9020
  %v9117 = vsub.f32 %v8925, %v9021
  %v9118 = vsub.f32 %v8926, %v9022
  %v9119 = vsub.f32 %v8927, %v9023
  %v9120 = vsub.f32 %v8928, %v9024
  %v9121 = vsub.f32 %v8929, %v9025
  %v9122 = vsub.f32 %v8930, %v9026
  %v9123 = vsub.f32 %v8931, %v9027
  %v9124 = vsub.f32 %v8932, %v9028
  %v9125 = vsub.f32 %v8933, %v9029
  %v9126 = vsub.f32 %v8934, %v9030
  %v9127 = vsub.f32 %v8935, %v9031
  %v9128 = vsub.f32 %v8936, %v9032
  %v9129 = vsub.f32 %v8937, %v9033
  %v9130 = vsub.f32 %v8938, %v9034
  %v9131 = vsub.f32 %v8939, %v9035
  %v9132 = vsub.f32 %v8940, %v9036
  %v9133 = vsub.f32 %v8941, %v9037
  %v9134 = vsub.f32 %v8942, %v9038
  %v9135 = vsub.f32 %v8943, %v9039
  %v9136 = vsub.f32 %v8944, %v9040
  %v9137 = vsub.f32 %v8945, %v9041
  %v9138 = vsub.f32 %v8946, %v9042
  %v9139 = vsub.f32 %v8947, %v9043
  %v9140 = vsub.f32 %v8948, %v9044
  %v9141 = vsub.f32 %v8949, %v9045
  %v9142 = vsub.f32 %v8950, %v9046
  %v9143 = vsub.f32 %v8951, %v9047
  %v9144 = vsub.f32 %v8952, %v9048
  %v9145 = vsub.f32 %v8953, %v9049
  %v9146 = vsub.f32 %v8954, %v9050
  %v9147 = vsub.f32 %v8955, %v9051
  %v9148 = vsub.f32 %v8956, %v9052
  %v9149 = vsub.f32 %v8957, %v9053
  %v9150 = vsub.f32 %v8958, %v9054
  %v9151 = vsub.f32 %v8959, %v9055
  %v9152 = vsub.f32 %v8960, %v9056
  %v9153 = vsub.f32 %v8961, %v9057
  %v9154 = vsub.f32 %v8962, %v9058
  %v9155 = vsub.f32 %v8963, %v9059
  %v9156 = vsub.f32 %v8964, %v9060
  %v9157 = vsub.f32 %v8965, %v9061
  %v9158 = vsub.f32 %v8966, %v9062
  %v9159 = vsub.f32 %v8967, %v9063
  %v9160 = vsub.f32 %v8968, %v9064
  %v9161 = vsub.f32 %v8969, %v9065
  %v9162 = vsub.f32 %v8970, %v9066
  %v9163 = vsub.f32 %v8971, %v9067
  %v9164 = vsub.f32 %v8972, %v9068
  %v9165 = vsub.f32 %v8973, %v9069
  %v9166 = vsub.f32 %v8974, %v9070
  %v9167 = vsub.f32 %v8975, %v9071
  %v9168 = vsub.f32 %v8976, %v9072
  %v9169 = vsub.f32 %v8977, %v9073
  %v9170 = vsub.f32 %v8978, %v9074
  %v9171 = vsub.f32 %v8979, %v9075
  %v9172 = vsub.f32 %v8980, %v9076
  %v9173 = vsub.f32 %v8981, %v9077
  %v9174 = vsub.f32 %v8982, %v9078
  %v9175 = vsub.f32 %v8983, %v9079
  %v9176 = vsub.f32 %v8984, %v9080
  %v9177 = vsub.f32 %v8985, %v9081
  %v9178 = vsub.f32 %v8986, %v9082
  %v9179 = vsub.f32 %v8987, %v9083
  %v9180 = vsub.f32 %v8988, %v9084
  %v9181 = vsub.f32 %v8989, %v9085
  %v9182 = vsub.f32 %v8990, %v9086
  %v9183 = vsub.f32 %v8991, %v9087
  %v9184 = vsub.f32 %v8992, %v9088
  %v9185 = vsub.f32 %v8993, %v9089
  %v9186 = vsub.f32 %v8994, %v9090
  %v9187 = vmax.f32 %v9091, 0.0
  %v9188 = vmax.f32 %v9092, 0.0
  %v9189 = vmax.f32 %v9093, 0.0
  %v9190 = vmax.f32 %v9094, 0.0
  %v9191 = vmax.f32 %v9095, 0.0
  %v9192 = vmax.f32 %v9096, 0.0
  %v9193 = vmax.f32 %v9097, 0.0
  %v9194 = vmax.f32 %v9098, 0.0
  %v9195 = vmax.f32 %v9099, 0.0
  %v9196 = vmax.f32 %v9100, 0.0
  %v9197 = vmax.f32 %v9101, 0.0
  %v9198 = vmax.f32 %v9102, 0.0
  %v9199 = vmax.f32 %v9103, 0.0
  %v9200 = vmax.f32 %v9104, 0.0
  %v9201 = vmax.f32 %v9105, 0.0
  %v9202 = vmax.f32 %v9106, 0.0
  %v9203 = vmax.f32 %v9107, 0.0
  %v9204 = vmax.f32 %v9108, 0.0
  %v9205 = vmax.f32 %v9109, 0.0
  %v9206 = vmax.f32 %v9110, 0.0
  %v9207 = vmax.f32 %v9111, 0.0
  %v9208 = vmax.f32 %v9112, 0.0
  %v9209 = vmax.f32 %v9113, 0.0
  %v9210 = vmax.f32 %v9114, 0.0
  %v9211 = vmax.f32 %v9115, 0.0
  %v9212 = vmax.f32 %v9116, 0.0
  %v9213 = vmax.f32 %v9117, 0.0
  %v9214 = vmax.f32 %v9118, 0.0
  %v9215 = vmax.f32 %v9119, 0.0
  %v9216 = vmax.f32 %v9120, 0.0
  %v9217 = vmax.f32 %v9121, 0.0
  %v9218 = vmax.f32 %v9122, 0.0
  %v9219 = vmax.f32 %v9123, 0.0
  %v9220 = vmax.f32 %v9124, 0.0
  %v9221 = vmax.f32 %v9125, 0.0
  %v9222 = vmax.f32 %v9126, 0.0
  %v9223 = vmax.f32 %v9127, 0.0
  %v9224 = vmax.f32 %v9128, 0.0
  %v9225 = vmax.f32 %v9129, 0.0
  %v9226 = vmax.f32 %v9130, 0.0
  %v9227 = vmax.f32 %v9131, 0.0
  %v9228 = vmax.f32 %v9132, 0.0
  %v9229 = vmax.f32 %v9133, 0.0
  %v9230 = vmax.f32 %v9134, 0.0
  %v9231 = vmax.f32 %v9135, 0.0
  %v9232 = vmax.f32 %v9136, 0.0
  %v9233 = vmax.f32 %v9137, 0.0
  %v9234 = vmax.f32 %v9138, 0.0
  %v9235 = vmax.f32 %v9139, 0.0
  %v9236 = vmax.f32 %v9140, 0.0
  %v9237 = vmax.f32 %v9141, 0.0
  %v9238 = vmax.f32 %v9142, 0.0
  %v9239 = vmax.f32 %v9143, 0.0
  %v9240 = vmax.f32 %v9144, 0.0
  %v9241 = vmax.f32 %v9145, 0.0
  %v9242 = vmax.f32 %v9146, 0.0
  %v9243 = vmax.f32 %v9147, 0.0
  %v9244 = vmax.f32 %v9148, 0.0
  %v9245 = vmax.f32 %v9149, 0.0
  %v9246 = vmax.f32 %v9150, 0.0
  %v9247 = vmax.f32 %v9151, 0.0
  %v9248 = vmax.f32 %v9152, 0.0
  %v9249 = vmax.f32 %v9153, 0.0
  %v9250 = vmax.f32 %v9154, 0.0
  %v9251 = vmax.f32 %v9155, 0.0
  %v9252 = vmax.f32 %v9156, 0.0
  %v9253 = vmax.f32 %v9157, 0.0
  %v9254 = vmax.f32 %v9158, 0.0
  %v9255 = vmax.f32 %v9159, 0.0
  %v9256 = vmax.f32 %v9160, 0.0
  %v9257 = vmax.f32 %v9161, 0.0
  %v9258 = vmax.f32 %v9162, 0.0
  %v9259 = vmax.f32 %v9163, 0.0
  %v9260 = vmax.f32 %v9164, 0.0
  %v9261 = vmax.f32 %v9165, 0.0
  %v9262 = vmax.f32 %v9166, 0.0
  %v9263 = vmax.f32 %v9167, 0.0
  %v9264 = vmax.f32 %v9168, 0.0
  %v9265 = vmax.f32 %v9169, 0.0
  %v9266 = vmax.f32 %v9170, 0.0
  %v9267 = vmax.f32 %v9171, 0.0
  %v9268 = vmax.f32 %v9172, 0.0
  %v9269 = vmax.f32 %v9173, 0.0
  %v9270 = vmax.f32 %v9174, 0.0
  %v9271 = vmax.f32 %v9175, 0.0
  %v9272 = vmax.f32 %v9176, 0.0
  %v9273 = vmax.f32 %v9177, 0.0
  %v9274 = vmax.f32 %v9178, 0.0
  %v9275 = vmax.f32 %v9179, 0.0
  %v9276 = vmax.f32 %v9180, 0.0
  %v9277 = vmax.f32 %v9181, 0.0
  %v9278 = vmax.f32 %v9182, 0.0
  %v9279 = vmax.f32 %v9183, 0.0
  %v9280 = vmax.f32 %v9184, 0.0
  %v9281 = vmax.f32 %v9185, 0.0
  %v9282 = vmax.f32 %v9186, 0.0
  %v9283 = vsub.f32 %v8035, %v8419
  %v9284 = vsub.f32 %v8036, %v8420
  %v9285 = vsub.f32 %v8037, %v8421
  %v9286 = vsub.f32 %v8038, %v8422
  %v9287 = vsub.f32 %v8039, %v8423
  %v9288 = vsub.f32 %v8040, %v8424
  %v9289 = vsub.f32 %v8041, %v8425
  %v9290 = vsub.f32 %v8042, %v8426
  %v9291 = vsub.f32 %v8043, %v8427
  %v9292 = vsub.f32 %v8044, %v8428
  %v9293 = vsub.f32 %v8045, %v8429
  %v9294 = vsub.f32 %v8046, %v8430
  %v9295 = vsub.f32 %v8047, %v8431
  %v9296 = vsub.f32 %v8048, %v8432
  %v9297 = vsub.f32 %v8049, %v8433
  %v9298 = vsub.f32 %v8050, %v8434
  %v9299 = vsub.f32 %v8051, %v8435
  %v9300 = vsub.f32 %v8052, %v8436
  %v9301 = vsub.f32 %v8053, %v8437
  %v9302 = vsub.f32 %v8054, %v8438
  %v9303 = vsub.f32 %v8055, %v8439
  %v9304 = vsub.f32 %v8056, %v8440
  %v9305 = vsub.f32 %v8057, %v8441
  %v9306 = vsub.f32 %v8058, %v8442
  %v9307 = vsub.f32 %v8059, %v8443
  %v9308 = vsub.f32 %v8060, %v8444
  %v9309 = vsub.f32 %v8061, %v8445
  %v9310 = vsub.f32 %v8062, %v8446
  %v9311 = vsub.f32 %v8063, %v8447
  %v9312 = vsub.f32 %v8064, %v8448
  %v9313 = vsub.f32 %v8065, %v8449
  %v9314 = vsub.f32 %v8066, %v8450
  %v9315 = vsub.f32 %v8067, %v8451
  %v9316 = vsub.f32 %v8068, %v8452
  %v9317 = vsub.f32 %v8069, %v8453
  %v9318 = vsub.f32 %v8070, %v8454
  %v9319 = vsub.f32 %v8071, %v8455
  %v9320 = vsub.f32 %v8072, %v8456
  %v9321 = vsub.f32 %v8073, %v8457
  %v9322 = vsub.f32 %v8074, %v8458
  %v9323 = vsub.f32 %v8075, %v8459
  %v9324 = vsub.f32 %v8076, %v8460
  %v9325 = vsub.f32 %v8077, %v8461
  %v9326 = vsub.f32 %v8078, %v8462
  %v9327 = vsub.f32 %v8079, %v8463
  %v9328 = vsub.f32 %v8080, %v8464
  %v9329 = vsub.f32 %v8081, %v8465
  %v9330 = vsub.f32 %v8082, %v8466
  %v9331 = vsub.f32 %v8083, %v8467
  %v9332 = vsub.f32 %v8084, %v8468
  %v9333 = vsub.f32 %v8085, %v8469
  %v9334 = vsub.f32 %v8086, %v8470
  %v9335 = vsub.f32 %v8087, %v8471
  %v9336 = vsub.f32 %v8088, %v8472
  %v9337 = vsub.f32 %v8089, %v8473
  %v9338 = vsub.f32 %v8090, %v8474
  %v9339 = vsub.f32 %v8091, %v8475
  %v9340 = vsub.f32 %v8092, %v8476
  %v9341 = vsub.f32 %v8093, %v8477
  %v9342 = vsub.f32 %v8094, %v8478
  %v9343 = vsub.f32 %v8095, %v8479
  %v9344 = vsub.f32 %v8096, %v8480
  %v9345 = vsub.f32 %v8097, %v8481
  %v9346 = vsub.f32 %v8098, %v8482
  %v9347 = vsub.f32 %v8099, %v8483
  %v9348 = vsub.f32 %v8100, %v8484
  %v9349 = vsub.f32 %v8101, %v8485
  %v9350 = vsub.f32 %v8102, %v8486
  %v9351 = vsub.f32 %v8103, %v8487
  %v9352 = vsub.f32 %v8104, %v8488
  %v9353 = vsub.f32 %v8105, %v8489
  %v9354 = vsub.f32 %v8106, %v8490
  %v9355 = vsub.f32 %v8107, %v8491
  %v9356 = vsub.f32 %v8108, %v8492
  %v9357 = vsub.f32 %v8109, %v8493
  %v9358 = vsub.f32 %v8110, %v8494
  %v9359 = vsub.f32 %v8111, %v8495
  %v9360 = vsub.f32 %v8112, %v8496
  %v9361 = vsub.f32 %v8113, %v8497
  %v9362 = vsub.f32 %v8114, %v8498
  %v9363 = vsub.f32 %v8115, %v8499
  %v9364 = vsub.f32 %v8116, %v8500
  %v9365 = vsub.f32 %v8117, %v8501
  %v9366 = vsub.f32 %v8118, %v8502
  %v9367 = vsub.f32 %v8119, %v8503
  %v9368 = vsub.f32 %v8120, %v8504
  %v9369 = vsub.f32 %v8121, %v8505
  %v9370 = vsub.f32 %v8122, %v8506
  %v9371 = vsub.f32 %v8123, %v8507
  %v9372 = vsub.f32 %v8124, %v8508
  %v9373 = vsub.f32 %v8125, %v8509
  %v9374 = vsub.f32 %v8126, %v8510
  %v9375 = vsub.f32 %v8127, %v8511
  %v9376 = vsub.f32 %v8128, %v8512
  %v9377 = vsub.f32 %v8129, %v8513
  %v9378 = vsub.f32 %v8130, %v8514
  %v9379 = vadd.f32 %v9187, 1e-05
  %v9380 = vadd.f32 %v9188, 1e-05
  %v9381 = vadd.f32 %v9189, 1e-05
  %v9382 = vadd.f32 %v9190, 1e-05
  %v9383 = vadd.f32 %v9191, 1e-05
  %v9384 = vadd.f32 %v9192, 1e-05
  %v9385 = vadd.f32 %v9193, 1e-05
  %v9386 = vadd.f32 %v9194, 1e-05
  %v9387 = vadd.f32 %v9195, 1e-05
  %v9388 = vadd.f32 %v9196, 1e-05
  %v9389 = vadd.f32 %v9197, 1e-05
  %v9390 = vadd.f32 %v9198, 1e-05
  %v9391 = vadd.f32 %v9199, 1e-05
  %v9392 = vadd.f32 %v9200, 1e-05
  %v9393 = vadd.f32 %v9201, 1e-05
  %v9394 = vadd.f32 %v9202, 1e-05
  %v9395 = vadd.f32 %v9203, 1e-05
  %v9396 = vadd.f32 %v9204, 1e-05
  %v9397 = vadd.f32 %v9205, 1e-05
  %v9398 = vadd.f32 %v9206, 1e-05
  %v9399 = vadd.f32 %v9207, 1e-05
  %v9400 = vadd.f32 %v9208, 1e-05
  %v9401 = vadd.f32 %v9209, 1e-05
  %v9402 = vadd.f32 %v9210, 1e-05
  %v9403 = vadd.f32 %v9211, 1e-05
  %v9404 = vadd.f32 %v9212, 1e-05
  %v9405 = vadd.f32 %v9213, 1e-05
  %v9406 = vadd.f32 %v9214, 1e-05
  %v9407 = vadd.f32 %v9215, 1e-05
  %v9408 = vadd.f32 %v9216, 1e-05
  %v9409 = vadd.f32 %v9217, 1e-05
  %v9410 = vadd.f32 %v9218, 1e-05
  %v9411 = vadd.f32 %v9219, 1e-05
  %v9412 = vadd.f32 %v9220, 1e-05
  %v9413 = vadd.f32 %v9221, 1e-05
  %v9414 = vadd.f32 %v9222, 1e-05
  %v9415 = vadd.f32 %v9223, 1e-05
  %v9416 = vadd.f32 %v9224, 1e-05
  %v9417 = vadd.f32 %v9225, 1e-05
  %v9418 = vadd.f32 %v9226, 1e-05
  %v9419 = vadd.f32 %v9227, 1e-05
  %v9420 = vadd.f32 %v9228, 1e-05
  %v9421 = vadd.f32 %v9229, 1e-05
  %v9422 = vadd.f32 %v9230, 1e-05
  %v9423 = vadd.f32 %v9231, 1e-05
  %v9424 = vadd.f32 %v9232, 1e-05
  %v9425 = vadd.f32 %v9233, 1e-05
  %v9426 = vadd.f32 %v9234, 1e-05
  %v9427 = vadd.f32 %v9235, 1e-05
  %v9428 = vadd.f32 %v9236, 1e-05
  %v9429 = vadd.f32 %v9237, 1e-05
  %v9430 = vadd.f32 %v9238, 1e-05
  %v9431 = vadd.f32 %v9239, 1e-05
  %v9432 = vadd.f32 %v9240, 1e-05
  %v9433 = vadd.f32 %v9241, 1e-05
  %v9434 = vadd.f32 %v9242, 1e-05
  %v9435 = vadd.f32 %v9243, 1e-05
  %v9436 = vadd.f32 %v9244, 1e-05
  %v9437 = vadd.f32 %v9245, 1e-05
  %v9438 = vadd.f32 %v9246, 1e-05
  %v9439 = vadd.f32 %v9247, 1e-05
  %v9440 = vadd.f32 %v9248, 1e-05
  %v9441 = vadd.f32 %v9249, 1e-05
  %v9442 = vadd.f32 %v9250, 1e-05
  %v9443 = vadd.f32 %v9251, 1e-05
  %v9444 = vadd.f32 %v9252, 1e-05
  %v9445 = vadd.f32 %v9253, 1e-05
  %v9446 = vadd.f32 %v9254, 1e-05
  %v9447 = vadd.f32 %v9255, 1e-05
  %v9448 = vadd.f32 %v9256, 1e-05
  %v9449 = vadd.f32 %v9257, 1e-05
  %v9450 = vadd.f32 %v9258, 1e-05
  %v9451 = vadd.f32 %v9259, 1e-05
  %v9452 = vadd.f32 %v9260, 1e-05
  %v9453 = vadd.f32 %v9261, 1e-05
  %v9454 = vadd.f32 %v9262, 1e-05
  %v9455 = vadd.f32 %v9263, 1e-05
  %v9456 = vadd.f32 %v9264, 1e-05
  %v9457 = vadd.f32 %v9265, 1e-05
  %v9458 = vadd.f32 %v9266, 1e-05
  %v9459 = vadd.f32 %v9267, 1e-05
  %v9460 = vadd.f32 %v9268, 1e-05
  %v9461 = vadd.f32 %v9269, 1e-05
  %v9462 = vadd.f32 %v9270, 1e-05
  %v9463 = vadd.f32 %v9271, 1e-05
  %v9464 = vadd.f32 %v9272, 1e-05
  %v9465 = vadd.f32 %v9273, 1e-05
  %v9466 = vadd.f32 %v9274, 1e-05
  %v9467 = vadd.f32 %v9275, 1e-05
  %v9468 = vadd.f32 %v9276, 1e-05
  %v9469 = vadd.f32 %v9277, 1e-05
  %v9470 = vadd.f32 %v9278, 1e-05
  %v9471 = vadd.f32 %v9279, 1e-05
  %v9472 = vadd.f32 %v9280, 1e-05
  %v9473 = vadd.f32 %v9281, 1e-05
  %v9474 = vadd.f32 %v9282, 1e-05
  %v9475 = vrsqrt.pop %v9379
  %v9476 = vmul.f32 %v9475, %v9379
  %v9477 = vmul.f32 %v9476, %v9475
  %v9478 = vmul.f32 0.5, %v9477
  %v9479 = vsub.f32 1.5, %v9478
  %v9480 = vmul.f32 %v9475, %v9479
  %vm9481 = vweird.f32 %v9379
  %vm9482 = vweird.f32 %v9475
  %vm9483 = vmor %vm9481, %vm9482
  %v9484 = vsel %vm9483, %v9475, %v9480
  %v9485 = vrsqrt.pop %v9380
  %v9486 = vmul.f32 %v9485, %v9380
  %v9487 = vmul.f32 %v9486, %v9485
  %v9488 = vmul.f32 0.5, %v9487
  %v9489 = vsub.f32 1.5, %v9488
  %v9490 = vmul.f32 %v9485, %v9489
  %vm9491 = vweird.f32 %v9380
  %vm9492 = vweird.f32 %v9485
  %vm9493 = vmor %vm9491, %vm9492
  %v9494 = vsel %vm9493, %v9485, %v9490
  %v9495 = vrsqrt.pop %v9381
  %v9496 = vmul.f32 %v9495, %v9381
  %v9497 = vmul.f32 %v9496, %v9495
  %v9498 = vmul.f32 0.5, %v9497
  %v9499 = vsub.f32 1.5, %v9498
  %v9500 = vmul.f32 %v9495, %v9499
  %vm9501 = vweird.f32 %v9381
  %vm9502 = vweird.f32 %v9495
  %vm9503 = vmor %vm9501, %vm9502
  %v9504 = vsel %vm9503, %v9495, %v9500
  %v9505 = vrsqrt.pop %v9382
  %v9506 = vmul.f32 %v9505, %v9382
  %v9507 = vmul.f32 %v9506, %v9505
  %v9508 = vmul.f32 0.5, %v9507
  %v9509 = vsub.f32 1.5, %v9508
  %v9510 = vmul.f32 %v9505, %v9509
  %vm9511 = vweird.f32 %v9382
  %vm9512 = vweird.f32 %v9505
  %vm9513 = vmor %vm9511, %vm9512
  %v9514 = vsel %vm9513, %v9505, %v9510
  %v9515 = vrsqrt.pop %v9383
  %v9516 = vmul.f32 %v9515, %v9383
  %v9517 = vmul.f32 %v9516, %v9515
  %v9518 = vmul.f32 0.5, %v9517
  %v9519 = vsub.f32 1.5, %v9518
  %v9520 = vmul.f32 %v9515, %v9519
  %vm9521 = vweird.f32 %v9383
  %vm9522 = vweird.f32 %v9515
  %vm9523 = vmor %vm9521, %vm9522
  %v9524 = vsel %vm9523, %v9515, %v9520
  %v9525 = vrsqrt.pop %v9384
  %v9526 = vmul.f32 %v9525, %v9384
  %v9527 = vmul.f32 %v9526, %v9525
  %v9528 = vmul.f32 0.5, %v9527
  %v9529 = vsub.f32 1.5, %v9528
  %v9530 = vmul.f32 %v9525, %v9529
  %vm9531 = vweird.f32 %v9384
  %vm9532 = vweird.f32 %v9525
  %vm9533 = vmor %vm9531, %vm9532
  %v9534 = vsel %vm9533, %v9525, %v9530
  %v9535 = vrsqrt.pop %v9385
  %v9536 = vmul.f32 %v9535, %v9385
  %v9537 = vmul.f32 %v9536, %v9535
  %v9538 = vmul.f32 0.5, %v9537
  %v9539 = vsub.f32 1.5, %v9538
  %v9540 = vmul.f32 %v9535, %v9539
  %vm9541 = vweird.f32 %v9385
  %vm9542 = vweird.f32 %v9535
  %vm9543 = vmor %vm9541, %vm9542
  %v9544 = vsel %vm9543, %v9535, %v9540
  %v9545 = vrsqrt.pop %v9386
  %v9546 = vmul.f32 %v9545, %v9386
  %v9547 = vmul.f32 %v9546, %v9545
  %v9548 = vmul.f32 0.5, %v9547
  %v9549 = vsub.f32 1.5, %v9548
  %v9550 = vmul.f32 %v9545, %v9549
  %vm9551 = vweird.f32 %v9386
  %vm9552 = vweird.f32 %v9545
  %vm9553 = vmor %vm9551, %vm9552
  %v9554 = vsel %vm9553, %v9545, %v9550
  %v9555 = vrsqrt.pop %v9387
  %v9556 = vmul.f32 %v9555, %v9387
  %v9557 = vmul.f32 %v9556, %v9555
  %v9558 = vmul.f32 0.5, %v9557
  %v9559 = vsub.f32 1.5, %v9558
  %v9560 = vmul.f32 %v9555, %v9559
  %vm9561 = vweird.f32 %v9387
  %vm9562 = vweird.f32 %v9555
  %vm9563 = vmor %vm9561, %vm9562
  %v9564 = vsel %vm9563, %v9555, %v9560
  %v9565 = vrsqrt.pop %v9388
  %v9566 = vmul.f32 %v9565, %v9388
  %v9567 = vmul.f32 %v9566, %v9565
  %v9568 = vmul.f32 0.5, %v9567
  %v9569 = vsub.f32 1.5, %v9568
  %v9570 = vmul.f32 %v9565, %v9569
  %vm9571 = vweird.f32 %v9388
  %vm9572 = vweird.f32 %v9565
  %vm9573 = vmor %vm9571, %vm9572
  %v9574 = vsel %vm9573, %v9565, %v9570
  %v9575 = vrsqrt.pop %v9389
  %v9576 = vmul.f32 %v9575, %v9389
  %v9577 = vmul.f32 %v9576, %v9575
  %v9578 = vmul.f32 0.5, %v9577
  %v9579 = vsub.f32 1.5, %v9578
  %v9580 = vmul.f32 %v9575, %v9579
  %vm9581 = vweird.f32 %v9389
  %vm9582 = vweird.f32 %v9575
  %vm9583 = vmor %vm9581, %vm9582
  %v9584 = vsel %vm9583, %v9575, %v9580
  %v9585 = vrsqrt.pop %v9390
  %v9586 = vmul.f32 %v9585, %v9390
  %v9587 = vmul.f32 %v9586, %v9585
  %v9588 = vmul.f32 0.5, %v9587
  %v9589 = vsub.f32 1.5, %v9588
  %v9590 = vmul.f32 %v9585, %v9589
  %vm9591 = vweird.f32 %v9390
  %vm9592 = vweird.f32 %v9585
  %vm9593 = vmor %vm9591, %vm9592
  %v9594 = vsel %vm9593, %v9585, %v9590
  %v9595 = vrsqrt.pop %v9391
  %v9596 = vmul.f32 %v9595, %v9391
  %v9597 = vmul.f32 %v9596, %v9595
  %v9598 = vmul.f32 0.5, %v9597
  %v9599 = vsub.f32 1.5, %v9598
  %v9600 = vmul.f32 %v9595, %v9599
  %vm9601 = vweird.f32 %v9391
  %vm9602 = vweird.f32 %v9595
  %vm9603 = vmor %vm9601, %vm9602
  %v9604 = vsel %vm9603, %v9595, %v9600
  %v9605 = vrsqrt.pop %v9392
  %v9606 = vmul.f32 %v9605, %v9392
  %v9607 = vmul.f32 %v9606, %v9605
  %v9608 = vmul.f32 0.5, %v9607
  %v9609 = vsub.f32 1.5, %v9608
  %v9610 = vmul.f32 %v9605, %v9609
  %vm9611 = vweird.f32 %v9392
  %vm9612 = vweird.f32 %v9605
  %vm9613 = vmor %vm9611, %vm9612
  %v9614 = vsel %vm9613, %v9605, %v9610
  %v9615 = vrsqrt.pop %v9393
  %v9616 = vmul.f32 %v9615, %v9393
  %v9617 = vmul.f32 %v9616, %v9615
  %v9618 = vmul.f32 0.5, %v9617
  %v9619 = vsub.f32 1.5, %v9618
  %v9620 = vmul.f32 %v9615, %v9619
  %vm9621 = vweird.f32 %v9393
  %vm9622 = vweird.f32 %v9615
  %vm9623 = vmor %vm9621, %vm9622
  %v9624 = vsel %vm9623, %v9615, %v9620
  %v9625 = vrsqrt.pop %v9394
  %v9626 = vmul.f32 %v9625, %v9394
  %v9627 = vmul.f32 %v9626, %v9625
  %v9628 = vmul.f32 0.5, %v9627
  %v9629 = vsub.f32 1.5, %v9628
  %v9630 = vmul.f32 %v9625, %v9629
  %vm9631 = vweird.f32 %v9394
  %vm9632 = vweird.f32 %v9625
  %vm9633 = vmor %vm9631, %vm9632
  %v9634 = vsel %vm9633, %v9625, %v9630
  %v9635 = vrsqrt.pop %v9395
  %v9636 = vmul.f32 %v9635, %v9395
  %v9637 = vmul.f32 %v9636, %v9635
  %v9638 = vmul.f32 0.5, %v9637
  %v9639 = vsub.f32 1.5, %v9638
  %v9640 = vmul.f32 %v9635, %v9639
  %vm9641 = vweird.f32 %v9395
  %vm9642 = vweird.f32 %v9635
  %vm9643 = vmor %vm9641, %vm9642
  %v9644 = vsel %vm9643, %v9635, %v9640
  %v9645 = vrsqrt.pop %v9396
  %v9646 = vmul.f32 %v9645, %v9396
  %v9647 = vmul.f32 %v9646, %v9645
  %v9648 = vmul.f32 0.5, %v9647
  %v9649 = vsub.f32 1.5, %v9648
  %v9650 = vmul.f32 %v9645, %v9649
  %vm9651 = vweird.f32 %v9396
  %vm9652 = vweird.f32 %v9645
  %vm9653 = vmor %vm9651, %vm9652
  %v9654 = vsel %vm9653, %v9645, %v9650
  %v9655 = vrsqrt.pop %v9397
  %v9656 = vmul.f32 %v9655, %v9397
  %v9657 = vmul.f32 %v9656, %v9655
  %v9658 = vmul.f32 0.5, %v9657
  %v9659 = vsub.f32 1.5, %v9658
  %v9660 = vmul.f32 %v9655, %v9659
  %vm9661 = vweird.f32 %v9397
  %vm9662 = vweird.f32 %v9655
  %vm9663 = vmor %vm9661, %vm9662
  %v9664 = vsel %vm9663, %v9655, %v9660
  %v9665 = vrsqrt.pop %v9398
  %v9666 = vmul.f32 %v9665, %v9398
  %v9667 = vmul.f32 %v9666, %v9665
  %v9668 = vmul.f32 0.5, %v9667
  %v9669 = vsub.f32 1.5, %v9668
  %v9670 = vmul.f32 %v9665, %v9669
  %vm9671 = vweird.f32 %v9398
  %vm9672 = vweird.f32 %v9665
  %vm9673 = vmor %vm9671, %vm9672
  %v9674 = vsel %vm9673, %v9665, %v9670
  %v9675 = vrsqrt.pop %v9399
  %v9676 = vmul.f32 %v9675, %v9399
  %v9677 = vmul.f32 %v9676, %v9675
  %v9678 = vmul.f32 0.5, %v9677
  %v9679 = vsub.f32 1.5, %v9678
  %v9680 = vmul.f32 %v9675, %v9679
  %vm9681 = vweird.f32 %v9399
  %vm9682 = vweird.f32 %v9675
  %vm9683 = vmor %vm9681, %vm9682
  %v9684 = vsel %vm9683, %v9675, %v9680
  %v9685 = vrsqrt.pop %v9400
  %v9686 = vmul.f32 %v9685, %v9400
  %v9687 = vmul.f32 %v9686, %v9685
  %v9688 = vmul.f32 0.5, %v9687
  %v9689 = vsub.f32 1.5, %v9688
  %v9690 = vmul.f32 %v9685, %v9689
  %vm9691 = vweird.f32 %v9400
  %vm9692 = vweird.f32 %v9685
  %vm9693 = vmor %vm9691, %vm9692
  %v9694 = vsel %vm9693, %v9685, %v9690
  %v9695 = vrsqrt.pop %v9401
  %v9696 = vmul.f32 %v9695, %v9401
  %v9697 = vmul.f32 %v9696, %v9695
  %v9698 = vmul.f32 0.5, %v9697
  %v9699 = vsub.f32 1.5, %v9698
  %v9700 = vmul.f32 %v9695, %v9699
  %vm9701 = vweird.f32 %v9401
  %vm9702 = vweird.f32 %v9695
  %vm9703 = vmor %vm9701, %vm9702
  %v9704 = vsel %vm9703, %v9695, %v9700
  %v9705 = vrsqrt.pop %v9402
  %v9706 = vmul.f32 %v9705, %v9402
  %v9707 = vmul.f32 %v9706, %v9705
  %v9708 = vmul.f32 0.5, %v9707
  %v9709 = vsub.f32 1.5, %v9708
  %v9710 = vmul.f32 %v9705, %v9709
  %vm9711 = vweird.f32 %v9402
  %vm9712 = vweird.f32 %v9705
  %vm9713 = vmor %vm9711, %vm9712
  %v9714 = vsel %vm9713, %v9705, %v9710
  %v9715 = vrsqrt.pop %v9403
  %v9716 = vmul.f32 %v9715, %v9403
  %v9717 = vmul.f32 %v9716, %v9715
  %v9718 = vmul.f32 0.5, %v9717
  %v9719 = vsub.f32 1.5, %v9718
  %v9720 = vmul.f32 %v9715, %v9719
  %vm9721 = vweird.f32 %v9403
  %vm9722 = vweird.f32 %v9715
  %vm9723 = vmor %vm9721, %vm9722
  %v9724 = vsel %vm9723, %v9715, %v9720
  %v9725 = vrsqrt.pop %v9404
  %v9726 = vmul.f32 %v9725, %v9404
  %v9727 = vmul.f32 %v9726, %v9725
  %v9728 = vmul.f32 0.5, %v9727
  %v9729 = vsub.f32 1.5, %v9728
  %v9730 = vmul.f32 %v9725, %v9729
  %vm9731 = vweird.f32 %v9404
  %vm9732 = vweird.f32 %v9725
  %vm9733 = vmor %vm9731, %vm9732
  %v9734 = vsel %vm9733, %v9725, %v9730
  %v9735 = vrsqrt.pop %v9405
  %v9736 = vmul.f32 %v9735, %v9405
  %v9737 = vmul.f32 %v9736, %v9735
  %v9738 = vmul.f32 0.5, %v9737
  %v9739 = vsub.f32 1.5, %v9738
  %v9740 = vmul.f32 %v9735, %v9739
  %vm9741 = vweird.f32 %v9405
  %vm9742 = vweird.f32 %v9735
  %vm9743 = vmor %vm9741, %vm9742
  %v9744 = vsel %vm9743, %v9735, %v9740
  %v9745 = vrsqrt.pop %v9406
  %v9746 = vmul.f32 %v9745, %v9406
  %v9747 = vmul.f32 %v9746, %v9745
  %v9748 = vmul.f32 0.5, %v9747
  %v9749 = vsub.f32 1.5, %v9748
  %v9750 = vmul.f32 %v9745, %v9749
  %vm9751 = vweird.f32 %v9406
  %vm9752 = vweird.f32 %v9745
  %vm9753 = vmor %vm9751, %vm9752
  %v9754 = vsel %vm9753, %v9745, %v9750
  %v9755 = vrsqrt.pop %v9407
  %v9756 = vmul.f32 %v9755, %v9407
  %v9757 = vmul.f32 %v9756, %v9755
  %v9758 = vmul.f32 0.5, %v9757
  %v9759 = vsub.f32 1.5, %v9758
  %v9760 = vmul.f32 %v9755, %v9759
  %vm9761 = vweird.f32 %v9407
  %vm9762 = vweird.f32 %v9755
  %vm9763 = vmor %vm9761, %vm9762
  %v9764 = vsel %vm9763, %v9755, %v9760
  %v9765 = vrsqrt.pop %v9408
  %v9766 = vmul.f32 %v9765, %v9408
  %v9767 = vmul.f32 %v9766, %v9765
  %v9768 = vmul.f32 0.5, %v9767
  %v9769 = vsub.f32 1.5, %v9768
  %v9770 = vmul.f32 %v9765, %v9769
  %vm9771 = vweird.f32 %v9408
  %vm9772 = vweird.f32 %v9765
  %vm9773 = vmor %vm9771, %vm9772
  %v9774 = vsel %vm9773, %v9765, %v9770
  %v9775 = vrsqrt.pop %v9409
  %v9776 = vmul.f32 %v9775, %v9409
  %v9777 = vmul.f32 %v9776, %v9775
  %v9778 = vmul.f32 0.5, %v9777
  %v9779 = vsub.f32 1.5, %v9778
  %v9780 = vmul.f32 %v9775, %v9779
  %vm9781 = vweird.f32 %v9409
  %vm9782 = vweird.f32 %v9775
  %vm9783 = vmor %vm9781, %vm9782
  %v9784 = vsel %vm9783, %v9775, %v9780
  %v9785 = vrsqrt.pop %v9410
  %v9786 = vmul.f32 %v9785, %v9410
  %v9787 = vmul.f32 %v9786, %v9785
  %v9788 = vmul.f32 0.5, %v9787
  %v9789 = vsub.f32 1.5, %v9788
  %v9790 = vmul.f32 %v9785, %v9789
  %vm9791 = vweird.f32 %v9410
  %vm9792 = vweird.f32 %v9785
  %vm9793 = vmor %vm9791, %vm9792
  %v9794 = vsel %vm9793, %v9785, %v9790
  %v9795 = vrsqrt.pop %v9411
  %v9796 = vmul.f32 %v9795, %v9411
  %v9797 = vmul.f32 %v9796, %v9795
  %v9798 = vmul.f32 0.5, %v9797
  %v9799 = vsub.f32 1.5, %v9798
  %v9800 = vmul.f32 %v9795, %v9799
  %vm9801 = vweird.f32 %v9411
  %vm9802 = vweird.f32 %v9795
  %vm9803 = vmor %vm9801, %vm9802
  %v9804 = vsel %vm9803, %v9795, %v9800
  %v9805 = vrsqrt.pop %v9412
  %v9806 = vmul.f32 %v9805, %v9412
  %v9807 = vmul.f32 %v9806, %v9805
  %v9808 = vmul.f32 0.5, %v9807
  %v9809 = vsub.f32 1.5, %v9808
  %v9810 = vmul.f32 %v9805, %v9809
  %vm9811 = vweird.f32 %v9412
  %vm9812 = vweird.f32 %v9805
  %vm9813 = vmor %vm9811, %vm9812
  %v9814 = vsel %vm9813, %v9805, %v9810
  %v9815 = vrsqrt.pop %v9413
  %v9816 = vmul.f32 %v9815, %v9413
  %v9817 = vmul.f32 %v9816, %v9815
  %v9818 = vmul.f32 0.5, %v9817
  %v9819 = vsub.f32 1.5, %v9818
  %v9820 = vmul.f32 %v9815, %v9819
  %vm9821 = vweird.f32 %v9413
  %vm9822 = vweird.f32 %v9815
  %vm9823 = vmor %vm9821, %vm9822
  %v9824 = vsel %vm9823, %v9815, %v9820
  %v9825 = vrsqrt.pop %v9414
  %v9826 = vmul.f32 %v9825, %v9414
  %v9827 = vmul.f32 %v9826, %v9825
  %v9828 = vmul.f32 0.5, %v9827
  %v9829 = vsub.f32 1.5, %v9828
  %v9830 = vmul.f32 %v9825, %v9829
  %vm9831 = vweird.f32 %v9414
  %vm9832 = vweird.f32 %v9825
  %vm9833 = vmor %vm9831, %vm9832
  %v9834 = vsel %vm9833, %v9825, %v9830
  %v9835 = vrsqrt.pop %v9415
  %v9836 = vmul.f32 %v9835, %v9415
  %v9837 = vmul.f32 %v9836, %v9835
  %v9838 = vmul.f32 0.5, %v9837
  %v9839 = vsub.f32 1.5, %v9838
  %v9840 = vmul.f32 %v9835, %v9839
  %vm9841 = vweird.f32 %v9415
  %vm9842 = vweird.f32 %v9835
  %vm9843 = vmor %vm9841, %vm9842
  %v9844 = vsel %vm9843, %v9835, %v9840
  %v9845 = vrsqrt.pop %v9416
  %v9846 = vmul.f32 %v9845, %v9416
  %v9847 = vmul.f32 %v9846, %v9845
  %v9848 = vmul.f32 0.5, %v9847
  %v9849 = vsub.f32 1.5, %v9848
  %v9850 = vmul.f32 %v9845, %v9849
  %vm9851 = vweird.f32 %v9416
  %vm9852 = vweird.f32 %v9845
  %vm9853 = vmor %vm9851, %vm9852
  %v9854 = vsel %vm9853, %v9845, %v9850
  %v9855 = vrsqrt.pop %v9417
  %v9856 = vmul.f32 %v9855, %v9417
  %v9857 = vmul.f32 %v9856, %v9855
  %v9858 = vmul.f32 0.5, %v9857
  %v9859 = vsub.f32 1.5, %v9858
  %v9860 = vmul.f32 %v9855, %v9859
  %vm9861 = vweird.f32 %v9417
  %vm9862 = vweird.f32 %v9855
  %vm9863 = vmor %vm9861, %vm9862
  %v9864 = vsel %vm9863, %v9855, %v9860
  %v9865 = vrsqrt.pop %v9418
  %v9866 = vmul.f32 %v9865, %v9418
  %v9867 = vmul.f32 %v9866, %v9865
  %v9868 = vmul.f32 0.5, %v9867
  %v9869 = vsub.f32 1.5, %v9868
  %v9870 = vmul.f32 %v9865, %v9869
  %vm9871 = vweird.f32 %v9418
  %vm9872 = vweird.f32 %v9865
  %vm9873 = vmor %vm9871, %vm9872
  %v9874 = vsel %vm9873, %v9865, %v9870
  %v9875 = vrsqrt.pop %v9419
  %v9876 = vmul.f32 %v9875, %v9419
  %v9877 = vmul.f32 %v9876, %v9875
  %v9878 = vmul.f32 0.5, %v9877
  %v9879 = vsub.f32 1.5, %v9878
  %v9880 = vmul.f32 %v9875, %v9879
  %vm9881 = vweird.f32 %v9419
  %vm9882 = vweird.f32 %v9875
  %vm9883 = vmor %vm9881, %vm9882
  %v9884 = vsel %vm9883, %v9875, %v9880
  %v9885 = vrsqrt.pop %v9420
  %v9886 = vmul.f32 %v9885, %v9420
  %v9887 = vmul.f32 %v9886, %v9885
  %v9888 = vmul.f32 0.5, %v9887
  %v9889 = vsub.f32 1.5, %v9888
  %v9890 = vmul.f32 %v9885, %v9889
  %vm9891 = vweird.f32 %v9420
  %vm9892 = vweird.f32 %v9885
  %vm9893 = vmor %vm9891, %vm9892
  %v9894 = vsel %vm9893, %v9885, %v9890
  %v9895 = vrsqrt.pop %v9421
  %v9896 = vmul.f32 %v9895, %v9421
  %v9897 = vmul.f32 %v9896, %v9895
  %v9898 = vmul.f32 0.5, %v9897
  %v9899 = vsub.f32 1.5, %v9898
  %v9900 = vmul.f32 %v9895, %v9899
  %vm9901 = vweird.f32 %v9421
  %vm9902 = vweird.f32 %v9895
  %vm9903 = vmor %vm9901, %vm9902
  %v9904 = vsel %vm9903, %v9895, %v9900
  %v9905 = vrsqrt.pop %v9422
  %v9906 = vmul.f32 %v9905, %v9422
  %v9907 = vmul.f32 %v9906, %v9905
  %v9908 = vmul.f32 0.5, %v9907
  %v9909 = vsub.f32 1.5, %v9908
  %v9910 = vmul.f32 %v9905, %v9909
  %vm9911 = vweird.f32 %v9422
  %vm9912 = vweird.f32 %v9905
  %vm9913 = vmor %vm9911, %vm9912
  %v9914 = vsel %vm9913, %v9905, %v9910
  %v9915 = vrsqrt.pop %v9423
  %v9916 = vmul.f32 %v9915, %v9423
  %v9917 = vmul.f32 %v9916, %v9915
  %v9918 = vmul.f32 0.5, %v9917
  %v9919 = vsub.f32 1.5, %v9918
  %v9920 = vmul.f32 %v9915, %v9919
  %vm9921 = vweird.f32 %v9423
  %vm9922 = vweird.f32 %v9915
  %vm9923 = vmor %vm9921, %vm9922
  %v9924 = vsel %vm9923, %v9915, %v9920
  %v9925 = vrsqrt.pop %v9424
  %v9926 = vmul.f32 %v9925, %v9424
  %v9927 = vmul.f32 %v9926, %v9925
  %v9928 = vmul.f32 0.5, %v9927
  %v9929 = vsub.f32 1.5, %v9928
  %v9930 = vmul.f32 %v9925, %v9929
  %vm9931 = vweird.f32 %v9424
  %vm9932 = vweird.f32 %v9925
  %vm9933 = vmor %vm9931, %vm9932
  %v9934 = vsel %vm9933, %v9925, %v9930
  %v9935 = vrsqrt.pop %v9425
  %v9936 = vmul.f32 %v9935, %v9425
  %v9937 = vmul.f32 %v9936, %v9935
  %v9938 = vmul.f32 0.5, %v9937
  %v9939 = vsub.f32 1.5, %v9938
  %v9940 = vmul.f32 %v9935, %v9939
  %vm9941 = vweird.f32 %v9425
  %vm9942 = vweird.f32 %v9935
  %vm9943 = vmor %vm9941, %vm9942
  %v9944 = vsel %vm9943, %v9935, %v9940
  %v9945 = vrsqrt.pop %v9426
  %v9946 = vmul.f32 %v9945, %v9426
  %v9947 = vmul.f32 %v9946, %v9945
  %v9948 = vmul.f32 0.5, %v9947
  %v9949 = vsub.f32 1.5, %v9948
  %v9950 = vmul.f32 %v9945, %v9949
  %vm9951 = vweird.f32 %v9426
  %vm9952 = vweird.f32 %v9945
  %vm9953 = vmor %vm9951, %vm9952
  %v9954 = vsel %vm9953, %v9945, %v9950
  %v9955 = vrsqrt.pop %v9427
  %v9956 = vmul.f32 %v9955, %v9427
  %v9957 = vmul.f32 %v9956, %v9955
  %v9958 = vmul.f32 0.5, %v9957
  %v9959 = vsub.f32 1.5, %v9958
  %v9960 = vmul.f32 %v9955, %v9959
  %vm9961 = vweird.f32 %v9427
  %vm9962 = vweird.f32 %v9955
  %vm9963 = vmor %vm9961, %vm9962
  %v9964 = vsel %vm9963, %v9955, %v9960
  %v9965 = vrsqrt.pop %v9428
  %v9966 = vmul.f32 %v9965, %v9428
  %v9967 = vmul.f32 %v9966, %v9965
  %v9968 = vmul.f32 0.5, %v9967
  %v9969 = vsub.f32 1.5, %v9968
  %v9970 = vmul.f32 %v9965, %v9969
  %vm9971 = vweird.f32 %v9428
  %vm9972 = vweird.f32 %v9965
  %vm9973 = vmor %vm9971, %vm9972
  %v9974 = vsel %vm9973, %v9965, %v9970
  %v9975 = vrsqrt.pop %v9429
  %v9976 = vmul.f32 %v9975, %v9429
  %v9977 = vmul.f32 %v9976, %v9975
  %v9978 = vmul.f32 0.5, %v9977
  %v9979 = vsub.f32 1.5, %v9978
  %v9980 = vmul.f32 %v9975, %v9979
  %vm9981 = vweird.f32 %v9429
  %vm9982 = vweird.f32 %v9975
  %vm9983 = vmor %vm9981, %vm9982
  %v9984 = vsel %vm9983, %v9975, %v9980
  %v9985 = vrsqrt.pop %v9430
  %v9986 = vmul.f32 %v9985, %v9430
  %v9987 = vmul.f32 %v9986, %v9985
  %v9988 = vmul.f32 0.5, %v9987
  %v9989 = vsub.f32 1.5, %v9988
  %v9990 = vmul.f32 %v9985, %v9989
  %vm9991 = vweird.f32 %v9430
  %vm9992 = vweird.f32 %v9985
  %vm9993 = vmor %vm9991, %vm9992
  %v9994 = vsel %vm9993, %v9985, %v9990
  %v9995 = vrsqrt.pop %v9431
  %v9996 = vmul.f32 %v9995, %v9431
  %v9997 = vmul.f32 %v9996, %v9995
  %v9998 = vmul.f32 0.5, %v9997
  %v9999 = vsub.f32 1.5, %v9998
  %v10000 = vmul.f32 %v9995, %v9999
  %vm10001 = vweird.f32 %v9431
  %vm10002 = vweird.f32 %v9995
  %vm10003 = vmor %vm10001, %vm10002
  %v10004 = vsel %vm10003, %v9995, %v10000
  %v10005 = vrsqrt.pop %v9432
  %v10006 = vmul.f32 %v10005, %v9432
  %v10007 = vmul.f32 %v10006, %v10005
  %v10008 = vmul.f32 0.5, %v10007
  %v10009 = vsub.f32 1.5, %v10008
  %v10010 = vmul.f32 %v10005, %v10009
  %vm10011 = vweird.f32 %v9432
  %vm10012 = vweird.f32 %v10005
  %vm10013 = vmor %vm10011, %vm10012
  %v10014 = vsel %vm10013, %v10005, %v10010
  %v10015 = vrsqrt.pop %v9433
  %v10016 = vmul.f32 %v10015, %v9433
  %v10017 = vmul.f32 %v10016, %v10015
  %v10018 = vmul.f32 0.5, %v10017
  %v10019 = vsub.f32 1.5, %v10018
  %v10020 = vmul.f32 %v10015, %v10019
  %vm10021 = vweird.f32 %v9433
  %vm10022 = vweird.f32 %v10015
  %vm10023 = vmor %vm10021, %vm10022
  %v10024 = vsel %vm10023, %v10015, %v10020
  %v10025 = vrsqrt.pop %v9434
  %v10026 = vmul.f32 %v10025, %v9434
  %v10027 = vmul.f32 %v10026, %v10025
  %v10028 = vmul.f32 0.5, %v10027
  %v10029 = vsub.f32 1.5, %v10028
  %v10030 = vmul.f32 %v10025, %v10029
  %vm10031 = vweird.f32 %v9434
  %vm10032 = vweird.f32 %v10025
  %vm10033 = vmor %vm10031, %vm10032
  %v10034 = vsel %vm10033, %v10025, %v10030
  %v10035 = vrsqrt.pop %v9435
  %v10036 = vmul.f32 %v10035, %v9435
  %v10037 = vmul.f32 %v10036, %v10035
  %v10038 = vmul.f32 0.5, %v10037
  %v10039 = vsub.f32 1.5, %v10038
  %v10040 = vmul.f32 %v10035, %v10039
  %vm10041 = vweird.f32 %v9435
  %vm10042 = vweird.f32 %v10035
  %vm10043 = vmor %vm10041, %vm10042
  %v10044 = vsel %vm10043, %v10035, %v10040
  %v10045 = vrsqrt.pop %v9436
  %v10046 = vmul.f32 %v10045, %v9436
  %v10047 = vmul.f32 %v10046, %v10045
  %v10048 = vmul.f32 0.5, %v10047
  %v10049 = vsub.f32 1.5, %v10048
  %v10050 = vmul.f32 %v10045, %v10049
  %vm10051 = vweird.f32 %v9436
  %vm10052 = vweird.f32 %v10045
  %vm10053 = vmor %vm10051, %vm10052
  %v10054 = vsel %vm10053, %v10045, %v10050
  %v10055 = vrsqrt.pop %v9437
  %v10056 = vmul.f32 %v10055, %v9437
  %v10057 = vmul.f32 %v10056, %v10055
  %v10058 = vmul.f32 0.5, %v10057
  %v10059 = vsub.f32 1.5, %v10058
  %v10060 = vmul.f32 %v10055, %v10059
  %vm10061 = vweird.f32 %v9437
  %vm10062 = vweird.f32 %v10055
  %vm10063 = vmor %vm10061, %vm10062
  %v10064 = vsel %vm10063, %v10055, %v10060
  %v10065 = vrsqrt.pop %v9438
  %v10066 = vmul.f32 %v10065, %v9438
  %v10067 = vmul.f32 %v10066, %v10065
  %v10068 = vmul.f32 0.5, %v10067
  %v10069 = vsub.f32 1.5, %v10068
  %v10070 = vmul.f32 %v10065, %v10069
  %vm10071 = vweird.f32 %v9438
  %vm10072 = vweird.f32 %v10065
  %vm10073 = vmor %vm10071, %vm10072
  %v10074 = vsel %vm10073, %v10065, %v10070
  %v10075 = vrsqrt.pop %v9439
  %v10076 = vmul.f32 %v10075, %v9439
  %v10077 = vmul.f32 %v10076, %v10075
  %v10078 = vmul.f32 0.5, %v10077
  %v10079 = vsub.f32 1.5, %v10078
  %v10080 = vmul.f32 %v10075, %v10079
  %vm10081 = vweird.f32 %v9439
  %vm10082 = vweird.f32 %v10075
  %vm10083 = vmor %vm10081, %vm10082
  %v10084 = vsel %vm10083, %v10075, %v10080
  %v10085 = vrsqrt.pop %v9440
  %v10086 = vmul.f32 %v10085, %v9440
  %v10087 = vmul.f32 %v10086, %v10085
  %v10088 = vmul.f32 0.5, %v10087
  %v10089 = vsub.f32 1.5, %v10088
  %v10090 = vmul.f32 %v10085, %v10089
  %vm10091 = vweird.f32 %v9440
  %vm10092 = vweird.f32 %v10085
  %vm10093 = vmor %vm10091, %vm10092
  %v10094 = vsel %vm10093, %v10085, %v10090
  %v10095 = vrsqrt.pop %v9441
  %v10096 = vmul.f32 %v10095, %v9441
  %v10097 = vmul.f32 %v10096, %v10095
  %v10098 = vmul.f32 0.5, %v10097
  %v10099 = vsub.f32 1.5, %v10098
  %v10100 = vmul.f32 %v10095, %v10099
  %vm10101 = vweird.f32 %v9441
  %vm10102 = vweird.f32 %v10095
  %vm10103 = vmor %vm10101, %vm10102
  %v10104 = vsel %vm10103, %v10095, %v10100
  %v10105 = vrsqrt.pop %v9442
  %v10106 = vmul.f32 %v10105, %v9442
  %v10107 = vmul.f32 %v10106, %v10105
  %v10108 = vmul.f32 0.5, %v10107
  %v10109 = vsub.f32 1.5, %v10108
  %v10110 = vmul.f32 %v10105, %v10109
  %vm10111 = vweird.f32 %v9442
  %vm10112 = vweird.f32 %v10105
  %vm10113 = vmor %vm10111, %vm10112
  %v10114 = vsel %vm10113, %v10105, %v10110
  %v10115 = vrsqrt.pop %v9443
  %v10116 = vmul.f32 %v10115, %v9443
  %v10117 = vmul.f32 %v10116, %v10115
  %v10118 = vmul.f32 0.5, %v10117
  %v10119 = vsub.f32 1.5, %v10118
  %v10120 = vmul.f32 %v10115, %v10119
  %vm10121 = vweird.f32 %v9443
  %vm10122 = vweird.f32 %v10115
  %vm10123 = vmor %vm10121, %vm10122
  %v10124 = vsel %vm10123, %v10115, %v10120
  %v10125 = vrsqrt.pop %v9444
  %v10126 = vmul.f32 %v10125, %v9444
  %v10127 = vmul.f32 %v10126, %v10125
  %v10128 = vmul.f32 0.5, %v10127
  %v10129 = vsub.f32 1.5, %v10128
  %v10130 = vmul.f32 %v10125, %v10129
  %vm10131 = vweird.f32 %v9444
  %vm10132 = vweird.f32 %v10125
  %vm10133 = vmor %vm10131, %vm10132
  %v10134 = vsel %vm10133, %v10125, %v10130
  %v10135 = vrsqrt.pop %v9445
  %v10136 = vmul.f32 %v10135, %v9445
  %v10137 = vmul.f32 %v10136, %v10135
  %v10138 = vmul.f32 0.5, %v10137
  %v10139 = vsub.f32 1.5, %v10138
  %v10140 = vmul.f32 %v10135, %v10139
  %vm10141 = vweird.f32 %v9445
  %vm10142 = vweird.f32 %v10135
  %vm10143 = vmor %vm10141, %vm10142
  %v10144 = vsel %vm10143, %v10135, %v10140
  %v10145 = vrsqrt.pop %v9446
  %v10146 = vmul.f32 %v10145, %v9446
  %v10147 = vmul.f32 %v10146, %v10145
  %v10148 = vmul.f32 0.5, %v10147
  %v10149 = vsub.f32 1.5, %v10148
  %v10150 = vmul.f32 %v10145, %v10149
  %vm10151 = vweird.f32 %v9446
  %vm10152 = vweird.f32 %v10145
  %vm10153 = vmor %vm10151, %vm10152
  %v10154 = vsel %vm10153, %v10145, %v10150
  %v10155 = vrsqrt.pop %v9447
  %v10156 = vmul.f32 %v10155, %v9447
  %v10157 = vmul.f32 %v10156, %v10155
  %v10158 = vmul.f32 0.5, %v10157
  %v10159 = vsub.f32 1.5, %v10158
  %v10160 = vmul.f32 %v10155, %v10159
  %vm10161 = vweird.f32 %v9447
  %vm10162 = vweird.f32 %v10155
  %vm10163 = vmor %vm10161, %vm10162
  %v10164 = vsel %vm10163, %v10155, %v10160
  %v10165 = vrsqrt.pop %v9448
  %v10166 = vmul.f32 %v10165, %v9448
  %v10167 = vmul.f32 %v10166, %v10165
  %v10168 = vmul.f32 0.5, %v10167
  %v10169 = vsub.f32 1.5, %v10168
  %v10170 = vmul.f32 %v10165, %v10169
  %vm10171 = vweird.f32 %v9448
  %vm10172 = vweird.f32 %v10165
  %vm10173 = vmor %vm10171, %vm10172
  %v10174 = vsel %vm10173, %v10165, %v10170
  %v10175 = vrsqrt.pop %v9449
  %v10176 = vmul.f32 %v10175, %v9449
  %v10177 = vmul.f32 %v10176, %v10175
  %v10178 = vmul.f32 0.5, %v10177
  %v10179 = vsub.f32 1.5, %v10178
  %v10180 = vmul.f32 %v10175, %v10179
  %vm10181 = vweird.f32 %v9449
  %vm10182 = vweird.f32 %v10175
  %vm10183 = vmor %vm10181, %vm10182
  %v10184 = vsel %vm10183, %v10175, %v10180
  %v10185 = vrsqrt.pop %v9450
  %v10186 = vmul.f32 %v10185, %v9450
  %v10187 = vmul.f32 %v10186, %v10185
  %v10188 = vmul.f32 0.5, %v10187
  %v10189 = vsub.f32 1.5, %v10188
  %v10190 = vmul.f32 %v10185, %v10189
  %vm10191 = vweird.f32 %v9450
  %vm10192 = vweird.f32 %v10185
  %vm10193 = vmor %vm10191, %vm10192
  %v10194 = vsel %vm10193, %v10185, %v10190
  %v10195 = vrsqrt.pop %v9451
  %v10196 = vmul.f32 %v10195, %v9451
  %v10197 = vmul.f32 %v10196, %v10195
  %v10198 = vmul.f32 0.5, %v10197
  %v10199 = vsub.f32 1.5, %v10198
  %v10200 = vmul.f32 %v10195, %v10199
  %vm10201 = vweird.f32 %v9451
  %vm10202 = vweird.f32 %v10195
  %vm10203 = vmor %vm10201, %vm10202
  %v10204 = vsel %vm10203, %v10195, %v10200
  %v10205 = vrsqrt.pop %v9452
  %v10206 = vmul.f32 %v10205, %v9452
  %v10207 = vmul.f32 %v10206, %v10205
  %v10208 = vmul.f32 0.5, %v10207
  %v10209 = vsub.f32 1.5, %v10208
  %v10210 = vmul.f32 %v10205, %v10209
  %vm10211 = vweird.f32 %v9452
  %vm10212 = vweird.f32 %v10205
  %vm10213 = vmor %vm10211, %vm10212
  %v10214 = vsel %vm10213, %v10205, %v10210
  %v10215 = vrsqrt.pop %v9453
  %v10216 = vmul.f32 %v10215, %v9453
  %v10217 = vmul.f32 %v10216, %v10215
  %v10218 = vmul.f32 0.5, %v10217
  %v10219 = vsub.f32 1.5, %v10218
  %v10220 = vmul.f32 %v10215, %v10219
  %vm10221 = vweird.f32 %v9453
  %vm10222 = vweird.f32 %v10215
  %vm10223 = vmor %vm10221, %vm10222
  %v10224 = vsel %vm10223, %v10215, %v10220
  %v10225 = vrsqrt.pop %v9454
  %v10226 = vmul.f32 %v10225, %v9454
  %v10227 = vmul.f32 %v10226, %v10225
  %v10228 = vmul.f32 0.5, %v10227
  %v10229 = vsub.f32 1.5, %v10228
  %v10230 = vmul.f32 %v10225, %v10229
  %vm10231 = vweird.f32 %v9454
  %vm10232 = vweird.f32 %v10225
  %vm10233 = vmor %vm10231, %vm10232
  %v10234 = vsel %vm10233, %v10225, %v10230
  %v10235 = vrsqrt.pop %v9455
  %v10236 = vmul.f32 %v10235, %v9455
  %v10237 = vmul.f32 %v10236, %v10235
  %v10238 = vmul.f32 0.5, %v10237
  %v10239 = vsub.f32 1.5, %v10238
  %v10240 = vmul.f32 %v10235, %v10239
  %vm10241 = vweird.f32 %v9455
  %vm10242 = vweird.f32 %v10235
  %vm10243 = vmor %vm10241, %vm10242
  %v10244 = vsel %vm10243, %v10235, %v10240
  %v10245 = vrsqrt.pop %v9456
  %v10246 = vmul.f32 %v10245, %v9456
  %v10247 = vmul.f32 %v10246, %v10245
  %v10248 = vmul.f32 0.5, %v10247
  %v10249 = vsub.f32 1.5, %v10248
  %v10250 = vmul.f32 %v10245, %v10249
  %vm10251 = vweird.f32 %v9456
  %vm10252 = vweird.f32 %v10245
  %vm10253 = vmor %vm10251, %vm10252
  %v10254 = vsel %vm10253, %v10245, %v10250
  %v10255 = vrsqrt.pop %v9457
  %v10256 = vmul.f32 %v10255, %v9457
  %v10257 = vmul.f32 %v10256, %v10255
  %v10258 = vmul.f32 0.5, %v10257
  %v10259 = vsub.f32 1.5, %v10258
  %v10260 = vmul.f32 %v10255, %v10259
  %vm10261 = vweird.f32 %v9457
  %vm10262 = vweird.f32 %v10255
  %vm10263 = vmor %vm10261, %vm10262
  %v10264 = vsel %vm10263, %v10255, %v10260
  %v10265 = vrsqrt.pop %v9458
  %v10266 = vmul.f32 %v10265, %v9458
  %v10267 = vmul.f32 %v10266, %v10265
  %v10268 = vmul.f32 0.5, %v10267
  %v10269 = vsub.f32 1.5, %v10268
  %v10270 = vmul.f32 %v10265, %v10269
  %vm10271 = vweird.f32 %v9458
  %vm10272 = vweird.f32 %v10265
  %vm10273 = vmor %vm10271, %vm10272
  %v10274 = vsel %vm10273, %v10265, %v10270
  %v10275 = vrsqrt.pop %v9459
  %v10276 = vmul.f32 %v10275, %v9459
  %v10277 = vmul.f32 %v10276, %v10275
  %v10278 = vmul.f32 0.5, %v10277
  %v10279 = vsub.f32 1.5, %v10278
  %v10280 = vmul.f32 %v10275, %v10279
  %vm10281 = vweird.f32 %v9459
  %vm10282 = vweird.f32 %v10275
  %vm10283 = vmor %vm10281, %vm10282
  %v10284 = vsel %vm10283, %v10275, %v10280
  %v10285 = vrsqrt.pop %v9460
  %v10286 = vmul.f32 %v10285, %v9460
  %v10287 = vmul.f32 %v10286, %v10285
  %v10288 = vmul.f32 0.5, %v10287
  %v10289 = vsub.f32 1.5, %v10288
  %v10290 = vmul.f32 %v10285, %v10289
  %vm10291 = vweird.f32 %v9460
  %vm10292 = vweird.f32 %v10285
  %vm10293 = vmor %vm10291, %vm10292
  %v10294 = vsel %vm10293, %v10285, %v10290
  %v10295 = vrsqrt.pop %v9461
  %v10296 = vmul.f32 %v10295, %v9461
  %v10297 = vmul.f32 %v10296, %v10295
  %v10298 = vmul.f32 0.5, %v10297
  %v10299 = vsub.f32 1.5, %v10298
  %v10300 = vmul.f32 %v10295, %v10299
  %vm10301 = vweird.f32 %v9461
  %vm10302 = vweird.f32 %v10295
  %vm10303 = vmor %vm10301, %vm10302
  %v10304 = vsel %vm10303, %v10295, %v10300
  %v10305 = vrsqrt.pop %v9462
  %v10306 = vmul.f32 %v10305, %v9462
  %v10307 = vmul.f32 %v10306, %v10305
  %v10308 = vmul.f32 0.5, %v10307
  %v10309 = vsub.f32 1.5, %v10308
  %v10310 = vmul.f32 %v10305, %v10309
  %vm10311 = vweird.f32 %v9462
  %vm10312 = vweird.f32 %v10305
  %vm10313 = vmor %vm10311, %vm10312
  %v10314 = vsel %vm10313, %v10305, %v10310
  %v10315 = vrsqrt.pop %v9463
  %v10316 = vmul.f32 %v10315, %v9463
  %v10317 = vmul.f32 %v10316, %v10315
  %v10318 = vmul.f32 0.5, %v10317
  %v10319 = vsub.f32 1.5, %v10318
  %v10320 = vmul.f32 %v10315, %v10319
  %vm10321 = vweird.f32 %v9463
  %vm10322 = vweird.f32 %v10315
  %vm10323 = vmor %vm10321, %vm10322
  %v10324 = vsel %vm10323, %v10315, %v10320
  %v10325 = vrsqrt.pop %v9464
  %v10326 = vmul.f32 %v10325, %v9464
  %v10327 = vmul.f32 %v10326, %v10325
  %v10328 = vmul.f32 0.5, %v10327
  %v10329 = vsub.f32 1.5, %v10328
  %v10330 = vmul.f32 %v10325, %v10329
  %vm10331 = vweird.f32 %v9464
  %vm10332 = vweird.f32 %v10325
  %vm10333 = vmor %vm10331, %vm10332
  %v10334 = vsel %vm10333, %v10325, %v10330
  %v10335 = vrsqrt.pop %v9465
  %v10336 = vmul.f32 %v10335, %v9465
  %v10337 = vmul.f32 %v10336, %v10335
  %v10338 = vmul.f32 0.5, %v10337
  %v10339 = vsub.f32 1.5, %v10338
  %v10340 = vmul.f32 %v10335, %v10339
  %vm10341 = vweird.f32 %v9465
  %vm10342 = vweird.f32 %v10335
  %vm10343 = vmor %vm10341, %vm10342
  %v10344 = vsel %vm10343, %v10335, %v10340
  %v10345 = vrsqrt.pop %v9466
  %v10346 = vmul.f32 %v10345, %v9466
  %v10347 = vmul.f32 %v10346, %v10345
  %v10348 = vmul.f32 0.5, %v10347
  %v10349 = vsub.f32 1.5, %v10348
  %v10350 = vmul.f32 %v10345, %v10349
  %vm10351 = vweird.f32 %v9466
  %vm10352 = vweird.f32 %v10345
  %vm10353 = vmor %vm10351, %vm10352
  %v10354 = vsel %vm10353, %v10345, %v10350
  %v10355 = vrsqrt.pop %v9467
  %v10356 = vmul.f32 %v10355, %v9467
  %v10357 = vmul.f32 %v10356, %v10355
  %v10358 = vmul.f32 0.5, %v10357
  %v10359 = vsub.f32 1.5, %v10358
  %v10360 = vmul.f32 %v10355, %v10359
  %vm10361 = vweird.f32 %v9467
  %vm10362 = vweird.f32 %v10355
  %vm10363 = vmor %vm10361, %vm10362
  %v10364 = vsel %vm10363, %v10355, %v10360
  %v10365 = vrsqrt.pop %v9468
  %v10366 = vmul.f32 %v10365, %v9468
  %v10367 = vmul.f32 %v10366, %v10365
  %v10368 = vmul.f32 0.5, %v10367
  %v10369 = vsub.f32 1.5, %v10368
  %v10370 = vmul.f32 %v10365, %v10369
  %vm10371 = vweird.f32 %v9468
  %vm10372 = vweird.f32 %v10365
  %vm10373 = vmor %vm10371, %vm10372
  %v10374 = vsel %vm10373, %v10365, %v10370
  %v10375 = vrsqrt.pop %v9469
  %v10376 = vmul.f32 %v10375, %v9469
  %v10377 = vmul.f32 %v10376, %v10375
  %v10378 = vmul.f32 0.5, %v10377
  %v10379 = vsub.f32 1.5, %v10378
  %v10380 = vmul.f32 %v10375, %v10379
  %vm10381 = vweird.f32 %v9469
  %vm10382 = vweird.f32 %v10375
  %vm10383 = vmor %vm10381, %vm10382
  %v10384 = vsel %vm10383, %v10375, %v10380
  %v10385 = vrsqrt.pop %v9470
  %v10386 = vmul.f32 %v10385, %v9470
  %v10387 = vmul.f32 %v10386, %v10385
  %v10388 = vmul.f32 0.5, %v10387
  %v10389 = vsub.f32 1.5, %v10388
  %v10390 = vmul.f32 %v10385, %v10389
  %vm10391 = vweird.f32 %v9470
  %vm10392 = vweird.f32 %v10385
  %vm10393 = vmor %vm10391, %vm10392
  %v10394 = vsel %vm10393, %v10385, %v10390
  %v10395 = vrsqrt.pop %v9471
  %v10396 = vmul.f32 %v10395, %v9471
  %v10397 = vmul.f32 %v10396, %v10395
  %v10398 = vmul.f32 0.5, %v10397
  %v10399 = vsub.f32 1.5, %v10398
  %v10400 = vmul.f32 %v10395, %v10399
  %vm10401 = vweird.f32 %v9471
  %vm10402 = vweird.f32 %v10395
  %vm10403 = vmor %vm10401, %vm10402
  %v10404 = vsel %vm10403, %v10395, %v10400
  %v10405 = vrsqrt.pop %v9472
  %v10406 = vmul.f32 %v10405, %v9472
  %v10407 = vmul.f32 %v10406, %v10405
  %v10408 = vmul.f32 0.5, %v10407
  %v10409 = vsub.f32 1.5, %v10408
  %v10410 = vmul.f32 %v10405, %v10409
  %vm10411 = vweird.f32 %v9472
  %vm10412 = vweird.f32 %v10405
  %vm10413 = vmor %vm10411, %vm10412
  %v10414 = vsel %vm10413, %v10405, %v10410
  %v10415 = vrsqrt.pop %v9473
  %v10416 = vmul.f32 %v10415, %v9473
  %v10417 = vmul.f32 %v10416, %v10415
  %v10418 = vmul.f32 0.5, %v10417
  %v10419 = vsub.f32 1.5, %v10418
  %v10420 = vmul.f32 %v10415, %v10419
  %vm10421 = vweird.f32 %v9473
  %vm10422 = vweird.f32 %v10415
  %vm10423 = vmor %vm10421, %vm10422
  %v10424 = vsel %vm10423, %v10415, %v10420
  %v10425 = vrsqrt.pop %v9474
  %v10426 = vmul.f32 %v10425, %v9474
  %v10427 = vmul.f32 %v10426, %v10425
  %v10428 = vmul.f32 0.5, %v10427
  %v10429 = vsub.f32 1.5, %v10428
  %v10430 = vmul.f32 %v10425, %v10429
  %vm10431 = vweird.f32 %v9474
  %vm10432 = vweird.f32 %v10425
  %vm10433 = vmor %vm10431, %vm10432
  %v10434 = vsel %vm10433, %v10425, %v10430
  %v10435 = vmul.f32 %v9283, %v9484
  %v10436 = vmul.f32 %v9284, %v9494
  %v10437 = vmul.f32 %v9285, %v9504
  %v10438 = vmul.f32 %v9286, %v9514
  %v10439 = vmul.f32 %v9287, %v9524
  %v10440 = vmul.f32 %v9288, %v9534
  %v10441 = vmul.f32 %v9289, %v9544
  %v10442 = vmul.f32 %v9290, %v9554
  %v10443 = vmul.f32 %v9291, %v9564
  %v10444 = vmul.f32 %v9292, %v9574
  %v10445 = vmul.f32 %v9293, %v9584
  %v10446 = vmul.f32 %v9294, %v9594
  %v10447 = vmul.f32 %v9295, %v9604
  %v10448 = vmul.f32 %v9296, %v9614
  %v10449 = vmul.f32 %v9297, %v9624
  %v10450 = vmul.f32 %v9298, %v9634
  %v10451 = vmul.f32 %v9299, %v9644
  %v10452 = vmul.f32 %v9300, %v9654
  %v10453 = vmul.f32 %v9301, %v9664
  %v10454 = vmul.f32 %v9302, %v9674
  %v10455 = vmul.f32 %v9303, %v9684
  %v10456 = vmul.f32 %v9304, %v9694
  %v10457 = vmul.f32 %v9305, %v9704
  %v10458 = vmul.f32 %v9306, %v9714
  %v10459 = vmul.f32 %v9307, %v9724
  %v10460 = vmul.f32 %v9308, %v9734
  %v10461 = vmul.f32 %v9309, %v9744
  %v10462 = vmul.f32 %v9310, %v9754
  %v10463 = vmul.f32 %v9311, %v9764
  %v10464 = vmul.f32 %v9312, %v9774
  %v10465 = vmul.f32 %v9313, %v9784
  %v10466 = vmul.f32 %v9314, %v9794
  %v10467 = vmul.f32 %v9315, %v9804
  %v10468 = vmul.f32 %v9316, %v9814
  %v10469 = vmul.f32 %v9317, %v9824
  %v10470 = vmul.f32 %v9318, %v9834
  %v10471 = vmul.f32 %v9319, %v9844
  %v10472 = vmul.f32 %v9320, %v9854
  %v10473 = vmul.f32 %v9321, %v9864
  %v10474 = vmul.f32 %v9322, %v9874
  %v10475 = vmul.f32 %v9323, %v9884
  %v10476 = vmul.f32 %v9324, %v9894
  %v10477 = vmul.f32 %v9325, %v9904
  %v10478 = vmul.f32 %v9326, %v9914
  %v10479 = vmul.f32 %v9327, %v9924
  %v10480 = vmul.f32 %v9328, %v9934
  %v10481 = vmul.f32 %v9329, %v9944
  %v10482 = vmul.f32 %v9330, %v9954
  %v10483 = vmul.f32 %v9331, %v9964
  %v10484 = vmul.f32 %v9332, %v9974
  %v10485 = vmul.f32 %v9333, %v9984
  %v10486 = vmul.f32 %v9334, %v9994
  %v10487 = vmul.f32 %v9335, %v10004
  %v10488 = vmul.f32 %v9336, %v10014
  %v10489 = vmul.f32 %v9337, %v10024
  %v10490 = vmul.f32 %v9338, %v10034
  %v10491 = vmul.f32 %v9339, %v10044
  %v10492 = vmul.f32 %v9340, %v10054
  %v10493 = vmul.f32 %v9341, %v10064
  %v10494 = vmul.f32 %v9342, %v10074
  %v10495 = vmul.f32 %v9343, %v10084
  %v10496 = vmul.f32 %v9344, %v10094
  %v10497 = vmul.f32 %v9345, %v10104
  %v10498 = vmul.f32 %v9346, %v10114
  %v10499 = vmul.f32 %v9347, %v10124
  %v10500 = vmul.f32 %v9348, %v10134
  %v10501 = vmul.f32 %v9349, %v10144
  %v10502 = vmul.f32 %v9350, %v10154
  %v10503 = vmul.f32 %v9351, %v10164
  %v10504 = vmul.f32 %v9352, %v10174
  %v10505 = vmul.f32 %v9353, %v10184
  %v10506 = vmul.f32 %v9354, %v10194
  %v10507 = vmul.f32 %v9355, %v10204
  %v10508 = vmul.f32 %v9356, %v10214
  %v10509 = vmul.f32 %v9357, %v10224
  %v10510 = vmul.f32 %v9358, %v10234
  %v10511 = vmul.f32 %v9359, %v10244
  %v10512 = vmul.f32 %v9360, %v10254
  %v10513 = vmul.f32 %v9361, %v10264
  %v10514 = vmul.f32 %v9362, %v10274
  %v10515 = vmul.f32 %v9363, %v10284
  %v10516 = vmul.f32 %v9364, %v10294
  %v10517 = vmul.f32 %v9365, %v10304
  %v10518 = vmul.f32 %v9366, %v10314
  %v10519 = vmul.f32 %v9367, %v10324
  %v10520 = vmul.f32 %v9368, %v10334
  %v10521 = vmul.f32 %v9369, %v10344
  %v10522 = vmul.f32 %v9370, %v10354
  %v10523 = vmul.f32 %v9371, %v10364
  %v10524 = vmul.f32 %v9372, %v10374
  %v10525 = vmul.f32 %v9373, %v10384
  %v10526 = vmul.f32 %v9374, %v10394
  %v10527 = vmul.f32 %v9375, %v10404
  %v10528 = vmul.f32 %v9376, %v10414
  %v10529 = vmul.f32 %v9377, %v10424
  %v10530 = vmul.f32 %v9378, %v10434
  %v10531 = vperm.slane %v33, 0
  %v10532 = vmul.f32 %v10435, %v10531
  %v10533 = vmul.f32 %v10436, %v10531
  %v10534 = vmul.f32 %v10437, %v10531
  %v10535 = vmul.f32 %v10438, %v10531
  %v10536 = vmul.f32 %v10439, %v10531
  %v10537 = vmul.f32 %v10440, %v10531
  %v10538 = vmul.f32 %v10441, %v10531
  %v10539 = vmul.f32 %v10442, %v10531
  %v10540 = vmul.f32 %v10443, %v10531
  %v10541 = vmul.f32 %v10444, %v10531
  %v10542 = vmul.f32 %v10445, %v10531
  %v10543 = vmul.f32 %v10446, %v10531
  %v10544 = vmul.f32 %v10447, %v10531
  %v10545 = vmul.f32 %v10448, %v10531
  %v10546 = vmul.f32 %v10449, %v10531
  %v10547 = vmul.f32 %v10450, %v10531
  %v10548 = vmul.f32 %v10451, %v10531
  %v10549 = vmul.f32 %v10452, %v10531
  %v10550 = vmul.f32 %v10453, %v10531
  %v10551 = vmul.f32 %v10454, %v10531
  %v10552 = vmul.f32 %v10455, %v10531
  %v10553 = vmul.f32 %v10456, %v10531
  %v10554 = vmul.f32 %v10457, %v10531
  %v10555 = vmul.f32 %v10458, %v10531
  %v10556 = vmul.f32 %v10459, %v10531
  %v10557 = vmul.f32 %v10460, %v10531
  %v10558 = vmul.f32 %v10461, %v10531
  %v10559 = vmul.f32 %v10462, %v10531
  %v10560 = vmul.f32 %v10463, %v10531
  %v10561 = vmul.f32 %v10464, %v10531
  %v10562 = vmul.f32 %v10465, %v10531
  %v10563 = vmul.f32 %v10466, %v10531
  %v10564 = vmul.f32 %v10467, %v10531
  %v10565 = vmul.f32 %v10468, %v10531
  %v10566 = vmul.f32 %v10469, %v10531
  %v10567 = vmul.f32 %v10470, %v10531
  %v10568 = vmul.f32 %v10471, %v10531
  %v10569 = vmul.f32 %v10472, %v10531
  %v10570 = vmul.f32 %v10473, %v10531
  %v10571 = vmul.f32 %v10474, %v10531
  %v10572 = vmul.f32 %v10475, %v10531
  %v10573 = vmul.f32 %v10476, %v10531
  %v10574 = vmul.f32 %v10477, %v10531
  %v10575 = vmul.f32 %v10478, %v10531
  %v10576 = vmul.f32 %v10479, %v10531
  %v10577 = vmul.f32 %v10480, %v10531
  %v10578 = vmul.f32 %v10481, %v10531
  %v10579 = vmul.f32 %v10482, %v10531
  %v10580 = vmul.f32 %v10483, %v10531
  %v10581 = vmul.f32 %v10484, %v10531
  %v10582 = vmul.f32 %v10485, %v10531
  %v10583 = vmul.f32 %v10486, %v10531
  %v10584 = vmul.f32 %v10487, %v10531
  %v10585 = vmul.f32 %v10488, %v10531
  %v10586 = vmul.f32 %v10489, %v10531
  %v10587 = vmul.f32 %v10490, %v10531
  %v10588 = vmul.f32 %v10491, %v10531
  %v10589 = vmul.f32 %v10492, %v10531
  %v10590 = vmul.f32 %v10493, %v10531
  %v10591 = vmul.f32 %v10494, %v10531
  %v10592 = vmul.f32 %v10495, %v10531
  %v10593 = vmul.f32 %v10496, %v10531
  %v10594 = vmul.f32 %v10497, %v10531
  %v10595 = vmul.f32 %v10498, %v10531
  %v10596 = vmul.f32 %v10499, %v10531
  %v10597 = vmul.f32 %v10500, %v10531
  %v10598 = vmul.f32 %v10501, %v10531
  %v10599 = vmul.f32 %v10502, %v10531
  %v10600 = vmul.f32 %v10503, %v10531
  %v10601 = vmul.f32 %v10504, %v10531
  %v10602 = vmul.f32 %v10505, %v10531
  %v10603 = vmul.f32 %v10506, %v10531
  %v10604 = vmul.f32 %v10507, %v10531
  %v10605 = vmul.f32 %v10508, %v10531
  %v10606 = vmul.f32 %v10509, %v10531
  %v10607 = vmul.f32 %v10510, %v10531
  %v10608 = vmul.f32 %v10511, %v10531
  %v10609 = vmul.f32 %v10512, %v10531
  %v10610 = vmul.f32 %v10513, %v10531
  %v10611 = vmul.f32 %v10514, %v10531
  %v10612 = vmul.f32 %v10515, %v10531
  %v10613 = vmul.f32 %v10516, %v10531
  %v10614 = vmul.f32 %v10517, %v10531
  %v10615 = vmul.f32 %v10518, %v10531
  %v10616 = vmul.f32 %v10519, %v10531
  %v10617 = vmul.f32 %v10520, %v10531
  %v10618 = vmul.f32 %v10521, %v10531
  %v10619 = vmul.f32 %v10522, %v10531
  %v10620 = vmul.f32 %v10523, %v10531
  %v10621 = vmul.f32 %v10524, %v10531
  %v10622 = vmul.f32 %v10525, %v10531
  %v10623 = vmul.f32 %v10526, %v10531
  %v10624 = vmul.f32 %v10527, %v10531
  %v10625 = vmul.f32 %v10528, %v10531
  %v10626 = vmul.f32 %v10529, %v10531
  %v10627 = vmul.f32 %v10530, %v10531
  %v10628 = vperm.slane %v34, 0
  %v10629 = vadd.f32 %v10532, %v10628
  %v10630 = vadd.f32 %v10533, %v10628
  %v10631 = vadd.f32 %v10534, %v10628
  %v10632 = vadd.f32 %v10535, %v10628
  %v10633 = vadd.f32 %v10536, %v10628
  %v10634 = vadd.f32 %v10537, %v10628
  %v10635 = vadd.f32 %v10538, %v10628
  %v10636 = vadd.f32 %v10539, %v10628
  %v10637 = vadd.f32 %v10540, %v10628
  %v10638 = vadd.f32 %v10541, %v10628
  %v10639 = vadd.f32 %v10542, %v10628
  %v10640 = vadd.f32 %v10543, %v10628
  %v10641 = vadd.f32 %v10544, %v10628
  %v10642 = vadd.f32 %v10545, %v10628
  %v10643 = vadd.f32 %v10546, %v10628
  %v10644 = vadd.f32 %v10547, %v10628
  %v10645 = vadd.f32 %v10548, %v10628
  %v10646 = vadd.f32 %v10549, %v10628
  %v10647 = vadd.f32 %v10550, %v10628
  %v10648 = vadd.f32 %v10551, %v10628
  %v10649 = vadd.f32 %v10552, %v10628
  %v10650 = vadd.f32 %v10553, %v10628
  %v10651 = vadd.f32 %v10554, %v10628
  %v10652 = vadd.f32 %v10555, %v10628
  %v10653 = vadd.f32 %v10556, %v10628
  %v10654 = vadd.f32 %v10557, %v10628
  %v10655 = vadd.f32 %v10558, %v10628
  %v10656 = vadd.f32 %v10559, %v10628
  %v10657 = vadd.f32 %v10560, %v10628
  %v10658 = vadd.f32 %v10561, %v10628
  %v10659 = vadd.f32 %v10562, %v10628
  %v10660 = vadd.f32 %v10563, %v10628
  %v10661 = vadd.f32 %v10564, %v10628
  %v10662 = vadd.f32 %v10565, %v10628
  %v10663 = vadd.f32 %v10566, %v10628
  %v10664 = vadd.f32 %v10567, %v10628
  %v10665 = vadd.f32 %v10568, %v10628
  %v10666 = vadd.f32 %v10569, %v10628
  %v10667 = vadd.f32 %v10570, %v10628
  %v10668 = vadd.f32 %v10571, %v10628
  %v10669 = vadd.f32 %v10572, %v10628
  %v10670 = vadd.f32 %v10573, %v10628
  %v10671 = vadd.f32 %v10574, %v10628
  %v10672 = vadd.f32 %v10575, %v10628
  %v10673 = vadd.f32 %v10576, %v10628
  %v10674 = vadd.f32 %v10577, %v10628
  %v10675 = vadd.f32 %v10578, %v10628
  %v10676 = vadd.f32 %v10579, %v10628
  %v10677 = vadd.f32 %v10580, %v10628
  %v10678 = vadd.f32 %v10581, %v10628
  %v10679 = vadd.f32 %v10582, %v10628
  %v10680 = vadd.f32 %v10583, %v10628
  %v10681 = vadd.f32 %v10584, %v10628
  %v10682 = vadd.f32 %v10585, %v10628
  %v10683 = vadd.f32 %v10586, %v10628
  %v10684 = vadd.f32 %v10587, %v10628
  %v10685 = vadd.f32 %v10588, %v10628
  %v10686 = vadd.f32 %v10589, %v10628
  %v10687 = vadd.f32 %v10590, %v10628
  %v10688 = vadd.f32 %v10591, %v10628
  %v10689 = vadd.f32 %v10592, %v10628
  %v10690 = vadd.f32 %v10593, %v10628
  %v10691 = vadd.f32 %v10594, %v10628
  %v10692 = vadd.f32 %v10595, %v10628
  %v10693 = vadd.f32 %v10596, %v10628
  %v10694 = vadd.f32 %v10597, %v10628
  %v10695 = vadd.f32 %v10598, %v10628
  %v10696 = vadd.f32 %v10599, %v10628
  %v10697 = vadd.f32 %v10600, %v10628
  %v10698 = vadd.f32 %v10601, %v10628
  %v10699 = vadd.f32 %v10602, %v10628
  %v10700 = vadd.f32 %v10603, %v10628
  %v10701 = vadd.f32 %v10604, %v10628
  %v10702 = vadd.f32 %v10605, %v10628
  %v10703 = vadd.f32 %v10606, %v10628
  %v10704 = vadd.f32 %v10607, %v10628
  %v10705 = vadd.f32 %v10608, %v10628
  %v10706 = vadd.f32 %v10609, %v10628
  %v10707 = vadd.f32 %v10610, %v10628
  %v10708 = vadd.f32 %v10611, %v10628
  %v10709 = vadd.f32 %v10612, %v10628
  %v10710 = vadd.f32 %v10613, %v10628
  %v10711 = vadd.f32 %v10614, %v10628
  %v10712 = vadd.f32 %v10615, %v10628
  %v10713 = vadd.f32 %v10616, %v10628
  %v10714 = vadd.f32 %v10617, %v10628
  %v10715 = vadd.f32 %v10618, %v10628
  %v10716 = vadd.f32 %v10619, %v10628
  %v10717 = vadd.f32 %v10620, %v10628
  %v10718 = vadd.f32 %v10621, %v10628
  %v10719 = vadd.f32 %v10622, %v10628
  %v10720 = vadd.f32 %v10623, %v10628
  %v10721 = vadd.f32 %v10624, %v10628
  %v10722 = vadd.f32 %v10625, %v10628
  %v10723 = vadd.f32 %v10626, %v10628
  %v10724 = vadd.f32 %v10627, %v10628
  %v10725 = vperm.slane %v39, 0
  %v10727 = vsel %vm562, %v10629, 0
  %v10730 = vsel %vm562, %v10630, 0
  %v10733 = vsel %vm562, %v10631, 0
  %v10736 = vsel %vm562, %v10632, 0
  %v10739 = vsel %vm562, %v10633, 0
  %v10742 = vsel %vm562, %v10634, 0
  %v10745 = vsel %vm562, %v10635, 0
  %v10748 = vsel %vm562, %v10636, 0
  %v10751 = vsel %vm562, %v10637, 0
  %v10754 = vsel %vm562, %v10638, 0
  %v10757 = vsel %vm562, %v10639, 0
  %v10760 = vsel %vm562, %v10640, 0
  %v10763 = vsel %vm562, %v10641, 0
  %v10766 = vsel %vm562, %v10642, 0
  %v10769 = vsel %vm562, %v10643, 0
  %v10772 = vsel %vm562, %v10644, 0
  %v10775 = vsel %vm562, %v10645, 0
  %v10778 = vsel %vm562, %v10646, 0
  %v10781 = vsel %vm562, %v10647, 0
  %v10784 = vsel %vm562, %v10648, 0
  %v10787 = vsel %vm562, %v10649, 0
  %v10790 = vsel %vm562, %v10650, 0
  %v10793 = vsel %vm562, %v10651, 0
  %v10796 = vsel %vm562, %v10652, 0
  %v10799 = vsel %vm562, %v10653, 0
  %v10802 = vsel %vm562, %v10654, 0
  %v10805 = vsel %vm562, %v10655, 0
  %v10808 = vsel %vm562, %v10656, 0
  %v10811 = vsel %vm562, %v10657, 0
  %v10814 = vsel %vm562, %v10658, 0
  %v10817 = vsel %vm562, %v10659, 0
  %v10820 = vsel %vm562, %v10660, 0
  %v10823 = vsel %vm562, %v10661, 0
  %v10826 = vsel %vm562, %v10662, 0
  %v10829 = vsel %vm562, %v10663, 0
  %v10832 = vsel %vm562, %v10664, 0
  %v10835 = vsel %vm562, %v10665, 0
  %v10838 = vsel %vm562, %v10666, 0
  %v10841 = vsel %vm562, %v10667, 0
  %v10844 = vsel %vm562, %v10668, 0
  %v10847 = vsel %vm562, %v10669, 0
  %v10850 = vsel %vm562, %v10670, 0
  %v10853 = vsel %vm562, %v10671, 0
  %v10856 = vsel %vm562, %v10672, 0
  %v10859 = vsel %vm562, %v10673, 0
  %v10862 = vsel %vm562, %v10674, 0
  %v10865 = vsel %vm562, %v10675, 0
  %v10868 = vsel %vm562, %v10676, 0
  %v10871 = vsel %vm562, %v10677, 0
  %v10874 = vsel %vm562, %v10678, 0
  %v10877 = vsel %vm562, %v10679, 0
  %v10880 = vsel %vm562, %v10680, 0
  %v10883 = vsel %vm562, %v10681, 0
  %v10886 = vsel %vm562, %v10682, 0
  %v10889 = vsel %vm562, %v10683, 0
  %v10892 = vsel %vm562, %v10684, 0
  %v10895 = vsel %vm562, %v10685, 0
  %v10898 = vsel %vm562, %v10686, 0
  %v10901 = vsel %vm562, %v10687, 0
  %v10904 = vsel %vm562, %v10688, 0
  %v10907 = vsel %vm562, %v10689, 0
  %v10910 = vsel %vm562, %v10690, 0
  %v10913 = vsel %vm562, %v10691, 0
  %v10916 = vsel %vm562, %v10692, 0
  %v10919 = vsel %vm562, %v10693, 0
  %v10922 = vsel %vm562, %v10694, 0
  %v10925 = vsel %vm562, %v10695, 0
  %v10928 = vsel %vm562, %v10696, 0
  %v10931 = vsel %vm562, %v10697, 0
  %v10934 = vsel %vm562, %v10698, 0
  %v10937 = vsel %vm562, %v10699, 0
  %v10940 = vsel %vm562, %v10700, 0
  %v10943 = vsel %vm562, %v10701, 0
  %v10946 = vsel %vm562, %v10702, 0
  %v10949 = vsel %vm562, %v10703, 0
  %v10952 = vsel %vm562, %v10704, 0
  %v10955 = vsel %vm562, %v10705, 0
  %v10958 = vsel %vm562, %v10706, 0
  %v10961 = vsel %vm562, %v10707, 0
  %v10964 = vsel %vm562, %v10708, 0
  %v10967 = vsel %vm562, %v10709, 0
  %v10970 = vsel %vm562, %v10710, 0
  %v10973 = vsel %vm562, %v10711, 0
  %v10976 = vsel %vm562, %v10712, 0
  %v10979 = vsel %vm562, %v10713, 0
  %v10982 = vsel %vm562, %v10714, 0
  %v10985 = vsel %vm562, %v10715, 0
  %v10988 = vsel %vm562, %v10716, 0
  %v10991 = vsel %vm562, %v10717, 0
  %v10994 = vsel %vm562, %v10718, 0
  %v10997 = vsel %vm562, %v10719, 0
  %v11000 = vsel %vm562, %v10720, 0
  %v11003 = vsel %vm562, %v10721, 0
  %v11006 = vsel %vm562, %v10722, 0
  %v11009 = vsel %vm562, %v10723, 0
  %v11012 = vsel %vm562, %v10724, 0
  %11014 = vmatpush.msra.mxu0 0.0
  %11015 = vmatpush.msra.mxu0 0.0
  %11016 = vmatpush.msra.mxu0 0.0
  %11017 = vmatpush.msra.mxu0 0.0
  %11018 = vmatpush.msra.mxu0 0.0
  %11019 = vmatpush.msra.mxu0 0.0
  %11020 = vmatpush.msra.mxu0 0.0
  %11021 = vmatpush.msra.mxu0 0.0
  %11022 = vmatpush.msra.mxu0 0.0
  %11023 = vmatpush.msra.mxu0 0.0
  %11024 = vmatpush.msra.mxu0 0.0
  %11025 = vmatpush.msra.mxu0 0.0
  %11026 = vmatpush.msra.mxu0 %v38
  %11027 = vmatpush.msra.mxu0 %v37
  %11028 = vmatpush.msra.mxu0 %v36
  %11029 = vmatpush.msra.mxu0 %v35
  %11030 = vmatmul.f32.gmra.mxu0 %v10727
  %v11031 = vpop.f32.mrf.mxu0
  %v11032 = vadd.f32 %v10725, %v11031
  %11033 = vmatmul.f32.gmra.mxu0 %v10730
  %v11034 = vpop.f32.mrf.mxu0
  %v11035 = vadd.f32 %v10725, %v11034
  %11036 = vmatmul.f32.gmra.mxu0 %v10733
  %v11037 = vpop.f32.mrf.mxu0
  %v11038 = vadd.f32 %v10725, %v11037
  %11039 = vmatmul.f32.gmra.mxu0 %v10736
  %v11040 = vpop.f32.mrf.mxu0
  %v11041 = vadd.f32 %v10725, %v11040
  %11042 = vmatmul.f32.gmra.mxu0 %v10739
  %v11043 = vpop.f32.mrf.mxu0
  %v11044 = vadd.f32 %v10725, %v11043
  %11045 = vmatmul.f32.gmra.mxu0 %v10742
  %v11046 = vpop.f32.mrf.mxu0
  %v11047 = vadd.f32 %v10725, %v11046
  %11048 = vmatmul.f32.gmra.mxu0 %v10745
  %v11049 = vpop.f32.mrf.mxu0
  %v11050 = vadd.f32 %v10725, %v11049
  %11051 = vmatmul.f32.gmra.mxu0 %v10748
  %v11052 = vpop.f32.mrf.mxu0
  %v11053 = vadd.f32 %v10725, %v11052
  %11054 = vmatmul.f32.gmra.mxu0 %v10751
  %v11055 = vpop.f32.mrf.mxu0
  %v11056 = vadd.f32 %v10725, %v11055
  %11057 = vmatmul.f32.gmra.mxu0 %v10754
  %v11058 = vpop.f32.mrf.mxu0
  %v11059 = vadd.f32 %v10725, %v11058
  %11060 = vmatmul.f32.gmra.mxu0 %v10757
  %v11061 = vpop.f32.mrf.mxu0
  %v11062 = vadd.f32 %v10725, %v11061
  %11063 = vmatmul.f32.gmra.mxu0 %v10760
  %v11064 = vpop.f32.mrf.mxu0
  %v11065 = vadd.f32 %v10725, %v11064
  %11066 = vmatmul.f32.gmra.mxu0 %v10763
  %v11067 = vpop.f32.mrf.mxu0
  %v11068 = vadd.f32 %v10725, %v11067
  %11069 = vmatmul.f32.gmra.mxu0 %v10766
  %v11070 = vpop.f32.mrf.mxu0
  %v11071 = vadd.f32 %v10725, %v11070
  %11072 = vmatmul.f32.gmra.mxu0 %v10769
  %v11073 = vpop.f32.mrf.mxu0
  %v11074 = vadd.f32 %v10725, %v11073
  %11075 = vmatmul.f32.gmra.mxu0 %v10772
  %v11076 = vpop.f32.mrf.mxu0
  %v11077 = vadd.f32 %v10725, %v11076
  %11078 = vmatmul.f32.gmra.mxu0 %v10775
  %v11079 = vpop.f32.mrf.mxu0
  %v11080 = vadd.f32 %v10725, %v11079
  %11081 = vmatmul.f32.gmra.mxu0 %v10778
  %v11082 = vpop.f32.mrf.mxu0
  %v11083 = vadd.f32 %v10725, %v11082
  %11084 = vmatmul.f32.gmra.mxu0 %v10781
  %v11085 = vpop.f32.mrf.mxu0
  %v11086 = vadd.f32 %v10725, %v11085
  %11087 = vmatmul.f32.gmra.mxu0 %v10784
  %v11088 = vpop.f32.mrf.mxu0
  %v11089 = vadd.f32 %v10725, %v11088
  %11090 = vmatmul.f32.gmra.mxu0 %v10787
  %v11091 = vpop.f32.mrf.mxu0
  %v11092 = vadd.f32 %v10725, %v11091
  %11093 = vmatmul.f32.gmra.mxu0 %v10790
  %v11094 = vpop.f32.mrf.mxu0
  %v11095 = vadd.f32 %v10725, %v11094
  %11096 = vmatmul.f32.gmra.mxu0 %v10793
  %v11097 = vpop.f32.mrf.mxu0
  %v11098 = vadd.f32 %v10725, %v11097
  %11099 = vmatmul.f32.gmra.mxu0 %v10796
  %v11100 = vpop.f32.mrf.mxu0
  %v11101 = vadd.f32 %v10725, %v11100
  %11102 = vmatmul.f32.gmra.mxu0 %v10799
  %v11103 = vpop.f32.mrf.mxu0
  %v11104 = vadd.f32 %v10725, %v11103
  %11105 = vmatmul.f32.gmra.mxu0 %v10802
  %v11106 = vpop.f32.mrf.mxu0
  %v11107 = vadd.f32 %v10725, %v11106
  %11108 = vmatmul.f32.gmra.mxu0 %v10805
  %v11109 = vpop.f32.mrf.mxu0
  %v11110 = vadd.f32 %v10725, %v11109
  %11111 = vmatmul.f32.gmra.mxu0 %v10808
  %v11112 = vpop.f32.mrf.mxu0
  %v11113 = vadd.f32 %v10725, %v11112
  %11114 = vmatmul.f32.gmra.mxu0 %v10811
  %v11115 = vpop.f32.mrf.mxu0
  %v11116 = vadd.f32 %v10725, %v11115
  %11117 = vmatmul.f32.gmra.mxu0 %v10814
  %v11118 = vpop.f32.mrf.mxu0
  %v11119 = vadd.f32 %v10725, %v11118
  %11120 = vmatmul.f32.gmra.mxu0 %v10817
  %v11121 = vpop.f32.mrf.mxu0
  %v11122 = vadd.f32 %v10725, %v11121
  %11123 = vmatmul.f32.gmra.mxu0 %v10820
  %v11124 = vpop.f32.mrf.mxu0
  %v11125 = vadd.f32 %v10725, %v11124
  %11126 = vmatmul.f32.gmra.mxu0 %v10823
  %v11127 = vpop.f32.mrf.mxu0
  %v11128 = vadd.f32 %v10725, %v11127
  %11129 = vmatmul.f32.gmra.mxu0 %v10826
  %v11130 = vpop.f32.mrf.mxu0
  %v11131 = vadd.f32 %v10725, %v11130
  %11132 = vmatmul.f32.gmra.mxu0 %v10829
  %v11133 = vpop.f32.mrf.mxu0
  %v11134 = vadd.f32 %v10725, %v11133
  %11135 = vmatmul.f32.gmra.mxu0 %v10832
  %v11136 = vpop.f32.mrf.mxu0
  %v11137 = vadd.f32 %v10725, %v11136
  %11138 = vmatmul.f32.gmra.mxu0 %v10835
  %v11139 = vpop.f32.mrf.mxu0
  %v11140 = vadd.f32 %v10725, %v11139
  %11141 = vmatmul.f32.gmra.mxu0 %v10838
  %v11142 = vpop.f32.mrf.mxu0
  %v11143 = vadd.f32 %v10725, %v11142
  %11144 = vmatmul.f32.gmra.mxu0 %v10841
  %v11145 = vpop.f32.mrf.mxu0
  %v11146 = vadd.f32 %v10725, %v11145
  %11147 = vmatmul.f32.gmra.mxu0 %v10844
  %v11148 = vpop.f32.mrf.mxu0
  %v11149 = vadd.f32 %v10725, %v11148
  %11150 = vmatmul.f32.gmra.mxu0 %v10847
  %v11151 = vpop.f32.mrf.mxu0
  %v11152 = vadd.f32 %v10725, %v11151
  %11153 = vmatmul.f32.gmra.mxu0 %v10850
  %v11154 = vpop.f32.mrf.mxu0
  %v11155 = vadd.f32 %v10725, %v11154
  %11156 = vmatmul.f32.gmra.mxu0 %v10853
  %v11157 = vpop.f32.mrf.mxu0
  %v11158 = vadd.f32 %v10725, %v11157
  %11159 = vmatmul.f32.gmra.mxu0 %v10856
  %v11160 = vpop.f32.mrf.mxu0
  %v11161 = vadd.f32 %v10725, %v11160
  %11162 = vmatmul.f32.gmra.mxu0 %v10859
  %v11163 = vpop.f32.mrf.mxu0
  %v11164 = vadd.f32 %v10725, %v11163
  %11165 = vmatmul.f32.gmra.mxu0 %v10862
  %v11166 = vpop.f32.mrf.mxu0
  %v11167 = vadd.f32 %v10725, %v11166
  %11168 = vmatmul.f32.gmra.mxu0 %v10865
  %v11169 = vpop.f32.mrf.mxu0
  %v11170 = vadd.f32 %v10725, %v11169
  %11171 = vmatmul.f32.gmra.mxu0 %v10868
  %v11172 = vpop.f32.mrf.mxu0
  %v11173 = vadd.f32 %v10725, %v11172
  %11174 = vmatmul.f32.gmra.mxu0 %v10871
  %v11175 = vpop.f32.mrf.mxu0
  %11176 = vmatmul.f32.gmra.mxu0 %v10874
  %v11177 = vpop.f32.mrf.mxu0
  %11178 = vmatmul.f32.gmra.mxu0 %v10877
  %v11179 = vpop.f32.mrf.mxu0
  %11180 = vmatmul.f32.gmra.mxu0 %v10880
  %v11181 = vpop.f32.mrf.mxu0
  %11182 = vmatmul.f32.gmra.mxu0 %v10883
  %v11183 = vpop.f32.mrf.mxu0
  %11184 = vmatmul.f32.gmra.mxu0 %v10886
  %v11185 = vpop.f32.mrf.mxu0
  %11186 = vmatmul.f32.gmra.mxu0 %v10889
  %v11187 = vpop.f32.mrf.mxu0
  %11188 = vmatmul.f32.gmra.mxu0 %v10892
  %v11189 = vpop.f32.mrf.mxu0
  %11190 = vmatmul.f32.gmra.mxu0 %v10895
  %v11191 = vpop.f32.mrf.mxu0
  %11192 = vmatmul.f32.gmra.mxu0 %v10898
  %v11193 = vpop.f32.mrf.mxu0
  %11194 = vmatmul.f32.gmra.mxu0 %v10901
  %v11195 = vpop.f32.mrf.mxu0
  %11196 = vmatmul.f32.gmra.mxu0 %v10904
  %v11197 = vpop.f32.mrf.mxu0
  %11198 = vmatmul.f32.gmra.mxu0 %v10907
  %v11199 = vpop.f32.mrf.mxu0
  %11200 = vmatmul.f32.gmra.mxu0 %v10910
  %v11201 = vpop.f32.mrf.mxu0
  %11202 = vmatmul.f32.gmra.mxu0 %v10913
  %v11203 = vpop.f32.mrf.mxu0
  %11204 = vmatmul.f32.gmra.mxu0 %v10916
  %v11205 = vpop.f32.mrf.mxu0
  %11206 = vmatmul.f32.gmra.mxu0 %v10919
  %v11207 = vpop.f32.mrf.mxu0
  %11208 = vmatmul.f32.gmra.mxu0 %v10922
  %v11209 = vpop.f32.mrf.mxu0
  %11210 = vmatmul.f32.gmra.mxu0 %v10925
  %v11211 = vpop.f32.mrf.mxu0
  %11212 = vmatmul.f32.gmra.mxu0 %v10928
  %v11213 = vpop.f32.mrf.mxu0
  %11214 = vmatmul.f32.gmra.mxu0 %v10931
  %v11215 = vpop.f32.mrf.mxu0
  %11216 = vmatmul.f32.gmra.mxu0 %v10934
  %v11217 = vpop.f32.mrf.mxu0
  %11218 = vmatmul.f32.gmra.mxu0 %v10937
  %v11219 = vpop.f32.mrf.mxu0
  %11220 = vmatmul.f32.gmra.mxu0 %v10940
  %v11221 = vpop.f32.mrf.mxu0
  %11222 = vmatmul.f32.gmra.mxu0 %v10943
  %v11223 = vpop.f32.mrf.mxu0
  %11224 = vmatmul.f32.gmra.mxu0 %v10946
  %v11225 = vpop.f32.mrf.mxu0
  %11226 = vmatmul.f32.gmra.mxu0 %v10949
  %v11227 = vpop.f32.mrf.mxu0
  %11228 = vmatmul.f32.gmra.mxu0 %v10952
  %v11229 = vpop.f32.mrf.mxu0
  %11230 = vmatmul.f32.gmra.mxu0 %v10955
  %v11231 = vpop.f32.mrf.mxu0
  %11232 = vmatmul.f32.gmra.mxu0 %v10958
  %v11233 = vpop.f32.mrf.mxu0
  %11234 = vmatmul.f32.gmra.mxu0 %v10961
  %v11235 = vpop.f32.mrf.mxu0
  %11236 = vmatmul.f32.gmra.mxu0 %v10964
  %v11237 = vpop.f32.mrf.mxu0
  %11238 = vmatmul.f32.gmra.mxu0 %v10967
  %v11239 = vpop.f32.mrf.mxu0
  %11240 = vmatmul.f32.gmra.mxu0 %v10970
  %v11241 = vpop.f32.mrf.mxu0
  %11242 = vmatmul.f32.gmra.mxu0 %v10973
  %v11243 = vpop.f32.mrf.mxu0
  %11244 = vmatmul.f32.gmra.mxu0 %v10976
  %v11245 = vpop.f32.mrf.mxu0
  %11246 = vmatmul.f32.gmra.mxu0 %v10979
  %v11247 = vpop.f32.mrf.mxu0
  %11248 = vmatmul.f32.gmra.mxu0 %v10982
  %v11249 = vpop.f32.mrf.mxu0
  %11250 = vmatmul.f32.gmra.mxu0 %v10985
  %v11251 = vpop.f32.mrf.mxu0
  %11252 = vmatmul.f32.gmra.mxu0 %v10988
  %v11253 = vpop.f32.mrf.mxu0
  %11254 = vmatmul.f32.gmra.mxu0 %v10991
  %v11255 = vpop.f32.mrf.mxu0
  %11256 = vmatmul.f32.gmra.mxu0 %v10994
  %v11257 = vpop.f32.mrf.mxu0
  %11258 = vmatmul.f32.gmra.mxu0 %v10997
  %v11259 = vpop.f32.mrf.mxu0
  %11260 = vmatmul.f32.gmra.mxu0 %v11000
  %v11261 = vpop.f32.mrf.mxu0
  %11262 = vmatmul.f32.gmra.mxu0 %v11003
  %v11263 = vpop.f32.mrf.mxu0
  %11264 = vmatmul.f32.gmra.mxu0 %v11006
  %v11265 = vpop.f32.mrf.mxu0
  %11266 = vmatmul.f32.gmra.mxu0 %v11009
  %v11267 = vpop.f32.mrf.mxu0
  %11268 = vmatmul.f32.gmra.mxu0 %v11012
  %v11269 = vpop.f32.mrf.mxu0
  %11270 = vdwg.mxu0
  %v11272 = vsel %vm562, %v7553, 0
  %v11275 = vsel %vm562, %v11032, 0
  %v11278 = vsel %vm562, %v11035, 0
  %v11281 = vsel %vm562, %v11038, 0
  %v11284 = vsel %vm562, %v11041, 0
  %v11287 = vsel %vm562, %v11044, 0
  %v11290 = vsel %vm562, %v11047, 0
  %v11293 = vsel %vm562, %v11050, 0
  %v11296 = vsel %vm562, %v11053, 0
  %v11299 = vsel %vm562, %v11056, 0
  %v11302 = vsel %vm562, %v11059, 0
  %v11305 = vsel %vm562, %v11062, 0
  %v11308 = vsel %vm562, %v11065, 0
  %v11311 = vsel %vm562, %v11068, 0
  %v11314 = vsel %vm562, %v11071, 0
  %v11317 = vsel %vm562, %v11074, 0
  %v11320 = vsel %vm562, %v11077, 0
  %v11323 = vsel %vm562, %v11080, 0
  %v11326 = vsel %vm562, %v11083, 0
  %v11329 = vsel %vm562, %v11086, 0
  %v11332 = vsel %vm562, %v11089, 0
  %v11335 = vsel %vm562, %v11092, 0
  %v11338 = vsel %vm562, %v11095, 0
  %v11341 = vsel %vm562, %v11098, 0
  %v11344 = vsel %vm562, %v11101, 0
  %v11347 = vsel %vm562, %v11104, 0
  %v11350 = vsel %vm562, %v11107, 0
  %v11353 = vsel %vm562, %v11110, 0
  %v11356 = vsel %vm562, %v11113, 0
  %v11359 = vsel %vm562, %v11116, 0
  %v11362 = vsel %vm562, %v11119, 0
  %v11365 = vsel %vm562, %v11122, 0
  %v11368 = vsel %vm562, %v11125, 0
  %v11371 = vsel %vm562, %v11128, 0
  %v11374 = vsel %vm562, %v11131, 0
  %v11377 = vsel %vm562, %v11134, 0
  %v11380 = vsel %vm562, %v11137, 0
  %v11383 = vsel %vm562, %v11140, 0
  %v11386 = vsel %vm562, %v11143, 0
  %v11389 = vsel %vm562, %v11146, 0
  %v11392 = vsel %vm562, %v11149, 0
  %v11395 = vsel %vm562, %v11152, 0
  %v11398 = vsel %vm562, %v11155, 0
  %v11401 = vsel %vm562, %v11158, 0
  %v11404 = vsel %vm562, %v11161, 0
  %v11407 = vsel %vm562, %v11164, 0
  %v11410 = vsel %vm562, %v11167, 0
  %v11413 = vsel %vm562, %v11170, 0
  %v11416 = vsel %vm562, %v11173, 0
  %11418 = vmatpush.xpose.msra.mxu0 %v11320
  %11419 = vmatpush.xpose.msra.mxu0 %v11317
  %11420 = vmatpush.xpose.msra.mxu0 %v11314
  %11421 = vmatpush.xpose.msra.mxu0 %v11311
  %11422 = vmatpush.xpose.msra.mxu0 %v11308
  %11423 = vmatpush.xpose.msra.mxu0 %v11305
  %11424 = vmatpush.xpose.msra.mxu0 %v11302
  %11425 = vmatpush.xpose.msra.mxu0 %v11299
  %11426 = vmatpush.xpose.msra.mxu0 %v11296
  %11427 = vmatpush.xpose.msra.mxu0 %v11293
  %11428 = vmatpush.xpose.msra.mxu0 %v11290
  %11429 = vmatpush.xpose.msra.mxu0 %v11287
  %11430 = vmatpush.xpose.msra.mxu0 %v11284
  %11431 = vmatpush.xpose.msra.mxu0 %v11281
  %11432 = vmatpush.xpose.msra.mxu0 %v11278
  %11433 = vmatpush.xpose.msra.mxu0 %v11275
  %11434 = vmatmul.f32.gmra.mxu0 %v11272
  %v11435 = vpop.f32.mrf.mxu0
  %v11436 = vadd.f32 0.0, %v11435
  %11437 = vdwg.mxu0
  %11438 = vmatpush.xpose.msra.mxu0 %v11368
  %11439 = vmatpush.xpose.msra.mxu0 %v11365
  %11440 = vmatpush.xpose.msra.mxu0 %v11362
  %11441 = vmatpush.xpose.msra.mxu0 %v11359
  %11442 = vmatpush.xpose.msra.mxu0 %v11356
  %11443 = vmatpush.xpose.msra.mxu0 %v11353
  %11444 = vmatpush.xpose.msra.mxu0 %v11350
  %11445 = vmatpush.xpose.msra.mxu0 %v11347
  %11446 = vmatpush.xpose.msra.mxu0 %v11344
  %11447 = vmatpush.xpose.msra.mxu0 %v11341
  %11448 = vmatpush.xpose.msra.mxu0 %v11338
  %11449 = vmatpush.xpose.msra.mxu0 %v11335
  %11450 = vmatpush.xpose.msra.mxu0 %v11332
  %11451 = vmatpush.xpose.msra.mxu0 %v11329
  %11452 = vmatpush.xpose.msra.mxu0 %v11326
  %11453 = vmatpush.xpose.msra.mxu0 %v11323
  %11454 = vmatmul.f32.gmra.mxu0 %v11272
  %v11455 = vpop.f32.mrf.mxu0
  %v11456 = vadd.f32 0.0, %v11455
  %11457 = vdwg.mxu0
  %11458 = vmatpush.xpose.msra.mxu0 %v11416
  %11459 = vmatpush.xpose.msra.mxu0 %v11413
  %11460 = vmatpush.xpose.msra.mxu0 %v11410
  %11461 = vmatpush.xpose.msra.mxu0 %v11407
  %11462 = vmatpush.xpose.msra.mxu0 %v11404
  %11463 = vmatpush.xpose.msra.mxu0 %v11401
  %11464 = vmatpush.xpose.msra.mxu0 %v11398
  %11465 = vmatpush.xpose.msra.mxu0 %v11395
  %11466 = vmatpush.xpose.msra.mxu0 %v11392
  %11467 = vmatpush.xpose.msra.mxu0 %v11389
  %11468 = vmatpush.xpose.msra.mxu0 %v11386
  %11469 = vmatpush.xpose.msra.mxu0 %v11383
  %11470 = vmatpush.xpose.msra.mxu0 %v11380
  %11471 = vmatpush.xpose.msra.mxu0 %v11377
  %11472 = vmatpush.xpose.msra.mxu0 %v11374
  %11473 = vmatpush.xpose.msra.mxu0 %v11371
  %11474 = vmatmul.f32.gmra.mxu0 %v11272
  %v11475 = vpop.f32.mrf.mxu0
  %v11476 = vadd.f32 0.0, %v11475
  %11477 = vdwg.mxu0
  %v11478 = vmul.f32 %v11436, 0.17677669
  %v11479 = vmul.f32 %v11456, 0.17677669
  %v11480 = vmul.f32 %v11476, 0.17677669
  %v11481 = vrot.slane %v7553, 6
  %v11482 = vsel %vm562, %v11481, 0
  %v11485 = vsel %vm562, %v2562, 0
  %v11488 = vsel %vm562, %v2565, 0
  %v11491 = vsel %vm562, %v2568, 0
  %v11494 = vsel %vm562, %v2571, 0
  %v11497 = vsel %vm562, %v2574, 0
  %v11500 = vsel %vm562, %v2577, 0
  %v11503 = vsel %vm562, %v2580, 0
  %v11506 = vsel %vm562, %v2583, 0
  %v11509 = vsel %vm562, %v2586, 0
  %v11512 = vsel %vm562, %v2589, 0
  %v11515 = vsel %vm562, %v2592, 0
  %v11518 = vsel %vm562, %v2595, 0
  %v11521 = vsel %vm562, %v2598, 0
  %v11524 = vsel %vm562, %v2601, 0
  %v11527 = vsel %vm562, %v2604, 0
  %v11530 = vsel %vm562, %v2607, 0
  %11532 = vmatpush.xpose.msra.mxu0 %v11530
  %11533 = vmatpush.xpose.msra.mxu0 %v11527
  %11534 = vmatpush.xpose.msra.mxu0 %v11524
  %11535 = vmatpush.xpose.msra.mxu0 %v11521
  %11536 = vmatpush.xpose.msra.mxu0 %v11518
  %11537 = vmatpush.xpose.msra.mxu0 %v11515
  %11538 = vmatpush.xpose.msra.mxu0 %v11512
  %11539 = vmatpush.xpose.msra.mxu0 %v11509
  %11540 = vmatpush.xpose.msra.mxu0 %v11506
  %11541 = vmatpush.xpose.msra.mxu0 %v11503
  %11542 = vmatpush.xpose.msra.mxu0 %v11500
  %11543 = vmatpush.xpose.msra.mxu0 %v11497
  %11544 = vmatpush.xpose.msra.mxu0 %v11494
  %11545 = vmatpush.xpose.msra.mxu0 %v11491
  %11546 = vmatpush.xpose.msra.mxu0 %v11488
  %11547 = vmatpush.xpose.msra.mxu0 %v11485
  %11548 = vmatmul.f32.gmra.mxu0 %v11482
  %v11549 = vpop.f32.mrf.mxu0
  %v11550 = vadd.f32 0.0, %v11549
  %11551 = vdwg.mxu0
  %v11552 = vmul.f32 %v11550, 0.17677669
  %v11553 = vmul.f32 %v11478, %v197
  %v11554 = vmul.f32 %v11479, %v198
  %v11555 = vmul.f32 %v11480, %v199
  %11556 = vmatpush.msra.mxu0 %v180
  %11557 = vmatpush.msra.mxu0 %v179
  %11558 = vmatpush.msra.mxu0 %v178
  %11559 = vmatpush.msra.mxu0 %v177
  %11560 = vmatpush.msra.mxu0 %v176
  %11561 = vmatpush.msra.mxu0 %v175
  %11562 = vmatpush.msra.mxu0 %v174
  %11563 = vmatpush.msra.mxu0 %v173
  %11564 = vmatpush.msra.mxu0 %v180
  %11565 = vmatpush.msra.mxu0 %v179
  %11566 = vmatpush.msra.mxu0 %v178
  %11567 = vmatpush.msra.mxu0 %v177
  %11568 = vmatpush.msra.mxu0 %v176
  %11569 = vmatpush.msra.mxu0 %v175
  %11570 = vmatpush.msra.mxu0 %v174
  %11571 = vmatpush.msra.mxu0 %v173
  %11572 = vmatmul.f32.gmra.mxu0 %v11553
  %v11573 = vpop.f32.mrf.mxu0
  %v11574 = vadd.f32 0.0, %v11573
  %11575 = vdwg.mxu0
  %11576 = vmatpush.msra.mxu0 %v180
  %11577 = vmatpush.msra.mxu0 %v179
  %11578 = vmatpush.msra.mxu0 %v178
  %11579 = vmatpush.msra.mxu0 %v177
  %11580 = vmatpush.msra.mxu0 %v176
  %11581 = vmatpush.msra.mxu0 %v175
  %11582 = vmatpush.msra.mxu0 %v174
  %11583 = vmatpush.msra.mxu0 %v173
  %11584 = vmatpush.msra.mxu0 %v180
  %11585 = vmatpush.msra.mxu0 %v179
  %11586 = vmatpush.msra.mxu0 %v178
  %11587 = vmatpush.msra.mxu0 %v177
  %11588 = vmatpush.msra.mxu0 %v176
  %11589 = vmatpush.msra.mxu0 %v175
  %11590 = vmatpush.msra.mxu0 %v174
  %11591 = vmatpush.msra.mxu0 %v173
  %11592 = vmatmul.f32.gmra.mxu0 %v11554
  %v11593 = vpop.f32.mrf.mxu0
  %v11594 = vadd.f32 %v11574, %v11593
  %11595 = vdwg.mxu0
  %11596 = vmatpush.msra.mxu0 %v180
  %11597 = vmatpush.msra.mxu0 %v179
  %11598 = vmatpush.msra.mxu0 %v178
  %11599 = vmatpush.msra.mxu0 %v177
  %11600 = vmatpush.msra.mxu0 %v176
  %11601 = vmatpush.msra.mxu0 %v175
  %11602 = vmatpush.msra.mxu0 %v174
  %11603 = vmatpush.msra.mxu0 %v173
  %11604 = vmatpush.msra.mxu0 %v180
  %11605 = vmatpush.msra.mxu0 %v179
  %11606 = vmatpush.msra.mxu0 %v178
  %11607 = vmatpush.msra.mxu0 %v177
  %11608 = vmatpush.msra.mxu0 %v176
  %11609 = vmatpush.msra.mxu0 %v175
  %11610 = vmatpush.msra.mxu0 %v174
  %11611 = vmatpush.msra.mxu0 %v173
  %11612 = vmatmul.f32.gmra.mxu0 %v11555
  %v11613 = vpop.f32.mrf.mxu0
  %v11614 = vadd.f32 %v11594, %v11613
  %11615 = vdwg.mxu0
  %v11616 = vmul.f32 %v11552, %v197
  %11617 = vmatpush.msra.mxu0 %v180
  %11618 = vmatpush.msra.mxu0 %v179
  %11619 = vmatpush.msra.mxu0 %v178
  %11620 = vmatpush.msra.mxu0 %v177
  %11621 = vmatpush.msra.mxu0 %v176
  %11622 = vmatpush.msra.mxu0 %v175
  %11623 = vmatpush.msra.mxu0 %v174
  %11624 = vmatpush.msra.mxu0 %v173
  %11625 = vmatpush.msra.mxu0 %v180
  %11626 = vmatpush.msra.mxu0 %v179
  %11627 = vmatpush.msra.mxu0 %v178
  %11628 = vmatpush.msra.mxu0 %v177
  %11629 = vmatpush.msra.mxu0 %v176
  %11630 = vmatpush.msra.mxu0 %v175
  %11631 = vmatpush.msra.mxu0 %v174
  %11632 = vmatpush.msra.mxu0 %v173
  %11633 = vmatmul.f32.gmra.mxu0 %v11616
  %v11634 = vpop.f32.mrf.mxu0
  %v11635 = vadd.f32 0.0, %v11634
  %11636 = vdwg.mxu0
  %vm11637 = vcmask 518144
  %v11638 = vsel %vm11637, %v11614, -inf
  %v11639 = vrot.slane %v11638, 4
  %v11640 = vmax.f32 %v11638, %v11639
  %v11641 = vrot.slane %v11640, 2
  %v11642 = vmax.f32 %v11640, %v11641
  %v11643 = vrot.slane %v11642, 1
  %v11644 = vmax.f32 %v11642, %v11643
  %v11645 = vmax.f32 %v11644, %v11635
  %v11646 = vperm.slane %v11645, 0
  %v11647 = vsub.f32 %v11614, %v11646
  %v11648 = vmul.f32 %v11647, 1.442695
  %v11649 = vpow.pop %v11648
  %v11650 = vsub.f32 %v11635, %v11645
  %v11651 = vmul.f32 %v11650, 1.442695
  %v11652 = vpow.pop %v11651
  %v11653 = vsel %vm11637, %v11649, 0.0
  %v11654 = vrot.slane %v11653, 4
  %v11655 = vadd.f32 %v11653, %v11654
  %v11656 = vrot.slane %v11655, 2
  %v11657 = vadd.f32 %v11655, %v11656
  %v11658 = vrot.slane %v11657, 1
  %v11659 = vadd.f32 %v11657, %v11658
  %v11660 = vadd.f32 %v11659, %v11652
  %v11661 = vperm.slane %v11660, 0
  %v11662 = vrcp.pop %v11661
  %v11663 = vmul.f32 %v11661, %v11662
  %v11664 = vsub.f32 1.0, %v11663
  %v11665 = vmul.f32 %v11662, %v11664
  %v11666 = vadd.f32 %v11662, %v11665
  %vm11667 = vweird.f32 %v11661
  %vm11668 = vweird.f32 %v11662
  %vm11669 = vmor %vm11667, %vm11668
  %v11670 = vsel %vm11669, %v11662, %v11666
  %v11671 = vand.u32 2147483647, %v11661
  %vm11672 = vcmp.eq.f32.partialorder %v11671, 8.507059e+37
  %v11673 = vand.u32 %v11661, 2147483648
  %v11674 = vor.u32 1.1754944e-38, %v11673
  %v11675 = vsel %vm11672, %v11674, %v11670
  %v11676 = vmul.f32 %v11649, %v11675
  %v11677 = vadd.f32 %v11676, 1e-08
  %v11678 = vrcp.pop %v11660
  %v11679 = vmul.f32 %v11660, %v11678
  %v11680 = vsub.f32 1.0, %v11679
  %v11681 = vmul.f32 %v11678, %v11680
  %v11682 = vadd.f32 %v11678, %v11681
  %vm11683 = vweird.f32 %v11660
  %vm11684 = vweird.f32 %v11678
  %vm11685 = vmor %vm11683, %vm11684
  %v11686 = vsel %vm11685, %v11678, %v11682
  %v11687 = vand.u32 2147483647, %v11660
  %vm11688 = vcmp.eq.f32.partialorder %v11687, 8.507059e+37
  %v11689 = vand.u32 %v11660, 2147483648
  %v11690 = vor.u32 1.1754944e-38, %v11689
  %v11691 = vsel %vm11688, %v11690, %v11686
  %v11692 = vmul.f32 %v11652, %v11691
  %v11693 = vadd.f32 %v11692, 1e-08
  %vm11694 = vcmask 521219
  %v11695 = vsel %vm11694, %v11614, -inf
  %v11696 = vrot.slane %v11695, 4
  %v11697 = vmax.f32 %v11695, %v11696
  %v11698 = vrot.slane %v11697, 2
  %v11699 = vmax.f32 %v11697, %v11698
  %v11700 = vrot.slane %v11699, 1
  %v11701 = vmax.f32 %v11699, %v11700
  %v11702 = vmax.f32 %v11701, %v11635
  %v11703 = vperm.slane %v11702, 1
  %v11704 = vsub.f32 %v11614, %v11703
  %v11705 = vmul.f32 %v11704, 1.442695
  %v11706 = vpow.pop %v11705
  %v11707 = vsub.f32 %v11635, %v11702
  %v11708 = vmul.f32 %v11707, 1.442695
  %v11709 = vpow.pop %v11708
  %v11711 = vrot.slane %v11706, 3
  %v11713 = vsel %vm11637, %v11711, 0.0
  %v11714 = vrot.slane %v11713, 4
  %v11715 = vadd.f32 %v11713, %v11714
  %v11716 = vrot.slane %v11715, 2
  %v11717 = vadd.f32 %v11715, %v11716
  %v11718 = vrot.slane %v11717, 1
  %v11719 = vadd.f32 %v11717, %v11718
  %v11720 = vadd.f32 %v11719, %v11709
  %v11721 = vperm.slane %v11720, 1
  %v11722 = vrcp.pop %v11721
  %v11723 = vmul.f32 %v11721, %v11722
  %v11724 = vsub.f32 1.0, %v11723
  %v11725 = vmul.f32 %v11722, %v11724
  %v11726 = vadd.f32 %v11722, %v11725
  %vm11727 = vweird.f32 %v11721
  %vm11728 = vweird.f32 %v11722
  %vm11729 = vmor %vm11727, %vm11728
  %v11730 = vsel %vm11729, %v11722, %v11726
  %v11731 = vand.u32 2147483647, %v11721
  %vm11732 = vcmp.eq.f32.partialorder %v11731, 8.507059e+37
  %v11733 = vand.u32 %v11721, 2147483648
  %v11734 = vor.u32 1.1754944e-38, %v11733
  %v11735 = vsel %vm11732, %v11734, %v11730
  %v11736 = vmul.f32 %v11706, %v11735
  %v11737 = vadd.f32 %v11736, 1e-08
  %v11738 = vrcp.pop %v11720
  %v11739 = vmul.f32 %v11720, %v11738
  %v11740 = vsub.f32 1.0, %v11739
  %v11741 = vmul.f32 %v11738, %v11740
  %v11742 = vadd.f32 %v11738, %v11741
  %vm11743 = vweird.f32 %v11720
  %vm11744 = vweird.f32 %v11738
  %vm11745 = vmor %vm11743, %vm11744
  %v11746 = vsel %vm11745, %v11738, %v11742
  %v11747 = vand.u32 2147483647, %v11720
  %vm11748 = vcmp.eq.f32.partialorder %v11747, 8.507059e+37
  %v11749 = vand.u32 %v11720, 2147483648
  %v11750 = vor.u32 1.1754944e-38, %v11749
  %v11751 = vsel %vm11748, %v11750, %v11746
  %v11752 = vmul.f32 %v11709, %v11751
  %v11753 = vadd.f32 %v11752, 1e-08
  %vm11754 = vcmask 1042432
  %v11755 = vsel %vm11754, %v11677, %v11737
  %vm11756 = vcmask 1040384
  %v11757 = vsel %vm11756, %v11693, %v11753
  %v11759 = vrot.slane %v11677, 7
  %v11762 = vrot.slane %v11753, 5
  %v11765 = vrot.slane %v11737, 6
  %v11767 = vsel %vm11756, %v11693, %v11759
  %vm11768 = vcmask 1043456
  %v11769 = vsel %vm11768, %v11767, %v11762
  %vm11770 = vcmask 1044480
  %v11771 = vsel %vm11770, %v11769, %v11765
  %vm11772 = vcmask 521216
  %v11773 = vsel %vm11772, %v11755, 0.0
  %11774 = vadd.xlane.f32.xlu0 %v11773
  %v11775 = vpop.xlane.xlu0 %11774
  %v11776 = vrcp.pop %v11775
  %v11777 = vmul.f32 %v11775, %v11776
  %v11778 = vsub.f32 1.0, %v11777
  %v11779 = vmul.f32 %v11776, %v11778
  %v11780 = vadd.f32 %v11776, %v11779
  %vm11781 = vweird.f32 %v11775
  %vm11782 = vweird.f32 %v11776
  %vm11783 = vmor %vm11781, %vm11782
  %v11784 = vsel %vm11783, %v11776, %v11780
  %v11785 = vand.u32 2147483647, %v11775
  %vm11786 = vcmp.eq.f32.partialorder %v11785, 8.507059e+37
  %v11787 = vand.u32 %v11775, 2147483648
  %v11788 = vor.u32 1.1754944e-38, %v11787
  %v11789 = vsel %vm11786, %v11788, %v11784
  %v11790 = vmul.f32 %v11755, %v11789
  %vm11791 = vcmask 517120
  %v11792 = vsel %vm11791, %v11757, 0.0
  %11793 = vadd.xlane.f32.xlu0 %v11792
  %v11794 = vpop.xlane.xlu0 %11793
  %v11795 = vrcp.pop %v11794
  %v11796 = vmul.f32 %v11794, %v11795
  %v11797 = vsub.f32 1.0, %v11796
  %v11798 = vmul.f32 %v11795, %v11797
  %v11799 = vadd.f32 %v11795, %v11798
  %vm11800 = vweird.f32 %v11794
  %vm11801 = vweird.f32 %v11795
  %vm11802 = vmor %vm11800, %vm11801
  %v11803 = vsel %vm11802, %v11795, %v11799
  %v11804 = vand.u32 2147483647, %v11794
  %vm11805 = vcmp.eq.f32.partialorder %v11804, 8.507059e+37
  %v11806 = vand.u32 %v11794, 2147483648
  %v11807 = vor.u32 1.1754944e-38, %v11806
  %v11808 = vsel %vm11805, %v11807, %v11803
  %v11809 = vmul.f32 %v11757, %v11808
  %v11811 = vsel %vm267, %v11790, 0
  %11813 = vmatpush.msra.mxu0 0.0
  %11814 = vmatpush.msra.mxu0 0.0
  %11815 = vmatpush.msra.mxu0 0.0
  %11816 = vmatpush.msra.mxu0 0.0
  %11817 = vmatpush.msra.mxu0 0.0
  %11818 = vmatpush.msra.mxu0 0.0
  %11819 = vmatpush.msra.mxu0 0.0
  %11820 = vmatpush.msra.mxu0 0.0
  %11821 = vmatpush.msra.mxu0 %v24
  %11822 = vmatpush.msra.mxu0 %v23
  %11823 = vmatpush.msra.mxu0 %v22
  %11824 = vmatpush.msra.mxu0 %v21
  %11825 = vmatpush.msra.mxu0 %v20
  %11826 = vmatpush.msra.mxu0 %v19
  %11827 = vmatpush.msra.mxu0 %v18
  %11828 = vmatpush.msra.mxu0 %v17
  %11829 = vmatmul.f32.gmra.mxu0 %v11811
  %v11830 = vpop.f32.mrf.mxu0
  %v11831 = vadd.f32 0.0, %v11830
  %11832 = vdwg.mxu0
  %11849 = vrot.lane.b32.xlu0 %v128, 96
  %v11850 = vpop.permute.xlu0 %11849
  %11851 = vrot.lane.b32.xlu0 %v129, 96
  %v11852 = vpop.permute.xlu0 %11851
  %11853 = vrot.lane.b32.xlu0 %v130, 96
  %v11854 = vpop.permute.xlu0 %11853
  %11855 = vrot.lane.b32.xlu0 %v131, 96
  %v11856 = vpop.permute.xlu0 %11855
  %11857 = vrot.lane.b32.xlu0 %v132, 96
  %v11858 = vpop.permute.xlu0 %11857
  %11859 = vrot.lane.b32.xlu0 %v133, 96
  %v11860 = vpop.permute.xlu0 %11859
  %11861 = vrot.lane.b32.xlu0 %v134, 96
  %v11862 = vpop.permute.xlu0 %11861
  %11863 = vrot.lane.b32.xlu0 %v135, 96
  %v11864 = vpop.permute.xlu0 %11863
  %11865 = vrot.lane.b32.xlu0 %v136, 96
  %v11866 = vpop.permute.xlu0 %11865
  %11867 = vrot.lane.b32.xlu0 %v137, 96
  %v11868 = vpop.permute.xlu0 %11867
  %11869 = vrot.lane.b32.xlu0 %v138, 96
  %v11870 = vpop.permute.xlu0 %11869
  %11871 = vrot.lane.b32.xlu0 %v139, 96
  %v11872 = vpop.permute.xlu0 %11871
  %11873 = vrot.lane.b32.xlu0 %v140, 96
  %v11874 = vpop.permute.xlu0 %11873
  %11875 = vrot.lane.b32.xlu0 %v141, 96
  %v11876 = vpop.permute.xlu0 %11875
  %11877 = vrot.lane.b32.xlu0 %v142, 96
  %v11878 = vpop.permute.xlu0 %11877
  %11879 = vrot.lane.b32.xlu0 %v143, 96
  %v11880 = vpop.permute.xlu0 %11879
  %vm11897 = vcmask 64512
  %v11898 = vsel %vm11897, %v11850, 0.0
  %11899 = vadd.xlane.f32.xlu0 %v11898
  %v11900 = vpop.xlane.xlu0 %11899
  %v11901 = vsel %vm11897, %v11852, 0.0
  %11902 = vadd.xlane.f32.xlu0 %v11901
  %v11903 = vpop.xlane.xlu0 %11902
  %v11904 = vsel %vm11897, %v11854, 0.0
  %11905 = vadd.xlane.f32.xlu0 %v11904
  %v11906 = vpop.xlane.xlu0 %11905
  %v11907 = vsel %vm11897, %v11856, 0.0
  %11908 = vadd.xlane.f32.xlu0 %v11907
  %v11909 = vpop.xlane.xlu0 %11908
  %v11910 = vsel %vm11897, %v11858, 0.0
  %11911 = vadd.xlane.f32.xlu0 %v11910
  %v11912 = vpop.xlane.xlu0 %11911
  %v11913 = vsel %vm11897, %v11860, 0.0
  %11914 = vadd.xlane.f32.xlu0 %v11913
  %v11915 = vpop.xlane.xlu0 %11914
  %v11916 = vsel %vm11897, %v11862, 0.0
  %11917 = vadd.xlane.f32.xlu0 %v11916
  %v11918 = vpop.xlane.xlu0 %11917
  %v11919 = vsel %vm11897, %v11864, 0.0
  %11920 = vadd.xlane.f32.xlu0 %v11919
  %v11921 = vpop.xlane.xlu0 %11920
  %v11922 = vsel %vm11897, %v11866, 0.0
  %11923 = vadd.xlane.f32.xlu0 %v11922
  %v11924 = vpop.xlane.xlu0 %11923
  %v11925 = vsel %vm11897, %v11868, 0.0
  %11926 = vadd.xlane.f32.xlu0 %v11925
  %v11927 = vpop.xlane.xlu0 %11926
  %v11928 = vsel %vm11897, %v11870, 0.0
  %11929 = vadd.xlane.f32.xlu0 %v11928
  %v11930 = vpop.xlane.xlu0 %11929
  %v11931 = vsel %vm11897, %v11872, 0.0
  %11932 = vadd.xlane.f32.xlu0 %v11931
  %v11933 = vpop.xlane.xlu0 %11932
  %v11934 = vsel %vm11897, %v11874, 0.0
  %11935 = vadd.xlane.f32.xlu0 %v11934
  %v11936 = vpop.xlane.xlu0 %11935
  %v11937 = vsel %vm11897, %v11876, 0.0
  %11938 = vadd.xlane.f32.xlu0 %v11937
  %v11939 = vpop.xlane.xlu0 %11938
  %v11940 = vsel %vm11897, %v11878, 0.0
  %11941 = vadd.xlane.f32.xlu0 %v11940
  %v11942 = vpop.xlane.xlu0 %11941
  %v11943 = vsel %vm11897, %v11880, 0.0
  %11944 = vadd.xlane.f32.xlu0 %v11943
  %v11945 = vpop.xlane.xlu0 %11944
  %v11946 = vrcp.pop 8.0
  %v11947 = vmul.f32 8.0, %v11946
  %v11948 = vsub.f32 1.0, %v11947
  %v11949 = vmul.f32 %v11946, %v11948
  %v11950 = vadd.f32 %v11946, %v11949
  %vm11951 = vweird.f32 %v11946
  %v11952 = vsel %vm11951, %v11946, %v11950
  %v11953 = vmul.f32 %v11900, %v11952
  %v11954 = vmul.f32 %v11903, %v11952
  %v11955 = vmul.f32 %v11906, %v11952
  %v11956 = vmul.f32 %v11909, %v11952
  %v11957 = vmul.f32 %v11912, %v11952
  %v11958 = vmul.f32 %v11915, %v11952
  %v11959 = vmul.f32 %v11918, %v11952
  %v11960 = vmul.f32 %v11921, %v11952
  %v11961 = vmul.f32 %v11924, %v11952
  %v11962 = vmul.f32 %v11927, %v11952
  %v11963 = vmul.f32 %v11930, %v11952
  %v11964 = vmul.f32 %v11933, %v11952
  %v11965 = vmul.f32 %v11936, %v11952
  %v11966 = vmul.f32 %v11939, %v11952
  %v11967 = vmul.f32 %v11942, %v11952
  %v11968 = vmul.f32 %v11945, %v11952
  %11985 = vrot.lane.b32.xlu0 %v634, 96
  %v11986 = vpop.permute.xlu0 %11985
  %11987 = vrot.lane.b32.xlu0 %v635, 96
  %v11988 = vpop.permute.xlu0 %11987
  %11989 = vrot.lane.b32.xlu0 %v636, 96
  %v11990 = vpop.permute.xlu0 %11989
  %11991 = vrot.lane.b32.xlu0 %v637, 96
  %v11992 = vpop.permute.xlu0 %11991
  %11993 = vrot.lane.b32.xlu0 %v638, 96
  %v11994 = vpop.permute.xlu0 %11993
  %11995 = vrot.lane.b32.xlu0 %v639, 96
  %v11996 = vpop.permute.xlu0 %11995
  %11997 = vrot.lane.b32.xlu0 %v640, 96
  %v11998 = vpop.permute.xlu0 %11997
  %11999 = vrot.lane.b32.xlu0 %v641, 96
  %v12000 = vpop.permute.xlu0 %11999
  %12001 = vrot.lane.b32.xlu0 %v642, 96
  %v12002 = vpop.permute.xlu0 %12001
  %12003 = vrot.lane.b32.xlu0 %v643, 96
  %v12004 = vpop.permute.xlu0 %12003
  %12005 = vrot.lane.b32.xlu0 %v644, 96
  %v12006 = vpop.permute.xlu0 %12005
  %12007 = vrot.lane.b32.xlu0 %v645, 96
  %v12008 = vpop.permute.xlu0 %12007
  %12009 = vrot.lane.b32.xlu0 %v646, 96
  %v12010 = vpop.permute.xlu0 %12009
  %12011 = vrot.lane.b32.xlu0 %v647, 96
  %v12012 = vpop.permute.xlu0 %12011
  %12013 = vrot.lane.b32.xlu0 %v648, 96
  %v12014 = vpop.permute.xlu0 %12013
  %12015 = vrot.lane.b32.xlu0 %v649, 96
  %v12016 = vpop.permute.xlu0 %12015
  %v12033 = vsel %vm11897, %v11986, 0.0
  %12034 = vadd.xlane.f32.xlu0 %v12033
  %v12035 = vpop.xlane.xlu0 %12034
  %v12036 = vsel %vm11897, %v11988, 0.0
  %12037 = vadd.xlane.f32.xlu0 %v12036
  %v12038 = vpop.xlane.xlu0 %12037
  %v12039 = vsel %vm11897, %v11990, 0.0
  %12040 = vadd.xlane.f32.xlu0 %v12039
  %v12041 = vpop.xlane.xlu0 %12040
  %v12042 = vsel %vm11897, %v11992, 0.0
  %12043 = vadd.xlane.f32.xlu0 %v12042
  %v12044 = vpop.xlane.xlu0 %12043
  %v12045 = vsel %vm11897, %v11994, 0.0
  %12046 = vadd.xlane.f32.xlu0 %v12045
  %v12047 = vpop.xlane.xlu0 %12046
  %v12048 = vsel %vm11897, %v11996, 0.0
  %12049 = vadd.xlane.f32.xlu0 %v12048
  %v12050 = vpop.xlane.xlu0 %12049
  %v12051 = vsel %vm11897, %v11998, 0.0
  %12052 = vadd.xlane.f32.xlu0 %v12051
  %v12053 = vpop.xlane.xlu0 %12052
  %v12054 = vsel %vm11897, %v12000, 0.0
  %12055 = vadd.xlane.f32.xlu0 %v12054
  %v12056 = vpop.xlane.xlu0 %12055
  %v12057 = vsel %vm11897, %v12002, 0.0
  %12058 = vadd.xlane.f32.xlu0 %v12057
  %v12059 = vpop.xlane.xlu0 %12058
  %v12060 = vsel %vm11897, %v12004, 0.0
  %12061 = vadd.xlane.f32.xlu0 %v12060
  %v12062 = vpop.xlane.xlu0 %12061
  %v12063 = vsel %vm11897, %v12006, 0.0
  %12064 = vadd.xlane.f32.xlu0 %v12063
  %v12065 = vpop.xlane.xlu0 %12064
  %v12066 = vsel %vm11897, %v12008, 0.0
  %12067 = vadd.xlane.f32.xlu0 %v12066
  %v12068 = vpop.xlane.xlu0 %12067
  %v12069 = vsel %vm11897, %v12010, 0.0
  %12070 = vadd.xlane.f32.xlu0 %v12069
  %v12071 = vpop.xlane.xlu0 %12070
  %v12072 = vsel %vm11897, %v12012, 0.0
  %12073 = vadd.xlane.f32.xlu0 %v12072
  %v12074 = vpop.xlane.xlu0 %12073
  %v12075 = vsel %vm11897, %v12014, 0.0
  %12076 = vadd.xlane.f32.xlu0 %v12075
  %v12077 = vpop.xlane.xlu0 %12076
  %v12078 = vsel %vm11897, %v12016, 0.0
  %12079 = vadd.xlane.f32.xlu0 %v12078
  %v12080 = vpop.xlane.xlu0 %12079
  %v12081 = vmul.f32 %v12035, %v11952
  %v12082 = vmul.f32 %v12038, %v11952
  %v12083 = vmul.f32 %v12041, %v11952
  %v12084 = vmul.f32 %v12044, %v11952
  %v12085 = vmul.f32 %v12047, %v11952
  %v12086 = vmul.f32 %v12050, %v11952
  %v12087 = vmul.f32 %v12053, %v11952
  %v12088 = vmul.f32 %v12056, %v11952
  %v12089 = vmul.f32 %v12059, %v11952
  %v12090 = vmul.f32 %v12062, %v11952
  %v12091 = vmul.f32 %v12065, %v11952
  %v12092 = vmul.f32 %v12068, %v11952
  %v12093 = vmul.f32 %v12071, %v11952
  %v12094 = vmul.f32 %v12074, %v11952
  %v12095 = vmul.f32 %v12077, %v11952
  %v12096 = vmul.f32 %v12080, %v11952
  %v12097 = vmul.f32 %v11953, %v11953
  %v12098 = vmul.f32 %v11954, %v11954
  %v12099 = vmul.f32 %v11955, %v11955
  %v12100 = vmul.f32 %v11956, %v11956
  %v12101 = vmul.f32 %v11957, %v11957
  %v12102 = vmul.f32 %v11958, %v11958
  %v12103 = vmul.f32 %v11959, %v11959
  %v12104 = vmul.f32 %v11960, %v11960
  %v12105 = vmul.f32 %v11961, %v11961
  %v12106 = vmul.f32 %v11962, %v11962
  %v12107 = vmul.f32 %v11963, %v11963
  %v12108 = vmul.f32 %v11964, %v11964
  %v12109 = vmul.f32 %v11965, %v11965
  %v12110 = vmul.f32 %v11966, %v11966
  %v12111 = vmul.f32 %v11967, %v11967
  %v12112 = vmul.f32 %v11968, %v11968
  %v12113 = vsub.f32 %v12081, %v12097
  %v12114 = vsub.f32 %v12082, %v12098
  %v12115 = vsub.f32 %v12083, %v12099
  %v12116 = vsub.f32 %v12084, %v12100
  %v12117 = vsub.f32 %v12085, %v12101
  %v12118 = vsub.f32 %v12086, %v12102
  %v12119 = vsub.f32 %v12087, %v12103
  %v12120 = vsub.f32 %v12088, %v12104
  %v12121 = vsub.f32 %v12089, %v12105
  %v12122 = vsub.f32 %v12090, %v12106
  %v12123 = vsub.f32 %v12091, %v12107
  %v12124 = vsub.f32 %v12092, %v12108
  %v12125 = vsub.f32 %v12093, %v12109
  %v12126 = vsub.f32 %v12094, %v12110
  %v12127 = vsub.f32 %v12095, %v12111
  %v12128 = vsub.f32 %v12096, %v12112
  %v12129 = vmax.f32 %v12113, 0.0
  %v12130 = vmax.f32 %v12114, 0.0
  %v12131 = vmax.f32 %v12115, 0.0
  %v12132 = vmax.f32 %v12116, 0.0
  %v12133 = vmax.f32 %v12117, 0.0
  %v12134 = vmax.f32 %v12118, 0.0
  %v12135 = vmax.f32 %v12119, 0.0
  %v12136 = vmax.f32 %v12120, 0.0
  %v12137 = vmax.f32 %v12121, 0.0
  %v12138 = vmax.f32 %v12122, 0.0
  %v12139 = vmax.f32 %v12123, 0.0
  %v12140 = vmax.f32 %v12124, 0.0
  %v12141 = vmax.f32 %v12125, 0.0
  %v12142 = vmax.f32 %v12126, 0.0
  %v12143 = vmax.f32 %v12127, 0.0
  %v12144 = vmax.f32 %v12128, 0.0
  %v12145 = vsub.f32 %v128, %v11953
  %v12146 = vsub.f32 %v129, %v11954
  %v12147 = vsub.f32 %v130, %v11955
  %v12148 = vsub.f32 %v131, %v11956
  %v12149 = vsub.f32 %v132, %v11957
  %v12150 = vsub.f32 %v133, %v11958
  %v12151 = vsub.f32 %v134, %v11959
  %v12152 = vsub.f32 %v135, %v11960
  %v12153 = vsub.f32 %v136, %v11961
  %v12154 = vsub.f32 %v137, %v11962
  %v12155 = vsub.f32 %v138, %v11963
  %v12156 = vsub.f32 %v139, %v11964
  %v12157 = vsub.f32 %v140, %v11965
  %v12158 = vsub.f32 %v141, %v11966
  %v12159 = vsub.f32 %v142, %v11967
  %v12160 = vsub.f32 %v143, %v11968
  %v12161 = vadd.f32 %v12129, 1e-05
  %v12162 = vadd.f32 %v12130, 1e-05
  %v12163 = vadd.f32 %v12131, 1e-05
  %v12164 = vadd.f32 %v12132, 1e-05
  %v12165 = vadd.f32 %v12133, 1e-05
  %v12166 = vadd.f32 %v12134, 1e-05
  %v12167 = vadd.f32 %v12135, 1e-05
  %v12168 = vadd.f32 %v12136, 1e-05
  %v12169 = vadd.f32 %v12137, 1e-05
  %v12170 = vadd.f32 %v12138, 1e-05
  %v12171 = vadd.f32 %v12139, 1e-05
  %v12172 = vadd.f32 %v12140, 1e-05
  %v12173 = vadd.f32 %v12141, 1e-05
  %v12174 = vadd.f32 %v12142, 1e-05
  %v12175 = vadd.f32 %v12143, 1e-05
  %v12176 = vadd.f32 %v12144, 1e-05
  %v12177 = vrsqrt.pop %v12161
  %v12178 = vmul.f32 %v12177, %v12161
  %v12179 = vmul.f32 %v12178, %v12177
  %v12180 = vmul.f32 0.5, %v12179
  %v12181 = vsub.f32 1.5, %v12180
  %v12182 = vmul.f32 %v12177, %v12181
  %vm12183 = vweird.f32 %v12161
  %vm12184 = vweird.f32 %v12177
  %vm12185 = vmor %vm12183, %vm12184
  %v12186 = vsel %vm12185, %v12177, %v12182
  %v12187 = vrsqrt.pop %v12162
  %v12188 = vmul.f32 %v12187, %v12162
  %v12189 = vmul.f32 %v12188, %v12187
  %v12190 = vmul.f32 0.5, %v12189
  %v12191 = vsub.f32 1.5, %v12190
  %v12192 = vmul.f32 %v12187, %v12191
  %vm12193 = vweird.f32 %v12162
  %vm12194 = vweird.f32 %v12187
  %vm12195 = vmor %vm12193, %vm12194
  %v12196 = vsel %vm12195, %v12187, %v12192
  %v12197 = vrsqrt.pop %v12163
  %v12198 = vmul.f32 %v12197, %v12163
  %v12199 = vmul.f32 %v12198, %v12197
  %v12200 = vmul.f32 0.5, %v12199
  %v12201 = vsub.f32 1.5, %v12200
  %v12202 = vmul.f32 %v12197, %v12201
  %vm12203 = vweird.f32 %v12163
  %vm12204 = vweird.f32 %v12197
  %vm12205 = vmor %vm12203, %vm12204
  %v12206 = vsel %vm12205, %v12197, %v12202
  %v12207 = vrsqrt.pop %v12164
  %v12208 = vmul.f32 %v12207, %v12164
  %v12209 = vmul.f32 %v12208, %v12207
  %v12210 = vmul.f32 0.5, %v12209
  %v12211 = vsub.f32 1.5, %v12210
  %v12212 = vmul.f32 %v12207, %v12211
  %vm12213 = vweird.f32 %v12164
  %vm12214 = vweird.f32 %v12207
  %vm12215 = vmor %vm12213, %vm12214
  %v12216 = vsel %vm12215, %v12207, %v12212
  %v12217 = vrsqrt.pop %v12165
  %v12218 = vmul.f32 %v12217, %v12165
  %v12219 = vmul.f32 %v12218, %v12217
  %v12220 = vmul.f32 0.5, %v12219
  %v12221 = vsub.f32 1.5, %v12220
  %v12222 = vmul.f32 %v12217, %v12221
  %vm12223 = vweird.f32 %v12165
  %vm12224 = vweird.f32 %v12217
  %vm12225 = vmor %vm12223, %vm12224
  %v12226 = vsel %vm12225, %v12217, %v12222
  %v12227 = vrsqrt.pop %v12166
  %v12228 = vmul.f32 %v12227, %v12166
  %v12229 = vmul.f32 %v12228, %v12227
  %v12230 = vmul.f32 0.5, %v12229
  %v12231 = vsub.f32 1.5, %v12230
  %v12232 = vmul.f32 %v12227, %v12231
  %vm12233 = vweird.f32 %v12166
  %vm12234 = vweird.f32 %v12227
  %vm12235 = vmor %vm12233, %vm12234
  %v12236 = vsel %vm12235, %v12227, %v12232
  %v12237 = vrsqrt.pop %v12167
  %v12238 = vmul.f32 %v12237, %v12167
  %v12239 = vmul.f32 %v12238, %v12237
  %v12240 = vmul.f32 0.5, %v12239
  %v12241 = vsub.f32 1.5, %v12240
  %v12242 = vmul.f32 %v12237, %v12241
  %vm12243 = vweird.f32 %v12167
  %vm12244 = vweird.f32 %v12237
  %vm12245 = vmor %vm12243, %vm12244
  %v12246 = vsel %vm12245, %v12237, %v12242
  %v12247 = vrsqrt.pop %v12168
  %v12248 = vmul.f32 %v12247, %v12168
  %v12249 = vmul.f32 %v12248, %v12247
  %v12250 = vmul.f32 0.5, %v12249
  %v12251 = vsub.f32 1.5, %v12250
  %v12252 = vmul.f32 %v12247, %v12251
  %vm12253 = vweird.f32 %v12168
  %vm12254 = vweird.f32 %v12247
  %vm12255 = vmor %vm12253, %vm12254
  %v12256 = vsel %vm12255, %v12247, %v12252
  %v12257 = vrsqrt.pop %v12169
  %v12258 = vmul.f32 %v12257, %v12169
  %v12259 = vmul.f32 %v12258, %v12257
  %v12260 = vmul.f32 0.5, %v12259
  %v12261 = vsub.f32 1.5, %v12260
  %v12262 = vmul.f32 %v12257, %v12261
  %vm12263 = vweird.f32 %v12169
  %vm12264 = vweird.f32 %v12257
  %vm12265 = vmor %vm12263, %vm12264
  %v12266 = vsel %vm12265, %v12257, %v12262
  %v12267 = vrsqrt.pop %v12170
  %v12268 = vmul.f32 %v12267, %v12170
  %v12269 = vmul.f32 %v12268, %v12267
  %v12270 = vmul.f32 0.5, %v12269
  %v12271 = vsub.f32 1.5, %v12270
  %v12272 = vmul.f32 %v12267, %v12271
  %vm12273 = vweird.f32 %v12170
  %vm12274 = vweird.f32 %v12267
  %vm12275 = vmor %vm12273, %vm12274
  %v12276 = vsel %vm12275, %v12267, %v12272
  %v12277 = vrsqrt.pop %v12171
  %v12278 = vmul.f32 %v12277, %v12171
  %v12279 = vmul.f32 %v12278, %v12277
  %v12280 = vmul.f32 0.5, %v12279
  %v12281 = vsub.f32 1.5, %v12280
  %v12282 = vmul.f32 %v12277, %v12281
  %vm12283 = vweird.f32 %v12171
  %vm12284 = vweird.f32 %v12277
  %vm12285 = vmor %vm12283, %vm12284
  %v12286 = vsel %vm12285, %v12277, %v12282
  %v12287 = vrsqrt.pop %v12172
  %v12288 = vmul.f32 %v12287, %v12172
  %v12289 = vmul.f32 %v12288, %v12287
  %v12290 = vmul.f32 0.5, %v12289
  %v12291 = vsub.f32 1.5, %v12290
  %v12292 = vmul.f32 %v12287, %v12291
  %vm12293 = vweird.f32 %v12172
  %vm12294 = vweird.f32 %v12287
  %vm12295 = vmor %vm12293, %vm12294
  %v12296 = vsel %vm12295, %v12287, %v12292
  %v12297 = vrsqrt.pop %v12173
  %v12298 = vmul.f32 %v12297, %v12173
  %v12299 = vmul.f32 %v12298, %v12297
  %v12300 = vmul.f32 0.5, %v12299
  %v12301 = vsub.f32 1.5, %v12300
  %v12302 = vmul.f32 %v12297, %v12301
  %vm12303 = vweird.f32 %v12173
  %vm12304 = vweird.f32 %v12297
  %vm12305 = vmor %vm12303, %vm12304
  %v12306 = vsel %vm12305, %v12297, %v12302
  %v12307 = vrsqrt.pop %v12174
  %v12308 = vmul.f32 %v12307, %v12174
  %v12309 = vmul.f32 %v12308, %v12307
  %v12310 = vmul.f32 0.5, %v12309
  %v12311 = vsub.f32 1.5, %v12310
  %v12312 = vmul.f32 %v12307, %v12311
  %vm12313 = vweird.f32 %v12174
  %vm12314 = vweird.f32 %v12307
  %vm12315 = vmor %vm12313, %vm12314
  %v12316 = vsel %vm12315, %v12307, %v12312
  %v12317 = vrsqrt.pop %v12175
  %v12318 = vmul.f32 %v12317, %v12175
  %v12319 = vmul.f32 %v12318, %v12317
  %v12320 = vmul.f32 0.5, %v12319
  %v12321 = vsub.f32 1.5, %v12320
  %v12322 = vmul.f32 %v12317, %v12321
  %vm12323 = vweird.f32 %v12175
  %vm12324 = vweird.f32 %v12317
  %vm12325 = vmor %vm12323, %vm12324
  %v12326 = vsel %vm12325, %v12317, %v12322
  %v12327 = vrsqrt.pop %v12176
  %v12328 = vmul.f32 %v12327, %v12176
  %v12329 = vmul.f32 %v12328, %v12327
  %v12330 = vmul.f32 0.5, %v12329
  %v12331 = vsub.f32 1.5, %v12330
  %v12332 = vmul.f32 %v12327, %v12331
  %vm12333 = vweird.f32 %v12176
  %vm12334 = vweird.f32 %v12327
  %vm12335 = vmor %vm12333, %vm12334
  %v12336 = vsel %vm12335, %v12327, %v12332
  %v12337 = vmul.f32 %v12145, %v12186
  %v12338 = vmul.f32 %v12146, %v12196
  %v12339 = vmul.f32 %v12147, %v12206
  %v12340 = vmul.f32 %v12148, %v12216
  %v12341 = vmul.f32 %v12149, %v12226
  %v12342 = vmul.f32 %v12150, %v12236
  %v12343 = vmul.f32 %v12151, %v12246
  %v12344 = vmul.f32 %v12152, %v12256
  %v12345 = vmul.f32 %v12153, %v12266
  %v12346 = vmul.f32 %v12154, %v12276
  %v12347 = vmul.f32 %v12155, %v12286
  %v12348 = vmul.f32 %v12156, %v12296
  %v12349 = vmul.f32 %v12157, %v12306
  %v12350 = vmul.f32 %v12158, %v12316
  %v12351 = vmul.f32 %v12159, %v12326
  %v12352 = vmul.f32 %v12160, %v12336
  %12369 = vrot.lane.b32.xlu0 %v12337, 96
  %v12370 = vpop.permute.xlu0 %12369
  %12371 = vrot.lane.b32.xlu0 %v12338, 96
  %v12372 = vpop.permute.xlu0 %12371
  %12373 = vrot.lane.b32.xlu0 %v12339, 96
  %v12374 = vpop.permute.xlu0 %12373
  %12375 = vrot.lane.b32.xlu0 %v12340, 96
  %v12376 = vpop.permute.xlu0 %12375
  %12377 = vrot.lane.b32.xlu0 %v12341, 96
  %v12378 = vpop.permute.xlu0 %12377
  %12379 = vrot.lane.b32.xlu0 %v12342, 96
  %v12380 = vpop.permute.xlu0 %12379
  %12381 = vrot.lane.b32.xlu0 %v12343, 96
  %v12382 = vpop.permute.xlu0 %12381
  %12383 = vrot.lane.b32.xlu0 %v12344, 96
  %v12384 = vpop.permute.xlu0 %12383
  %12385 = vrot.lane.b32.xlu0 %v12345, 96
  %v12386 = vpop.permute.xlu0 %12385
  %12387 = vrot.lane.b32.xlu0 %v12346, 96
  %v12388 = vpop.permute.xlu0 %12387
  %12389 = vrot.lane.b32.xlu0 %v12347, 96
  %v12390 = vpop.permute.xlu0 %12389
  %12391 = vrot.lane.b32.xlu0 %v12348, 96
  %v12392 = vpop.permute.xlu0 %12391
  %12393 = vrot.lane.b32.xlu0 %v12349, 96
  %v12394 = vpop.permute.xlu0 %12393
  %12395 = vrot.lane.b32.xlu0 %v12350, 96
  %v12396 = vpop.permute.xlu0 %12395
  %12397 = vrot.lane.b32.xlu0 %v12351, 96
  %v12398 = vpop.permute.xlu0 %12397
  %12399 = vrot.lane.b32.xlu0 %v12352, 96
  %v12400 = vpop.permute.xlu0 %12399
  %12417 = vrot.lane.b32.xlu0 %v12337, 104
  %v12418 = vpop.permute.xlu0 %12417
  %12419 = vrot.lane.b32.xlu0 %v12338, 104
  %v12420 = vpop.permute.xlu0 %12419
  %12421 = vrot.lane.b32.xlu0 %v12339, 104
  %v12422 = vpop.permute.xlu0 %12421
  %12423 = vrot.lane.b32.xlu0 %v12340, 104
  %v12424 = vpop.permute.xlu0 %12423
  %12425 = vrot.lane.b32.xlu0 %v12341, 104
  %v12426 = vpop.permute.xlu0 %12425
  %12427 = vrot.lane.b32.xlu0 %v12342, 104
  %v12428 = vpop.permute.xlu0 %12427
  %12429 = vrot.lane.b32.xlu0 %v12343, 104
  %v12430 = vpop.permute.xlu0 %12429
  %12431 = vrot.lane.b32.xlu0 %v12344, 104
  %v12432 = vpop.permute.xlu0 %12431
  %12433 = vrot.lane.b32.xlu0 %v12345, 104
  %v12434 = vpop.permute.xlu0 %12433
  %12435 = vrot.lane.b32.xlu0 %v12346, 104
  %v12436 = vpop.permute.xlu0 %12435
  %12437 = vrot.lane.b32.xlu0 %v12347, 104
  %v12438 = vpop.permute.xlu0 %12437
  %12439 = vrot.lane.b32.xlu0 %v12348, 104
  %v12440 = vpop.permute.xlu0 %12439
  %12441 = vrot.lane.b32.xlu0 %v12349, 104
  %v12442 = vpop.permute.xlu0 %12441
  %12443 = vrot.lane.b32.xlu0 %v12350, 104
  %v12444 = vpop.permute.xlu0 %12443
  %12445 = vrot.lane.b32.xlu0 %v12351, 104
  %v12446 = vpop.permute.xlu0 %12445
  %12447 = vrot.lane.b32.xlu0 %v12352, 104
  %v12448 = vpop.permute.xlu0 %12447
  %v12465 = vsel %vm11897, %v12370, %v12418
  %v12466 = vsel %vm11897, %v12372, %v12420
  %v12467 = vsel %vm11897, %v12374, %v12422
  %v12468 = vsel %vm11897, %v12376, %v12424
  %v12469 = vsel %vm11897, %v12378, %v12426
  %v12470 = vsel %vm11897, %v12380, %v12428
  %v12471 = vsel %vm11897, %v12382, %v12430
  %v12472 = vsel %vm11897, %v12384, %v12432
  %v12473 = vsel %vm11897, %v12386, %v12434
  %v12474 = vsel %vm11897, %v12388, %v12436
  %v12475 = vsel %vm11897, %v12390, %v12438
  %v12476 = vsel %vm11897, %v12392, %v12440
  %v12477 = vsel %vm11897, %v12394, %v12442
  %v12478 = vsel %vm11897, %v12396, %v12444
  %v12479 = vsel %vm11897, %v12398, %v12446
  %v12480 = vsel %vm11897, %v12400, %v12448
  %v12481 = vperm.slane %v92, 0
  %v12482 = vmul.f32 %v12465, %v12481
  %v12483 = vmul.f32 %v12466, %v12481
  %v12484 = vmul.f32 %v12467, %v12481
  %v12485 = vmul.f32 %v12468, %v12481
  %v12486 = vmul.f32 %v12469, %v12481
  %v12487 = vmul.f32 %v12470, %v12481
  %v12488 = vmul.f32 %v12471, %v12481
  %v12489 = vmul.f32 %v12472, %v12481
  %v12490 = vmul.f32 %v12473, %v12481
  %v12491 = vmul.f32 %v12474, %v12481
  %v12492 = vmul.f32 %v12475, %v12481
  %v12493 = vmul.f32 %v12476, %v12481
  %v12494 = vmul.f32 %v12477, %v12481
  %v12495 = vmul.f32 %v12478, %v12481
  %v12496 = vmul.f32 %v12479, %v12481
  %v12497 = vmul.f32 %v12480, %v12481
  %v12498 = vperm.slane %v93, 0
  %v12499 = vadd.f32 %v12482, %v12498
  %v12500 = vadd.f32 %v12483, %v12498
  %v12501 = vadd.f32 %v12484, %v12498
  %v12502 = vadd.f32 %v12485, %v12498
  %v12503 = vadd.f32 %v12486, %v12498
  %v12504 = vadd.f32 %v12487, %v12498
  %v12505 = vadd.f32 %v12488, %v12498
  %v12506 = vadd.f32 %v12489, %v12498
  %v12507 = vadd.f32 %v12490, %v12498
  %v12508 = vadd.f32 %v12491, %v12498
  %v12509 = vadd.f32 %v12492, %v12498
  %v12510 = vadd.f32 %v12493, %v12498
  %v12511 = vadd.f32 %v12494, %v12498
  %v12512 = vadd.f32 %v12495, %v12498
  %v12513 = vadd.f32 %v12496, %v12498
  %v12514 = vadd.f32 %v12497, %v12498
  %v12515 = vperm.slane %v96, 0
  %vm12516 = vcmask 130048
  %v12518 = vsel %vm12516, %v12499, 0
  %v12521 = vsel %vm12516, %v12500, 0
  %v12524 = vsel %vm12516, %v12501, 0
  %v12527 = vsel %vm12516, %v12502, 0
  %v12530 = vsel %vm12516, %v12503, 0
  %v12533 = vsel %vm12516, %v12504, 0
  %v12536 = vsel %vm12516, %v12505, 0
  %v12539 = vsel %vm12516, %v12506, 0
  %v12542 = vsel %vm12516, %v12507, 0
  %v12545 = vsel %vm12516, %v12508, 0
  %v12548 = vsel %vm12516, %v12509, 0
  %v12551 = vsel %vm12516, %v12510, 0
  %v12554 = vsel %vm12516, %v12511, 0
  %v12557 = vsel %vm12516, %v12512, 0
  %v12560 = vsel %vm12516, %v12513, 0
  %v12563 = vsel %vm12516, %v12514, 0
  %12565 = vmatpush.msra.mxu0 0.0
  %12566 = vmatpush.msra.mxu0 0.0
  %12567 = vmatpush.msra.mxu0 0.0
  %12568 = vmatpush.msra.mxu0 0.0
  %12569 = vmatpush.msra.mxu0 0.0
  %12570 = vmatpush.msra.mxu0 0.0
  %12571 = vmatpush.msra.mxu0 0.0
  %12572 = vmatpush.msra.mxu0 0.0
  %12573 = vmatpush.msra.mxu0 0.0
  %12574 = vmatpush.msra.mxu0 0.0
  %12575 = vmatpush.msra.mxu0 0.0
  %12576 = vmatpush.msra.mxu0 0.0
  %12577 = vmatpush.msra.mxu0 0.0
  %12578 = vmatpush.msra.mxu0 0.0
  %12579 = vmatpush.msra.mxu0 %v95
  %12580 = vmatpush.msra.mxu0 %v94
  %12581 = vmatmul.f32.gmra.mxu0 %v12518
  %v12582 = vpop.f32.mrf.mxu0
  %v12583 = vadd.f32 %v12515, %v12582
  %12584 = vmatmul.f32.gmra.mxu0 %v12521
  %v12585 = vpop.f32.mrf.mxu0
  %v12586 = vadd.f32 %v12515, %v12585
  %12587 = vmatmul.f32.gmra.mxu0 %v12524
  %v12588 = vpop.f32.mrf.mxu0
  %v12589 = vadd.f32 %v12515, %v12588
  %12590 = vmatmul.f32.gmra.mxu0 %v12527
  %v12591 = vpop.f32.mrf.mxu0
  %v12592 = vadd.f32 %v12515, %v12591
  %12593 = vmatmul.f32.gmra.mxu0 %v12530
  %v12594 = vpop.f32.mrf.mxu0
  %v12595 = vadd.f32 %v12515, %v12594
  %12596 = vmatmul.f32.gmra.mxu0 %v12533
  %v12597 = vpop.f32.mrf.mxu0
  %v12598 = vadd.f32 %v12515, %v12597
  %12599 = vmatmul.f32.gmra.mxu0 %v12536
  %v12600 = vpop.f32.mrf.mxu0
  %v12601 = vadd.f32 %v12515, %v12600
  %12602 = vmatmul.f32.gmra.mxu0 %v12539
  %v12603 = vpop.f32.mrf.mxu0
  %v12604 = vadd.f32 %v12515, %v12603
  %12605 = vmatmul.f32.gmra.mxu0 %v12542
  %v12606 = vpop.f32.mrf.mxu0
  %v12607 = vadd.f32 %v12515, %v12606
  %12608 = vmatmul.f32.gmra.mxu0 %v12545
  %v12609 = vpop.f32.mrf.mxu0
  %v12610 = vadd.f32 %v12515, %v12609
  %12611 = vmatmul.f32.gmra.mxu0 %v12548
  %v12612 = vpop.f32.mrf.mxu0
  %v12613 = vadd.f32 %v12515, %v12612
  %12614 = vmatmul.f32.gmra.mxu0 %v12551
  %v12615 = vpop.f32.mrf.mxu0
  %v12616 = vadd.f32 %v12515, %v12615
  %12617 = vmatmul.f32.gmra.mxu0 %v12554
  %v12618 = vpop.f32.mrf.mxu0
  %v12619 = vadd.f32 %v12515, %v12618
  %12620 = vmatmul.f32.gmra.mxu0 %v12557
  %v12621 = vpop.f32.mrf.mxu0
  %v12622 = vadd.f32 %v12515, %v12621
  %12623 = vmatmul.f32.gmra.mxu0 %v12560
  %v12624 = vpop.f32.mrf.mxu0
  %v12625 = vadd.f32 %v12515, %v12624
  %12626 = vmatmul.f32.gmra.mxu0 %v12563
  %v12627 = vpop.f32.mrf.mxu0
  %v12628 = vadd.f32 %v12515, %v12627
  %12629 = vdwg.mxu0
  %12630 = vmatpush.msra.mxu0 0.0
  %12631 = vmatpush.msra.mxu0 0.0
  %12632 = vmatpush.msra.mxu0 0.0
  %12633 = vmatpush.msra.mxu0 0.0
  %12634 = vmatpush.msra.mxu0 0.0
  %12635 = vmatpush.msra.mxu0 0.0
  %12636 = vmatpush.msra.mxu0 0.0
  %12637 = vmatpush.msra.mxu0 0.0
  %12638 = vmatpush.msra.mxu0 %v275
  %12639 = vmatpush.msra.mxu0 %v274
  %12640 = vmatpush.msra.mxu0 %v273
  %12641 = vmatpush.msra.mxu0 %v272
  %12642 = vmatpush.msra.mxu0 %v271
  %12643 = vmatpush.msra.mxu0 %v270
  %12644 = vmatpush.msra.mxu0 %v269
  %12645 = vmatpush.msra.mxu0 %v268
  %12646 = vmatmul.f32.gmra.mxu0 %v11811
  %v12647 = vpop.f32.mrf.mxu0
  %v12648 = vadd.f32 0.0, %v12647
  %12649 = vdwg.mxu0
  %v12650 = vmul.f32 %v12648, %v233
  %v12652 = vsel %vm267, %v11809, 0
  %12654 = vmatpush.msra.mxu0 0.0
  %12655 = vmatpush.msra.mxu0 0.0
  %12656 = vmatpush.msra.mxu0 0.0
  %12657 = vmatpush.msra.mxu0 0.0
  %12658 = vmatpush.msra.mxu0 0.0
  %12659 = vmatpush.msra.mxu0 0.0
  %12660 = vmatpush.msra.mxu0 0.0
  %12661 = vmatpush.msra.mxu0 0.0
  %12662 = vmatpush.msra.mxu0 %v275
  %12663 = vmatpush.msra.mxu0 %v274
  %12664 = vmatpush.msra.mxu0 %v273
  %12665 = vmatpush.msra.mxu0 %v272
  %12666 = vmatpush.msra.mxu0 %v271
  %12667 = vmatpush.msra.mxu0 %v270
  %12668 = vmatpush.msra.mxu0 %v269
  %12669 = vmatpush.msra.mxu0 %v268
  %12670 = vmatmul.f32.gmra.mxu0 %v12652
  %v12671 = vpop.f32.mrf.mxu0
  %v12672 = vadd.f32 0.0, %v12671
  %12673 = vdwg.mxu0
  %v12674 = vmul.f32 %v12672, %v197
  %v12676 = vrot.slane %v12674, 2
  %v12678 = vsel %vm7726, %v12650, %v12676
  %12679 = vmatpush.msra.mxu0 %v12628
  %12680 = vmatpush.msra.mxu0 %v12625
  %12681 = vmatpush.msra.mxu0 %v12622
  %12682 = vmatpush.msra.mxu0 %v12619
  %12683 = vmatpush.msra.mxu0 %v12616
  %12684 = vmatpush.msra.mxu0 %v12613
  %12685 = vmatpush.msra.mxu0 %v12610
  %12686 = vmatpush.msra.mxu0 %v12607
  %12687 = vmatpush.msra.mxu0 %v12604
  %12688 = vmatpush.msra.mxu0 %v12601
  %12689 = vmatpush.msra.mxu0 %v12598
  %12690 = vmatpush.msra.mxu0 %v12595
  %12691 = vmatpush.msra.mxu0 %v12592
  %12692 = vmatpush.msra.mxu0 %v12589
  %12693 = vmatpush.msra.mxu0 %v12586
  %12694 = vmatpush.msra.mxu0 %v12583
  %12695 = vmatmul.f32.gmra.mxu0 %v12678
  %v12696 = vpop.f32.mrf.mxu0
  %v12697 = vadd.f32 0.0, %v12696
  %12698 = vdwg.mxu0
  %vm12699 = vcmp.gt.f32.partialorder %v560, 0.5
  %v12700 = vsel %vm12699, 1, 0
  %vm12701 = vcmp.eq.s32.totalorder %v12700, 1
  %12703 = vrot.lane.b32.xlu0 %v12697, 120
  %v12704 = vpop.permute.xlu0 %12703
  %v12706 = vsel %vm12701, %v12697, %v12704
  %v12707 = vsel %vm7726, %v11831, 0.0
  %12709 = vrot.lane.b32.xlu0 %v12706, 32
  %v12710 = vpop.permute.xlu0 %12709
  %12713 = vrot.lane.b32.xlu0 %v12707, 40
  %v12714 = vpop.permute.xlu0 %12713
  %v12716 = vsel %vm562, %v2783, %v12710
  %vm12717 = vcmask 326656
  %v12718 = vsel %vm12717, %v12716, %v12714
  %v12720 = vrot.slane %v12718, 6
  %v12722 = vrot.slane %v12718, 7
  %v12724 = vrot.slane %v12718, 3
  %v12726 = vsel %vm11756, %v12720, %v12722
  %v12727 = vsel %vm11768, %v12726, %v12724
  %v12728 = vsel %vm11770, %v12727, %v12720
  %12730 = vrot.lane.b32.xlu0 %v12728, 64
  %v12731 = vpop.permute.xlu0 %12730
  %v12733 = vsel %vm267, %v11771, %v12731
  %vm12734 = vcmask 867328
  %v12735 = vsel %vm12734, %v12733, 0.0
  %12736 = vst [vmem:[%s3] sm:$0xff] %v12735
  // Predicated region
  $region21: #{slot_attention_forward.1} parent=0 // pred_check
    _
  $region22: #{slot_attention_forward.1} parent=0 // pred_check_branch
    %12738 = sbr.rel (0) target = $region24
  $region23: #{slot_attention_forward.1} parent=0 // pred_region
    _
  $region24: #{slot_attention_forward.1} parent=0 // pred_fallthru
    _
  // Predicated region
  $region25: #{slot_attention_forward.1} parent=0 // pred_check
    _
  $region26: #{slot_attention_forward.1} parent=0 // pred_check_branch
    %12740 = sbr.rel (0) target = $region28
  $region27: #{slot_attention_forward.1} parent=0 // pred_region
    _
  $region28: #{slot_attention_forward.1} parent=0 // pred_fallthru
    _

</llo_original>
